<compile_context>
chip_gen: v6e
topology: v6e:2x2x1
jax: 0.10.0
libtpu: 0.0.40
codegen_flags: <defaults>
</compile_context>

<pallas_src>
import functools
import numpy as np

import jax
import jax.numpy as jnp
from jax.experimental import pallas as pl
from jax.experimental.pallas import tpu as pltpu

LOG2PI = float(np.log(2.0 * np.pi))
LANE = 128


def _round_up(a, m):
    return (a + m - 1) // m * m


def _vb_kernel(x_ref, eps_ref, wenc_ref, benc_ref, wdec_ref, bdec_ref,
               out_ref, *, dz, dz_pad, dx, mxu_dtype):
    """One grid step = one batch tile, ALL samples fused. Kernel refs:
       x_ref   (TB, Dx) f32        eps_ref (S, TB, Dz) bf16
       wenc    (Dx, 2*dz_pad)      benc    (1, 2*dz_pad)  [mu | log_sigma], 128-aligned halves
       wdec    (Dz, Dx)            bdec    (1, Dx)
       out_ref (S, TB) f32
    """
    x = x_ref[...]                                        # (TB, Dx)
    eps = eps_ref[...].astype(jnp.float32)                # (S, TB, Dz)
    s, tb, _ = eps.shape                                  # static

    # Fused encoder: one (TB, Dx) @ (Dx, 2*dz_pad) matmul -> [mu | log_sigma].
    enc = jnp.dot(x.astype(mxu_dtype), wenc_ref[...].astype(mxu_dtype),
                  preferred_element_type=jnp.float32) + benc_ref[...]
    mu = enc[:, :dz]                                      # lane offset 0
    log_sigma = enc[:, dz_pad:dz_pad + dz]                # lane offset 128-aligned
    sigma = jnp.exp(log_sigma)                            # EUP, computed once
    sum_log_sigma = jnp.sum(log_sigma, axis=-1)           # (TB,), XLU, computed once

    # Reparameterized samples for all S at once: z = mu + sigma * eps.
    z = mu[None] + sigma[None] * eps                      # (S, TB, Dz)

    # Decoder: fold samples into the batch -> one tall MXU matmul.
    # TODO(synk): for very large S*TB*Dx, chunk this matmul over S instead of
    # shrinking tile_b (keeps the lane-dense 128-wide output tile).
    z2 = z.reshape(s * tb, dz)
    x_rec = jnp.dot(z2.astype(mxu_dtype), wdec_ref[...].astype(mxu_dtype),
                    preferred_element_type=jnp.float32) + bdec_ref[...]
    diff = x_rec.reshape(s, tb, dx) - x[None]             # (S, TB, Dx)

    # log w = log p(z) + log p(x|z) - log q(z|x), using (z - mu)/sigma == eps:
    #   0.5*sum(eps^2 - z^2) + sum(log_sigma) - 0.5*sum(diff^2) - 0.5*Dx*log(2*pi)
    log_w = (0.5 * jnp.sum(eps * eps - z * z, axis=-1)    # single fused Dz reduce
             + sum_log_sigma[None]
             - 0.5 * jnp.sum(diff * diff, axis=-1)
             - 0.5 * dx * LOG2PI)                         # (S, TB)

    out_ref[...] = log_w                                  # lane-dense, unmasked store


def fuse_encoder_params(params):
    """Hoisted out of the per-call path (run once): fuse [W_mu | W_logsigma],
    zero-padding each half to a 128-lane boundary so the in-kernel split is
    lane-aligned (no XLU realignment copy)."""
    wmu, bmu, wls, bls, wdec, bdec = params
    _, dz = wmu.shape
    dz_pad = _round_up(dz, LANE)
    pad = lambda a: jnp.pad(a, ((0, 0), (0, dz_pad - dz)))
    w_enc = jnp.concatenate([pad(wmu), pad(wls)], axis=1)   # (Dx, 2*dz_pad)
    b_enc = jnp.concatenate([pad(bmu), pad(bls)], axis=1)   # (1, 2*dz_pad)
    return w_enc, b_enc, wdec, bdec


def _pick_tile_and_vmem(s, dz, dx):
    """Largest 128-multiple batch tile whose working set fits a per-generation
    VMEM budget (v7x: 64 MiB physical; v5e/v6e: 128 MiB)."""
    try:
        vmem_cap = int(pltpu.get_tpu_info().vmem_capacity_bytes)
    except Exception:  # conservative fallback if the trace-time query is unavailable
        vmem_cap = 64 * 1024 * 1024
    vmem_limit = min(int(vmem_cap * 3 // 4), 96 * 1024 * 1024)
    budget = vmem_limit // 2          # headroom for compiler temporaries / spills

    def block_bytes(tb):
        eps_b = 2 * s * tb * dz * 2   # bf16 eps, double-buffered
        x_b = 2 * tb * dx * 4         # f32 x, double-buffered
        out_b = 2 * s * tb * 4        # f32 out, double-buffered
        z_b = s * tb * dz * 4         # z temporary
        rec_b = 2 * s * tb * dx * 4   # x_rec + diff temporaries
        return eps_b + x_b + out_b + z_b + rec_b

    tile_b = 4 * LANE
    while tile_b > LANE and block_bytes(tile_b) > budget:
        tile_b -= LANE
    return tile_b, vmem_limit


def variational_log_weights(x, eps, fused_params, *, mxu_dtype=jnp.float32,
                            eps_dtype=jnp.bfloat16):
    """Runs the Pallas kernel; returns log p(x,z_s) - log q(z_s|x) of shape (S, B)."""
    w_enc, b_enc, wdec, bdec = fused_params
    S, B, Dz = eps.shape
    _, Dx = x.shape
    dz_pad = w_enc.shape[1] // 2

    tile_b, vmem_limit = _pick_tile_and_vmem(S, Dz, Dx)
    b_pad = _round_up(B, tile_b)
    if b_pad != B:   # pad batch so every output block is lane-dense and unmasked
        x = jnp.pad(x, ((0, b_pad - B), (0, 0)))
        eps = jnp.pad(eps, ((0, 0), (0, b_pad - B), (0, 0)))
    eps = eps.astype(eps_dtype)       # stream the dominant HBM input in bf16
    grid = (b_pad // tile_b,)
    # TODO(synk): grid=(1,) for tiny B cannot shard across v7x's 2 TensorCores;
    # realistic batch sizes give >= 2 "parallel" tiles automatically.

    kernel = functools.partial(_vb_kernel, dz=Dz, dz_pad=dz_pad, dx=Dx,
                               mxu_dtype=mxu_dtype)

    # TODO(synk): pipeline_mode=pl.Buffered(1) on the four constant weight
    # blocks would drop their (few-KiB) double buffers; omitted to keep
    # lowering compatibility.
    log_w = pl.pallas_call(
        kernel,
        out_shape=jax.ShapeDtypeStruct((S, b_pad), jnp.float32),
        grid_spec=pltpu.PrefetchScalarGridSpec(
            num_scalar_prefetch=0,
            grid=grid,
            in_specs=[
                pl.BlockSpec((tile_b, Dx), lambda i: (i, 0)),        # x
                pl.BlockSpec((S, tile_b, Dz), lambda i: (0, i, 0)),  # eps (all samples)
                pl.BlockSpec((Dx, 2 * dz_pad), lambda i: (0, 0)),    # W_enc = [W_mu | W_ls]
                pl.BlockSpec((1, 2 * dz_pad), lambda i: (0, 0)),     # b_enc
                pl.BlockSpec((Dz, Dx), lambda i: (0, 0)),            # W_dec
                pl.BlockSpec((1, Dx), lambda i: (0, 0)),             # b_dec
            ],
            out_specs=pl.BlockSpec((S, tile_b), lambda i: (0, i)),
        ),
        compiler_params=pltpu.CompilerParams(
            dimension_semantics=("parallel",),
            vmem_limit_bytes=vmem_limit),
    )(x, eps, w_enc, b_enc, wdec, bdec)
    return log_w[:, :B]


@functools.partial(jax.jit, static_argnames=("bound_type", "mxu_dtype", "eps_dtype"))
def variational_bound(x, eps, fused_params, bound_type="elbo",
                      mxu_dtype=jnp.float32, eps_dtype=jnp.bfloat16):
    """forward(): ELBO_joint / iw_joint semantics of VariationalBound."""
    log_w = variational_log_weights(x, eps, fused_params,
                                    mxu_dtype=mxu_dtype, eps_dtype=eps_dtype)
    n_samples = eps.shape[0]
    if bound_type == "elbo":
        return jnp.mean(log_w, axis=0)                                      # (B,)
    elif bound_type == "iw":
        return jax.scipy.special.logsumexp(log_w, axis=0) - jnp.log(n_samples)
    else:
        # TODO(synk): 'renyi' / 'forward_kl' raise NotImplementedError upstream too.
        raise ValueError("Unknown bound type")


def _reference_log_weights(x, eps, params):
    wmu, bmu, wls, bls, wdec, bdec = params
    mu = x @ wmu + bmu
    ls = x @ wls + bls
    sigma = jnp.exp(ls)
    z = mu[None] + sigma[None] * eps
    zc = (z - mu[None]) / sigma[None]
    log_q = (-0.5 * jnp.sum(zc * zc, -1) - jnp.sum(ls, -1)[None]
             - 0.5 * z.shape[-1] * LOG2PI)
    log_pz = -0.5 * jnp.sum(z * z, -1) - 0.5 * z.shape[-1] * LOG2PI
    x_rec = jnp.einsum("sbz,zx->sbx", z, wdec) + bdec
    diff = x[None] - x_rec
    log_px = -0.5 * jnp.sum(diff * diff, -1) - 0.5 * x.shape[-1] * LOG2PI
    return log_pz + log_px - log_q


if __name__ == "__main__":
    B, Dx, Dz, S = 8, 32, 16, 4

    key = jax.random.PRNGKey(0)
    kx, ke, k1, k2, k3, k4, k5, k6 = jax.random.split(key, 8)

    # Observations and reparameterization noise (rsample's epsilon).
    x = jax.random.normal(kx, (B, Dx), jnp.float32)
    eps = jax.random.normal(ke, (S, B, Dz), jnp.float32)

    # Deterministic synthetic parameters for posterior / joint.
    wmu = 0.1 * jax.random.normal(k1, (Dx, Dz), jnp.float32)
    bmu = 0.1 * jax.random.normal(k2, (1, Dz), jnp.float32)
    wls = 0.05 * jax.random.normal(k3, (Dx, Dz), jnp.float32)
    bls = 0.05 * jax.random.normal(k4, (1, Dz), jnp.float32)
    wdec = 0.1 * jax.random.normal(k5, (Dz, Dx), jnp.float32)
    bdec = 0.1 * jax.random.normal(k6, (1, Dx), jnp.float32)
    params = (wmu, bmu, wls, bls, wdec, bdec)

    # Hoisted parameter fusion / lane padding: done once, not per forward.
    fused = fuse_encoder_params(params)

    elbo = jax.block_until_ready(variational_bound(x, eps, fused, bound_type="elbo"))
    iw = jax.block_until_ready(variational_bound(x, eps, fused, bound_type="iw"))

    # Correctness check vs. pure-JAX reference; the reference consumes the same
    # bf16-quantized noise the kernel streams (noise source is arbitrary to the
    # module semantics, so this compares the bound computation itself).
    eps_q = eps.astype(jnp.bfloat16).astype(jnp.float32)
    log_w_ref = _reference_log_weights(x, eps_q, params)
    elbo_ref = jnp.mean(log_w_ref, axis=0)
    iw_ref = jax.scipy.special.logsumexp(log_w_ref, axis=0) - jnp.log(S)
    assert jnp.allclose(elbo, elbo_ref, atol=1e-3, rtol=1e-3), (elbo, elbo_ref)
    assert jnp.allclose(iw, iw_ref, atol=1e-3, rtol=1e-3), (iw, iw_ref)

    print("KERNEL_OK")
</pallas_src>

<mosaic_0001>
module attributes {stable_mosaic.version = 11 : i64} {
  func.func @_vb_kernel(%arg0: i32, %arg1: memref<512x32xf32, #tpu.memory_space<vmem>>, %arg2: memref<4x512x16xbf16, #tpu.memory_space<vmem>>, %arg3: memref<32x256xf32, #tpu.memory_space<vmem>>, %arg4: memref<1x256xf32, #tpu.memory_space<vmem>>, %arg5: memref<16x32xf32, #tpu.memory_space<vmem>>, %arg6: memref<1x32xf32, #tpu.memory_space<vmem>>, %arg7: memref<4x512xf32, #tpu.memory_space<vmem>>) attributes {dimension_semantics = [#tpu.dimension_semantics<parallel>], iteration_bounds = array<i64: 1>, scalar_prefetch = 0 : i64, scratch_operands = 0 : i64, tpu.core_type = #tpu.core_type<tc>, window_params = [{transform_indices = @transform_0, window_bounds = array<i64: 512, 32>}, {transform_indices = @transform_1, window_bounds = array<i64: 4, 512, 16>}, {pipeline_mode = #tpu.pipeline_mode<synchronous>, transform_indices = @transform_2, window_bounds = array<i64: 32, 256>}, {pipeline_mode = #tpu.pipeline_mode<synchronous>, transform_indices = @transform_3, window_bounds = array<i64: 1, 256>}, {pipeline_mode = #tpu.pipeline_mode<synchronous>, transform_indices = @transform_4, window_bounds = array<i64: 16, 32>}, {pipeline_mode = #tpu.pipeline_mode<synchronous>, transform_indices = @transform_5, window_bounds = array<i64: 1, 32>}, {transform_indices = @transform_6, window_bounds = array<i64: 4, 512>}]} {
    %c0 = arith.constant 0 : index
    %c0_0 = arith.constant 0 : index
    %0 = vector.load %arg1[%c0, %c0_0] : memref<512x32xf32, #tpu.memory_space<vmem>>, vector<512x32xf32>
    %c0_1 = arith.constant 0 : index
    %c0_2 = arith.constant 0 : index
    %c0_3 = arith.constant 0 : index
    %1 = vector.load %arg2[%c0_1, %c0_2, %c0_3] : memref<4x512x16xbf16, #tpu.memory_space<vmem>>, vector<4x512x16xbf16>
    %2 = arith.extf %1 : vector<4x512x16xbf16> to vector<4x512x16xf32>
    %c0_4 = arith.constant 0 : index
    %c0_5 = arith.constant 0 : index
    %3 = vector.load %arg3[%c0_4, %c0_5] : memref<32x256xf32, #tpu.memory_space<vmem>>, vector<32x256xf32>
    %cst = arith.constant dense<0.000000e+00> : vector<512x256xf32>
    %4 = tpu.matmul %0, %3, %cst {dimension_numbers = #tpu.dot_dimension_numbers<[1], [0], [0], [1], [0, 0, 1, 1], [], []>} : vector<512x32xf32>, vector<32x256xf32>, vector<512x256xf32> -> vector<512x256xf32>
    %c0_6 = arith.constant 0 : index
    %c0_7 = arith.constant 0 : index
    %5 = vector.load %arg4[%c0_6, %c0_7] : memref<1x256xf32, #tpu.memory_space<vmem>>, vector<1x256xf32>
    %6 = vector.broadcast %5 : vector<1x256xf32> to vector<512x256xf32>
    %7 = arith.addf %4, %6 : vector<512x256xf32>
    %8 = vector.extract_strided_slice %7 {offsets = [0, 0], sizes = [512, 16], strides = [1, 1]} : vector<512x256xf32> to vector<512x16xf32>
    %9 = vector.extract_strided_slice %7 {offsets = [0, 128], sizes = [512, 16], strides = [1, 1]} : vector<512x256xf32> to vector<512x16xf32>
    %10 = math.exp %9 : vector<512x16xf32>
    %cst_8 = arith.constant dense<0.000000e+00> : vector<512xf32>
    %11 = vector.multi_reduction <add>, %9, %cst_8 [1] : vector<512x16xf32> to vector<512xf32>
    %12 = vector.shape_cast %8 : vector<512x16xf32> to vector<1x512x16xf32>
    %13 = vector.shape_cast %10 : vector<512x16xf32> to vector<1x512x16xf32>
    %14 = vector.broadcast %13 : vector<1x512x16xf32> to vector<4x512x16xf32>
    %15 = arith.mulf %14, %2 : vector<4x512x16xf32>
    %16 = vector.broadcast %12 : vector<1x512x16xf32> to vector<4x512x16xf32>
    %17 = arith.addf %16, %15 : vector<4x512x16xf32>
    %18 = vector.shape_cast %17 : vector<4x512x16xf32> to vector<2048x16xf32>
    %c0_9 = arith.constant 0 : index
    %c0_10 = arith.constant 0 : index
    %19 = vector.load %arg5[%c0_9, %c0_10] : memref<16x32xf32, #tpu.memory_space<vmem>>, vector<16x32xf32>
    %cst_11 = arith.constant dense<0.000000e+00> : vector<2048x32xf32>
    %20 = tpu.matmul %18, %19, %cst_11 {dimension_numbers = #tpu.dot_dimension_numbers<[1], [0], [0], [1], [0, 0, 1, 1], [], []>} : vector<2048x16xf32>, vector<16x32xf32>, vector<2048x32xf32> -> vector<2048x32xf32>
    %c0_12 = arith.constant 0 : index
    %c0_13 = arith.constant 0 : index
    %21 = vector.load %arg6[%c0_12, %c0_13] : memref<1x32xf32, #tpu.memory_space<vmem>>, vector<1x32xf32>
    %22 = vector.broadcast %21 : vector<1x32xf32> to vector<2048x32xf32>
    %23 = arith.addf %20, %22 : vector<2048x32xf32>
    %24 = vector.shape_cast %23 : vector<2048x32xf32> to vector<4x512x32xf32>
    %25 = vector.shape_cast %0 : vector<512x32xf32> to vector<1x512x32xf32>
    %26 = vector.broadcast %25 : vector<1x512x32xf32> to vector<4x512x32xf32>
    %27 = arith.subf %24, %26 : vector<4x512x32xf32>
    %28 = arith.mulf %2, %2 : vector<4x512x16xf32>
    %29 = arith.mulf %17, %17 : vector<4x512x16xf32>
    %30 = arith.subf %28, %29 : vector<4x512x16xf32>
    %cst_14 = arith.constant dense<0.000000e+00> : vector<4x512xf32>
    %31 = vector.multi_reduction <add>, %30, %cst_14 [2] : vector<4x512x16xf32> to vector<4x512xf32>
    %cst_15 = arith.constant 5.000000e-01 : f32
    %32 = vector.broadcast %cst_15 : f32 to vector<4x512xf32>
    %33 = arith.mulf %32, %31 : vector<4x512xf32>
    %34 = vector.shape_cast %11 : vector<512xf32> to vector<1x512xf32>
    %35 = vector.broadcast %34 : vector<1x512xf32> to vector<4x512xf32>
    %36 = arith.addf %33, %35 : vector<4x512xf32>
    %37 = arith.mulf %27, %27 : vector<4x512x32xf32>
    %cst_16 = arith.constant dense<0.000000e+00> : vector<4x512xf32>
    %38 = vector.multi_reduction <add>, %37, %cst_16 [2] : vector<4x512x32xf32> to vector<4x512xf32>
    %cst_17 = arith.constant 5.000000e-01 : f32
    %39 = vector.broadcast %cst_17 : f32 to vector<4x512xf32>
    %40 = arith.mulf %39, %38 : vector<4x512xf32>
    %41 = arith.subf %36, %40 : vector<4x512xf32>
    %cst_18 = arith.constant 29.4060326 : f32
    %42 = vector.broadcast %cst_18 : f32 to vector<4x512xf32>
    %43 = arith.subf %41, %42 : vector<4x512xf32>
    %c0_19 = arith.constant 0 : index
    %c0_20 = arith.constant 0 : index
    %44 = vector.load %arg7[%c0_19, %c0_20] : memref<4x512xf32, #tpu.memory_space<vmem>>, vector<4x512xf32>
    tpu.vector_store %arg7[%c0_19, %c0_20], %43 {strides = array<i32>} : memref<4x512xf32, #tpu.memory_space<vmem>>, vector<4x512xf32>,
    return
  }
  func.func @transform_0(%arg0: i32) -> (i32, i32) {
    %c0_i32 = arith.constant 0 : i32
    %c0_i32_0 = arith.constant 0 : i32
    return %arg0, %c0_i32 : i32, i32
  }
  func.func @transform_1(%arg0: i32) -> (i32, i32, i32) {
    %c0_i32 = arith.constant 0 : i32
    %c0_i32_0 = arith.constant 0 : i32
    %c0_i32_1 = arith.constant 0 : i32
    return %c0_i32, %arg0, %c0_i32_0 : i32, i32, i32
  }
  func.func @transform_2(%arg0: i32) -> (i32, i32) {
    %c0_i32 = arith.constant 0 : i32
    %c0_i32_0 = arith.constant 0 : i32
    %c0_i32_1 = arith.constant 0 : i32
    return %c0_i32, %c0_i32_0 : i32, i32
  }
  func.func @transform_3(%arg0: i32) -> (i32, i32) {
    %c0_i32 = arith.constant 0 : i32
    %c0_i32_0 = arith.constant 0 : i32
    %c0_i32_1 = arith.constant 0 : i32
    return %c0_i32, %c0_i32_0 : i32, i32
  }
  func.func @transform_4(%arg0: i32) -> (i32, i32) {
    %c0_i32 = arith.constant 0 : i32
    %c0_i32_0 = arith.constant 0 : i32
    %c0_i32_1 = arith.constant 0 : i32
    return %c0_i32, %c0_i32_0 : i32, i32
  }
  func.func @transform_5(%arg0: i32) -> (i32, i32) {
    %c0_i32 = arith.constant 0 : i32
    %c0_i32_0 = arith.constant 0 : i32
    %c0_i32_1 = arith.constant 0 : i32
    return %c0_i32, %c0_i32_0 : i32, i32
  }
  func.func @transform_6(%arg0: i32) -> (i32, i32) {
    %c0_i32 = arith.constant 0 : i32
    %c0_i32_0 = arith.constant 0 : i32
    return %c0_i32, %arg0 : i32, i32
  }
}

</mosaic_0001>

<llo_original>
// kernel: variational_bound.1
$region0: #{variational_bound.1}
  #allocation0 [shape = 'u32[]', space=smem, size = 0x4, offset = 0x4, fixed_abs, tag = 'smem constant byte address 0x4 - core index']
  #allocation1 [shape = 'u32[144,128]{1,0:T(1,128)}', space=vmem, size = 0x12000, scoped, tag = 'internal scratch']
  %s0 = inlined_call_operand.vmem [shape: f32[512,32], index: 0, kind: input, shape index: {}]
  %s1 = inlined_call_operand.vmem [shape: bf16[4,512,16], index: 1, kind: input, shape index: {}]
  %s2 = inlined_call_operand.vmem [shape: f32[32,256], index: 2, kind: input, shape index: {}]
  %s3 = inlined_call_operand.vmem [shape: f32[1,256], index: 3, kind: input, shape index: {}]
  %s4 = inlined_call_operand.vmem [shape: f32[16,32], index: 4, kind: input, shape index: {}]
  %s5 = inlined_call_operand.vmem [shape: f32[1,32], index: 5, kind: input, shape index: {}]
  %s6 = inlined_call_operand.vmem [shape: f32[4,512], index: 6, kind: output, shape index: {}]
  %s7 = sld [smem:[#allocation0]]
  $region34: #{variational_bound.1} parent=0
    _
  %s9 = ssub.s32 1, %s7
  %s10 = scalar_select 0, %s9, %s7
  // Predicated region
  $region2: #{variational_bound.1} parent=0 // pred_check
    _
  $region3: #{variational_bound.1} parent=0 // pred_check_branch
    %12 = sbr.rel (0) target = $region5
  $region4: #{variational_bound.1} parent=0 // pred_region
    _
  $region5: #{variational_bound.1} parent=0 // pred_fallthru
    _
  // Predicated region
  $region6: #{variational_bound.1} parent=0 // pred_check
    _
  $region7: #{variational_bound.1} parent=0 // pred_check_branch
    %14 = sbr.rel (0) target = $region9
  $region8: #{variational_bound.1} parent=0 // pred_region
    _
  $region9: #{variational_bound.1} parent=0 // pred_fallthru
    _
  // Predicated region
  $region10: #{variational_bound.1} parent=0 // pred_check
    _
  $region11: #{variational_bound.1} parent=0 // pred_check_branch
    %16 = sbr.rel (0) target = $region13
  $region12: #{variational_bound.1} parent=0 // pred_region
    _
  $region13: #{variational_bound.1} parent=0 // pred_fallthru
    _
  // Predicated region
  $region14: #{variational_bound.1} parent=0 // pred_check
    _
  $region15: #{variational_bound.1} parent=0 // pred_check_branch
    %18 = sbr.rel (0) target = $region17
  $region16: #{variational_bound.1} parent=0 // pred_region
    _
  $region17: #{variational_bound.1} parent=0 // pred_fallthru
    _
  // Predicated region
  $region18: #{variational_bound.1} parent=0 // pred_check
    _
  $region19: #{variational_bound.1} parent=0 // pred_check_branch
    %20 = sbr.rel (0) target = $region21
  $region20: #{variational_bound.1} parent=0 // pred_region
    _
  $region21: #{variational_bound.1} parent=0 // pred_fallthru
    _
  // Predicated region
  $region22: #{variational_bound.1} parent=0 // pred_check
    _
  $region23: #{variational_bound.1} parent=0 // pred_check_branch
    %22 = sbr.rel (0) target = $region25
  $region24: #{variational_bound.1} parent=0 // pred_region
    _
  $region25: #{variational_bound.1} parent=0 // pred_fallthru
    _
  %v23 = vld [vmem:[%s0] sm:$0xff]
  %v24 = vld [vmem:[%s0 + $0x8] sm:$0xff]
  %v25 = vld [vmem:[%s0 + $0x10] sm:$0xff]
  %v26 = vld [vmem:[%s0 + $0x18] sm:$0xff]
  %v27 = vld [vmem:[%s0 + $0x20] sm:$0xff]
  %v28 = vld [vmem:[%s0 + $0x28] sm:$0xff]
  %v29 = vld [vmem:[%s0 + $0x30] sm:$0xff]
  %v30 = vld [vmem:[%s0 + $0x38] sm:$0xff]
  %v31 = vld [vmem:[%s0 + $0x40] sm:$0xff]
  %v32 = vld [vmem:[%s0 + $0x48] sm:$0xff]
  %v33 = vld [vmem:[%s0 + $0x50] sm:$0xff]
  %v34 = vld [vmem:[%s0 + $0x58] sm:$0xff]
  %v35 = vld [vmem:[%s0 + $0x60] sm:$0xff]
  %v36 = vld [vmem:[%s0 + $0x68] sm:$0xff]
  %v37 = vld [vmem:[%s0 + $0x70] sm:$0xff]
  %v38 = vld [vmem:[%s0 + $0x78] sm:$0xff]
  %v39 = vld [vmem:[%s0 + $0x80] sm:$0xff]
  %v40 = vld [vmem:[%s0 + $0x88] sm:$0xff]
  %v41 = vld [vmem:[%s0 + $0x90] sm:$0xff]
  %v42 = vld [vmem:[%s0 + $0x98] sm:$0xff]
  %v43 = vld [vmem:[%s0 + $0xa0] sm:$0xff]
  %v44 = vld [vmem:[%s0 + $0xa8] sm:$0xff]
  %v45 = vld [vmem:[%s0 + $0xb0] sm:$0xff]
  %v46 = vld [vmem:[%s0 + $0xb8] sm:$0xff]
  %v47 = vld [vmem:[%s0 + $0xc0] sm:$0xff]
  %v48 = vld [vmem:[%s0 + $0xc8] sm:$0xff]
  %v49 = vld [vmem:[%s0 + $0xd0] sm:$0xff]
  %v50 = vld [vmem:[%s0 + $0xd8] sm:$0xff]
  %v51 = vld [vmem:[%s0 + $0xe0] sm:$0xff]
  %v52 = vld [vmem:[%s0 + $0xe8] sm:$0xff]
  %v53 = vld [vmem:[%s0 + $0xf0] sm:$0xff]
  %v54 = vld [vmem:[%s0 + $0xf8] sm:$0xff]
  %v55 = vld [vmem:[%s0 + $0x100] sm:$0xff]
  %v56 = vld [vmem:[%s0 + $0x108] sm:$0xff]
  %v57 = vld [vmem:[%s0 + $0x110] sm:$0xff]
  %v58 = vld [vmem:[%s0 + $0x118] sm:$0xff]
  %v59 = vld [vmem:[%s0 + $0x120] sm:$0xff]
  %v60 = vld [vmem:[%s0 + $0x128] sm:$0xff]
  %v61 = vld [vmem:[%s0 + $0x130] sm:$0xff]
  %v62 = vld [vmem:[%s0 + $0x138] sm:$0xff]
  %v63 = vld [vmem:[%s0 + $0x140] sm:$0xff]
  %v64 = vld [vmem:[%s0 + $0x148] sm:$0xff]
  %v65 = vld [vmem:[%s0 + $0x150] sm:$0xff]
  %v66 = vld [vmem:[%s0 + $0x158] sm:$0xff]
  %v67 = vld [vmem:[%s0 + $0x160] sm:$0xff]
  %v68 = vld [vmem:[%s0 + $0x168] sm:$0xff]
  %v69 = vld [vmem:[%s0 + $0x170] sm:$0xff]
  %v70 = vld [vmem:[%s0 + $0x178] sm:$0xff]
  %v71 = vld [vmem:[%s0 + $0x180] sm:$0xff]
  %v72 = vld [vmem:[%s0 + $0x188] sm:$0xff]
  %v73 = vld [vmem:[%s0 + $0x190] sm:$0xff]
  %v74 = vld [vmem:[%s0 + $0x198] sm:$0xff]
  %v75 = vld [vmem:[%s0 + $0x1a0] sm:$0xff]
  %v76 = vld [vmem:[%s0 + $0x1a8] sm:$0xff]
  %v77 = vld [vmem:[%s0 + $0x1b0] sm:$0xff]
  %v78 = vld [vmem:[%s0 + $0x1b8] sm:$0xff]
  %v79 = vld [vmem:[%s0 + $0x1c0] sm:$0xff]
  %v80 = vld [vmem:[%s0 + $0x1c8] sm:$0xff]
  %v81 = vld [vmem:[%s0 + $0x1d0] sm:$0xff]
  %v82 = vld [vmem:[%s0 + $0x1d8] sm:$0xff]
  %v83 = vld [vmem:[%s0 + $0x1e0] sm:$0xff]
  %v84 = vld [vmem:[%s0 + $0x1e8] sm:$0xff]
  %v85 = vld [vmem:[%s0 + $0x1f0] sm:$0xff]
  %v86 = vld [vmem:[%s0 + $0x1f8] sm:$0xff]
  %v87 = vld [vmem:[%s1] sm:$0xf]
  %v88 = vld [vmem:[%s1 + $0x4] sm:$0xf]
  %v89 = vld [vmem:[%s1 + $0x8] sm:$0xf]
  %v90 = vld [vmem:[%s1 + $0xc] sm:$0xf]
  %v91 = vld [vmem:[%s1 + $0x10] sm:$0xf]
  %v92 = vld [vmem:[%s1 + $0x14] sm:$0xf]
  %v93 = vld [vmem:[%s1 + $0x18] sm:$0xf]
  %v94 = vld [vmem:[%s1 + $0x1c] sm:$0xf]
  %v95 = vld [vmem:[%s1 + $0x20] sm:$0xf]
  %v96 = vld [vmem:[%s1 + $0x24] sm:$0xf]
  %v97 = vld [vmem:[%s1 + $0x28] sm:$0xf]
  %v98 = vld [vmem:[%s1 + $0x2c] sm:$0xf]
  %v99 = vld [vmem:[%s1 + $0x30] sm:$0xf]
  %v100 = vld [vmem:[%s1 + $0x34] sm:$0xf]
  %v101 = vld [vmem:[%s1 + $0x38] sm:$0xf]
  %v102 = vld [vmem:[%s1 + $0x3c] sm:$0xf]
  %v103 = vld [vmem:[%s1 + $0x40] sm:$0xf]
  %v104 = vld [vmem:[%s1 + $0x44] sm:$0xf]
  %v105 = vld [vmem:[%s1 + $0x48] sm:$0xf]
  %v106 = vld [vmem:[%s1 + $0x4c] sm:$0xf]
  %v107 = vld [vmem:[%s1 + $0x50] sm:$0xf]
  %v108 = vld [vmem:[%s1 + $0x54] sm:$0xf]
  %v109 = vld [vmem:[%s1 + $0x58] sm:$0xf]
  %v110 = vld [vmem:[%s1 + $0x5c] sm:$0xf]
  %v111 = vld [vmem:[%s1 + $0x60] sm:$0xf]
  %v112 = vld [vmem:[%s1 + $0x64] sm:$0xf]
  %v113 = vld [vmem:[%s1 + $0x68] sm:$0xf]
  %v114 = vld [vmem:[%s1 + $0x6c] sm:$0xf]
  %v115 = vld [vmem:[%s1 + $0x70] sm:$0xf]
  %v116 = vld [vmem:[%s1 + $0x74] sm:$0xf]
  %v117 = vld [vmem:[%s1 + $0x78] sm:$0xf]
  %v118 = vld [vmem:[%s1 + $0x7c] sm:$0xf]
  %v119 = vld [vmem:[%s1 + $0x80] sm:$0xf]
  %v120 = vld [vmem:[%s1 + $0x84] sm:$0xf]
  %v121 = vld [vmem:[%s1 + $0x88] sm:$0xf]
  %v122 = vld [vmem:[%s1 + $0x8c] sm:$0xf]
  %v123 = vld [vmem:[%s1 + $0x90] sm:$0xf]
  %v124 = vld [vmem:[%s1 + $0x94] sm:$0xf]
  %v125 = vld [vmem:[%s1 + $0x98] sm:$0xf]
  %v126 = vld [vmem:[%s1 + $0x9c] sm:$0xf]
  %v127 = vld [vmem:[%s1 + $0xa0] sm:$0xf]
  %v128 = vld [vmem:[%s1 + $0xa4] sm:$0xf]
  %v129 = vld [vmem:[%s1 + $0xa8] sm:$0xf]
  %v130 = vld [vmem:[%s1 + $0xac] sm:$0xf]
  %v131 = vld [vmem:[%s1 + $0xb0] sm:$0xf]
  %v132 = vld [vmem:[%s1 + $0xb4] sm:$0xf]
  %v133 = vld [vmem:[%s1 + $0xb8] sm:$0xf]
  %v134 = vld [vmem:[%s1 + $0xbc] sm:$0xf]
  %v135 = vld [vmem:[%s1 + $0xc0] sm:$0xf]
  %v136 = vld [vmem:[%s1 + $0xc4] sm:$0xf]
  %v137 = vld [vmem:[%s1 + $0xc8] sm:$0xf]
  %v138 = vld [vmem:[%s1 + $0xcc] sm:$0xf]
  %v139 = vld [vmem:[%s1 + $0xd0] sm:$0xf]
  %v140 = vld [vmem:[%s1 + $0xd4] sm:$0xf]
  %v141 = vld [vmem:[%s1 + $0xd8] sm:$0xf]
  %v142 = vld [vmem:[%s1 + $0xdc] sm:$0xf]
  %v143 = vld [vmem:[%s1 + $0xe0] sm:$0xf]
  %v144 = vld [vmem:[%s1 + $0xe4] sm:$0xf]
  %v145 = vld [vmem:[%s1 + $0xe8] sm:$0xf]
  %v146 = vld [vmem:[%s1 + $0xec] sm:$0xf]
  %v147 = vld [vmem:[%s1 + $0xf0] sm:$0xf]
  %v148 = vld [vmem:[%s1 + $0xf4] sm:$0xf]
  %v149 = vld [vmem:[%s1 + $0xf8] sm:$0xf]
  %v150 = vld [vmem:[%s1 + $0xfc] sm:$0xf]
  %v151 = vld [vmem:[%s1 + $0x100] sm:$0xf]
  %v152 = vld [vmem:[%s1 + $0x104] sm:$0xf]
  %v153 = vld [vmem:[%s1 + $0x108] sm:$0xf]
  %v154 = vld [vmem:[%s1 + $0x10c] sm:$0xf]
  %v155 = vld [vmem:[%s1 + $0x110] sm:$0xf]
  %v156 = vld [vmem:[%s1 + $0x114] sm:$0xf]
  %v157 = vld [vmem:[%s1 + $0x118] sm:$0xf]
  %v158 = vld [vmem:[%s1 + $0x11c] sm:$0xf]
  %v159 = vld [vmem:[%s1 + $0x120] sm:$0xf]
  %v160 = vld [vmem:[%s1 + $0x124] sm:$0xf]
  %v161 = vld [vmem:[%s1 + $0x128] sm:$0xf]
  %v162 = vld [vmem:[%s1 + $0x12c] sm:$0xf]
  %v163 = vld [vmem:[%s1 + $0x130] sm:$0xf]
  %v164 = vld [vmem:[%s1 + $0x134] sm:$0xf]
  %v165 = vld [vmem:[%s1 + $0x138] sm:$0xf]
  %v166 = vld [vmem:[%s1 + $0x13c] sm:$0xf]
  %v167 = vld [vmem:[%s1 + $0x140] sm:$0xf]
  %v168 = vld [vmem:[%s1 + $0x144] sm:$0xf]
  %v169 = vld [vmem:[%s1 + $0x148] sm:$0xf]
  %v170 = vld [vmem:[%s1 + $0x14c] sm:$0xf]
  %v171 = vld [vmem:[%s1 + $0x150] sm:$0xf]
  %v172 = vld [vmem:[%s1 + $0x154] sm:$0xf]
  %v173 = vld [vmem:[%s1 + $0x158] sm:$0xf]
  %v174 = vld [vmem:[%s1 + $0x15c] sm:$0xf]
  %v175 = vld [vmem:[%s1 + $0x160] sm:$0xf]
  %v176 = vld [vmem:[%s1 + $0x164] sm:$0xf]
  %v177 = vld [vmem:[%s1 + $0x168] sm:$0xf]
  %v178 = vld [vmem:[%s1 + $0x16c] sm:$0xf]
  %v179 = vld [vmem:[%s1 + $0x170] sm:$0xf]
  %v180 = vld [vmem:[%s1 + $0x174] sm:$0xf]
  %v181 = vld [vmem:[%s1 + $0x178] sm:$0xf]
  %v182 = vld [vmem:[%s1 + $0x17c] sm:$0xf]
  %v183 = vld [vmem:[%s1 + $0x180] sm:$0xf]
  %v184 = vld [vmem:[%s1 + $0x184] sm:$0xf]
  %v185 = vld [vmem:[%s1 + $0x188] sm:$0xf]
  %v186 = vld [vmem:[%s1 + $0x18c] sm:$0xf]
  %v187 = vld [vmem:[%s1 + $0x190] sm:$0xf]
  %v188 = vld [vmem:[%s1 + $0x194] sm:$0xf]
  %v189 = vld [vmem:[%s1 + $0x198] sm:$0xf]
  %v190 = vld [vmem:[%s1 + $0x19c] sm:$0xf]
  %v191 = vld [vmem:[%s1 + $0x1a0] sm:$0xf]
  %v192 = vld [vmem:[%s1 + $0x1a4] sm:$0xf]
  %v193 = vld [vmem:[%s1 + $0x1a8] sm:$0xf]
  %v194 = vld [vmem:[%s1 + $0x1ac] sm:$0xf]
  %v195 = vld [vmem:[%s1 + $0x1b0] sm:$0xf]
  %v196 = vld [vmem:[%s1 + $0x1b4] sm:$0xf]
  %v197 = vld [vmem:[%s1 + $0x1b8] sm:$0xf]
  %v198 = vld [vmem:[%s1 + $0x1bc] sm:$0xf]
  %v199 = vld [vmem:[%s1 + $0x1c0] sm:$0xf]
  %v200 = vld [vmem:[%s1 + $0x1c4] sm:$0xf]
  %v201 = vld [vmem:[%s1 + $0x1c8] sm:$0xf]
  %v202 = vld [vmem:[%s1 + $0x1cc] sm:$0xf]
  %v203 = vld [vmem:[%s1 + $0x1d0] sm:$0xf]
  %v204 = vld [vmem:[%s1 + $0x1d4] sm:$0xf]
  %v205 = vld [vmem:[%s1 + $0x1d8] sm:$0xf]
  %v206 = vld [vmem:[%s1 + $0x1dc] sm:$0xf]
  %v207 = vld [vmem:[%s1 + $0x1e0] sm:$0xf]
  %v208 = vld [vmem:[%s1 + $0x1e4] sm:$0xf]
  %v209 = vld [vmem:[%s1 + $0x1e8] sm:$0xf]
  %v210 = vld [vmem:[%s1 + $0x1ec] sm:$0xf]
  %v211 = vld [vmem:[%s1 + $0x1f0] sm:$0xf]
  %v212 = vld [vmem:[%s1 + $0x1f4] sm:$0xf]
  %v213 = vld [vmem:[%s1 + $0x1f8] sm:$0xf]
  %v214 = vld [vmem:[%s1 + $0x1fc] sm:$0xf]
  %v215 = vld [vmem:[%s1 + $0x200] sm:$0xf]
  %v216 = vld [vmem:[%s1 + $0x204] sm:$0xf]
  %v217 = vld [vmem:[%s1 + $0x208] sm:$0xf]
  %v218 = vld [vmem:[%s1 + $0x20c] sm:$0xf]
  %v219 = vld [vmem:[%s1 + $0x210] sm:$0xf]
  %v220 = vld [vmem:[%s1 + $0x214] sm:$0xf]
  %v221 = vld [vmem:[%s1 + $0x218] sm:$0xf]
  %v222 = vld [vmem:[%s1 + $0x21c] sm:$0xf]
  %v223 = vld [vmem:[%s1 + $0x220] sm:$0xf]
  %v224 = vld [vmem:[%s1 + $0x224] sm:$0xf]
  %v225 = vld [vmem:[%s1 + $0x228] sm:$0xf]
  %v226 = vld [vmem:[%s1 + $0x22c] sm:$0xf]
  %v227 = vld [vmem:[%s1 + $0x230] sm:$0xf]
  %v228 = vld [vmem:[%s1 + $0x234] sm:$0xf]
  %v229 = vld [vmem:[%s1 + $0x238] sm:$0xf]
  %v230 = vld [vmem:[%s1 + $0x23c] sm:$0xf]
  %v231 = vld [vmem:[%s1 + $0x240] sm:$0xf]
  %v232 = vld [vmem:[%s1 + $0x244] sm:$0xf]
  %v233 = vld [vmem:[%s1 + $0x248] sm:$0xf]
  %v234 = vld [vmem:[%s1 + $0x24c] sm:$0xf]
  %v235 = vld [vmem:[%s1 + $0x250] sm:$0xf]
  %v236 = vld [vmem:[%s1 + $0x254] sm:$0xf]
  %v237 = vld [vmem:[%s1 + $0x258] sm:$0xf]
  %v238 = vld [vmem:[%s1 + $0x25c] sm:$0xf]
  %v239 = vld [vmem:[%s1 + $0x260] sm:$0xf]
  %v240 = vld [vmem:[%s1 + $0x264] sm:$0xf]
  %v241 = vld [vmem:[%s1 + $0x268] sm:$0xf]
  %v242 = vld [vmem:[%s1 + $0x26c] sm:$0xf]
  %v243 = vld [vmem:[%s1 + $0x270] sm:$0xf]
  %v244 = vld [vmem:[%s1 + $0x274] sm:$0xf]
  %v245 = vld [vmem:[%s1 + $0x278] sm:$0xf]
  %v246 = vld [vmem:[%s1 + $0x27c] sm:$0xf]
  %v247 = vld [vmem:[%s1 + $0x280] sm:$0xf]
  %v248 = vld [vmem:[%s1 + $0x284] sm:$0xf]
  %v249 = vld [vmem:[%s1 + $0x288] sm:$0xf]
  %v250 = vld [vmem:[%s1 + $0x28c] sm:$0xf]
  %v251 = vld [vmem:[%s1 + $0x290] sm:$0xf]
  %v252 = vld [vmem:[%s1 + $0x294] sm:$0xf]
  %v253 = vld [vmem:[%s1 + $0x298] sm:$0xf]
  %v254 = vld [vmem:[%s1 + $0x29c] sm:$0xf]
  %v255 = vld [vmem:[%s1 + $0x2a0] sm:$0xf]
  %v256 = vld [vmem:[%s1 + $0x2a4] sm:$0xf]
  %v257 = vld [vmem:[%s1 + $0x2a8] sm:$0xf]
  %v258 = vld [vmem:[%s1 + $0x2ac] sm:$0xf]
  %v259 = vld [vmem:[%s1 + $0x2b0] sm:$0xf]
  %v260 = vld [vmem:[%s1 + $0x2b4] sm:$0xf]
  %v261 = vld [vmem:[%s1 + $0x2b8] sm:$0xf]
  %v262 = vld [vmem:[%s1 + $0x2bc] sm:$0xf]
  %v263 = vld [vmem:[%s1 + $0x2c0] sm:$0xf]
  %v264 = vld [vmem:[%s1 + $0x2c4] sm:$0xf]
  %v265 = vld [vmem:[%s1 + $0x2c8] sm:$0xf]
  %v266 = vld [vmem:[%s1 + $0x2cc] sm:$0xf]
  %v267 = vld [vmem:[%s1 + $0x2d0] sm:$0xf]
  %v268 = vld [vmem:[%s1 + $0x2d4] sm:$0xf]
  %v269 = vld [vmem:[%s1 + $0x2d8] sm:$0xf]
  %v270 = vld [vmem:[%s1 + $0x2dc] sm:$0xf]
  %v271 = vld [vmem:[%s1 + $0x2e0] sm:$0xf]
  %v272 = vld [vmem:[%s1 + $0x2e4] sm:$0xf]
  %v273 = vld [vmem:[%s1 + $0x2e8] sm:$0xf]
  %v274 = vld [vmem:[%s1 + $0x2ec] sm:$0xf]
  %v275 = vld [vmem:[%s1 + $0x2f0] sm:$0xf]
  %v276 = vld [vmem:[%s1 + $0x2f4] sm:$0xf]
  %v277 = vld [vmem:[%s1 + $0x2f8] sm:$0xf]
  %v278 = vld [vmem:[%s1 + $0x2fc] sm:$0xf]
  %v279 = vld [vmem:[%s1 + $0x300] sm:$0xf]
  %v280 = vld [vmem:[%s1 + $0x304] sm:$0xf]
  %v281 = vld [vmem:[%s1 + $0x308] sm:$0xf]
  %v282 = vld [vmem:[%s1 + $0x30c] sm:$0xf]
  %v283 = vld [vmem:[%s1 + $0x310] sm:$0xf]
  %v284 = vld [vmem:[%s1 + $0x314] sm:$0xf]
  %v285 = vld [vmem:[%s1 + $0x318] sm:$0xf]
  %v286 = vld [vmem:[%s1 + $0x31c] sm:$0xf]
  %v287 = vld [vmem:[%s1 + $0x320] sm:$0xf]
  %v288 = vld [vmem:[%s1 + $0x324] sm:$0xf]
  %v289 = vld [vmem:[%s1 + $0x328] sm:$0xf]
  %v290 = vld [vmem:[%s1 + $0x32c] sm:$0xf]
  %v291 = vld [vmem:[%s1 + $0x330] sm:$0xf]
  %v292 = vld [vmem:[%s1 + $0x334] sm:$0xf]
  %v293 = vld [vmem:[%s1 + $0x338] sm:$0xf]
  %v294 = vld [vmem:[%s1 + $0x33c] sm:$0xf]
  %v295 = vld [vmem:[%s1 + $0x340] sm:$0xf]
  %v296 = vld [vmem:[%s1 + $0x344] sm:$0xf]
  %v297 = vld [vmem:[%s1 + $0x348] sm:$0xf]
  %v298 = vld [vmem:[%s1 + $0x34c] sm:$0xf]
  %v299 = vld [vmem:[%s1 + $0x350] sm:$0xf]
  %v300 = vld [vmem:[%s1 + $0x354] sm:$0xf]
  %v301 = vld [vmem:[%s1 + $0x358] sm:$0xf]
  %v302 = vld [vmem:[%s1 + $0x35c] sm:$0xf]
  %v303 = vld [vmem:[%s1 + $0x360] sm:$0xf]
  %v304 = vld [vmem:[%s1 + $0x364] sm:$0xf]
  %v305 = vld [vmem:[%s1 + $0x368] sm:$0xf]
  %v306 = vld [vmem:[%s1 + $0x36c] sm:$0xf]
  %v307 = vld [vmem:[%s1 + $0x370] sm:$0xf]
  %v308 = vld [vmem:[%s1 + $0x374] sm:$0xf]
  %v309 = vld [vmem:[%s1 + $0x378] sm:$0xf]
  %v310 = vld [vmem:[%s1 + $0x37c] sm:$0xf]
  %v311 = vld [vmem:[%s1 + $0x380] sm:$0xf]
  %v312 = vld [vmem:[%s1 + $0x384] sm:$0xf]
  %v313 = vld [vmem:[%s1 + $0x388] sm:$0xf]
  %v314 = vld [vmem:[%s1 + $0x38c] sm:$0xf]
  %v315 = vld [vmem:[%s1 + $0x390] sm:$0xf]
  %v316 = vld [vmem:[%s1 + $0x394] sm:$0xf]
  %v317 = vld [vmem:[%s1 + $0x398] sm:$0xf]
  %v318 = vld [vmem:[%s1 + $0x39c] sm:$0xf]
  %v319 = vld [vmem:[%s1 + $0x3a0] sm:$0xf]
  %v320 = vld [vmem:[%s1 + $0x3a4] sm:$0xf]
  %v321 = vld [vmem:[%s1 + $0x3a8] sm:$0xf]
  %v322 = vld [vmem:[%s1 + $0x3ac] sm:$0xf]
  %v323 = vld [vmem:[%s1 + $0x3b0] sm:$0xf]
  %v324 = vld [vmem:[%s1 + $0x3b4] sm:$0xf]
  %v325 = vld [vmem:[%s1 + $0x3b8] sm:$0xf]
  %v326 = vld [vmem:[%s1 + $0x3bc] sm:$0xf]
  %v327 = vld [vmem:[%s1 + $0x3c0] sm:$0xf]
  %v328 = vld [vmem:[%s1 + $0x3c4] sm:$0xf]
  %v329 = vld [vmem:[%s1 + $0x3c8] sm:$0xf]
  %v330 = vld [vmem:[%s1 + $0x3cc] sm:$0xf]
  %v331 = vld [vmem:[%s1 + $0x3d0] sm:$0xf]
  %v332 = vld [vmem:[%s1 + $0x3d4] sm:$0xf]
  %v333 = vld [vmem:[%s1 + $0x3d8] sm:$0xf]
  %v334 = vld [vmem:[%s1 + $0x3dc] sm:$0xf]
  %v335 = vld [vmem:[%s1 + $0x3e0] sm:$0xf]
  %v336 = vld [vmem:[%s1 + $0x3e4] sm:$0xf]
  %v337 = vld [vmem:[%s1 + $0x3e8] sm:$0xf]
  %v338 = vld [vmem:[%s1 + $0x3ec] sm:$0xf]
  %v339 = vld [vmem:[%s1 + $0x3f0] sm:$0xf]
  %v340 = vld [vmem:[%s1 + $0x3f4] sm:$0xf]
  %v341 = vld [vmem:[%s1 + $0x3f8] sm:$0xf]
  %v342 = vld [vmem:[%s1 + $0x3fc] sm:$0xf]
  %v343 = vunpack.c.l.bf16 %v87
  %v344 = vunpack.c.l.bf16 %v88
  %v345 = vunpack.c.l.bf16 %v89
  %v346 = vunpack.c.l.bf16 %v90
  %v347 = vunpack.c.l.bf16 %v91
  %v348 = vunpack.c.l.bf16 %v92
  %v349 = vunpack.c.l.bf16 %v93
  %v350 = vunpack.c.l.bf16 %v94
  %v351 = vunpack.c.l.bf16 %v95
  %v352 = vunpack.c.l.bf16 %v96
  %v353 = vunpack.c.l.bf16 %v97
  %v354 = vunpack.c.l.bf16 %v98
  %v355 = vunpack.c.l.bf16 %v99
  %v356 = vunpack.c.l.bf16 %v100
  %v357 = vunpack.c.l.bf16 %v101
  %v358 = vunpack.c.l.bf16 %v102
  %v359 = vunpack.c.l.bf16 %v103
  %v360 = vunpack.c.l.bf16 %v104
  %v361 = vunpack.c.l.bf16 %v105
  %v362 = vunpack.c.l.bf16 %v106
  %v363 = vunpack.c.l.bf16 %v107
  %v364 = vunpack.c.l.bf16 %v108
  %v365 = vunpack.c.l.bf16 %v109
  %v366 = vunpack.c.l.bf16 %v110
  %v367 = vunpack.c.l.bf16 %v111
  %v368 = vunpack.c.l.bf16 %v112
  %v369 = vunpack.c.l.bf16 %v113
  %v370 = vunpack.c.l.bf16 %v114
  %v371 = vunpack.c.l.bf16 %v115
  %v372 = vunpack.c.l.bf16 %v116
  %v373 = vunpack.c.l.bf16 %v117
  %v374 = vunpack.c.l.bf16 %v118
  %v375 = vunpack.c.l.bf16 %v119
  %v376 = vunpack.c.l.bf16 %v120
  %v377 = vunpack.c.l.bf16 %v121
  %v378 = vunpack.c.l.bf16 %v122
  %v379 = vunpack.c.l.bf16 %v123
  %v380 = vunpack.c.l.bf16 %v124
  %v381 = vunpack.c.l.bf16 %v125
  %v382 = vunpack.c.l.bf16 %v126
  %v383 = vunpack.c.l.bf16 %v127
  %v384 = vunpack.c.l.bf16 %v128
  %v385 = vunpack.c.l.bf16 %v129
  %v386 = vunpack.c.l.bf16 %v130
  %v387 = vunpack.c.l.bf16 %v131
  %v388 = vunpack.c.l.bf16 %v132
  %v389 = vunpack.c.l.bf16 %v133
  %v390 = vunpack.c.l.bf16 %v134
  %v391 = vunpack.c.l.bf16 %v135
  %v392 = vunpack.c.l.bf16 %v136
  %v393 = vunpack.c.l.bf16 %v137
  %v394 = vunpack.c.l.bf16 %v138
  %v395 = vunpack.c.l.bf16 %v139
  %v396 = vunpack.c.l.bf16 %v140
  %v397 = vunpack.c.l.bf16 %v141
  %v398 = vunpack.c.l.bf16 %v142
  %v399 = vunpack.c.l.bf16 %v143
  %v400 = vunpack.c.l.bf16 %v144
  %v401 = vunpack.c.l.bf16 %v145
  %v402 = vunpack.c.l.bf16 %v146
  %v403 = vunpack.c.l.bf16 %v147
  %v404 = vunpack.c.l.bf16 %v148
  %v405 = vunpack.c.l.bf16 %v149
  %v406 = vunpack.c.l.bf16 %v150
  %v407 = vunpack.c.l.bf16 %v151
  %v408 = vunpack.c.l.bf16 %v152
  %v409 = vunpack.c.l.bf16 %v153
  %v410 = vunpack.c.l.bf16 %v154
  %v411 = vunpack.c.l.bf16 %v155
  %v412 = vunpack.c.l.bf16 %v156
  %v413 = vunpack.c.l.bf16 %v157
  %v414 = vunpack.c.l.bf16 %v158
  %v415 = vunpack.c.l.bf16 %v159
  %v416 = vunpack.c.l.bf16 %v160
  %v417 = vunpack.c.l.bf16 %v161
  %v418 = vunpack.c.l.bf16 %v162
  %v419 = vunpack.c.l.bf16 %v163
  %v420 = vunpack.c.l.bf16 %v164
  %v421 = vunpack.c.l.bf16 %v165
  %v422 = vunpack.c.l.bf16 %v166
  %v423 = vunpack.c.l.bf16 %v167
  %v424 = vunpack.c.l.bf16 %v168
  %v425 = vunpack.c.l.bf16 %v169
  %v426 = vunpack.c.l.bf16 %v170
  %v427 = vunpack.c.l.bf16 %v171
  %v428 = vunpack.c.l.bf16 %v172
  %v429 = vunpack.c.l.bf16 %v173
  %v430 = vunpack.c.l.bf16 %v174
  %v431 = vunpack.c.l.bf16 %v175
  %v432 = vunpack.c.l.bf16 %v176
  %v433 = vunpack.c.l.bf16 %v177
  %v434 = vunpack.c.l.bf16 %v178
  %v435 = vunpack.c.l.bf16 %v179
  %v436 = vunpack.c.l.bf16 %v180
  %v437 = vunpack.c.l.bf16 %v181
  %v438 = vunpack.c.l.bf16 %v182
  %v439 = vunpack.c.l.bf16 %v183
  %v440 = vunpack.c.l.bf16 %v184
  %v441 = vunpack.c.l.bf16 %v185
  %v442 = vunpack.c.l.bf16 %v186
  %v443 = vunpack.c.l.bf16 %v187
  %v444 = vunpack.c.l.bf16 %v188
  %v445 = vunpack.c.l.bf16 %v189
  %v446 = vunpack.c.l.bf16 %v190
  %v447 = vunpack.c.l.bf16 %v191
  %v448 = vunpack.c.l.bf16 %v192
  %v449 = vunpack.c.l.bf16 %v193
  %v450 = vunpack.c.l.bf16 %v194
  %v451 = vunpack.c.l.bf16 %v195
  %v452 = vunpack.c.l.bf16 %v196
  %v453 = vunpack.c.l.bf16 %v197
  %v454 = vunpack.c.l.bf16 %v198
  %v455 = vunpack.c.l.bf16 %v199
  %v456 = vunpack.c.l.bf16 %v200
  %v457 = vunpack.c.l.bf16 %v201
  %v458 = vunpack.c.l.bf16 %v202
  %v459 = vunpack.c.l.bf16 %v203
  %v460 = vunpack.c.l.bf16 %v204
  %v461 = vunpack.c.l.bf16 %v205
  %v462 = vunpack.c.l.bf16 %v206
  %v463 = vunpack.c.l.bf16 %v207
  %v464 = vunpack.c.l.bf16 %v208
  %v465 = vunpack.c.l.bf16 %v209
  %v466 = vunpack.c.l.bf16 %v210
  %v467 = vunpack.c.l.bf16 %v211
  %v468 = vunpack.c.l.bf16 %v212
  %v469 = vunpack.c.l.bf16 %v213
  %v470 = vunpack.c.l.bf16 %v214
  %v471 = vunpack.c.l.bf16 %v215
  %v472 = vunpack.c.l.bf16 %v216
  %v473 = vunpack.c.l.bf16 %v217
  %v474 = vunpack.c.l.bf16 %v218
  %v475 = vunpack.c.l.bf16 %v219
  %v476 = vunpack.c.l.bf16 %v220
  %v477 = vunpack.c.l.bf16 %v221
  %v478 = vunpack.c.l.bf16 %v222
  %v479 = vunpack.c.l.bf16 %v223
  %v480 = vunpack.c.l.bf16 %v224
  %v481 = vunpack.c.l.bf16 %v225
  %v482 = vunpack.c.l.bf16 %v226
  %v483 = vunpack.c.l.bf16 %v227
  %v484 = vunpack.c.l.bf16 %v228
  %v485 = vunpack.c.l.bf16 %v229
  %v486 = vunpack.c.l.bf16 %v230
  %v487 = vunpack.c.l.bf16 %v231
  %v488 = vunpack.c.l.bf16 %v232
  %v489 = vunpack.c.l.bf16 %v233
  %v490 = vunpack.c.l.bf16 %v234
  %v491 = vunpack.c.l.bf16 %v235
  %v492 = vunpack.c.l.bf16 %v236
  %v493 = vunpack.c.l.bf16 %v237
  %v494 = vunpack.c.l.bf16 %v238
  %v495 = vunpack.c.l.bf16 %v239
  %v496 = vunpack.c.l.bf16 %v240
  %v497 = vunpack.c.l.bf16 %v241
  %v498 = vunpack.c.l.bf16 %v242
  %v499 = vunpack.c.l.bf16 %v243
  %v500 = vunpack.c.l.bf16 %v244
  %v501 = vunpack.c.l.bf16 %v245
  %v502 = vunpack.c.l.bf16 %v246
  %v503 = vunpack.c.l.bf16 %v247
  %v504 = vunpack.c.l.bf16 %v248
  %v505 = vunpack.c.l.bf16 %v249
  %v506 = vunpack.c.l.bf16 %v250
  %v507 = vunpack.c.l.bf16 %v251
  %v508 = vunpack.c.l.bf16 %v252
  %v509 = vunpack.c.l.bf16 %v253
  %v510 = vunpack.c.l.bf16 %v254
  %v511 = vunpack.c.l.bf16 %v255
  %v512 = vunpack.c.l.bf16 %v256
  %v513 = vunpack.c.l.bf16 %v257
  %v514 = vunpack.c.l.bf16 %v258
  %v515 = vunpack.c.l.bf16 %v259
  %v516 = vunpack.c.l.bf16 %v260
  %v517 = vunpack.c.l.bf16 %v261
  %v518 = vunpack.c.l.bf16 %v262
  %v519 = vunpack.c.l.bf16 %v263
  %v520 = vunpack.c.l.bf16 %v264
  %v521 = vunpack.c.l.bf16 %v265
  %v522 = vunpack.c.l.bf16 %v266
  %v523 = vunpack.c.l.bf16 %v267
  %v524 = vunpack.c.l.bf16 %v268
  %v525 = vunpack.c.l.bf16 %v269
  %v526 = vunpack.c.l.bf16 %v270
  %v527 = vunpack.c.l.bf16 %v271
  %v528 = vunpack.c.l.bf16 %v272
  %v529 = vunpack.c.l.bf16 %v273
  %v530 = vunpack.c.l.bf16 %v274
  %v531 = vunpack.c.l.bf16 %v275
  %v532 = vunpack.c.l.bf16 %v276
  %v533 = vunpack.c.l.bf16 %v277
  %v534 = vunpack.c.l.bf16 %v278
  %v535 = vunpack.c.l.bf16 %v279
  %v536 = vunpack.c.l.bf16 %v280
  %v537 = vunpack.c.l.bf16 %v281
  %v538 = vunpack.c.l.bf16 %v282
  %v539 = vunpack.c.l.bf16 %v283
  %v540 = vunpack.c.l.bf16 %v284
  %v541 = vunpack.c.l.bf16 %v285
  %v542 = vunpack.c.l.bf16 %v286
  %v543 = vunpack.c.l.bf16 %v287
  %v544 = vunpack.c.l.bf16 %v288
  %v545 = vunpack.c.l.bf16 %v289
  %v546 = vunpack.c.l.bf16 %v290
  %v547 = vunpack.c.l.bf16 %v291
  %v548 = vunpack.c.l.bf16 %v292
  %v549 = vunpack.c.l.bf16 %v293
  %v550 = vunpack.c.l.bf16 %v294
  %v551 = vunpack.c.l.bf16 %v295
  %v552 = vunpack.c.l.bf16 %v296
  %v553 = vunpack.c.l.bf16 %v297
  %v554 = vunpack.c.l.bf16 %v298
  %v555 = vunpack.c.l.bf16 %v299
  %v556 = vunpack.c.l.bf16 %v300
  %v557 = vunpack.c.l.bf16 %v301
  %v558 = vunpack.c.l.bf16 %v302
  %v559 = vunpack.c.l.bf16 %v303
  %v560 = vunpack.c.l.bf16 %v304
  %v561 = vunpack.c.l.bf16 %v305
  %v562 = vunpack.c.l.bf16 %v306
  %v563 = vunpack.c.l.bf16 %v307
  %v564 = vunpack.c.l.bf16 %v308
  %v565 = vunpack.c.l.bf16 %v309
  %v566 = vunpack.c.l.bf16 %v310
  %v567 = vunpack.c.l.bf16 %v311
  %v568 = vunpack.c.l.bf16 %v312
  %v569 = vunpack.c.l.bf16 %v313
  %v570 = vunpack.c.l.bf16 %v314
  %v571 = vunpack.c.l.bf16 %v315
  %v572 = vunpack.c.l.bf16 %v316
  %v573 = vunpack.c.l.bf16 %v317
  %v574 = vunpack.c.l.bf16 %v318
  %v575 = vunpack.c.l.bf16 %v319
  %v576 = vunpack.c.l.bf16 %v320
  %v577 = vunpack.c.l.bf16 %v321
  %v578 = vunpack.c.l.bf16 %v322
  %v579 = vunpack.c.l.bf16 %v323
  %v580 = vunpack.c.l.bf16 %v324
  %v581 = vunpack.c.l.bf16 %v325
  %v582 = vunpack.c.l.bf16 %v326
  %v583 = vunpack.c.l.bf16 %v327
  %v584 = vunpack.c.l.bf16 %v328
  %v585 = vunpack.c.l.bf16 %v329
  %v586 = vunpack.c.l.bf16 %v330
  %v587 = vunpack.c.l.bf16 %v331
  %v588 = vunpack.c.l.bf16 %v332
  %v589 = vunpack.c.l.bf16 %v333
  %v590 = vunpack.c.l.bf16 %v334
  %v591 = vunpack.c.l.bf16 %v335
  %v592 = vunpack.c.l.bf16 %v336
  %v593 = vunpack.c.l.bf16 %v337
  %v594 = vunpack.c.l.bf16 %v338
  %v595 = vunpack.c.l.bf16 %v339
  %v596 = vunpack.c.l.bf16 %v340
  %v597 = vunpack.c.l.bf16 %v341
  %v598 = vunpack.c.l.bf16 %v342
  %v599 = vld [vmem:[%s2] sm:$0xff]
  %v600 = vld [vmem:[%s2 + $0x8] sm:$0xff]
  %v601 = vld [vmem:[%s2 + $0x10] sm:$0xff]
  %v602 = vld [vmem:[%s2 + $0x18] sm:$0xff]
  %v603 = vld [vmem:[%s2 + $0x20] sm:$0xff]
  %v604 = vld [vmem:[%s2 + $0x28] sm:$0xff]
  %v605 = vld [vmem:[%s2 + $0x30] sm:$0xff]
  %v606 = vld [vmem:[%s2 + $0x38] sm:$0xff]
  %v607 = vld [vmem:[%s3] sm:$0x3]
  %v609 = vlaneseq
  %v610 = vshrl.u32 %v609, 7
  %v611 = vsub.s32 0, %v610
  %v612 = vrot.slane %v607, %v611
  %v613 = vlaneseq
  %v614 = vshrl.u32 %v613, 7
  %v615 = vsub.s32 1, %v614
  %v616 = vrot.slane %v607, %v615
  %vm619 = vcmask 261120
  %v621 = vsel %vm619, %v23, 0
  %v624 = vsel %vm619, %v24, 0
  %v627 = vsel %vm619, %v25, 0
  %v630 = vsel %vm619, %v26, 0
  %v633 = vsel %vm619, %v27, 0
  %v636 = vsel %vm619, %v28, 0
  %v639 = vsel %vm619, %v29, 0
  %v642 = vsel %vm619, %v30, 0
  %v645 = vsel %vm619, %v31, 0
  %v648 = vsel %vm619, %v32, 0
  %v651 = vsel %vm619, %v33, 0
  %v654 = vsel %vm619, %v34, 0
  %v657 = vsel %vm619, %v35, 0
  %v660 = vsel %vm619, %v36, 0
  %v663 = vsel %vm619, %v37, 0
  %v666 = vsel %vm619, %v38, 0
  %v669 = vsel %vm619, %v39, 0
  %v672 = vsel %vm619, %v40, 0
  %v675 = vsel %vm619, %v41, 0
  %v678 = vsel %vm619, %v42, 0
  %v681 = vsel %vm619, %v43, 0
  %v684 = vsel %vm619, %v44, 0
  %v687 = vsel %vm619, %v45, 0
  %v690 = vsel %vm619, %v46, 0
  %v693 = vsel %vm619, %v47, 0
  %v696 = vsel %vm619, %v48, 0
  %v699 = vsel %vm619, %v49, 0
  %v702 = vsel %vm619, %v50, 0
  %v705 = vsel %vm619, %v51, 0
  %v708 = vsel %vm619, %v52, 0
  %v711 = vsel %vm619, %v53, 0
  %v714 = vsel %vm619, %v54, 0
  %v717 = vsel %vm619, %v55, 0
  %v720 = vsel %vm619, %v56, 0
  %v723 = vsel %vm619, %v57, 0
  %v726 = vsel %vm619, %v58, 0
  %v729 = vsel %vm619, %v59, 0
  %v732 = vsel %vm619, %v60, 0
  %v735 = vsel %vm619, %v61, 0
  %v738 = vsel %vm619, %v62, 0
  %v741 = vsel %vm619, %v63, 0
  %v744 = vsel %vm619, %v64, 0
  %v747 = vsel %vm619, %v65, 0
  %v750 = vsel %vm619, %v66, 0
  %v753 = vsel %vm619, %v67, 0
  %v756 = vsel %vm619, %v68, 0
  %v759 = vsel %vm619, %v69, 0
  %v762 = vsel %vm619, %v70, 0
  %v765 = vsel %vm619, %v71, 0
  %v768 = vsel %vm619, %v72, 0
  %v771 = vsel %vm619, %v73, 0
  %v774 = vsel %vm619, %v74, 0
  %v777 = vsel %vm619, %v75, 0
  %v780 = vsel %vm619, %v76, 0
  %v783 = vsel %vm619, %v77, 0
  %v786 = vsel %vm619, %v78, 0
  %v789 = vsel %vm619, %v79, 0
  %v792 = vsel %vm619, %v80, 0
  %v795 = vsel %vm619, %v81, 0
  %v798 = vsel %vm619, %v82, 0
  %v801 = vsel %vm619, %v83, 0
  %v804 = vsel %vm619, %v84, 0
  %v807 = vsel %vm619, %v85, 0
  %v810 = vsel %vm619, %v86, 0
  %812 = vmatprep.subr.mxu0 0.0
  %813 = vmatpush1.msra.mxu0 0.0
  %814 = vmatprep.subr.mxu0 0.0
  %815 = vmatpush1.msra.mxu0 0.0
  %816 = vmatprep.subr.mxu0 0.0
  %817 = vmatpush1.msra.mxu0 0.0
  %818 = vmatprep.subr.mxu0 0.0
  %819 = vmatpush1.msra.mxu0 0.0
  %820 = vmatprep.subr.mxu0 0.0
  %821 = vmatpush1.msra.mxu0 0.0
  %822 = vmatprep.subr.mxu0 0.0
  %823 = vmatpush1.msra.mxu0 0.0
  %824 = vmatprep.subr.mxu0 0.0
  %825 = vmatpush1.msra.mxu0 0.0
  %826 = vmatprep.subr.mxu0 0.0
  %827 = vmatpush1.msra.mxu0 0.0
  %828 = vmatprep.subr.mxu0 0.0
  %829 = vmatpush1.msra.mxu0 0.0
  %830 = vmatprep.subr.mxu0 0.0
  %831 = vmatpush1.msra.mxu0 0.0
  %832 = vmatprep.subr.mxu0 0.0
  %833 = vmatpush1.msra.mxu0 0.0
  %834 = vmatprep.subr.mxu0 0.0
  %835 = vmatpush1.msra.mxu0 0.0
  %836 = vmatprep.subr.mxu0 %v606
  %837 = vmatpush1.msra.mxu0 %v605
  %838 = vmatprep.subr.mxu0 %v604
  %839 = vmatpush1.msra.mxu0 %v603
  %840 = vmatprep.subr.mxu0 %v602
  %841 = vmatpush1.msra.mxu0 %v601
  %842 = vmatprep.subr.mxu0 %v600
  %843 = vmatpush1.msra.mxu0 %v599
  %844 = vmatprep.subr.mxu0 0.0
  %845 = vmatpush2.msra.mxu0 0.0
  %846 = vmatprep.subr.mxu0 0.0
  %847 = vmatpush2.msra.mxu0 0.0
  %848 = vmatprep.subr.mxu0 0.0
  %849 = vmatpush2.msra.mxu0 0.0
  %850 = vmatprep.subr.mxu0 0.0
  %851 = vmatpush2.msra.mxu0 0.0
  %852 = vmatprep.subr.mxu0 0.0
  %853 = vmatpush2.msra.mxu0 0.0
  %854 = vmatprep.subr.mxu0 0.0
  %855 = vmatpush2.msra.mxu0 0.0
  %856 = vmatprep.subr.mxu0 0.0
  %857 = vmatpush2.msra.mxu0 0.0
  %858 = vmatprep.subr.mxu0 0.0
  %859 = vmatpush2.msra.mxu0 0.0
  %860 = vmatprep.subr.mxu0 0.0
  %861 = vmatpush2.msra.mxu0 0.0
  %862 = vmatprep.subr.mxu0 0.0
  %863 = vmatpush2.msra.mxu0 0.0
  %864 = vmatprep.subr.mxu0 0.0
  %865 = vmatpush2.msra.mxu0 0.0
  %866 = vmatprep.subr.mxu0 0.0
  %867 = vmatpush2.msra.mxu0 0.0
  %868 = vmatprep.subr.mxu0 0.0
  %869 = vmatpush2.msra.mxu0 0.0
  %870 = vmatprep.subr.mxu0 0.0
  %871 = vmatpush2.msra.mxu0 0.0
  %872 = vmatprep.subr.mxu0 0.0
  %873 = vmatpush2.msra.mxu0 0.0
  %874 = vmatprep.subr.mxu0 0.0
  %875 = vmatpush2.msra.mxu0 0.0
  %876 = vmatprep.mubr.f32.mxu0 0.0
  %877 = vmatmul.mubr.f32.gmra.mxu0 %v621
  %v878 = vpop.f32.mrf.mxu0
  %v879 = vadd.f32 %v612, %v878
  %v880 = vpop.f32.mrf.mxu0
  %v881 = vadd.f32 %v616, %v880
  %882 = vmatprep.mubr.f32.mxu0 0.0
  %883 = vmatmul.mubr.f32.gmra.mxu0 %v624
  %v884 = vpop.f32.mrf.mxu0
  %v885 = vadd.f32 %v612, %v884
  %v886 = vpop.f32.mrf.mxu0
  %v887 = vadd.f32 %v616, %v886
  %888 = vmatprep.mubr.f32.mxu0 0.0
  %889 = vmatmul.mubr.f32.gmra.mxu0 %v627
  %v890 = vpop.f32.mrf.mxu0
  %v891 = vadd.f32 %v612, %v890
  %v892 = vpop.f32.mrf.mxu0
  %v893 = vadd.f32 %v616, %v892
  %894 = vmatprep.mubr.f32.mxu0 0.0
  %895 = vmatmul.mubr.f32.gmra.mxu0 %v630
  %v896 = vpop.f32.mrf.mxu0
  %v897 = vadd.f32 %v612, %v896
  %v898 = vpop.f32.mrf.mxu0
  %v899 = vadd.f32 %v616, %v898
  %900 = vmatprep.mubr.f32.mxu0 0.0
  %901 = vmatmul.mubr.f32.gmra.mxu0 %v633
  %v902 = vpop.f32.mrf.mxu0
  %v903 = vadd.f32 %v612, %v902
  %v904 = vpop.f32.mrf.mxu0
  %v905 = vadd.f32 %v616, %v904
  %906 = vmatprep.mubr.f32.mxu0 0.0
  %907 = vmatmul.mubr.f32.gmra.mxu0 %v636
  %v908 = vpop.f32.mrf.mxu0
  %v909 = vadd.f32 %v612, %v908
  %v910 = vpop.f32.mrf.mxu0
  %v911 = vadd.f32 %v616, %v910
  %912 = vmatprep.mubr.f32.mxu0 0.0
  %913 = vmatmul.mubr.f32.gmra.mxu0 %v639
  %v914 = vpop.f32.mrf.mxu0
  %v915 = vadd.f32 %v612, %v914
  %v916 = vpop.f32.mrf.mxu0
  %v917 = vadd.f32 %v616, %v916
  %918 = vmatprep.mubr.f32.mxu0 0.0
  %919 = vmatmul.mubr.f32.gmra.mxu0 %v642
  %v920 = vpop.f32.mrf.mxu0
  %v921 = vadd.f32 %v612, %v920
  %v922 = vpop.f32.mrf.mxu0
  %v923 = vadd.f32 %v616, %v922
  %924 = vmatprep.mubr.f32.mxu0 0.0
  %925 = vmatmul.mubr.f32.gmra.mxu0 %v645
  %v926 = vpop.f32.mrf.mxu0
  %v927 = vadd.f32 %v612, %v926
  %v928 = vpop.f32.mrf.mxu0
  %v929 = vadd.f32 %v616, %v928
  %930 = vmatprep.mubr.f32.mxu0 0.0
  %931 = vmatmul.mubr.f32.gmra.mxu0 %v648
  %v932 = vpop.f32.mrf.mxu0
  %v933 = vadd.f32 %v612, %v932
  %v934 = vpop.f32.mrf.mxu0
  %v935 = vadd.f32 %v616, %v934
  %936 = vmatprep.mubr.f32.mxu0 0.0
  %937 = vmatmul.mubr.f32.gmra.mxu0 %v651
  %v938 = vpop.f32.mrf.mxu0
  %v939 = vadd.f32 %v612, %v938
  %v940 = vpop.f32.mrf.mxu0
  %v941 = vadd.f32 %v616, %v940
  %942 = vmatprep.mubr.f32.mxu0 0.0
  %943 = vmatmul.mubr.f32.gmra.mxu0 %v654
  %v944 = vpop.f32.mrf.mxu0
  %v945 = vadd.f32 %v612, %v944
  %v946 = vpop.f32.mrf.mxu0
  %v947 = vadd.f32 %v616, %v946
  %948 = vmatprep.mubr.f32.mxu0 0.0
  %949 = vmatmul.mubr.f32.gmra.mxu0 %v657
  %v950 = vpop.f32.mrf.mxu0
  %v951 = vadd.f32 %v612, %v950
  %v952 = vpop.f32.mrf.mxu0
  %v953 = vadd.f32 %v616, %v952
  %954 = vmatprep.mubr.f32.mxu0 0.0
  %955 = vmatmul.mubr.f32.gmra.mxu0 %v660
  %v956 = vpop.f32.mrf.mxu0
  %v957 = vadd.f32 %v612, %v956
  %v958 = vpop.f32.mrf.mxu0
  %v959 = vadd.f32 %v616, %v958
  %960 = vmatprep.mubr.f32.mxu0 0.0
  %961 = vmatmul.mubr.f32.gmra.mxu0 %v663
  %v962 = vpop.f32.mrf.mxu0
  %v963 = vadd.f32 %v612, %v962
  %v964 = vpop.f32.mrf.mxu0
  %v965 = vadd.f32 %v616, %v964
  %966 = vmatprep.mubr.f32.mxu0 0.0
  %967 = vmatmul.mubr.f32.gmra.mxu0 %v666
  %v968 = vpop.f32.mrf.mxu0
  %v969 = vadd.f32 %v612, %v968
  %v970 = vpop.f32.mrf.mxu0
  %v971 = vadd.f32 %v616, %v970
  %972 = vmatprep.mubr.f32.mxu0 0.0
  %973 = vmatmul.mubr.f32.gmra.mxu0 %v669
  %v974 = vpop.f32.mrf.mxu0
  %v975 = vadd.f32 %v612, %v974
  %v976 = vpop.f32.mrf.mxu0
  %v977 = vadd.f32 %v616, %v976
  %978 = vmatprep.mubr.f32.mxu0 0.0
  %979 = vmatmul.mubr.f32.gmra.mxu0 %v672
  %v980 = vpop.f32.mrf.mxu0
  %v981 = vadd.f32 %v612, %v980
  %v982 = vpop.f32.mrf.mxu0
  %v983 = vadd.f32 %v616, %v982
  %984 = vmatprep.mubr.f32.mxu0 0.0
  %985 = vmatmul.mubr.f32.gmra.mxu0 %v675
  %v986 = vpop.f32.mrf.mxu0
  %v987 = vadd.f32 %v612, %v986
  %v988 = vpop.f32.mrf.mxu0
  %v989 = vadd.f32 %v616, %v988
  %990 = vmatprep.mubr.f32.mxu0 0.0
  %991 = vmatmul.mubr.f32.gmra.mxu0 %v678
  %v992 = vpop.f32.mrf.mxu0
  %v993 = vadd.f32 %v612, %v992
  %v994 = vpop.f32.mrf.mxu0
  %v995 = vadd.f32 %v616, %v994
  %996 = vmatprep.mubr.f32.mxu0 0.0
  %997 = vmatmul.mubr.f32.gmra.mxu0 %v681
  %v998 = vpop.f32.mrf.mxu0
  %v999 = vadd.f32 %v612, %v998
  %v1000 = vpop.f32.mrf.mxu0
  %v1001 = vadd.f32 %v616, %v1000
  %1002 = vmatprep.mubr.f32.mxu0 0.0
  %1003 = vmatmul.mubr.f32.gmra.mxu0 %v684
  %v1004 = vpop.f32.mrf.mxu0
  %v1005 = vadd.f32 %v612, %v1004
  %v1006 = vpop.f32.mrf.mxu0
  %v1007 = vadd.f32 %v616, %v1006
  %1008 = vmatprep.mubr.f32.mxu0 0.0
  %1009 = vmatmul.mubr.f32.gmra.mxu0 %v687
  %v1010 = vpop.f32.mrf.mxu0
  %v1011 = vadd.f32 %v612, %v1010
  %v1012 = vpop.f32.mrf.mxu0
  %v1013 = vadd.f32 %v616, %v1012
  %1014 = vmatprep.mubr.f32.mxu0 0.0
  %1015 = vmatmul.mubr.f32.gmra.mxu0 %v690
  %v1016 = vpop.f32.mrf.mxu0
  %v1017 = vadd.f32 %v612, %v1016
  %v1018 = vpop.f32.mrf.mxu0
  %v1019 = vadd.f32 %v616, %v1018
  %1020 = vmatprep.mubr.f32.mxu0 0.0
  %1021 = vmatmul.mubr.f32.gmra.mxu0 %v693
  %v1022 = vpop.f32.mrf.mxu0
  %v1023 = vadd.f32 %v612, %v1022
  %v1024 = vpop.f32.mrf.mxu0
  %v1025 = vadd.f32 %v616, %v1024
  %1026 = vmatprep.mubr.f32.mxu0 0.0
  %1027 = vmatmul.mubr.f32.gmra.mxu0 %v696
  %v1028 = vpop.f32.mrf.mxu0
  %v1029 = vadd.f32 %v612, %v1028
  %v1030 = vpop.f32.mrf.mxu0
  %v1031 = vadd.f32 %v616, %v1030
  %1032 = vmatprep.mubr.f32.mxu0 0.0
  %1033 = vmatmul.mubr.f32.gmra.mxu0 %v699
  %v1034 = vpop.f32.mrf.mxu0
  %v1035 = vadd.f32 %v612, %v1034
  %v1036 = vpop.f32.mrf.mxu0
  %v1037 = vadd.f32 %v616, %v1036
  %1038 = vmatprep.mubr.f32.mxu0 0.0
  %1039 = vmatmul.mubr.f32.gmra.mxu0 %v702
  %v1040 = vpop.f32.mrf.mxu0
  %v1041 = vadd.f32 %v612, %v1040
  %v1042 = vpop.f32.mrf.mxu0
  %v1043 = vadd.f32 %v616, %v1042
  %1044 = vmatprep.mubr.f32.mxu0 0.0
  %1045 = vmatmul.mubr.f32.gmra.mxu0 %v705
  %v1046 = vpop.f32.mrf.mxu0
  %v1047 = vadd.f32 %v612, %v1046
  %v1048 = vpop.f32.mrf.mxu0
  %v1049 = vadd.f32 %v616, %v1048
  %1050 = vmatprep.mubr.f32.mxu0 0.0
  %1051 = vmatmul.mubr.f32.gmra.mxu0 %v708
  %v1052 = vpop.f32.mrf.mxu0
  %v1053 = vadd.f32 %v612, %v1052
  %v1054 = vpop.f32.mrf.mxu0
  %v1055 = vadd.f32 %v616, %v1054
  %1056 = vmatprep.mubr.f32.mxu0 0.0
  %1057 = vmatmul.mubr.f32.gmra.mxu0 %v711
  %v1058 = vpop.f32.mrf.mxu0
  %v1059 = vadd.f32 %v612, %v1058
  %v1060 = vpop.f32.mrf.mxu0
  %v1061 = vadd.f32 %v616, %v1060
  %1062 = vmatprep.mubr.f32.mxu0 0.0
  %1063 = vmatmul.mubr.f32.gmra.mxu0 %v714
  %v1064 = vpop.f32.mrf.mxu0
  %v1065 = vadd.f32 %v612, %v1064
  %v1066 = vpop.f32.mrf.mxu0
  %v1067 = vadd.f32 %v616, %v1066
  %1068 = vmatprep.mubr.f32.mxu0 0.0
  %1069 = vmatmul.mubr.f32.gmra.mxu0 %v717
  %v1070 = vpop.f32.mrf.mxu0
  %v1071 = vadd.f32 %v612, %v1070
  %v1072 = vpop.f32.mrf.mxu0
  %v1073 = vadd.f32 %v616, %v1072
  %1074 = vmatprep.mubr.f32.mxu0 0.0
  %1075 = vmatmul.mubr.f32.gmra.mxu0 %v720
  %v1076 = vpop.f32.mrf.mxu0
  %v1077 = vadd.f32 %v612, %v1076
  %v1078 = vpop.f32.mrf.mxu0
  %v1079 = vadd.f32 %v616, %v1078
  %1080 = vmatprep.mubr.f32.mxu0 0.0
  %1081 = vmatmul.mubr.f32.gmra.mxu0 %v723
  %v1082 = vpop.f32.mrf.mxu0
  %v1083 = vadd.f32 %v612, %v1082
  %v1084 = vpop.f32.mrf.mxu0
  %v1085 = vadd.f32 %v616, %v1084
  %1086 = vmatprep.mubr.f32.mxu0 0.0
  %1087 = vmatmul.mubr.f32.gmra.mxu0 %v726
  %v1088 = vpop.f32.mrf.mxu0
  %v1089 = vadd.f32 %v612, %v1088
  %v1090 = vpop.f32.mrf.mxu0
  %v1091 = vadd.f32 %v616, %v1090
  %1092 = vmatprep.mubr.f32.mxu0 0.0
  %1093 = vmatmul.mubr.f32.gmra.mxu0 %v729
  %v1094 = vpop.f32.mrf.mxu0
  %v1095 = vadd.f32 %v612, %v1094
  %v1096 = vpop.f32.mrf.mxu0
  %v1097 = vadd.f32 %v616, %v1096
  %1098 = vmatprep.mubr.f32.mxu0 0.0
  %1099 = vmatmul.mubr.f32.gmra.mxu0 %v732
  %v1100 = vpop.f32.mrf.mxu0
  %v1101 = vadd.f32 %v612, %v1100
  %v1102 = vpop.f32.mrf.mxu0
  %v1103 = vadd.f32 %v616, %v1102
  %1104 = vmatprep.mubr.f32.mxu0 0.0
  %1105 = vmatmul.mubr.f32.gmra.mxu0 %v735
  %v1106 = vpop.f32.mrf.mxu0
  %v1107 = vadd.f32 %v612, %v1106
  %v1108 = vpop.f32.mrf.mxu0
  %v1109 = vadd.f32 %v616, %v1108
  %1110 = vmatprep.mubr.f32.mxu0 0.0
  %1111 = vmatmul.mubr.f32.gmra.mxu0 %v738
  %v1112 = vpop.f32.mrf.mxu0
  %v1113 = vadd.f32 %v612, %v1112
  %v1114 = vpop.f32.mrf.mxu0
  %v1115 = vadd.f32 %v616, %v1114
  %1116 = vmatprep.mubr.f32.mxu0 0.0
  %1117 = vmatmul.mubr.f32.gmra.mxu0 %v741
  %v1118 = vpop.f32.mrf.mxu0
  %v1119 = vadd.f32 %v612, %v1118
  %v1120 = vpop.f32.mrf.mxu0
  %v1121 = vadd.f32 %v616, %v1120
  %1122 = vmatprep.mubr.f32.mxu0 0.0
  %1123 = vmatmul.mubr.f32.gmra.mxu0 %v744
  %v1124 = vpop.f32.mrf.mxu0
  %v1125 = vadd.f32 %v612, %v1124
  %v1126 = vpop.f32.mrf.mxu0
  %v1127 = vadd.f32 %v616, %v1126
  %1128 = vmatprep.mubr.f32.mxu0 0.0
  %1129 = vmatmul.mubr.f32.gmra.mxu0 %v747
  %v1130 = vpop.f32.mrf.mxu0
  %v1131 = vadd.f32 %v612, %v1130
  %v1132 = vpop.f32.mrf.mxu0
  %v1133 = vadd.f32 %v616, %v1132
  %1134 = vmatprep.mubr.f32.mxu0 0.0
  %1135 = vmatmul.mubr.f32.gmra.mxu0 %v750
  %v1136 = vpop.f32.mrf.mxu0
  %v1137 = vadd.f32 %v612, %v1136
  %v1138 = vpop.f32.mrf.mxu0
  %v1139 = vadd.f32 %v616, %v1138
  %1140 = vmatprep.mubr.f32.mxu0 0.0
  %1141 = vmatmul.mubr.f32.gmra.mxu0 %v753
  %v1142 = vpop.f32.mrf.mxu0
  %v1143 = vadd.f32 %v612, %v1142
  %v1144 = vpop.f32.mrf.mxu0
  %v1145 = vadd.f32 %v616, %v1144
  %1146 = vmatprep.mubr.f32.mxu0 0.0
  %1147 = vmatmul.mubr.f32.gmra.mxu0 %v756
  %v1148 = vpop.f32.mrf.mxu0
  %v1149 = vadd.f32 %v612, %v1148
  %v1150 = vpop.f32.mrf.mxu0
  %v1151 = vadd.f32 %v616, %v1150
  %1152 = vmatprep.mubr.f32.mxu0 0.0
  %1153 = vmatmul.mubr.f32.gmra.mxu0 %v759
  %v1154 = vpop.f32.mrf.mxu0
  %v1155 = vadd.f32 %v612, %v1154
  %v1156 = vpop.f32.mrf.mxu0
  %v1157 = vadd.f32 %v616, %v1156
  %1158 = vmatprep.mubr.f32.mxu0 0.0
  %1159 = vmatmul.mubr.f32.gmra.mxu0 %v762
  %v1160 = vpop.f32.mrf.mxu0
  %v1161 = vadd.f32 %v612, %v1160
  %v1162 = vpop.f32.mrf.mxu0
  %v1163 = vadd.f32 %v616, %v1162
  %1164 = vmatprep.mubr.f32.mxu0 0.0
  %1165 = vmatmul.mubr.f32.gmra.mxu0 %v765
  %v1166 = vpop.f32.mrf.mxu0
  %v1167 = vadd.f32 %v612, %v1166
  %v1168 = vpop.f32.mrf.mxu0
  %v1169 = vadd.f32 %v616, %v1168
  %1170 = vmatprep.mubr.f32.mxu0 0.0
  %1171 = vmatmul.mubr.f32.gmra.mxu0 %v768
  %v1172 = vpop.f32.mrf.mxu0
  %v1173 = vadd.f32 %v612, %v1172
  %v1174 = vpop.f32.mrf.mxu0
  %v1175 = vadd.f32 %v616, %v1174
  %1176 = vmatprep.mubr.f32.mxu0 0.0
  %1177 = vmatmul.mubr.f32.gmra.mxu0 %v771
  %v1178 = vpop.f32.mrf.mxu0
  %v1179 = vadd.f32 %v612, %v1178
  %v1180 = vpop.f32.mrf.mxu0
  %v1181 = vadd.f32 %v616, %v1180
  %1182 = vmatprep.mubr.f32.mxu0 0.0
  %1183 = vmatmul.mubr.f32.gmra.mxu0 %v774
  %v1184 = vpop.f32.mrf.mxu0
  %v1185 = vadd.f32 %v612, %v1184
  %v1186 = vpop.f32.mrf.mxu0
  %v1187 = vadd.f32 %v616, %v1186
  %1188 = vmatprep.mubr.f32.mxu0 0.0
  %1189 = vmatmul.mubr.f32.gmra.mxu0 %v777
  %v1190 = vpop.f32.mrf.mxu0
  %v1191 = vadd.f32 %v612, %v1190
  %v1192 = vpop.f32.mrf.mxu0
  %v1193 = vadd.f32 %v616, %v1192
  %1194 = vmatprep.mubr.f32.mxu0 0.0
  %1195 = vmatmul.mubr.f32.gmra.mxu0 %v780
  %v1196 = vpop.f32.mrf.mxu0
  %v1197 = vadd.f32 %v612, %v1196
  %v1198 = vpop.f32.mrf.mxu0
  %v1199 = vadd.f32 %v616, %v1198
  %1200 = vmatprep.mubr.f32.mxu0 0.0
  %1201 = vmatmul.mubr.f32.gmra.mxu0 %v783
  %v1202 = vpop.f32.mrf.mxu0
  %v1203 = vadd.f32 %v612, %v1202
  %v1204 = vpop.f32.mrf.mxu0
  %v1205 = vadd.f32 %v616, %v1204
  %1206 = vmatprep.mubr.f32.mxu0 0.0
  %1207 = vmatmul.mubr.f32.gmra.mxu0 %v786
  %v1208 = vpop.f32.mrf.mxu0
  %v1209 = vadd.f32 %v612, %v1208
  %v1210 = vpop.f32.mrf.mxu0
  %v1211 = vadd.f32 %v616, %v1210
  %1212 = vmatprep.mubr.f32.mxu0 0.0
  %1213 = vmatmul.mubr.f32.gmra.mxu0 %v789
  %v1214 = vpop.f32.mrf.mxu0
  %v1215 = vadd.f32 %v612, %v1214
  %v1216 = vpop.f32.mrf.mxu0
  %v1217 = vadd.f32 %v616, %v1216
  %1218 = vmatprep.mubr.f32.mxu0 0.0
  %1219 = vmatmul.mubr.f32.gmra.mxu0 %v792
  %v1220 = vpop.f32.mrf.mxu0
  %v1221 = vadd.f32 %v612, %v1220
  %v1222 = vpop.f32.mrf.mxu0
  %v1223 = vadd.f32 %v616, %v1222
  %1224 = vmatprep.mubr.f32.mxu0 0.0
  %1225 = vmatmul.mubr.f32.gmra.mxu0 %v795
  %v1226 = vpop.f32.mrf.mxu0
  %v1227 = vadd.f32 %v612, %v1226
  %v1228 = vpop.f32.mrf.mxu0
  %v1229 = vadd.f32 %v616, %v1228
  %1230 = vmatprep.mubr.f32.mxu0 0.0
  %1231 = vmatmul.mubr.f32.gmra.mxu0 %v798
  %v1232 = vpop.f32.mrf.mxu0
  %v1233 = vadd.f32 %v612, %v1232
  %v1234 = vpop.f32.mrf.mxu0
  %v1235 = vadd.f32 %v616, %v1234
  %1236 = vmatprep.mubr.f32.mxu0 0.0
  %1237 = vmatmul.mubr.f32.gmra.mxu0 %v801
  %v1238 = vpop.f32.mrf.mxu0
  %v1239 = vadd.f32 %v612, %v1238
  %v1240 = vpop.f32.mrf.mxu0
  %v1241 = vadd.f32 %v616, %v1240
  %1242 = vmatprep.mubr.f32.mxu0 0.0
  %1243 = vmatmul.mubr.f32.gmra.mxu0 %v804
  %v1244 = vpop.f32.mrf.mxu0
  %v1245 = vadd.f32 %v612, %v1244
  %v1246 = vpop.f32.mrf.mxu0
  %v1247 = vadd.f32 %v616, %v1246
  %1248 = vmatprep.mubr.f32.mxu0 0.0
  %1249 = vmatmul.mubr.f32.gmra.mxu0 %v807
  %v1250 = vpop.f32.mrf.mxu0
  %v1251 = vadd.f32 %v612, %v1250
  %v1252 = vpop.f32.mrf.mxu0
  %v1253 = vadd.f32 %v616, %v1252
  %1254 = vmatprep.mubr.f32.mxu0 0.0
  %1255 = vmatmul.mubr.f32.gmra.mxu0 %v810
  %v1256 = vpop.f32.mrf.mxu0
  %v1257 = vadd.f32 %v612, %v1256
  %v1258 = vpop.f32.mrf.mxu0
  %v1259 = vadd.f32 %v616, %v1258
  %1260 = vdwg.mxu0
  %v1261 = vmul.f32 %v881, 1.442695
  %v1262 = vpow.pop %v1261
  %v1263 = vmul.f32 %v887, 1.442695
  %v1264 = vpow.pop %v1263
  %v1265 = vmul.f32 %v893, 1.442695
  %v1266 = vpow.pop %v1265
  %v1267 = vmul.f32 %v899, 1.442695
  %v1268 = vpow.pop %v1267
  %v1269 = vmul.f32 %v905, 1.442695
  %v1270 = vpow.pop %v1269
  %v1271 = vmul.f32 %v911, 1.442695
  %v1272 = vpow.pop %v1271
  %v1273 = vmul.f32 %v917, 1.442695
  %v1274 = vpow.pop %v1273
  %v1275 = vmul.f32 %v923, 1.442695
  %v1276 = vpow.pop %v1275
  %v1277 = vmul.f32 %v929, 1.442695
  %v1278 = vpow.pop %v1277
  %v1279 = vmul.f32 %v935, 1.442695
  %v1280 = vpow.pop %v1279
  %v1281 = vmul.f32 %v941, 1.442695
  %v1282 = vpow.pop %v1281
  %v1283 = vmul.f32 %v947, 1.442695
  %v1284 = vpow.pop %v1283
  %v1285 = vmul.f32 %v953, 1.442695
  %v1286 = vpow.pop %v1285
  %v1287 = vmul.f32 %v959, 1.442695
  %v1288 = vpow.pop %v1287
  %v1289 = vmul.f32 %v965, 1.442695
  %v1290 = vpow.pop %v1289
  %v1291 = vmul.f32 %v971, 1.442695
  %v1292 = vpow.pop %v1291
  %v1293 = vmul.f32 %v977, 1.442695
  %v1294 = vpow.pop %v1293
  %v1295 = vmul.f32 %v983, 1.442695
  %v1296 = vpow.pop %v1295
  %v1297 = vmul.f32 %v989, 1.442695
  %v1298 = vpow.pop %v1297
  %v1299 = vmul.f32 %v995, 1.442695
  %v1300 = vpow.pop %v1299
  %v1301 = vmul.f32 %v1001, 1.442695
  %v1302 = vpow.pop %v1301
  %v1303 = vmul.f32 %v1007, 1.442695
  %v1304 = vpow.pop %v1303
  %v1305 = vmul.f32 %v1013, 1.442695
  %v1306 = vpow.pop %v1305
  %v1307 = vmul.f32 %v1019, 1.442695
  %v1308 = vpow.pop %v1307
  %v1309 = vmul.f32 %v1025, 1.442695
  %v1310 = vpow.pop %v1309
  %v1311 = vmul.f32 %v1031, 1.442695
  %v1312 = vpow.pop %v1311
  %v1313 = vmul.f32 %v1037, 1.442695
  %v1314 = vpow.pop %v1313
  %v1315 = vmul.f32 %v1043, 1.442695
  %v1316 = vpow.pop %v1315
  %v1317 = vmul.f32 %v1049, 1.442695
  %v1318 = vpow.pop %v1317
  %v1319 = vmul.f32 %v1055, 1.442695
  %v1320 = vpow.pop %v1319
  %v1321 = vmul.f32 %v1061, 1.442695
  %v1322 = vpow.pop %v1321
  %v1323 = vmul.f32 %v1067, 1.442695
  %v1324 = vpow.pop %v1323
  %v1325 = vmul.f32 %v1073, 1.442695
  %v1326 = vpow.pop %v1325
  %v1327 = vmul.f32 %v1079, 1.442695
  %v1328 = vpow.pop %v1327
  %v1329 = vmul.f32 %v1085, 1.442695
  %v1330 = vpow.pop %v1329
  %v1331 = vmul.f32 %v1091, 1.442695
  %v1332 = vpow.pop %v1331
  %v1333 = vmul.f32 %v1097, 1.442695
  %v1334 = vpow.pop %v1333
  %v1335 = vmul.f32 %v1103, 1.442695
  %v1336 = vpow.pop %v1335
  %v1337 = vmul.f32 %v1109, 1.442695
  %v1338 = vpow.pop %v1337
  %v1339 = vmul.f32 %v1115, 1.442695
  %v1340 = vpow.pop %v1339
  %v1341 = vmul.f32 %v1121, 1.442695
  %v1342 = vpow.pop %v1341
  %v1343 = vmul.f32 %v1127, 1.442695
  %v1344 = vpow.pop %v1343
  %v1345 = vmul.f32 %v1133, 1.442695
  %v1346 = vpow.pop %v1345
  %v1347 = vmul.f32 %v1139, 1.442695
  %v1348 = vpow.pop %v1347
  %v1349 = vmul.f32 %v1145, 1.442695
  %v1350 = vpow.pop %v1349
  %v1351 = vmul.f32 %v1151, 1.442695
  %v1352 = vpow.pop %v1351
  %v1353 = vmul.f32 %v1157, 1.442695
  %v1354 = vpow.pop %v1353
  %v1355 = vmul.f32 %v1163, 1.442695
  %v1356 = vpow.pop %v1355
  %v1357 = vmul.f32 %v1169, 1.442695
  %v1358 = vpow.pop %v1357
  %v1359 = vmul.f32 %v1175, 1.442695
  %v1360 = vpow.pop %v1359
  %v1361 = vmul.f32 %v1181, 1.442695
  %v1362 = vpow.pop %v1361
  %v1363 = vmul.f32 %v1187, 1.442695
  %v1364 = vpow.pop %v1363
  %v1365 = vmul.f32 %v1193, 1.442695
  %v1366 = vpow.pop %v1365
  %v1367 = vmul.f32 %v1199, 1.442695
  %v1368 = vpow.pop %v1367
  %v1369 = vmul.f32 %v1205, 1.442695
  %v1370 = vpow.pop %v1369
  %v1371 = vmul.f32 %v1211, 1.442695
  %v1372 = vpow.pop %v1371
  %v1373 = vmul.f32 %v1217, 1.442695
  %v1374 = vpow.pop %v1373
  %v1375 = vmul.f32 %v1223, 1.442695
  %v1376 = vpow.pop %v1375
  %v1377 = vmul.f32 %v1229, 1.442695
  %v1378 = vpow.pop %v1377
  %v1379 = vmul.f32 %v1235, 1.442695
  %v1380 = vpow.pop %v1379
  %v1381 = vmul.f32 %v1241, 1.442695
  %v1382 = vpow.pop %v1381
  %v1383 = vmul.f32 %v1247, 1.442695
  %v1384 = vpow.pop %v1383
  %v1385 = vmul.f32 %v1253, 1.442695
  %v1386 = vpow.pop %v1385
  %v1387 = vmul.f32 %v1259, 1.442695
  %v1388 = vpow.pop %v1387
  %vm1389 = vcmask 130048
  %v1390 = vsel %vm1389, %v881, 0.0
  %1391 = vadd.xlane.f32.xlu0 %v1390
  %v1392 = vpop.xlane.xlu0 %1391
  %v1393 = vsel %vm1389, %v887, 0.0
  %1394 = vadd.xlane.f32.xlu0 %v1393
  %v1395 = vpop.xlane.xlu0 %1394
  %v1396 = vsel %vm1389, %v893, 0.0
  %1397 = vadd.xlane.f32.xlu0 %v1396
  %v1398 = vpop.xlane.xlu0 %1397
  %v1399 = vsel %vm1389, %v899, 0.0
  %1400 = vadd.xlane.f32.xlu0 %v1399
  %v1401 = vpop.xlane.xlu0 %1400
  %v1402 = vsel %vm1389, %v905, 0.0
  %1403 = vadd.xlane.f32.xlu0 %v1402
  %v1404 = vpop.xlane.xlu0 %1403
  %v1405 = vsel %vm1389, %v911, 0.0
  %1406 = vadd.xlane.f32.xlu0 %v1405
  %v1407 = vpop.xlane.xlu0 %1406
  %v1408 = vsel %vm1389, %v917, 0.0
  %1409 = vadd.xlane.f32.xlu0 %v1408
  %v1410 = vpop.xlane.xlu0 %1409
  %v1411 = vsel %vm1389, %v923, 0.0
  %1412 = vadd.xlane.f32.xlu0 %v1411
  %v1413 = vpop.xlane.xlu0 %1412
  %v1414 = vsel %vm1389, %v929, 0.0
  %1415 = vadd.xlane.f32.xlu0 %v1414
  %v1416 = vpop.xlane.xlu0 %1415
  %v1417 = vsel %vm1389, %v935, 0.0
  %1418 = vadd.xlane.f32.xlu0 %v1417
  %v1419 = vpop.xlane.xlu0 %1418
  %v1420 = vsel %vm1389, %v941, 0.0
  %1421 = vadd.xlane.f32.xlu0 %v1420
  %v1422 = vpop.xlane.xlu0 %1421
  %v1423 = vsel %vm1389, %v947, 0.0
  %1424 = vadd.xlane.f32.xlu0 %v1423
  %v1425 = vpop.xlane.xlu0 %1424
  %v1426 = vsel %vm1389, %v953, 0.0
  %1427 = vadd.xlane.f32.xlu0 %v1426
  %v1428 = vpop.xlane.xlu0 %1427
  %v1429 = vsel %vm1389, %v959, 0.0
  %1430 = vadd.xlane.f32.xlu0 %v1429
  %v1431 = vpop.xlane.xlu0 %1430
  %v1432 = vsel %vm1389, %v965, 0.0
  %1433 = vadd.xlane.f32.xlu0 %v1432
  %v1434 = vpop.xlane.xlu0 %1433
  %v1435 = vsel %vm1389, %v971, 0.0
  %1436 = vadd.xlane.f32.xlu0 %v1435
  %v1437 = vpop.xlane.xlu0 %1436
  %v1438 = vsel %vm1389, %v977, 0.0
  %1439 = vadd.xlane.f32.xlu0 %v1438
  %v1440 = vpop.xlane.xlu0 %1439
  %v1441 = vsel %vm1389, %v983, 0.0
  %1442 = vadd.xlane.f32.xlu0 %v1441
  %v1443 = vpop.xlane.xlu0 %1442
  %v1444 = vsel %vm1389, %v989, 0.0
  %1445 = vadd.xlane.f32.xlu0 %v1444
  %v1446 = vpop.xlane.xlu0 %1445
  %v1447 = vsel %vm1389, %v995, 0.0
  %1448 = vadd.xlane.f32.xlu0 %v1447
  %v1449 = vpop.xlane.xlu0 %1448
  %v1450 = vsel %vm1389, %v1001, 0.0
  %1451 = vadd.xlane.f32.xlu0 %v1450
  %v1452 = vpop.xlane.xlu0 %1451
  %v1453 = vsel %vm1389, %v1007, 0.0
  %1454 = vadd.xlane.f32.xlu0 %v1453
  %v1455 = vpop.xlane.xlu0 %1454
  %v1456 = vsel %vm1389, %v1013, 0.0
  %1457 = vadd.xlane.f32.xlu0 %v1456
  %v1458 = vpop.xlane.xlu0 %1457
  %v1459 = vsel %vm1389, %v1019, 0.0
  %1460 = vadd.xlane.f32.xlu0 %v1459
  %v1461 = vpop.xlane.xlu0 %1460
  %v1462 = vsel %vm1389, %v1025, 0.0
  %1463 = vadd.xlane.f32.xlu0 %v1462
  %v1464 = vpop.xlane.xlu0 %1463
  %v1465 = vsel %vm1389, %v1031, 0.0
  %1466 = vadd.xlane.f32.xlu0 %v1465
  %v1467 = vpop.xlane.xlu0 %1466
  %v1468 = vsel %vm1389, %v1037, 0.0
  %1469 = vadd.xlane.f32.xlu0 %v1468
  %v1470 = vpop.xlane.xlu0 %1469
  %v1471 = vsel %vm1389, %v1043, 0.0
  %1472 = vadd.xlane.f32.xlu0 %v1471
  %v1473 = vpop.xlane.xlu0 %1472
  %v1474 = vsel %vm1389, %v1049, 0.0
  %1475 = vadd.xlane.f32.xlu0 %v1474
  %v1476 = vpop.xlane.xlu0 %1475
  %v1477 = vsel %vm1389, %v1055, 0.0
  %1478 = vadd.xlane.f32.xlu0 %v1477
  %v1479 = vpop.xlane.xlu0 %1478
  %v1480 = vsel %vm1389, %v1061, 0.0
  %1481 = vadd.xlane.f32.xlu0 %v1480
  %v1482 = vpop.xlane.xlu0 %1481
  %v1483 = vsel %vm1389, %v1067, 0.0
  %1484 = vadd.xlane.f32.xlu0 %v1483
  %v1485 = vpop.xlane.xlu0 %1484
  %v1486 = vsel %vm1389, %v1073, 0.0
  %1487 = vadd.xlane.f32.xlu0 %v1486
  %v1488 = vpop.xlane.xlu0 %1487
  %v1489 = vsel %vm1389, %v1079, 0.0
  %1490 = vadd.xlane.f32.xlu0 %v1489
  %v1491 = vpop.xlane.xlu0 %1490
  %v1492 = vsel %vm1389, %v1085, 0.0
  %1493 = vadd.xlane.f32.xlu0 %v1492
  %v1494 = vpop.xlane.xlu0 %1493
  %v1495 = vsel %vm1389, %v1091, 0.0
  %1496 = vadd.xlane.f32.xlu0 %v1495
  %v1497 = vpop.xlane.xlu0 %1496
  %v1498 = vsel %vm1389, %v1097, 0.0
  %1499 = vadd.xlane.f32.xlu0 %v1498
  %v1500 = vpop.xlane.xlu0 %1499
  %v1501 = vsel %vm1389, %v1103, 0.0
  %1502 = vadd.xlane.f32.xlu0 %v1501
  %v1503 = vpop.xlane.xlu0 %1502
  %v1504 = vsel %vm1389, %v1109, 0.0
  %1505 = vadd.xlane.f32.xlu0 %v1504
  %v1506 = vpop.xlane.xlu0 %1505
  %v1507 = vsel %vm1389, %v1115, 0.0
  %1508 = vadd.xlane.f32.xlu0 %v1507
  %v1509 = vpop.xlane.xlu0 %1508
  %v1510 = vsel %vm1389, %v1121, 0.0
  %1511 = vadd.xlane.f32.xlu0 %v1510
  %v1512 = vpop.xlane.xlu0 %1511
  %v1513 = vsel %vm1389, %v1127, 0.0
  %1514 = vadd.xlane.f32.xlu0 %v1513
  %v1515 = vpop.xlane.xlu0 %1514
  %v1516 = vsel %vm1389, %v1133, 0.0
  %1517 = vadd.xlane.f32.xlu0 %v1516
  %v1518 = vpop.xlane.xlu0 %1517
  %v1519 = vsel %vm1389, %v1139, 0.0
  %1520 = vadd.xlane.f32.xlu0 %v1519
  %v1521 = vpop.xlane.xlu0 %1520
  %v1522 = vsel %vm1389, %v1145, 0.0
  %1523 = vadd.xlane.f32.xlu0 %v1522
  %v1524 = vpop.xlane.xlu0 %1523
  %v1525 = vsel %vm1389, %v1151, 0.0
  %1526 = vadd.xlane.f32.xlu0 %v1525
  %v1527 = vpop.xlane.xlu0 %1526
  %v1528 = vsel %vm1389, %v1157, 0.0
  %1529 = vadd.xlane.f32.xlu0 %v1528
  %v1530 = vpop.xlane.xlu0 %1529
  %v1531 = vsel %vm1389, %v1163, 0.0
  %1532 = vadd.xlane.f32.xlu0 %v1531
  %v1533 = vpop.xlane.xlu0 %1532
  %v1534 = vsel %vm1389, %v1169, 0.0
  %1535 = vadd.xlane.f32.xlu0 %v1534
  %v1536 = vpop.xlane.xlu0 %1535
  %v1537 = vsel %vm1389, %v1175, 0.0
  %1538 = vadd.xlane.f32.xlu0 %v1537
  %v1539 = vpop.xlane.xlu0 %1538
  %v1540 = vsel %vm1389, %v1181, 0.0
  %1541 = vadd.xlane.f32.xlu0 %v1540
  %v1542 = vpop.xlane.xlu0 %1541
  %v1543 = vsel %vm1389, %v1187, 0.0
  %1544 = vadd.xlane.f32.xlu0 %v1543
  %v1545 = vpop.xlane.xlu0 %1544
  %v1546 = vsel %vm1389, %v1193, 0.0
  %1547 = vadd.xlane.f32.xlu0 %v1546
  %v1548 = vpop.xlane.xlu0 %1547
  %v1549 = vsel %vm1389, %v1199, 0.0
  %1550 = vadd.xlane.f32.xlu0 %v1549
  %v1551 = vpop.xlane.xlu0 %1550
  %v1552 = vsel %vm1389, %v1205, 0.0
  %1553 = vadd.xlane.f32.xlu0 %v1552
  %v1554 = vpop.xlane.xlu0 %1553
  %v1555 = vsel %vm1389, %v1211, 0.0
  %1556 = vadd.xlane.f32.xlu0 %v1555
  %v1557 = vpop.xlane.xlu0 %1556
  %v1558 = vsel %vm1389, %v1217, 0.0
  %1559 = vadd.xlane.f32.xlu0 %v1558
  %v1560 = vpop.xlane.xlu0 %1559
  %v1561 = vsel %vm1389, %v1223, 0.0
  %1562 = vadd.xlane.f32.xlu0 %v1561
  %v1563 = vpop.xlane.xlu0 %1562
  %v1564 = vsel %vm1389, %v1229, 0.0
  %1565 = vadd.xlane.f32.xlu0 %v1564
  %v1566 = vpop.xlane.xlu0 %1565
  %v1567 = vsel %vm1389, %v1235, 0.0
  %1568 = vadd.xlane.f32.xlu0 %v1567
  %v1569 = vpop.xlane.xlu0 %1568
  %v1570 = vsel %vm1389, %v1241, 0.0
  %1571 = vadd.xlane.f32.xlu0 %v1570
  %v1572 = vpop.xlane.xlu0 %1571
  %v1573 = vsel %vm1389, %v1247, 0.0
  %1574 = vadd.xlane.f32.xlu0 %v1573
  %v1575 = vpop.xlane.xlu0 %1574
  %v1576 = vsel %vm1389, %v1253, 0.0
  %1577 = vadd.xlane.f32.xlu0 %v1576
  %v1578 = vpop.xlane.xlu0 %1577
  %v1579 = vsel %vm1389, %v1259, 0.0
  %1580 = vadd.xlane.f32.xlu0 %v1579
  %v1581 = vpop.xlane.xlu0 %1580
  %v1582 = vmul.f32 %v1262, %v343
  %v1583 = vmul.f32 %v1264, %v344
  %v1584 = vmul.f32 %v1266, %v345
  %v1585 = vmul.f32 %v1268, %v346
  %v1586 = vmul.f32 %v1270, %v347
  %v1587 = vmul.f32 %v1272, %v348
  %v1588 = vmul.f32 %v1274, %v349
  %v1589 = vmul.f32 %v1276, %v350
  %v1590 = vmul.f32 %v1278, %v351
  %v1591 = vmul.f32 %v1280, %v352
  %v1592 = vmul.f32 %v1282, %v353
  %v1593 = vmul.f32 %v1284, %v354
  %v1594 = vmul.f32 %v1286, %v355
  %v1595 = vmul.f32 %v1288, %v356
  %v1596 = vmul.f32 %v1290, %v357
  %v1597 = vmul.f32 %v1292, %v358
  %v1598 = vmul.f32 %v1294, %v359
  %v1599 = vmul.f32 %v1296, %v360
  %v1600 = vmul.f32 %v1298, %v361
  %v1601 = vmul.f32 %v1300, %v362
  %v1602 = vmul.f32 %v1302, %v363
  %v1603 = vmul.f32 %v1304, %v364
  %v1604 = vmul.f32 %v1306, %v365
  %v1605 = vmul.f32 %v1308, %v366
  %v1606 = vmul.f32 %v1310, %v367
  %v1607 = vmul.f32 %v1312, %v368
  %v1608 = vmul.f32 %v1314, %v369
  %v1609 = vmul.f32 %v1316, %v370
  %v1610 = vmul.f32 %v1318, %v371
  %v1611 = vmul.f32 %v1320, %v372
  %v1612 = vmul.f32 %v1322, %v373
  %v1613 = vmul.f32 %v1324, %v374
  %v1614 = vmul.f32 %v1326, %v375
  %v1615 = vmul.f32 %v1328, %v376
  %v1616 = vmul.f32 %v1330, %v377
  %v1617 = vmul.f32 %v1332, %v378
  %v1618 = vmul.f32 %v1334, %v379
  %v1619 = vmul.f32 %v1336, %v380
  %v1620 = vmul.f32 %v1338, %v381
  %v1621 = vmul.f32 %v1340, %v382
  %v1622 = vmul.f32 %v1342, %v383
  %v1623 = vmul.f32 %v1344, %v384
  %v1624 = vmul.f32 %v1346, %v385
  %v1625 = vmul.f32 %v1348, %v386
  %v1626 = vmul.f32 %v1350, %v387
  %v1627 = vmul.f32 %v1352, %v388
  %v1628 = vmul.f32 %v1354, %v389
  %v1629 = vmul.f32 %v1356, %v390
  %v1630 = vmul.f32 %v1358, %v391
  %v1631 = vmul.f32 %v1360, %v392
  %v1632 = vmul.f32 %v1362, %v393
  %v1633 = vmul.f32 %v1364, %v394
  %v1634 = vmul.f32 %v1366, %v395
  %v1635 = vmul.f32 %v1368, %v396
  %v1636 = vmul.f32 %v1370, %v397
  %v1637 = vmul.f32 %v1372, %v398
  %v1638 = vmul.f32 %v1374, %v399
  %v1639 = vmul.f32 %v1376, %v400
  %v1640 = vmul.f32 %v1378, %v401
  %v1641 = vmul.f32 %v1380, %v402
  %v1642 = vmul.f32 %v1382, %v403
  %v1643 = vmul.f32 %v1384, %v404
  %v1644 = vmul.f32 %v1386, %v405
  %v1645 = vmul.f32 %v1388, %v406
  %v1646 = vmul.f32 %v1262, %v407
  %v1647 = vmul.f32 %v1264, %v408
  %v1648 = vmul.f32 %v1266, %v409
  %v1649 = vmul.f32 %v1268, %v410
  %v1650 = vmul.f32 %v1270, %v411
  %v1651 = vmul.f32 %v1272, %v412
  %v1652 = vmul.f32 %v1274, %v413
  %v1653 = vmul.f32 %v1276, %v414
  %v1654 = vmul.f32 %v1278, %v415
  %v1655 = vmul.f32 %v1280, %v416
  %v1656 = vmul.f32 %v1282, %v417
  %v1657 = vmul.f32 %v1284, %v418
  %v1658 = vmul.f32 %v1286, %v419
  %v1659 = vmul.f32 %v1288, %v420
  %v1660 = vmul.f32 %v1290, %v421
  %v1661 = vmul.f32 %v1292, %v422
  %v1662 = vmul.f32 %v1294, %v423
  %v1663 = vmul.f32 %v1296, %v424
  %v1664 = vmul.f32 %v1298, %v425
  %v1665 = vmul.f32 %v1300, %v426
  %v1666 = vmul.f32 %v1302, %v427
  %v1667 = vmul.f32 %v1304, %v428
  %v1668 = vmul.f32 %v1306, %v429
  %v1669 = vmul.f32 %v1308, %v430
  %v1670 = vmul.f32 %v1310, %v431
  %v1671 = vmul.f32 %v1312, %v432
  %v1672 = vmul.f32 %v1314, %v433
  %v1673 = vmul.f32 %v1316, %v434
  %v1674 = vmul.f32 %v1318, %v435
  %v1675 = vmul.f32 %v1320, %v436
  %v1676 = vmul.f32 %v1322, %v437
  %v1677 = vmul.f32 %v1324, %v438
  %v1678 = vmul.f32 %v1326, %v439
  %v1679 = vmul.f32 %v1328, %v440
  %v1680 = vmul.f32 %v1330, %v441
  %v1681 = vmul.f32 %v1332, %v442
  %v1682 = vmul.f32 %v1334, %v443
  %v1683 = vmul.f32 %v1336, %v444
  %v1684 = vmul.f32 %v1338, %v445
  %v1685 = vmul.f32 %v1340, %v446
  %v1686 = vmul.f32 %v1342, %v447
  %v1687 = vmul.f32 %v1344, %v448
  %v1688 = vmul.f32 %v1346, %v449
  %v1689 = vmul.f32 %v1348, %v450
  %v1690 = vmul.f32 %v1350, %v451
  %v1691 = vmul.f32 %v1352, %v452
  %v1692 = vmul.f32 %v1354, %v453
  %v1693 = vmul.f32 %v1356, %v454
  %v1694 = vmul.f32 %v1358, %v455
  %v1695 = vmul.f32 %v1360, %v456
  %v1696 = vmul.f32 %v1362, %v457
  %v1697 = vmul.f32 %v1364, %v458
  %v1698 = vmul.f32 %v1366, %v459
  %v1699 = vmul.f32 %v1368, %v460
  %v1700 = vmul.f32 %v1370, %v461
  %v1701 = vmul.f32 %v1372, %v462
  %v1702 = vmul.f32 %v1374, %v463
  %v1703 = vmul.f32 %v1376, %v464
  %v1704 = vmul.f32 %v1378, %v465
  %v1705 = vmul.f32 %v1380, %v466
  %v1706 = vmul.f32 %v1382, %v467
  %v1707 = vmul.f32 %v1384, %v468
  %v1708 = vmul.f32 %v1386, %v469
  %v1709 = vmul.f32 %v1388, %v470
  %v1710 = vmul.f32 %v1262, %v471
  %v1711 = vmul.f32 %v1264, %v472
  %v1712 = vmul.f32 %v1266, %v473
  %v1713 = vmul.f32 %v1268, %v474
  %v1714 = vmul.f32 %v1270, %v475
  %v1715 = vmul.f32 %v1272, %v476
  %v1716 = vmul.f32 %v1274, %v477
  %v1717 = vmul.f32 %v1276, %v478
  %v1718 = vmul.f32 %v1278, %v479
  %v1719 = vmul.f32 %v1280, %v480
  %v1720 = vmul.f32 %v1282, %v481
  %v1721 = vmul.f32 %v1284, %v482
  %v1722 = vmul.f32 %v1286, %v483
  %v1723 = vmul.f32 %v1288, %v484
  %v1724 = vmul.f32 %v1290, %v485
  %v1725 = vmul.f32 %v1292, %v486
  %v1726 = vmul.f32 %v1294, %v487
  %v1727 = vmul.f32 %v1296, %v488
  %v1728 = vmul.f32 %v1298, %v489
  %v1729 = vmul.f32 %v1300, %v490
  %v1730 = vmul.f32 %v1302, %v491
  %v1731 = vmul.f32 %v1304, %v492
  %v1732 = vmul.f32 %v1306, %v493
  %v1733 = vmul.f32 %v1308, %v494
  %v1734 = vmul.f32 %v1310, %v495
  %v1735 = vmul.f32 %v1312, %v496
  %v1736 = vmul.f32 %v1314, %v497
  %v1737 = vmul.f32 %v1316, %v498
  %v1738 = vmul.f32 %v1318, %v499
  %v1739 = vmul.f32 %v1320, %v500
  %v1740 = vmul.f32 %v1322, %v501
  %v1741 = vmul.f32 %v1324, %v502
  %v1742 = vmul.f32 %v1326, %v503
  %v1743 = vmul.f32 %v1328, %v504
  %v1744 = vmul.f32 %v1330, %v505
  %v1745 = vmul.f32 %v1332, %v506
  %v1746 = vmul.f32 %v1334, %v507
  %v1747 = vmul.f32 %v1336, %v508
  %v1748 = vmul.f32 %v1338, %v509
  %v1749 = vmul.f32 %v1340, %v510
  %v1750 = vmul.f32 %v1342, %v511
  %v1751 = vmul.f32 %v1344, %v512
  %v1752 = vmul.f32 %v1346, %v513
  %v1753 = vmul.f32 %v1348, %v514
  %v1754 = vmul.f32 %v1350, %v515
  %v1755 = vmul.f32 %v1352, %v516
  %v1756 = vmul.f32 %v1354, %v517
  %v1757 = vmul.f32 %v1356, %v518
  %v1758 = vmul.f32 %v1358, %v519
  %v1759 = vmul.f32 %v1360, %v520
  %v1760 = vmul.f32 %v1362, %v521
  %v1761 = vmul.f32 %v1364, %v522
  %v1762 = vmul.f32 %v1366, %v523
  %v1763 = vmul.f32 %v1368, %v524
  %v1764 = vmul.f32 %v1370, %v525
  %v1765 = vmul.f32 %v1372, %v526
  %v1766 = vmul.f32 %v1374, %v527
  %v1767 = vmul.f32 %v1376, %v528
  %v1768 = vmul.f32 %v1378, %v529
  %v1769 = vmul.f32 %v1380, %v530
  %v1770 = vmul.f32 %v1382, %v531
  %v1771 = vmul.f32 %v1384, %v532
  %v1772 = vmul.f32 %v1386, %v533
  %v1773 = vmul.f32 %v1388, %v534
  %v1774 = vmul.f32 %v1262, %v535
  %v1775 = vmul.f32 %v1264, %v536
  %v1776 = vmul.f32 %v1266, %v537
  %v1777 = vmul.f32 %v1268, %v538
  %v1778 = vmul.f32 %v1270, %v539
  %v1779 = vmul.f32 %v1272, %v540
  %v1780 = vmul.f32 %v1274, %v541
  %v1781 = vmul.f32 %v1276, %v542
  %v1782 = vmul.f32 %v1278, %v543
  %v1783 = vmul.f32 %v1280, %v544
  %v1784 = vmul.f32 %v1282, %v545
  %v1785 = vmul.f32 %v1284, %v546
  %v1786 = vmul.f32 %v1286, %v547
  %v1787 = vmul.f32 %v1288, %v548
  %v1788 = vmul.f32 %v1290, %v549
  %v1789 = vmul.f32 %v1292, %v550
  %v1790 = vmul.f32 %v1294, %v551
  %v1791 = vmul.f32 %v1296, %v552
  %v1792 = vmul.f32 %v1298, %v553
  %v1793 = vmul.f32 %v1300, %v554
  %v1794 = vmul.f32 %v1302, %v555
  %v1795 = vmul.f32 %v1304, %v556
  %v1796 = vmul.f32 %v1306, %v557
  %v1797 = vmul.f32 %v1308, %v558
  %v1798 = vmul.f32 %v1310, %v559
  %v1799 = vmul.f32 %v1312, %v560
  %v1800 = vmul.f32 %v1314, %v561
  %v1801 = vmul.f32 %v1316, %v562
  %v1802 = vmul.f32 %v1318, %v563
  %v1803 = vmul.f32 %v1320, %v564
  %v1804 = vmul.f32 %v1322, %v565
  %v1805 = vmul.f32 %v1324, %v566
  %v1806 = vmul.f32 %v1326, %v567
  %v1807 = vmul.f32 %v1328, %v568
  %v1808 = vmul.f32 %v1330, %v569
  %v1809 = vmul.f32 %v1332, %v570
  %v1810 = vmul.f32 %v1334, %v571
  %v1811 = vmul.f32 %v1336, %v572
  %v1812 = vmul.f32 %v1338, %v573
  %v1813 = vmul.f32 %v1340, %v574
  %v1814 = vmul.f32 %v1342, %v575
  %v1815 = vmul.f32 %v1344, %v576
  %v1816 = vmul.f32 %v1346, %v577
  %v1817 = vmul.f32 %v1348, %v578
  %v1818 = vmul.f32 %v1350, %v579
  %v1819 = vmul.f32 %v1352, %v580
  %v1820 = vmul.f32 %v1354, %v581
  %v1821 = vmul.f32 %v1356, %v582
  %v1822 = vmul.f32 %v1358, %v583
  %v1823 = vmul.f32 %v1360, %v584
  %v1824 = vmul.f32 %v1362, %v585
  %v1825 = vmul.f32 %v1364, %v586
  %v1826 = vmul.f32 %v1366, %v587
  %v1827 = vmul.f32 %v1368, %v588
  %v1828 = vmul.f32 %v1370, %v589
  %v1829 = vmul.f32 %v1372, %v590
  %v1830 = vmul.f32 %v1374, %v591
  %v1831 = vmul.f32 %v1376, %v592
  %v1832 = vmul.f32 %v1378, %v593
  %v1833 = vmul.f32 %v1380, %v594
  %v1834 = vmul.f32 %v1382, %v595
  %v1835 = vmul.f32 %v1384, %v596
  %v1836 = vmul.f32 %v1386, %v597
  %v1837 = vmul.f32 %v1388, %v598
  %v1838 = vadd.f32 %v879, %v1582
  %v1839 = vadd.f32 %v885, %v1583
  %v1840 = vadd.f32 %v891, %v1584
  %v1841 = vadd.f32 %v897, %v1585
  %v1842 = vadd.f32 %v903, %v1586
  %v1843 = vadd.f32 %v909, %v1587
  %v1844 = vadd.f32 %v915, %v1588
  %v1845 = vadd.f32 %v921, %v1589
  %v1846 = vadd.f32 %v927, %v1590
  %v1847 = vadd.f32 %v933, %v1591
  %v1848 = vadd.f32 %v939, %v1592
  %v1849 = vadd.f32 %v945, %v1593
  %v1850 = vadd.f32 %v951, %v1594
  %v1851 = vadd.f32 %v957, %v1595
  %v1852 = vadd.f32 %v963, %v1596
  %v1853 = vadd.f32 %v969, %v1597
  %v1854 = vadd.f32 %v975, %v1598
  %v1855 = vadd.f32 %v981, %v1599
  %v1856 = vadd.f32 %v987, %v1600
  %v1857 = vadd.f32 %v993, %v1601
  %v1858 = vadd.f32 %v999, %v1602
  %v1859 = vadd.f32 %v1005, %v1603
  %v1860 = vadd.f32 %v1011, %v1604
  %v1861 = vadd.f32 %v1017, %v1605
  %v1862 = vadd.f32 %v1023, %v1606
  %v1863 = vadd.f32 %v1029, %v1607
  %v1864 = vadd.f32 %v1035, %v1608
  %v1865 = vadd.f32 %v1041, %v1609
  %v1866 = vadd.f32 %v1047, %v1610
  %v1867 = vadd.f32 %v1053, %v1611
  %v1868 = vadd.f32 %v1059, %v1612
  %v1869 = vadd.f32 %v1065, %v1613
  %v1870 = vadd.f32 %v1071, %v1614
  %v1871 = vadd.f32 %v1077, %v1615
  %v1872 = vadd.f32 %v1083, %v1616
  %v1873 = vadd.f32 %v1089, %v1617
  %v1874 = vadd.f32 %v1095, %v1618
  %v1875 = vadd.f32 %v1101, %v1619
  %v1876 = vadd.f32 %v1107, %v1620
  %v1877 = vadd.f32 %v1113, %v1621
  %v1878 = vadd.f32 %v1119, %v1622
  %v1879 = vadd.f32 %v1125, %v1623
  %v1880 = vadd.f32 %v1131, %v1624
  %v1881 = vadd.f32 %v1137, %v1625
  %v1882 = vadd.f32 %v1143, %v1626
  %v1883 = vadd.f32 %v1149, %v1627
  %v1884 = vadd.f32 %v1155, %v1628
  %v1885 = vadd.f32 %v1161, %v1629
  %v1886 = vadd.f32 %v1167, %v1630
  %v1887 = vadd.f32 %v1173, %v1631
  %v1888 = vadd.f32 %v1179, %v1632
  %v1889 = vadd.f32 %v1185, %v1633
  %v1890 = vadd.f32 %v1191, %v1634
  %v1891 = vadd.f32 %v1197, %v1635
  %v1892 = vadd.f32 %v1203, %v1636
  %v1893 = vadd.f32 %v1209, %v1637
  %v1894 = vadd.f32 %v1215, %v1638
  %v1895 = vadd.f32 %v1221, %v1639
  %v1896 = vadd.f32 %v1227, %v1640
  %v1897 = vadd.f32 %v1233, %v1641
  %v1898 = vadd.f32 %v1239, %v1642
  %v1899 = vadd.f32 %v1245, %v1643
  %v1900 = vadd.f32 %v1251, %v1644
  %v1901 = vadd.f32 %v1257, %v1645
  %v1902 = vadd.f32 %v879, %v1646
  %v1903 = vadd.f32 %v885, %v1647
  %v1904 = vadd.f32 %v891, %v1648
  %v1905 = vadd.f32 %v897, %v1649
  %v1906 = vadd.f32 %v903, %v1650
  %v1907 = vadd.f32 %v909, %v1651
  %v1908 = vadd.f32 %v915, %v1652
  %v1909 = vadd.f32 %v921, %v1653
  %v1910 = vadd.f32 %v927, %v1654
  %v1911 = vadd.f32 %v933, %v1655
  %v1912 = vadd.f32 %v939, %v1656
  %v1913 = vadd.f32 %v945, %v1657
  %v1914 = vadd.f32 %v951, %v1658
  %v1915 = vadd.f32 %v957, %v1659
  %v1916 = vadd.f32 %v963, %v1660
  %v1917 = vadd.f32 %v969, %v1661
  %v1918 = vadd.f32 %v975, %v1662
  %v1919 = vadd.f32 %v981, %v1663
  %v1920 = vadd.f32 %v987, %v1664
  %v1921 = vadd.f32 %v993, %v1665
  %v1922 = vadd.f32 %v999, %v1666
  %v1923 = vadd.f32 %v1005, %v1667
  %v1924 = vadd.f32 %v1011, %v1668
  %v1925 = vadd.f32 %v1017, %v1669
  %v1926 = vadd.f32 %v1023, %v1670
  %v1927 = vadd.f32 %v1029, %v1671
  %v1928 = vadd.f32 %v1035, %v1672
  %v1929 = vadd.f32 %v1041, %v1673
  %v1930 = vadd.f32 %v1047, %v1674
  %v1931 = vadd.f32 %v1053, %v1675
  %v1932 = vadd.f32 %v1059, %v1676
  %v1933 = vadd.f32 %v1065, %v1677
  %v1934 = vadd.f32 %v1071, %v1678
  %v1935 = vadd.f32 %v1077, %v1679
  %v1936 = vadd.f32 %v1083, %v1680
  %v1937 = vadd.f32 %v1089, %v1681
  %v1938 = vadd.f32 %v1095, %v1682
  %v1939 = vadd.f32 %v1101, %v1683
  %v1940 = vadd.f32 %v1107, %v1684
  %v1941 = vadd.f32 %v1113, %v1685
  %v1942 = vadd.f32 %v1119, %v1686
  %v1943 = vadd.f32 %v1125, %v1687
  %v1944 = vadd.f32 %v1131, %v1688
  %v1945 = vadd.f32 %v1137, %v1689
  %v1946 = vadd.f32 %v1143, %v1690
  %v1947 = vadd.f32 %v1149, %v1691
  %v1948 = vadd.f32 %v1155, %v1692
  %v1949 = vadd.f32 %v1161, %v1693
  %v1950 = vadd.f32 %v1167, %v1694
  %v1951 = vadd.f32 %v1173, %v1695
  %v1952 = vadd.f32 %v1179, %v1696
  %v1953 = vadd.f32 %v1185, %v1697
  %v1954 = vadd.f32 %v1191, %v1698
  %v1955 = vadd.f32 %v1197, %v1699
  %v1956 = vadd.f32 %v1203, %v1700
  %v1957 = vadd.f32 %v1209, %v1701
  %v1958 = vadd.f32 %v1215, %v1702
  %v1959 = vadd.f32 %v1221, %v1703
  %v1960 = vadd.f32 %v1227, %v1704
  %v1961 = vadd.f32 %v1233, %v1705
  %v1962 = vadd.f32 %v1239, %v1706
  %v1963 = vadd.f32 %v1245, %v1707
  %v1964 = vadd.f32 %v1251, %v1708
  %v1965 = vadd.f32 %v1257, %v1709
  %v1966 = vadd.f32 %v879, %v1710
  %v1967 = vadd.f32 %v885, %v1711
  %v1968 = vadd.f32 %v891, %v1712
  %v1969 = vadd.f32 %v897, %v1713
  %v1970 = vadd.f32 %v903, %v1714
  %v1971 = vadd.f32 %v909, %v1715
  %v1972 = vadd.f32 %v915, %v1716
  %v1973 = vadd.f32 %v921, %v1717
  %v1974 = vadd.f32 %v927, %v1718
  %v1975 = vadd.f32 %v933, %v1719
  %v1976 = vadd.f32 %v939, %v1720
  %v1977 = vadd.f32 %v945, %v1721
  %v1978 = vadd.f32 %v951, %v1722
  %v1979 = vadd.f32 %v957, %v1723
  %v1980 = vadd.f32 %v963, %v1724
  %v1981 = vadd.f32 %v969, %v1725
  %v1982 = vadd.f32 %v975, %v1726
  %v1983 = vadd.f32 %v981, %v1727
  %v1984 = vadd.f32 %v987, %v1728
  %v1985 = vadd.f32 %v993, %v1729
  %v1986 = vadd.f32 %v999, %v1730
  %v1987 = vadd.f32 %v1005, %v1731
  %v1988 = vadd.f32 %v1011, %v1732
  %v1989 = vadd.f32 %v1017, %v1733
  %v1990 = vadd.f32 %v1023, %v1734
  %v1991 = vadd.f32 %v1029, %v1735
  %v1992 = vadd.f32 %v1035, %v1736
  %v1993 = vadd.f32 %v1041, %v1737
  %v1994 = vadd.f32 %v1047, %v1738
  %v1995 = vadd.f32 %v1053, %v1739
  %v1996 = vadd.f32 %v1059, %v1740
  %v1997 = vadd.f32 %v1065, %v1741
  %v1998 = vadd.f32 %v1071, %v1742
  %v1999 = vadd.f32 %v1077, %v1743
  %v2000 = vadd.f32 %v1083, %v1744
  %v2001 = vadd.f32 %v1089, %v1745
  %v2002 = vadd.f32 %v1095, %v1746
  %v2003 = vadd.f32 %v1101, %v1747
  %v2004 = vadd.f32 %v1107, %v1748
  %v2005 = vadd.f32 %v1113, %v1749
  %v2006 = vadd.f32 %v1119, %v1750
  %v2007 = vadd.f32 %v1125, %v1751
  %v2008 = vadd.f32 %v1131, %v1752
  %v2009 = vadd.f32 %v1137, %v1753
  %v2010 = vadd.f32 %v1143, %v1754
  %v2011 = vadd.f32 %v1149, %v1755
  %v2012 = vadd.f32 %v1155, %v1756
  %v2013 = vadd.f32 %v1161, %v1757
  %v2014 = vadd.f32 %v1167, %v1758
  %v2015 = vadd.f32 %v1173, %v1759
  %v2016 = vadd.f32 %v1179, %v1760
  %v2017 = vadd.f32 %v1185, %v1761
  %v2018 = vadd.f32 %v1191, %v1762
  %v2019 = vadd.f32 %v1197, %v1763
  %v2020 = vadd.f32 %v1203, %v1764
  %v2021 = vadd.f32 %v1209, %v1765
  %v2022 = vadd.f32 %v1215, %v1766
  %v2023 = vadd.f32 %v1221, %v1767
  %v2024 = vadd.f32 %v1227, %v1768
  %v2025 = vadd.f32 %v1233, %v1769
  %v2026 = vadd.f32 %v1239, %v1770
  %v2027 = vadd.f32 %v1245, %v1771
  %v2028 = vadd.f32 %v1251, %v1772
  %v2029 = vadd.f32 %v1257, %v1773
  %v2030 = vadd.f32 %v879, %v1774
  %v2031 = vadd.f32 %v885, %v1775
  %v2032 = vadd.f32 %v891, %v1776
  %v2033 = vadd.f32 %v897, %v1777
  %v2034 = vadd.f32 %v903, %v1778
  %v2035 = vadd.f32 %v909, %v1779
  %v2036 = vadd.f32 %v915, %v1780
  %v2037 = vadd.f32 %v921, %v1781
  %v2038 = vadd.f32 %v927, %v1782
  %v2039 = vadd.f32 %v933, %v1783
  %v2040 = vadd.f32 %v939, %v1784
  %v2041 = vadd.f32 %v945, %v1785
  %v2042 = vadd.f32 %v951, %v1786
  %v2043 = vadd.f32 %v957, %v1787
  %v2044 = vadd.f32 %v963, %v1788
  %v2045 = vadd.f32 %v969, %v1789
  %v2046 = vadd.f32 %v975, %v1790
  %v2047 = vadd.f32 %v981, %v1791
  %v2048 = vadd.f32 %v987, %v1792
  %v2049 = vadd.f32 %v993, %v1793
  %v2050 = vadd.f32 %v999, %v1794
  %v2051 = vadd.f32 %v1005, %v1795
  %v2052 = vadd.f32 %v1011, %v1796
  %v2053 = vadd.f32 %v1017, %v1797
  %v2054 = vadd.f32 %v1023, %v1798
  %v2055 = vadd.f32 %v1029, %v1799
  %v2056 = vadd.f32 %v1035, %v1800
  %v2057 = vadd.f32 %v1041, %v1801
  %v2058 = vadd.f32 %v1047, %v1802
  %v2059 = vadd.f32 %v1053, %v1803
  %v2060 = vadd.f32 %v1059, %v1804
  %v2061 = vadd.f32 %v1065, %v1805
  %v2062 = vadd.f32 %v1071, %v1806
  %v2063 = vadd.f32 %v1077, %v1807
  %v2064 = vadd.f32 %v1083, %v1808
  %v2065 = vadd.f32 %v1089, %v1809
  %v2066 = vadd.f32 %v1095, %v1810
  %v2067 = vadd.f32 %v1101, %v1811
  %v2068 = vadd.f32 %v1107, %v1812
  %v2069 = vadd.f32 %v1113, %v1813
  %v2070 = vadd.f32 %v1119, %v1814
  %v2071 = vadd.f32 %v1125, %v1815
  %v2072 = vadd.f32 %v1131, %v1816
  %v2073 = vadd.f32 %v1137, %v1817
  %v2074 = vadd.f32 %v1143, %v1818
  %v2075 = vadd.f32 %v1149, %v1819
  %v2076 = vadd.f32 %v1155, %v1820
  %v2077 = vadd.f32 %v1161, %v1821
  %v2078 = vadd.f32 %v1167, %v1822
  %v2079 = vadd.f32 %v1173, %v1823
  %v2080 = vadd.f32 %v1179, %v1824
  %v2081 = vadd.f32 %v1185, %v1825
  %v2082 = vadd.f32 %v1191, %v1826
  %v2083 = vadd.f32 %v1197, %v1827
  %v2084 = vadd.f32 %v1203, %v1828
  %v2085 = vadd.f32 %v1209, %v1829
  %v2086 = vadd.f32 %v1215, %v1830
  %v2087 = vadd.f32 %v1221, %v1831
  %v2088 = vadd.f32 %v1227, %v1832
  %v2089 = vadd.f32 %v1233, %v1833
  %v2090 = vadd.f32 %v1239, %v1834
  %v2091 = vadd.f32 %v1245, %v1835
  %v2092 = vadd.f32 %v1251, %v1836
  %v2093 = vadd.f32 %v1257, %v1837
  %v2094 = vld [vmem:[%s4] sm:$0xff]
  %v2095 = vld [vmem:[%s4 + $0x8] sm:$0xff]
  %v2096 = vld [vmem:[%s5] sm:$0x1]
  %v2098 = vlaneseq
  %v2099 = vshrl.u32 %v2098, 7
  %v2100 = vsub.s32 0, %v2099
  %v2101 = vrot.slane %v2096, %v2100
  %v2104 = vsel %vm1389, %v1838, 0
  %v2107 = vsel %vm1389, %v1839, 0
  %v2110 = vsel %vm1389, %v1840, 0
  %v2113 = vsel %vm1389, %v1841, 0
  %v2116 = vsel %vm1389, %v1842, 0
  %v2119 = vsel %vm1389, %v1843, 0
  %v2122 = vsel %vm1389, %v1844, 0
  %v2125 = vsel %vm1389, %v1845, 0
  %v2128 = vsel %vm1389, %v1846, 0
  %v2131 = vsel %vm1389, %v1847, 0
  %v2134 = vsel %vm1389, %v1848, 0
  %v2137 = vsel %vm1389, %v1849, 0
  %v2140 = vsel %vm1389, %v1850, 0
  %v2143 = vsel %vm1389, %v1851, 0
  %v2146 = vsel %vm1389, %v1852, 0
  %v2149 = vsel %vm1389, %v1853, 0
  %v2152 = vsel %vm1389, %v1854, 0
  %v2155 = vsel %vm1389, %v1855, 0
  %v2158 = vsel %vm1389, %v1856, 0
  %v2161 = vsel %vm1389, %v1857, 0
  %v2164 = vsel %vm1389, %v1858, 0
  %v2167 = vsel %vm1389, %v1859, 0
  %v2170 = vsel %vm1389, %v1860, 0
  %v2173 = vsel %vm1389, %v1861, 0
  %v2176 = vsel %vm1389, %v1862, 0
  %v2179 = vsel %vm1389, %v1863, 0
  %v2182 = vsel %vm1389, %v1864, 0
  %v2185 = vsel %vm1389, %v1865, 0
  %v2188 = vsel %vm1389, %v1866, 0
  %v2191 = vsel %vm1389, %v1867, 0
  %v2194 = vsel %vm1389, %v1868, 0
  %v2197 = vsel %vm1389, %v1869, 0
  %v2200 = vsel %vm1389, %v1870, 0
  %v2203 = vsel %vm1389, %v1871, 0
  %v2206 = vsel %vm1389, %v1872, 0
  %v2209 = vsel %vm1389, %v1873, 0
  %v2212 = vsel %vm1389, %v1874, 0
  %v2215 = vsel %vm1389, %v1875, 0
  %v2218 = vsel %vm1389, %v1876, 0
  %v2221 = vsel %vm1389, %v1877, 0
  %v2224 = vsel %vm1389, %v1878, 0
  %v2227 = vsel %vm1389, %v1879, 0
  %v2230 = vsel %vm1389, %v1880, 0
  %v2233 = vsel %vm1389, %v1881, 0
  %v2236 = vsel %vm1389, %v1882, 0
  %v2239 = vsel %vm1389, %v1883, 0
  %v2242 = vsel %vm1389, %v1884, 0
  %v2245 = vsel %vm1389, %v1885, 0
  %v2248 = vsel %vm1389, %v1886, 0
  %v2251 = vsel %vm1389, %v1887, 0
  %v2254 = vsel %vm1389, %v1888, 0
  %v2257 = vsel %vm1389, %v1889, 0
  %v2260 = vsel %vm1389, %v1890, 0
  %v2263 = vsel %vm1389, %v1891, 0
  %v2266 = vsel %vm1389, %v1892, 0
  %v2269 = vsel %vm1389, %v1893, 0
  %v2272 = vsel %vm1389, %v1894, 0
  %v2275 = vsel %vm1389, %v1895, 0
  %v2278 = vsel %vm1389, %v1896, 0
  %v2281 = vsel %vm1389, %v1897, 0
  %v2284 = vsel %vm1389, %v1898, 0
  %v2287 = vsel %vm1389, %v1899, 0
  %v2290 = vsel %vm1389, %v1900, 0
  %v2293 = vsel %vm1389, %v1901, 0
  %v2296 = vsel %vm1389, %v1902, 0
  %v2299 = vsel %vm1389, %v1903, 0
  %v2302 = vsel %vm1389, %v1904, 0
  %v2305 = vsel %vm1389, %v1905, 0
  %v2308 = vsel %vm1389, %v1906, 0
  %v2311 = vsel %vm1389, %v1907, 0
  %v2314 = vsel %vm1389, %v1908, 0
  %v2317 = vsel %vm1389, %v1909, 0
  %v2320 = vsel %vm1389, %v1910, 0
  %v2323 = vsel %vm1389, %v1911, 0
  %v2326 = vsel %vm1389, %v1912, 0
  %v2329 = vsel %vm1389, %v1913, 0
  %v2332 = vsel %vm1389, %v1914, 0
  %v2335 = vsel %vm1389, %v1915, 0
  %v2338 = vsel %vm1389, %v1916, 0
  %v2341 = vsel %vm1389, %v1917, 0
  %v2344 = vsel %vm1389, %v1918, 0
  %v2347 = vsel %vm1389, %v1919, 0
  %v2350 = vsel %vm1389, %v1920, 0
  %v2353 = vsel %vm1389, %v1921, 0
  %v2356 = vsel %vm1389, %v1922, 0
  %v2359 = vsel %vm1389, %v1923, 0
  %v2362 = vsel %vm1389, %v1924, 0
  %v2365 = vsel %vm1389, %v1925, 0
  %v2368 = vsel %vm1389, %v1926, 0
  %v2371 = vsel %vm1389, %v1927, 0
  %v2374 = vsel %vm1389, %v1928, 0
  %v2377 = vsel %vm1389, %v1929, 0
  %v2380 = vsel %vm1389, %v1930, 0
  %v2383 = vsel %vm1389, %v1931, 0
  %v2386 = vsel %vm1389, %v1932, 0
  %v2389 = vsel %vm1389, %v1933, 0
  %v2392 = vsel %vm1389, %v1934, 0
  %v2395 = vsel %vm1389, %v1935, 0
  %v2398 = vsel %vm1389, %v1936, 0
  %v2401 = vsel %vm1389, %v1937, 0
  %v2404 = vsel %vm1389, %v1938, 0
  %v2407 = vsel %vm1389, %v1939, 0
  %v2410 = vsel %vm1389, %v1940, 0
  %v2413 = vsel %vm1389, %v1941, 0
  %v2416 = vsel %vm1389, %v1942, 0
  %v2419 = vsel %vm1389, %v1943, 0
  %v2422 = vsel %vm1389, %v1944, 0
  %v2425 = vsel %vm1389, %v1945, 0
  %v2428 = vsel %vm1389, %v1946, 0
  %v2431 = vsel %vm1389, %v1947, 0
  %v2434 = vsel %vm1389, %v1948, 0
  %v2437 = vsel %vm1389, %v1949, 0
  %v2440 = vsel %vm1389, %v1950, 0
  %v2443 = vsel %vm1389, %v1951, 0
  %v2446 = vsel %vm1389, %v1952, 0
  %v2449 = vsel %vm1389, %v1953, 0
  %v2452 = vsel %vm1389, %v1954, 0
  %v2455 = vsel %vm1389, %v1955, 0
  %v2458 = vsel %vm1389, %v1956, 0
  %v2461 = vsel %vm1389, %v1957, 0
  %v2464 = vsel %vm1389, %v1958, 0
  %v2467 = vsel %vm1389, %v1959, 0
  %v2470 = vsel %vm1389, %v1960, 0
  %v2473 = vsel %vm1389, %v1961, 0
  %v2476 = vsel %vm1389, %v1962, 0
  %v2479 = vsel %vm1389, %v1963, 0
  %v2482 = vsel %vm1389, %v1964, 0
  %v2485 = vsel %vm1389, %v1965, 0
  %v2488 = vsel %vm1389, %v1966, 0
  %v2491 = vsel %vm1389, %v1967, 0
  %v2494 = vsel %vm1389, %v1968, 0
  %v2497 = vsel %vm1389, %v1969, 0
  %v2500 = vsel %vm1389, %v1970, 0
  %v2503 = vsel %vm1389, %v1971, 0
  %v2506 = vsel %vm1389, %v1972, 0
  %v2509 = vsel %vm1389, %v1973, 0
  %v2512 = vsel %vm1389, %v1974, 0
  %v2515 = vsel %vm1389, %v1975, 0
  %v2518 = vsel %vm1389, %v1976, 0
  %v2521 = vsel %vm1389, %v1977, 0
  %v2524 = vsel %vm1389, %v1978, 0
  %v2527 = vsel %vm1389, %v1979, 0
  %v2530 = vsel %vm1389, %v1980, 0
  %v2533 = vsel %vm1389, %v1981, 0
  %v2536 = vsel %vm1389, %v1982, 0
  %v2539 = vsel %vm1389, %v1983, 0
  %v2542 = vsel %vm1389, %v1984, 0
  %v2545 = vsel %vm1389, %v1985, 0
  %v2548 = vsel %vm1389, %v1986, 0
  %v2551 = vsel %vm1389, %v1987, 0
  %v2554 = vsel %vm1389, %v1988, 0
  %v2557 = vsel %vm1389, %v1989, 0
  %v2560 = vsel %vm1389, %v1990, 0
  %v2563 = vsel %vm1389, %v1991, 0
  %v2566 = vsel %vm1389, %v1992, 0
  %v2569 = vsel %vm1389, %v1993, 0
  %v2572 = vsel %vm1389, %v1994, 0
  %v2575 = vsel %vm1389, %v1995, 0
  %v2578 = vsel %vm1389, %v1996, 0
  %v2581 = vsel %vm1389, %v1997, 0
  %v2584 = vsel %vm1389, %v1998, 0
  %v2587 = vsel %vm1389, %v1999, 0
  %v2590 = vsel %vm1389, %v2000, 0
  %v2593 = vsel %vm1389, %v2001, 0
  %v2596 = vsel %vm1389, %v2002, 0
  %v2599 = vsel %vm1389, %v2003, 0
  %v2602 = vsel %vm1389, %v2004, 0
  %v2605 = vsel %vm1389, %v2005, 0
  %v2608 = vsel %vm1389, %v2006, 0
  %v2611 = vsel %vm1389, %v2007, 0
  %v2614 = vsel %vm1389, %v2008, 0
  %v2617 = vsel %vm1389, %v2009, 0
  %v2620 = vsel %vm1389, %v2010, 0
  %v2623 = vsel %vm1389, %v2011, 0
  %v2626 = vsel %vm1389, %v2012, 0
  %v2629 = vsel %vm1389, %v2013, 0
  %v2632 = vsel %vm1389, %v2014, 0
  %v2635 = vsel %vm1389, %v2015, 0
  %v2638 = vsel %vm1389, %v2016, 0
  %v2641 = vsel %vm1389, %v2017, 0
  %v2644 = vsel %vm1389, %v2018, 0
  %v2647 = vsel %vm1389, %v2019, 0
  %v2650 = vsel %vm1389, %v2020, 0
  %v2653 = vsel %vm1389, %v2021, 0
  %v2656 = vsel %vm1389, %v2022, 0
  %v2659 = vsel %vm1389, %v2023, 0
  %v2662 = vsel %vm1389, %v2024, 0
  %v2665 = vsel %vm1389, %v2025, 0
  %v2668 = vsel %vm1389, %v2026, 0
  %v2671 = vsel %vm1389, %v2027, 0
  %v2674 = vsel %vm1389, %v2028, 0
  %v2677 = vsel %vm1389, %v2029, 0
  %v2680 = vsel %vm1389, %v2030, 0
  %v2683 = vsel %vm1389, %v2031, 0
  %v2686 = vsel %vm1389, %v2032, 0
  %v2689 = vsel %vm1389, %v2033, 0
  %v2692 = vsel %vm1389, %v2034, 0
  %v2695 = vsel %vm1389, %v2035, 0
  %v2698 = vsel %vm1389, %v2036, 0
  %v2701 = vsel %vm1389, %v2037, 0
  %v2704 = vsel %vm1389, %v2038, 0
  %v2707 = vsel %vm1389, %v2039, 0
  %v2710 = vsel %vm1389, %v2040, 0
  %v2713 = vsel %vm1389, %v2041, 0
  %v2716 = vsel %vm1389, %v2042, 0
  %v2719 = vsel %vm1389, %v2043, 0
  %v2722 = vsel %vm1389, %v2044, 0
  %v2725 = vsel %vm1389, %v2045, 0
  %v2728 = vsel %vm1389, %v2046, 0
  %v2731 = vsel %vm1389, %v2047, 0
  %v2734 = vsel %vm1389, %v2048, 0
  %v2737 = vsel %vm1389, %v2049, 0
  %v2740 = vsel %vm1389, %v2050, 0
  %v2743 = vsel %vm1389, %v2051, 0
  %v2746 = vsel %vm1389, %v2052, 0
  %v2749 = vsel %vm1389, %v2053, 0
  %v2752 = vsel %vm1389, %v2054, 0
  %v2755 = vsel %vm1389, %v2055, 0
  %v2758 = vsel %vm1389, %v2056, 0
  %v2761 = vsel %vm1389, %v2057, 0
  %v2764 = vsel %vm1389, %v2058, 0
  %v2767 = vsel %vm1389, %v2059, 0
  %v2770 = vsel %vm1389, %v2060, 0
  %v2773 = vsel %vm1389, %v2061, 0
  %v2776 = vsel %vm1389, %v2062, 0
  %v2779 = vsel %vm1389, %v2063, 0
  %v2782 = vsel %vm1389, %v2064, 0
  %v2785 = vsel %vm1389, %v2065, 0
  %v2788 = vsel %vm1389, %v2066, 0
  %v2791 = vsel %vm1389, %v2067, 0
  %v2794 = vsel %vm1389, %v2068, 0
  %v2797 = vsel %vm1389, %v2069, 0
  %v2800 = vsel %vm1389, %v2070, 0
  %v2803 = vsel %vm1389, %v2071, 0
  %v2806 = vsel %vm1389, %v2072, 0
  %v2809 = vsel %vm1389, %v2073, 0
  %v2812 = vsel %vm1389, %v2074, 0
  %v2815 = vsel %vm1389, %v2075, 0
  %v2818 = vsel %vm1389, %v2076, 0
  %v2821 = vsel %vm1389, %v2077, 0
  %v2824 = vsel %vm1389, %v2078, 0
  %v2827 = vsel %vm1389, %v2079, 0
  %v2830 = vsel %vm1389, %v2080, 0
  %v2833 = vsel %vm1389, %v2081, 0
  %v2836 = vsel %vm1389, %v2082, 0
  %v2839 = vsel %vm1389, %v2083, 0
  %v2842 = vsel %vm1389, %v2084, 0
  %v2845 = vsel %vm1389, %v2085, 0
  %v2848 = vsel %vm1389, %v2086, 0
  %v2851 = vsel %vm1389, %v2087, 0
  %v2854 = vsel %vm1389, %v2088, 0
  %v2857 = vsel %vm1389, %v2089, 0
  %v2860 = vsel %vm1389, %v2090, 0
  %v2863 = vsel %vm1389, %v2091, 0
  %v2866 = vsel %vm1389, %v2092, 0
  %v2869 = vsel %vm1389, %v2093, 0
  %2871 = vmatprep.subr.mxu0 0.0
  %2872 = vmatpush1.msra.mxu0 0.0
  %2873 = vmatprep.subr.mxu0 0.0
  %2874 = vmatpush1.msra.mxu0 0.0
  %2875 = vmatprep.subr.mxu0 0.0
  %2876 = vmatpush1.msra.mxu0 0.0
  %2877 = vmatprep.subr.mxu0 0.0
  %2878 = vmatpush1.msra.mxu0 0.0
  %2879 = vmatprep.subr.mxu0 0.0
  %2880 = vmatpush1.msra.mxu0 0.0
  %2881 = vmatprep.subr.mxu0 0.0
  %2882 = vmatpush1.msra.mxu0 0.0
  %2883 = vmatprep.subr.mxu0 0.0
  %2884 = vmatpush1.msra.mxu0 0.0
  %2885 = vmatprep.subr.mxu0 0.0
  %2886 = vmatpush1.msra.mxu0 0.0
  %2887 = vmatprep.subr.mxu0 0.0
  %2888 = vmatpush1.msra.mxu0 0.0
  %2889 = vmatprep.subr.mxu0 0.0
  %2890 = vmatpush1.msra.mxu0 0.0
  %2891 = vmatprep.subr.mxu0 0.0
  %2892 = vmatpush1.msra.mxu0 0.0
  %2893 = vmatprep.subr.mxu0 0.0
  %2894 = vmatpush1.msra.mxu0 0.0
  %2895 = vmatprep.subr.mxu0 0.0
  %2896 = vmatpush1.msra.mxu0 0.0
  %2897 = vmatprep.subr.mxu0 0.0
  %2898 = vmatpush1.msra.mxu0 0.0
  %2899 = vmatprep.subr.mxu0 0.0
  %2900 = vmatpush1.msra.mxu0 %v2095
  %2901 = vmatprep.subr.mxu0 0.0
  %2902 = vmatpush1.msra.mxu0 %v2094
  %2903 = vmatprep.subr.mxu0 0.0
  %2904 = vmatpush2.msra.mxu0 0.0
  %2905 = vmatprep.subr.mxu0 0.0
  %2906 = vmatpush2.msra.mxu0 0.0
  %2907 = vmatprep.subr.mxu0 0.0
  %2908 = vmatpush2.msra.mxu0 0.0
  %2909 = vmatprep.subr.mxu0 0.0
  %2910 = vmatpush2.msra.mxu0 0.0
  %2911 = vmatprep.subr.mxu0 0.0
  %2912 = vmatpush2.msra.mxu0 0.0
  %2913 = vmatprep.subr.mxu0 0.0
  %2914 = vmatpush2.msra.mxu0 0.0
  %2915 = vmatprep.subr.mxu0 0.0
  %2916 = vmatpush2.msra.mxu0 0.0
  %2917 = vmatprep.subr.mxu0 0.0
  %2918 = vmatpush2.msra.mxu0 0.0
  %2919 = vmatprep.subr.mxu0 0.0
  %2920 = vmatpush2.msra.mxu0 0.0
  %2921 = vmatprep.subr.mxu0 0.0
  %2922 = vmatpush2.msra.mxu0 0.0
  %2923 = vmatprep.subr.mxu0 0.0
  %2924 = vmatpush2.msra.mxu0 0.0
  %2925 = vmatprep.subr.mxu0 0.0
  %2926 = vmatpush2.msra.mxu0 0.0
  %2927 = vmatprep.subr.mxu0 0.0
  %2928 = vmatpush2.msra.mxu0 0.0
  %2929 = vmatprep.subr.mxu0 0.0
  %2930 = vmatpush2.msra.mxu0 0.0
  %2931 = vmatprep.subr.mxu0 0.0
  %2932 = vmatpush2.msra.mxu0 0.0
  %2933 = vmatprep.subr.mxu0 0.0
  %2934 = vmatpush2.msra.mxu0 0.0
  %2935 = vmatprep.mubr.f32.mxu0 0.0
  %2936 = vmatmul.mubr.f32.gmra.mxu0 %v2104
  %v2937 = vpop.f32.mrf.mxu0
  %v2938 = vadd.f32 %v2101, %v2937
  %v2939 = vpop.f32.mrf.mxu0
  %2940 = vmatprep.mubr.f32.mxu0 0.0
  %2941 = vmatmul.mubr.f32.gmra.mxu0 %v2107
  %v2942 = vpop.f32.mrf.mxu0
  %v2943 = vadd.f32 %v2101, %v2942
  %v2944 = vpop.f32.mrf.mxu0
  %2945 = vmatprep.mubr.f32.mxu0 0.0
  %2946 = vmatmul.mubr.f32.gmra.mxu0 %v2110
  %v2947 = vpop.f32.mrf.mxu0
  %v2948 = vadd.f32 %v2101, %v2947
  %v2949 = vpop.f32.mrf.mxu0
  %2950 = vmatprep.mubr.f32.mxu0 0.0
  %2951 = vmatmul.mubr.f32.gmra.mxu0 %v2113
  %v2952 = vpop.f32.mrf.mxu0
  %v2953 = vadd.f32 %v2101, %v2952
  %v2954 = vpop.f32.mrf.mxu0
  %2955 = vmatprep.mubr.f32.mxu0 0.0
  %2956 = vmatmul.mubr.f32.gmra.mxu0 %v2116
  %v2957 = vpop.f32.mrf.mxu0
  %v2958 = vadd.f32 %v2101, %v2957
  %v2959 = vpop.f32.mrf.mxu0
  %2960 = vmatprep.mubr.f32.mxu0 0.0
  %2961 = vmatmul.mubr.f32.gmra.mxu0 %v2119
  %v2962 = vpop.f32.mrf.mxu0
  %v2963 = vadd.f32 %v2101, %v2962
  %v2964 = vpop.f32.mrf.mxu0
  %2965 = vmatprep.mubr.f32.mxu0 0.0
  %2966 = vmatmul.mubr.f32.gmra.mxu0 %v2122
  %v2967 = vpop.f32.mrf.mxu0
  %v2968 = vadd.f32 %v2101, %v2967
  %v2969 = vpop.f32.mrf.mxu0
  %2970 = vmatprep.mubr.f32.mxu0 0.0
  %2971 = vmatmul.mubr.f32.gmra.mxu0 %v2125
  %v2972 = vpop.f32.mrf.mxu0
  %v2973 = vadd.f32 %v2101, %v2972
  %v2974 = vpop.f32.mrf.mxu0
  %2975 = vmatprep.mubr.f32.mxu0 0.0
  %2976 = vmatmul.mubr.f32.gmra.mxu0 %v2128
  %v2977 = vpop.f32.mrf.mxu0
  %v2978 = vadd.f32 %v2101, %v2977
  %v2979 = vpop.f32.mrf.mxu0
  %2980 = vmatprep.mubr.f32.mxu0 0.0
  %2981 = vmatmul.mubr.f32.gmra.mxu0 %v2131
  %v2982 = vpop.f32.mrf.mxu0
  %v2983 = vadd.f32 %v2101, %v2982
  %v2984 = vpop.f32.mrf.mxu0
  %2985 = vmatprep.mubr.f32.mxu0 0.0
  %2986 = vmatmul.mubr.f32.gmra.mxu0 %v2134
  %v2987 = vpop.f32.mrf.mxu0
  %v2988 = vadd.f32 %v2101, %v2987
  %v2989 = vpop.f32.mrf.mxu0
  %2990 = vmatprep.mubr.f32.mxu0 0.0
  %2991 = vmatmul.mubr.f32.gmra.mxu0 %v2137
  %v2992 = vpop.f32.mrf.mxu0
  %v2993 = vadd.f32 %v2101, %v2992
  %v2994 = vpop.f32.mrf.mxu0
  %2995 = vmatprep.mubr.f32.mxu0 0.0
  %2996 = vmatmul.mubr.f32.gmra.mxu0 %v2140
  %v2997 = vpop.f32.mrf.mxu0
  %v2998 = vadd.f32 %v2101, %v2997
  %v2999 = vpop.f32.mrf.mxu0
  %3000 = vmatprep.mubr.f32.mxu0 0.0
  %3001 = vmatmul.mubr.f32.gmra.mxu0 %v2143
  %v3002 = vpop.f32.mrf.mxu0
  %v3003 = vadd.f32 %v2101, %v3002
  %v3004 = vpop.f32.mrf.mxu0
  %3005 = vmatprep.mubr.f32.mxu0 0.0
  %3006 = vmatmul.mubr.f32.gmra.mxu0 %v2146
  %v3007 = vpop.f32.mrf.mxu0
  %v3008 = vadd.f32 %v2101, %v3007
  %v3009 = vpop.f32.mrf.mxu0
  %3010 = vmatprep.mubr.f32.mxu0 0.0
  %3011 = vmatmul.mubr.f32.gmra.mxu0 %v2149
  %v3012 = vpop.f32.mrf.mxu0
  %v3013 = vadd.f32 %v2101, %v3012
  %v3014 = vpop.f32.mrf.mxu0
  %3015 = vmatprep.mubr.f32.mxu0 0.0
  %3016 = vmatmul.mubr.f32.gmra.mxu0 %v2152
  %v3017 = vpop.f32.mrf.mxu0
  %v3018 = vadd.f32 %v2101, %v3017
  %v3019 = vpop.f32.mrf.mxu0
  %3020 = vmatprep.mubr.f32.mxu0 0.0
  %3021 = vmatmul.mubr.f32.gmra.mxu0 %v2155
  %v3022 = vpop.f32.mrf.mxu0
  %v3023 = vadd.f32 %v2101, %v3022
  %v3024 = vpop.f32.mrf.mxu0
  %3025 = vmatprep.mubr.f32.mxu0 0.0
  %3026 = vmatmul.mubr.f32.gmra.mxu0 %v2158
  %v3027 = vpop.f32.mrf.mxu0
  %v3028 = vadd.f32 %v2101, %v3027
  %v3029 = vpop.f32.mrf.mxu0
  %3030 = vmatprep.mubr.f32.mxu0 0.0
  %3031 = vmatmul.mubr.f32.gmra.mxu0 %v2161
  %v3032 = vpop.f32.mrf.mxu0
  %v3033 = vadd.f32 %v2101, %v3032
  %v3034 = vpop.f32.mrf.mxu0
  %3035 = vmatprep.mubr.f32.mxu0 0.0
  %3036 = vmatmul.mubr.f32.gmra.mxu0 %v2164
  %v3037 = vpop.f32.mrf.mxu0
  %v3038 = vadd.f32 %v2101, %v3037
  %v3039 = vpop.f32.mrf.mxu0
  %3040 = vmatprep.mubr.f32.mxu0 0.0
  %3041 = vmatmul.mubr.f32.gmra.mxu0 %v2167
  %v3042 = vpop.f32.mrf.mxu0
  %v3043 = vadd.f32 %v2101, %v3042
  %v3044 = vpop.f32.mrf.mxu0
  %3045 = vmatprep.mubr.f32.mxu0 0.0
  %3046 = vmatmul.mubr.f32.gmra.mxu0 %v2170
  %v3047 = vpop.f32.mrf.mxu0
  %v3048 = vadd.f32 %v2101, %v3047
  %v3049 = vpop.f32.mrf.mxu0
  %3050 = vmatprep.mubr.f32.mxu0 0.0
  %3051 = vmatmul.mubr.f32.gmra.mxu0 %v2173
  %v3052 = vpop.f32.mrf.mxu0
  %v3053 = vadd.f32 %v2101, %v3052
  %v3054 = vpop.f32.mrf.mxu0
  %3055 = vmatprep.mubr.f32.mxu0 0.0
  %3056 = vmatmul.mubr.f32.gmra.mxu0 %v2176
  %v3057 = vpop.f32.mrf.mxu0
  %v3058 = vadd.f32 %v2101, %v3057
  %v3059 = vpop.f32.mrf.mxu0
  %3060 = vmatprep.mubr.f32.mxu0 0.0
  %3061 = vmatmul.mubr.f32.gmra.mxu0 %v2179
  %v3062 = vpop.f32.mrf.mxu0
  %v3063 = vadd.f32 %v2101, %v3062
  %v3064 = vpop.f32.mrf.mxu0
  %3065 = vmatprep.mubr.f32.mxu0 0.0
  %3066 = vmatmul.mubr.f32.gmra.mxu0 %v2182
  %v3067 = vpop.f32.mrf.mxu0
  %v3068 = vadd.f32 %v2101, %v3067
  %v3069 = vpop.f32.mrf.mxu0
  %3070 = vmatprep.mubr.f32.mxu0 0.0
  %3071 = vmatmul.mubr.f32.gmra.mxu0 %v2185
  %v3072 = vpop.f32.mrf.mxu0
  %v3073 = vadd.f32 %v2101, %v3072
  %v3074 = vpop.f32.mrf.mxu0
  %3075 = vmatprep.mubr.f32.mxu0 0.0
  %3076 = vmatmul.mubr.f32.gmra.mxu0 %v2188
  %v3077 = vpop.f32.mrf.mxu0
  %v3078 = vadd.f32 %v2101, %v3077
  %v3079 = vpop.f32.mrf.mxu0
  %3080 = vmatprep.mubr.f32.mxu0 0.0
  %3081 = vmatmul.mubr.f32.gmra.mxu0 %v2191
  %v3082 = vpop.f32.mrf.mxu0
  %v3083 = vadd.f32 %v2101, %v3082
  %v3084 = vpop.f32.mrf.mxu0
  %3085 = vmatprep.mubr.f32.mxu0 0.0
  %3086 = vmatmul.mubr.f32.gmra.mxu0 %v2194
  %v3087 = vpop.f32.mrf.mxu0
  %v3088 = vadd.f32 %v2101, %v3087
  %v3089 = vpop.f32.mrf.mxu0
  %3090 = vmatprep.mubr.f32.mxu0 0.0
  %3091 = vmatmul.mubr.f32.gmra.mxu0 %v2197
  %v3092 = vpop.f32.mrf.mxu0
  %v3093 = vadd.f32 %v2101, %v3092
  %v3094 = vpop.f32.mrf.mxu0
  %3095 = vmatprep.mubr.f32.mxu0 0.0
  %3096 = vmatmul.mubr.f32.gmra.mxu0 %v2200
  %v3097 = vpop.f32.mrf.mxu0
  %v3098 = vadd.f32 %v2101, %v3097
  %v3099 = vpop.f32.mrf.mxu0
  %3100 = vmatprep.mubr.f32.mxu0 0.0
  %3101 = vmatmul.mubr.f32.gmra.mxu0 %v2203
  %v3102 = vpop.f32.mrf.mxu0
  %v3103 = vadd.f32 %v2101, %v3102
  %v3104 = vpop.f32.mrf.mxu0
  %3105 = vmatprep.mubr.f32.mxu0 0.0
  %3106 = vmatmul.mubr.f32.gmra.mxu0 %v2206
  %v3107 = vpop.f32.mrf.mxu0
  %v3108 = vadd.f32 %v2101, %v3107
  %v3109 = vpop.f32.mrf.mxu0
  %3110 = vmatprep.mubr.f32.mxu0 0.0
  %3111 = vmatmul.mubr.f32.gmra.mxu0 %v2209
  %v3112 = vpop.f32.mrf.mxu0
  %v3113 = vadd.f32 %v2101, %v3112
  %v3114 = vpop.f32.mrf.mxu0
  %3115 = vmatprep.mubr.f32.mxu0 0.0
  %3116 = vmatmul.mubr.f32.gmra.mxu0 %v2212
  %v3117 = vpop.f32.mrf.mxu0
  %v3118 = vadd.f32 %v2101, %v3117
  %v3119 = vpop.f32.mrf.mxu0
  %3120 = vmatprep.mubr.f32.mxu0 0.0
  %3121 = vmatmul.mubr.f32.gmra.mxu0 %v2215
  %v3122 = vpop.f32.mrf.mxu0
  %v3123 = vadd.f32 %v2101, %v3122
  %v3124 = vpop.f32.mrf.mxu0
  %3125 = vmatprep.mubr.f32.mxu0 0.0
  %3126 = vmatmul.mubr.f32.gmra.mxu0 %v2218
  %v3127 = vpop.f32.mrf.mxu0
  %v3128 = vadd.f32 %v2101, %v3127
  %v3129 = vpop.f32.mrf.mxu0
  %3130 = vmatprep.mubr.f32.mxu0 0.0
  %3131 = vmatmul.mubr.f32.gmra.mxu0 %v2221
  %v3132 = vpop.f32.mrf.mxu0
  %v3133 = vadd.f32 %v2101, %v3132
  %v3134 = vpop.f32.mrf.mxu0
  %3135 = vmatprep.mubr.f32.mxu0 0.0
  %3136 = vmatmul.mubr.f32.gmra.mxu0 %v2224
  %v3137 = vpop.f32.mrf.mxu0
  %v3138 = vadd.f32 %v2101, %v3137
  %v3139 = vpop.f32.mrf.mxu0
  %3140 = vmatprep.mubr.f32.mxu0 0.0
  %3141 = vmatmul.mubr.f32.gmra.mxu0 %v2227
  %v3142 = vpop.f32.mrf.mxu0
  %v3143 = vadd.f32 %v2101, %v3142
  %v3144 = vpop.f32.mrf.mxu0
  %3145 = vmatprep.mubr.f32.mxu0 0.0
  %3146 = vmatmul.mubr.f32.gmra.mxu0 %v2230
  %v3147 = vpop.f32.mrf.mxu0
  %v3148 = vadd.f32 %v2101, %v3147
  %v3149 = vpop.f32.mrf.mxu0
  %3150 = vmatprep.mubr.f32.mxu0 0.0
  %3151 = vmatmul.mubr.f32.gmra.mxu0 %v2233
  %v3152 = vpop.f32.mrf.mxu0
  %v3153 = vadd.f32 %v2101, %v3152
  %v3154 = vpop.f32.mrf.mxu0
  %3155 = vmatprep.mubr.f32.mxu0 0.0
  %3156 = vmatmul.mubr.f32.gmra.mxu0 %v2236
  %v3157 = vpop.f32.mrf.mxu0
  %v3158 = vadd.f32 %v2101, %v3157
  %v3159 = vpop.f32.mrf.mxu0
  %3160 = vmatprep.mubr.f32.mxu0 0.0
  %3161 = vmatmul.mubr.f32.gmra.mxu0 %v2239
  %v3162 = vpop.f32.mrf.mxu0
  %v3163 = vadd.f32 %v2101, %v3162
  %v3164 = vpop.f32.mrf.mxu0
  %3165 = vmatprep.mubr.f32.mxu0 0.0
  %3166 = vmatmul.mubr.f32.gmra.mxu0 %v2242
  %v3167 = vpop.f32.mrf.mxu0
  %v3168 = vadd.f32 %v2101, %v3167
  %v3169 = vpop.f32.mrf.mxu0
  %3170 = vmatprep.mubr.f32.mxu0 0.0
  %3171 = vmatmul.mubr.f32.gmra.mxu0 %v2245
  %v3172 = vpop.f32.mrf.mxu0
  %v3173 = vadd.f32 %v2101, %v3172
  %v3174 = vpop.f32.mrf.mxu0
  %3175 = vmatprep.mubr.f32.mxu0 0.0
  %3176 = vmatmul.mubr.f32.gmra.mxu0 %v2248
  %v3177 = vpop.f32.mrf.mxu0
  %v3178 = vadd.f32 %v2101, %v3177
  %v3179 = vpop.f32.mrf.mxu0
  %3180 = vmatprep.mubr.f32.mxu0 0.0
  %3181 = vmatmul.mubr.f32.gmra.mxu0 %v2251
  %v3182 = vpop.f32.mrf.mxu0
  %v3183 = vadd.f32 %v2101, %v3182
  %v3184 = vpop.f32.mrf.mxu0
  %3185 = vmatprep.mubr.f32.mxu0 0.0
  %3186 = vmatmul.mubr.f32.gmra.mxu0 %v2254
  %v3187 = vpop.f32.mrf.mxu0
  %v3188 = vadd.f32 %v2101, %v3187
  %v3189 = vpop.f32.mrf.mxu0
  %3190 = vmatprep.mubr.f32.mxu0 0.0
  %3191 = vmatmul.mubr.f32.gmra.mxu0 %v2257
  %v3192 = vpop.f32.mrf.mxu0
  %v3193 = vadd.f32 %v2101, %v3192
  %v3194 = vpop.f32.mrf.mxu0
  %3195 = vmatprep.mubr.f32.mxu0 0.0
  %3196 = vmatmul.mubr.f32.gmra.mxu0 %v2260
  %v3197 = vpop.f32.mrf.mxu0
  %v3198 = vadd.f32 %v2101, %v3197
  %v3199 = vpop.f32.mrf.mxu0
  %3200 = vmatprep.mubr.f32.mxu0 0.0
  %3201 = vmatmul.mubr.f32.gmra.mxu0 %v2263
  %v3202 = vpop.f32.mrf.mxu0
  %v3203 = vadd.f32 %v2101, %v3202
  %v3204 = vpop.f32.mrf.mxu0
  %3205 = vmatprep.mubr.f32.mxu0 0.0
  %3206 = vmatmul.mubr.f32.gmra.mxu0 %v2266
  %v3207 = vpop.f32.mrf.mxu0
  %v3208 = vadd.f32 %v2101, %v3207
  %v3209 = vpop.f32.mrf.mxu0
  %3210 = vmatprep.mubr.f32.mxu0 0.0
  %3211 = vmatmul.mubr.f32.gmra.mxu0 %v2269
  %v3212 = vpop.f32.mrf.mxu0
  %v3213 = vadd.f32 %v2101, %v3212
  %v3214 = vpop.f32.mrf.mxu0
  %3215 = vmatprep.mubr.f32.mxu0 0.0
  %3216 = vmatmul.mubr.f32.gmra.mxu0 %v2272
  %v3217 = vpop.f32.mrf.mxu0
  %v3218 = vadd.f32 %v2101, %v3217
  %v3219 = vpop.f32.mrf.mxu0
  %3220 = vmatprep.mubr.f32.mxu0 0.0
  %3221 = vmatmul.mubr.f32.gmra.mxu0 %v2275
  %v3222 = vpop.f32.mrf.mxu0
  %v3223 = vadd.f32 %v2101, %v3222
  %v3224 = vpop.f32.mrf.mxu0
  %3225 = vmatprep.mubr.f32.mxu0 0.0
  %3226 = vmatmul.mubr.f32.gmra.mxu0 %v2278
  %v3227 = vpop.f32.mrf.mxu0
  %v3228 = vadd.f32 %v2101, %v3227
  %v3229 = vpop.f32.mrf.mxu0
  %3230 = vmatprep.mubr.f32.mxu0 0.0
  %3231 = vmatmul.mubr.f32.gmra.mxu0 %v2281
  %v3232 = vpop.f32.mrf.mxu0
  %v3233 = vadd.f32 %v2101, %v3232
  %v3234 = vpop.f32.mrf.mxu0
  %3235 = vmatprep.mubr.f32.mxu0 0.0
  %3236 = vmatmul.mubr.f32.gmra.mxu0 %v2284
  %v3237 = vpop.f32.mrf.mxu0
  %v3238 = vadd.f32 %v2101, %v3237
  %v3239 = vpop.f32.mrf.mxu0
  %3240 = vmatprep.mubr.f32.mxu0 0.0
  %3241 = vmatmul.mubr.f32.gmra.mxu0 %v2287
  %v3242 = vpop.f32.mrf.mxu0
  %v3243 = vadd.f32 %v2101, %v3242
  %v3244 = vpop.f32.mrf.mxu0
  %3245 = vmatprep.mubr.f32.mxu0 0.0
  %3246 = vmatmul.mubr.f32.gmra.mxu0 %v2290
  %v3247 = vpop.f32.mrf.mxu0
  %v3248 = vadd.f32 %v2101, %v3247
  %v3249 = vpop.f32.mrf.mxu0
  %3250 = vmatprep.mubr.f32.mxu0 0.0
  %3251 = vmatmul.mubr.f32.gmra.mxu0 %v2293
  %v3252 = vpop.f32.mrf.mxu0
  %v3253 = vadd.f32 %v2101, %v3252
  %v3254 = vpop.f32.mrf.mxu0
  %3255 = vmatprep.mubr.f32.mxu0 0.0
  %3256 = vmatmul.mubr.f32.gmra.mxu0 %v2296
  %v3257 = vpop.f32.mrf.mxu0
  %v3258 = vadd.f32 %v2101, %v3257
  %v3259 = vpop.f32.mrf.mxu0
  %3260 = vmatprep.mubr.f32.mxu0 0.0
  %3261 = vmatmul.mubr.f32.gmra.mxu0 %v2299
  %v3262 = vpop.f32.mrf.mxu0
  %v3263 = vadd.f32 %v2101, %v3262
  %v3264 = vpop.f32.mrf.mxu0
  %3265 = vmatprep.mubr.f32.mxu0 0.0
  %3266 = vmatmul.mubr.f32.gmra.mxu0 %v2302
  %v3267 = vpop.f32.mrf.mxu0
  %v3268 = vadd.f32 %v2101, %v3267
  %v3269 = vpop.f32.mrf.mxu0
  %3270 = vmatprep.mubr.f32.mxu0 0.0
  %3271 = vmatmul.mubr.f32.gmra.mxu0 %v2305
  %v3272 = vpop.f32.mrf.mxu0
  %v3273 = vadd.f32 %v2101, %v3272
  %v3274 = vpop.f32.mrf.mxu0
  %3275 = vmatprep.mubr.f32.mxu0 0.0
  %3276 = vmatmul.mubr.f32.gmra.mxu0 %v2308
  %v3277 = vpop.f32.mrf.mxu0
  %v3278 = vadd.f32 %v2101, %v3277
  %v3279 = vpop.f32.mrf.mxu0
  %3280 = vmatprep.mubr.f32.mxu0 0.0
  %3281 = vmatmul.mubr.f32.gmra.mxu0 %v2311
  %v3282 = vpop.f32.mrf.mxu0
  %v3283 = vadd.f32 %v2101, %v3282
  %v3284 = vpop.f32.mrf.mxu0
  %3285 = vmatprep.mubr.f32.mxu0 0.0
  %3286 = vmatmul.mubr.f32.gmra.mxu0 %v2314
  %v3287 = vpop.f32.mrf.mxu0
  %v3288 = vadd.f32 %v2101, %v3287
  %v3289 = vpop.f32.mrf.mxu0
  %3290 = vmatprep.mubr.f32.mxu0 0.0
  %3291 = vmatmul.mubr.f32.gmra.mxu0 %v2317
  %v3292 = vpop.f32.mrf.mxu0
  %v3293 = vadd.f32 %v2101, %v3292
  %v3294 = vpop.f32.mrf.mxu0
  %3295 = vmatprep.mubr.f32.mxu0 0.0
  %3296 = vmatmul.mubr.f32.gmra.mxu0 %v2320
  %v3297 = vpop.f32.mrf.mxu0
  %v3298 = vadd.f32 %v2101, %v3297
  %v3299 = vpop.f32.mrf.mxu0
  %3300 = vmatprep.mubr.f32.mxu0 0.0
  %3301 = vmatmul.mubr.f32.gmra.mxu0 %v2323
  %v3302 = vpop.f32.mrf.mxu0
  %v3303 = vadd.f32 %v2101, %v3302
  %v3304 = vpop.f32.mrf.mxu0
  %3305 = vmatprep.mubr.f32.mxu0 0.0
  %3306 = vmatmul.mubr.f32.gmra.mxu0 %v2326
  %v3307 = vpop.f32.mrf.mxu0
  %v3308 = vadd.f32 %v2101, %v3307
  %v3309 = vpop.f32.mrf.mxu0
  %3310 = vmatprep.mubr.f32.mxu0 0.0
  %3311 = vmatmul.mubr.f32.gmra.mxu0 %v2329
  %v3312 = vpop.f32.mrf.mxu0
  %v3313 = vadd.f32 %v2101, %v3312
  %v3314 = vpop.f32.mrf.mxu0
  %3315 = vmatprep.mubr.f32.mxu0 0.0
  %3316 = vmatmul.mubr.f32.gmra.mxu0 %v2332
  %v3317 = vpop.f32.mrf.mxu0
  %v3318 = vadd.f32 %v2101, %v3317
  %v3319 = vpop.f32.mrf.mxu0
  %3320 = vmatprep.mubr.f32.mxu0 0.0
  %3321 = vmatmul.mubr.f32.gmra.mxu0 %v2335
  %v3322 = vpop.f32.mrf.mxu0
  %v3323 = vadd.f32 %v2101, %v3322
  %v3324 = vpop.f32.mrf.mxu0
  %3325 = vmatprep.mubr.f32.mxu0 0.0
  %3326 = vmatmul.mubr.f32.gmra.mxu0 %v2338
  %v3327 = vpop.f32.mrf.mxu0
  %v3328 = vadd.f32 %v2101, %v3327
  %v3329 = vpop.f32.mrf.mxu0
  %3330 = vmatprep.mubr.f32.mxu0 0.0
  %3331 = vmatmul.mubr.f32.gmra.mxu0 %v2341
  %v3332 = vpop.f32.mrf.mxu0
  %v3333 = vadd.f32 %v2101, %v3332
  %v3334 = vpop.f32.mrf.mxu0
  %3335 = vmatprep.mubr.f32.mxu0 0.0
  %3336 = vmatmul.mubr.f32.gmra.mxu0 %v2344
  %v3337 = vpop.f32.mrf.mxu0
  %v3338 = vadd.f32 %v2101, %v3337
  %v3339 = vpop.f32.mrf.mxu0
  %3340 = vmatprep.mubr.f32.mxu0 0.0
  %3341 = vmatmul.mubr.f32.gmra.mxu0 %v2347
  %v3342 = vpop.f32.mrf.mxu0
  %v3343 = vadd.f32 %v2101, %v3342
  %v3344 = vpop.f32.mrf.mxu0
  %3345 = vmatprep.mubr.f32.mxu0 0.0
  %3346 = vmatmul.mubr.f32.gmra.mxu0 %v2350
  %v3347 = vpop.f32.mrf.mxu0
  %v3348 = vadd.f32 %v2101, %v3347
  %v3349 = vpop.f32.mrf.mxu0
  %3350 = vmatprep.mubr.f32.mxu0 0.0
  %3351 = vmatmul.mubr.f32.gmra.mxu0 %v2353
  %v3352 = vpop.f32.mrf.mxu0
  %v3353 = vadd.f32 %v2101, %v3352
  %v3354 = vpop.f32.mrf.mxu0
  %3355 = vmatprep.mubr.f32.mxu0 0.0
  %3356 = vmatmul.mubr.f32.gmra.mxu0 %v2356
  %v3357 = vpop.f32.mrf.mxu0
  %v3358 = vadd.f32 %v2101, %v3357
  %v3359 = vpop.f32.mrf.mxu0
  %3360 = vmatprep.mubr.f32.mxu0 0.0
  %3361 = vmatmul.mubr.f32.gmra.mxu0 %v2359
  %v3362 = vpop.f32.mrf.mxu0
  %v3363 = vadd.f32 %v2101, %v3362
  %v3364 = vpop.f32.mrf.mxu0
  %3365 = vmatprep.mubr.f32.mxu0 0.0
  %3366 = vmatmul.mubr.f32.gmra.mxu0 %v2362
  %v3367 = vpop.f32.mrf.mxu0
  %v3368 = vadd.f32 %v2101, %v3367
  %v3369 = vpop.f32.mrf.mxu0
  %3370 = vmatprep.mubr.f32.mxu0 0.0
  %3371 = vmatmul.mubr.f32.gmra.mxu0 %v2365
  %v3372 = vpop.f32.mrf.mxu0
  %v3373 = vadd.f32 %v2101, %v3372
  %v3374 = vpop.f32.mrf.mxu0
  %3375 = vmatprep.mubr.f32.mxu0 0.0
  %3376 = vmatmul.mubr.f32.gmra.mxu0 %v2368
  %v3377 = vpop.f32.mrf.mxu0
  %v3378 = vadd.f32 %v2101, %v3377
  %v3379 = vpop.f32.mrf.mxu0
  %3380 = vmatprep.mubr.f32.mxu0 0.0
  %3381 = vmatmul.mubr.f32.gmra.mxu0 %v2371
  %v3382 = vpop.f32.mrf.mxu0
  %v3383 = vadd.f32 %v2101, %v3382
  %v3384 = vpop.f32.mrf.mxu0
  %3385 = vmatprep.mubr.f32.mxu0 0.0
  %3386 = vmatmul.mubr.f32.gmra.mxu0 %v2374
  %v3387 = vpop.f32.mrf.mxu0
  %v3388 = vadd.f32 %v2101, %v3387
  %v3389 = vpop.f32.mrf.mxu0
  %3390 = vmatprep.mubr.f32.mxu0 0.0
  %3391 = vmatmul.mubr.f32.gmra.mxu0 %v2377
  %v3392 = vpop.f32.mrf.mxu0
  %v3393 = vadd.f32 %v2101, %v3392
  %v3394 = vpop.f32.mrf.mxu0
  %3395 = vmatprep.mubr.f32.mxu0 0.0
  %3396 = vmatmul.mubr.f32.gmra.mxu0 %v2380
  %v3397 = vpop.f32.mrf.mxu0
  %v3398 = vadd.f32 %v2101, %v3397
  %v3399 = vpop.f32.mrf.mxu0
  %3400 = vmatprep.mubr.f32.mxu0 0.0
  %3401 = vmatmul.mubr.f32.gmra.mxu0 %v2383
  %v3402 = vpop.f32.mrf.mxu0
  %v3403 = vadd.f32 %v2101, %v3402
  %v3404 = vpop.f32.mrf.mxu0
  %3405 = vmatprep.mubr.f32.mxu0 0.0
  %3406 = vmatmul.mubr.f32.gmra.mxu0 %v2386
  %v3407 = vpop.f32.mrf.mxu0
  %v3408 = vadd.f32 %v2101, %v3407
  %v3409 = vpop.f32.mrf.mxu0
  %3410 = vmatprep.mubr.f32.mxu0 0.0
  %3411 = vmatmul.mubr.f32.gmra.mxu0 %v2389
  %v3412 = vpop.f32.mrf.mxu0
  %v3413 = vadd.f32 %v2101, %v3412
  %v3414 = vpop.f32.mrf.mxu0
  %3415 = vmatprep.mubr.f32.mxu0 0.0
  %3416 = vmatmul.mubr.f32.gmra.mxu0 %v2392
  %v3417 = vpop.f32.mrf.mxu0
  %v3418 = vadd.f32 %v2101, %v3417
  %v3419 = vpop.f32.mrf.mxu0
  %3420 = vmatprep.mubr.f32.mxu0 0.0
  %3421 = vmatmul.mubr.f32.gmra.mxu0 %v2395
  %v3422 = vpop.f32.mrf.mxu0
  %v3423 = vadd.f32 %v2101, %v3422
  %v3424 = vpop.f32.mrf.mxu0
  %3425 = vmatprep.mubr.f32.mxu0 0.0
  %3426 = vmatmul.mubr.f32.gmra.mxu0 %v2398
  %v3427 = vpop.f32.mrf.mxu0
  %v3428 = vadd.f32 %v2101, %v3427
  %v3429 = vpop.f32.mrf.mxu0
  %3430 = vmatprep.mubr.f32.mxu0 0.0
  %3431 = vmatmul.mubr.f32.gmra.mxu0 %v2401
  %v3432 = vpop.f32.mrf.mxu0
  %v3433 = vadd.f32 %v2101, %v3432
  %v3434 = vpop.f32.mrf.mxu0
  %3435 = vmatprep.mubr.f32.mxu0 0.0
  %3436 = vmatmul.mubr.f32.gmra.mxu0 %v2404
  %v3437 = vpop.f32.mrf.mxu0
  %v3438 = vadd.f32 %v2101, %v3437
  %v3439 = vpop.f32.mrf.mxu0
  %3440 = vmatprep.mubr.f32.mxu0 0.0
  %3441 = vmatmul.mubr.f32.gmra.mxu0 %v2407
  %v3442 = vpop.f32.mrf.mxu0
  %v3443 = vadd.f32 %v2101, %v3442
  %v3444 = vpop.f32.mrf.mxu0
  %3445 = vmatprep.mubr.f32.mxu0 0.0
  %3446 = vmatmul.mubr.f32.gmra.mxu0 %v2410
  %v3447 = vpop.f32.mrf.mxu0
  %v3448 = vadd.f32 %v2101, %v3447
  %v3449 = vpop.f32.mrf.mxu0
  %3450 = vmatprep.mubr.f32.mxu0 0.0
  %3451 = vmatmul.mubr.f32.gmra.mxu0 %v2413
  %v3452 = vpop.f32.mrf.mxu0
  %v3453 = vadd.f32 %v2101, %v3452
  %v3454 = vpop.f32.mrf.mxu0
  %3455 = vmatprep.mubr.f32.mxu0 0.0
  %3456 = vmatmul.mubr.f32.gmra.mxu0 %v2416
  %v3457 = vpop.f32.mrf.mxu0
  %v3458 = vadd.f32 %v2101, %v3457
  %v3459 = vpop.f32.mrf.mxu0
  %3460 = vmatprep.mubr.f32.mxu0 0.0
  %3461 = vmatmul.mubr.f32.gmra.mxu0 %v2419
  %v3462 = vpop.f32.mrf.mxu0
  %v3463 = vadd.f32 %v2101, %v3462
  %v3464 = vpop.f32.mrf.mxu0
  %3465 = vmatprep.mubr.f32.mxu0 0.0
  %3466 = vmatmul.mubr.f32.gmra.mxu0 %v2422
  %v3467 = vpop.f32.mrf.mxu0
  %v3468 = vadd.f32 %v2101, %v3467
  %v3469 = vpop.f32.mrf.mxu0
  %3470 = vmatprep.mubr.f32.mxu0 0.0
  %3471 = vmatmul.mubr.f32.gmra.mxu0 %v2425
  %v3472 = vpop.f32.mrf.mxu0
  %v3473 = vadd.f32 %v2101, %v3472
  %v3474 = vpop.f32.mrf.mxu0
  %3475 = vmatprep.mubr.f32.mxu0 0.0
  %3476 = vmatmul.mubr.f32.gmra.mxu0 %v2428
  %v3477 = vpop.f32.mrf.mxu0
  %v3478 = vadd.f32 %v2101, %v3477
  %v3479 = vpop.f32.mrf.mxu0
  %3480 = vmatprep.mubr.f32.mxu0 0.0
  %3481 = vmatmul.mubr.f32.gmra.mxu0 %v2431
  %v3482 = vpop.f32.mrf.mxu0
  %v3483 = vadd.f32 %v2101, %v3482
  %v3484 = vpop.f32.mrf.mxu0
  %3485 = vmatprep.mubr.f32.mxu0 0.0
  %3486 = vmatmul.mubr.f32.gmra.mxu0 %v2434
  %v3487 = vpop.f32.mrf.mxu0
  %v3488 = vadd.f32 %v2101, %v3487
  %v3489 = vpop.f32.mrf.mxu0
  %3490 = vmatprep.mubr.f32.mxu0 0.0
  %3491 = vmatmul.mubr.f32.gmra.mxu0 %v2437
  %v3492 = vpop.f32.mrf.mxu0
  %v3493 = vadd.f32 %v2101, %v3492
  %v3494 = vpop.f32.mrf.mxu0
  %3495 = vmatprep.mubr.f32.mxu0 0.0
  %3496 = vmatmul.mubr.f32.gmra.mxu0 %v2440
  %v3497 = vpop.f32.mrf.mxu0
  %v3498 = vadd.f32 %v2101, %v3497
  %v3499 = vpop.f32.mrf.mxu0
  %3500 = vmatprep.mubr.f32.mxu0 0.0
  %3501 = vmatmul.mubr.f32.gmra.mxu0 %v2443
  %v3502 = vpop.f32.mrf.mxu0
  %v3503 = vadd.f32 %v2101, %v3502
  %v3504 = vpop.f32.mrf.mxu0
  %3505 = vmatprep.mubr.f32.mxu0 0.0
  %3506 = vmatmul.mubr.f32.gmra.mxu0 %v2446
  %v3507 = vpop.f32.mrf.mxu0
  %v3508 = vadd.f32 %v2101, %v3507
  %v3509 = vpop.f32.mrf.mxu0
  %3510 = vmatprep.mubr.f32.mxu0 0.0
  %3511 = vmatmul.mubr.f32.gmra.mxu0 %v2449
  %v3512 = vpop.f32.mrf.mxu0
  %v3513 = vadd.f32 %v2101, %v3512
  %v3514 = vpop.f32.mrf.mxu0
  %3515 = vmatprep.mubr.f32.mxu0 0.0
  %3516 = vmatmul.mubr.f32.gmra.mxu0 %v2452
  %v3517 = vpop.f32.mrf.mxu0
  %v3518 = vadd.f32 %v2101, %v3517
  %v3519 = vpop.f32.mrf.mxu0
  %3520 = vmatprep.mubr.f32.mxu0 0.0
  %3521 = vmatmul.mubr.f32.gmra.mxu0 %v2455
  %v3522 = vpop.f32.mrf.mxu0
  %v3523 = vadd.f32 %v2101, %v3522
  %v3524 = vpop.f32.mrf.mxu0
  %3525 = vmatprep.mubr.f32.mxu0 0.0
  %3526 = vmatmul.mubr.f32.gmra.mxu0 %v2458
  %v3527 = vpop.f32.mrf.mxu0
  %v3528 = vadd.f32 %v2101, %v3527
  %v3529 = vpop.f32.mrf.mxu0
  %3530 = vmatprep.mubr.f32.mxu0 0.0
  %3531 = vmatmul.mubr.f32.gmra.mxu0 %v2461
  %v3532 = vpop.f32.mrf.mxu0
  %v3533 = vadd.f32 %v2101, %v3532
  %v3534 = vpop.f32.mrf.mxu0
  %3535 = vmatprep.mubr.f32.mxu0 0.0
  %3536 = vmatmul.mubr.f32.gmra.mxu0 %v2464
  %v3537 = vpop.f32.mrf.mxu0
  %v3538 = vadd.f32 %v2101, %v3537
  %v3539 = vpop.f32.mrf.mxu0
  %3540 = vmatprep.mubr.f32.mxu0 0.0
  %3541 = vmatmul.mubr.f32.gmra.mxu0 %v2467
  %v3542 = vpop.f32.mrf.mxu0
  %v3543 = vadd.f32 %v2101, %v3542
  %v3544 = vpop.f32.mrf.mxu0
  %3545 = vmatprep.mubr.f32.mxu0 0.0
  %3546 = vmatmul.mubr.f32.gmra.mxu0 %v2470
  %v3547 = vpop.f32.mrf.mxu0
  %v3548 = vadd.f32 %v2101, %v3547
  %v3549 = vpop.f32.mrf.mxu0
  %3550 = vmatprep.mubr.f32.mxu0 0.0
  %3551 = vmatmul.mubr.f32.gmra.mxu0 %v2473
  %v3552 = vpop.f32.mrf.mxu0
  %v3553 = vadd.f32 %v2101, %v3552
  %v3554 = vpop.f32.mrf.mxu0
  %3555 = vmatprep.mubr.f32.mxu0 0.0
  %3556 = vmatmul.mubr.f32.gmra.mxu0 %v2476
  %v3557 = vpop.f32.mrf.mxu0
  %v3558 = vadd.f32 %v2101, %v3557
  %v3559 = vpop.f32.mrf.mxu0
  %3560 = vmatprep.mubr.f32.mxu0 0.0
  %3561 = vmatmul.mubr.f32.gmra.mxu0 %v2479
  %v3562 = vpop.f32.mrf.mxu0
  %v3563 = vadd.f32 %v2101, %v3562
  %v3564 = vpop.f32.mrf.mxu0
  %3565 = vmatprep.mubr.f32.mxu0 0.0
  %3566 = vmatmul.mubr.f32.gmra.mxu0 %v2482
  %v3567 = vpop.f32.mrf.mxu0
  %v3568 = vadd.f32 %v2101, %v3567
  %v3569 = vpop.f32.mrf.mxu0
  %3570 = vmatprep.mubr.f32.mxu0 0.0
  %3571 = vmatmul.mubr.f32.gmra.mxu0 %v2485
  %v3572 = vpop.f32.mrf.mxu0
  %v3573 = vadd.f32 %v2101, %v3572
  %v3574 = vpop.f32.mrf.mxu0
  %3575 = vmatprep.mubr.f32.mxu0 0.0
  %3576 = vmatmul.mubr.f32.gmra.mxu0 %v2488
  %v3577 = vpop.f32.mrf.mxu0
  %v3578 = vadd.f32 %v2101, %v3577
  %v3579 = vpop.f32.mrf.mxu0
  %3580 = vmatprep.mubr.f32.mxu0 0.0
  %3581 = vmatmul.mubr.f32.gmra.mxu0 %v2491
  %v3582 = vpop.f32.mrf.mxu0
  %v3583 = vadd.f32 %v2101, %v3582
  %v3584 = vpop.f32.mrf.mxu0
  %3585 = vmatprep.mubr.f32.mxu0 0.0
  %3586 = vmatmul.mubr.f32.gmra.mxu0 %v2494
  %v3587 = vpop.f32.mrf.mxu0
  %v3588 = vadd.f32 %v2101, %v3587
  %v3589 = vpop.f32.mrf.mxu0
  %3590 = vmatprep.mubr.f32.mxu0 0.0
  %3591 = vmatmul.mubr.f32.gmra.mxu0 %v2497
  %v3592 = vpop.f32.mrf.mxu0
  %v3593 = vadd.f32 %v2101, %v3592
  %v3594 = vpop.f32.mrf.mxu0
  %3595 = vmatprep.mubr.f32.mxu0 0.0
  %3596 = vmatmul.mubr.f32.gmra.mxu0 %v2500
  %v3597 = vpop.f32.mrf.mxu0
  %v3598 = vadd.f32 %v2101, %v3597
  %v3599 = vpop.f32.mrf.mxu0
  %3600 = vmatprep.mubr.f32.mxu0 0.0
  %3601 = vmatmul.mubr.f32.gmra.mxu0 %v2503
  %v3602 = vpop.f32.mrf.mxu0
  %v3603 = vadd.f32 %v2101, %v3602
  %v3604 = vpop.f32.mrf.mxu0
  %3605 = vmatprep.mubr.f32.mxu0 0.0
  %3606 = vmatmul.mubr.f32.gmra.mxu0 %v2506
  %v3607 = vpop.f32.mrf.mxu0
  %v3608 = vadd.f32 %v2101, %v3607
  %v3609 = vpop.f32.mrf.mxu0
  %3610 = vmatprep.mubr.f32.mxu0 0.0
  %3611 = vmatmul.mubr.f32.gmra.mxu0 %v2509
  %v3612 = vpop.f32.mrf.mxu0
  %v3613 = vadd.f32 %v2101, %v3612
  %v3614 = vpop.f32.mrf.mxu0
  %3615 = vmatprep.mubr.f32.mxu0 0.0
  %3616 = vmatmul.mubr.f32.gmra.mxu0 %v2512
  %v3617 = vpop.f32.mrf.mxu0
  %v3618 = vadd.f32 %v2101, %v3617
  %v3619 = vpop.f32.mrf.mxu0
  %3620 = vmatprep.mubr.f32.mxu0 0.0
  %3621 = vmatmul.mubr.f32.gmra.mxu0 %v2515
  %v3622 = vpop.f32.mrf.mxu0
  %v3623 = vadd.f32 %v2101, %v3622
  %v3624 = vpop.f32.mrf.mxu0
  %3625 = vmatprep.mubr.f32.mxu0 0.0
  %3626 = vmatmul.mubr.f32.gmra.mxu0 %v2518
  %v3627 = vpop.f32.mrf.mxu0
  %v3628 = vadd.f32 %v2101, %v3627
  %v3629 = vpop.f32.mrf.mxu0
  %3630 = vmatprep.mubr.f32.mxu0 0.0
  %3631 = vmatmul.mubr.f32.gmra.mxu0 %v2521
  %v3632 = vpop.f32.mrf.mxu0
  %v3633 = vadd.f32 %v2101, %v3632
  %v3634 = vpop.f32.mrf.mxu0
  %3635 = vmatprep.mubr.f32.mxu0 0.0
  %3636 = vmatmul.mubr.f32.gmra.mxu0 %v2524
  %v3637 = vpop.f32.mrf.mxu0
  %v3638 = vadd.f32 %v2101, %v3637
  %v3639 = vpop.f32.mrf.mxu0
  %3640 = vmatprep.mubr.f32.mxu0 0.0
  %3641 = vmatmul.mubr.f32.gmra.mxu0 %v2527
  %v3642 = vpop.f32.mrf.mxu0
  %v3643 = vadd.f32 %v2101, %v3642
  %v3644 = vpop.f32.mrf.mxu0
  %3645 = vmatprep.mubr.f32.mxu0 0.0
  %3646 = vmatmul.mubr.f32.gmra.mxu0 %v2530
  %v3647 = vpop.f32.mrf.mxu0
  %v3648 = vadd.f32 %v2101, %v3647
  %v3649 = vpop.f32.mrf.mxu0
  %3650 = vmatprep.mubr.f32.mxu0 0.0
  %3651 = vmatmul.mubr.f32.gmra.mxu0 %v2533
  %v3652 = vpop.f32.mrf.mxu0
  %v3653 = vadd.f32 %v2101, %v3652
  %v3654 = vpop.f32.mrf.mxu0
  %3655 = vmatprep.mubr.f32.mxu0 0.0
  %3656 = vmatmul.mubr.f32.gmra.mxu0 %v2536
  %v3657 = vpop.f32.mrf.mxu0
  %v3658 = vadd.f32 %v2101, %v3657
  %v3659 = vpop.f32.mrf.mxu0
  %3660 = vmatprep.mubr.f32.mxu0 0.0
  %3661 = vmatmul.mubr.f32.gmra.mxu0 %v2539
  %v3662 = vpop.f32.mrf.mxu0
  %v3663 = vadd.f32 %v2101, %v3662
  %v3664 = vpop.f32.mrf.mxu0
  %3665 = vmatprep.mubr.f32.mxu0 0.0
  %3666 = vmatmul.mubr.f32.gmra.mxu0 %v2542
  %v3667 = vpop.f32.mrf.mxu0
  %v3668 = vadd.f32 %v2101, %v3667
  %v3669 = vpop.f32.mrf.mxu0
  %3670 = vmatprep.mubr.f32.mxu0 0.0
  %3671 = vmatmul.mubr.f32.gmra.mxu0 %v2545
  %v3672 = vpop.f32.mrf.mxu0
  %v3673 = vadd.f32 %v2101, %v3672
  %v3674 = vpop.f32.mrf.mxu0
  %3675 = vmatprep.mubr.f32.mxu0 0.0
  %3676 = vmatmul.mubr.f32.gmra.mxu0 %v2548
  %v3677 = vpop.f32.mrf.mxu0
  %v3678 = vadd.f32 %v2101, %v3677
  %v3679 = vpop.f32.mrf.mxu0
  %3680 = vmatprep.mubr.f32.mxu0 0.0
  %3681 = vmatmul.mubr.f32.gmra.mxu0 %v2551
  %v3682 = vpop.f32.mrf.mxu0
  %v3683 = vadd.f32 %v2101, %v3682
  %v3684 = vpop.f32.mrf.mxu0
  %3685 = vmatprep.mubr.f32.mxu0 0.0
  %3686 = vmatmul.mubr.f32.gmra.mxu0 %v2554
  %v3687 = vpop.f32.mrf.mxu0
  %v3688 = vadd.f32 %v2101, %v3687
  %v3689 = vpop.f32.mrf.mxu0
  %3690 = vmatprep.mubr.f32.mxu0 0.0
  %3691 = vmatmul.mubr.f32.gmra.mxu0 %v2557
  %v3692 = vpop.f32.mrf.mxu0
  %v3693 = vadd.f32 %v2101, %v3692
  %v3694 = vpop.f32.mrf.mxu0
  %3695 = vmatprep.mubr.f32.mxu0 0.0
  %3696 = vmatmul.mubr.f32.gmra.mxu0 %v2560
  %v3697 = vpop.f32.mrf.mxu0
  %v3698 = vadd.f32 %v2101, %v3697
  %v3699 = vpop.f32.mrf.mxu0
  %3700 = vmatprep.mubr.f32.mxu0 0.0
  %3701 = vmatmul.mubr.f32.gmra.mxu0 %v2563
  %v3702 = vpop.f32.mrf.mxu0
  %v3703 = vadd.f32 %v2101, %v3702
  %v3704 = vpop.f32.mrf.mxu0
  %3705 = vmatprep.mubr.f32.mxu0 0.0
  %3706 = vmatmul.mubr.f32.gmra.mxu0 %v2566
  %v3707 = vpop.f32.mrf.mxu0
  %v3708 = vadd.f32 %v2101, %v3707
  %v3709 = vpop.f32.mrf.mxu0
  %3710 = vmatprep.mubr.f32.mxu0 0.0
  %3711 = vmatmul.mubr.f32.gmra.mxu0 %v2569
  %v3712 = vpop.f32.mrf.mxu0
  %v3713 = vadd.f32 %v2101, %v3712
  %v3714 = vpop.f32.mrf.mxu0
  %3715 = vmatprep.mubr.f32.mxu0 0.0
  %3716 = vmatmul.mubr.f32.gmra.mxu0 %v2572
  %v3717 = vpop.f32.mrf.mxu0
  %v3718 = vadd.f32 %v2101, %v3717
  %v3719 = vpop.f32.mrf.mxu0
  %3720 = vmatprep.mubr.f32.mxu0 0.0
  %3721 = vmatmul.mubr.f32.gmra.mxu0 %v2575
  %v3722 = vpop.f32.mrf.mxu0
  %v3723 = vadd.f32 %v2101, %v3722
  %v3724 = vpop.f32.mrf.mxu0
  %3725 = vmatprep.mubr.f32.mxu0 0.0
  %3726 = vmatmul.mubr.f32.gmra.mxu0 %v2578
  %v3727 = vpop.f32.mrf.mxu0
  %v3728 = vadd.f32 %v2101, %v3727
  %v3729 = vpop.f32.mrf.mxu0
  %3730 = vmatprep.mubr.f32.mxu0 0.0
  %3731 = vmatmul.mubr.f32.gmra.mxu0 %v2581
  %v3732 = vpop.f32.mrf.mxu0
  %v3733 = vadd.f32 %v2101, %v3732
  %v3734 = vpop.f32.mrf.mxu0
  %3735 = vmatprep.mubr.f32.mxu0 0.0
  %3736 = vmatmul.mubr.f32.gmra.mxu0 %v2584
  %v3737 = vpop.f32.mrf.mxu0
  %v3738 = vadd.f32 %v2101, %v3737
  %v3739 = vpop.f32.mrf.mxu0
  %3740 = vmatprep.mubr.f32.mxu0 0.0
  %3741 = vmatmul.mubr.f32.gmra.mxu0 %v2587
  %v3742 = vpop.f32.mrf.mxu0
  %v3743 = vadd.f32 %v2101, %v3742
  %v3744 = vpop.f32.mrf.mxu0
  %3745 = vmatprep.mubr.f32.mxu0 0.0
  %3746 = vmatmul.mubr.f32.gmra.mxu0 %v2590
  %v3747 = vpop.f32.mrf.mxu0
  %v3748 = vadd.f32 %v2101, %v3747
  %v3749 = vpop.f32.mrf.mxu0
  %3750 = vmatprep.mubr.f32.mxu0 0.0
  %3751 = vmatmul.mubr.f32.gmra.mxu0 %v2593
  %v3752 = vpop.f32.mrf.mxu0
  %v3753 = vadd.f32 %v2101, %v3752
  %v3754 = vpop.f32.mrf.mxu0
  %3755 = vmatprep.mubr.f32.mxu0 0.0
  %3756 = vmatmul.mubr.f32.gmra.mxu0 %v2596
  %v3757 = vpop.f32.mrf.mxu0
  %v3758 = vadd.f32 %v2101, %v3757
  %v3759 = vpop.f32.mrf.mxu0
  %3760 = vmatprep.mubr.f32.mxu0 0.0
  %3761 = vmatmul.mubr.f32.gmra.mxu0 %v2599
  %v3762 = vpop.f32.mrf.mxu0
  %v3763 = vadd.f32 %v2101, %v3762
  %v3764 = vpop.f32.mrf.mxu0
  %3765 = vmatprep.mubr.f32.mxu0 0.0
  %3766 = vmatmul.mubr.f32.gmra.mxu0 %v2602
  %v3767 = vpop.f32.mrf.mxu0
  %v3768 = vadd.f32 %v2101, %v3767
  %v3769 = vpop.f32.mrf.mxu0
  %3770 = vmatprep.mubr.f32.mxu0 0.0
  %3771 = vmatmul.mubr.f32.gmra.mxu0 %v2605
  %v3772 = vpop.f32.mrf.mxu0
  %v3773 = vadd.f32 %v2101, %v3772
  %v3774 = vpop.f32.mrf.mxu0
  %3775 = vmatprep.mubr.f32.mxu0 0.0
  %3776 = vmatmul.mubr.f32.gmra.mxu0 %v2608
  %v3777 = vpop.f32.mrf.mxu0
  %v3778 = vadd.f32 %v2101, %v3777
  %v3779 = vpop.f32.mrf.mxu0
  %3780 = vmatprep.mubr.f32.mxu0 0.0
  %3781 = vmatmul.mubr.f32.gmra.mxu0 %v2611
  %v3782 = vpop.f32.mrf.mxu0
  %v3783 = vadd.f32 %v2101, %v3782
  %v3784 = vpop.f32.mrf.mxu0
  %3785 = vmatprep.mubr.f32.mxu0 0.0
  %3786 = vmatmul.mubr.f32.gmra.mxu0 %v2614
  %v3787 = vpop.f32.mrf.mxu0
  %v3788 = vadd.f32 %v2101, %v3787
  %v3789 = vpop.f32.mrf.mxu0
  %3790 = vmatprep.mubr.f32.mxu0 0.0
  %3791 = vmatmul.mubr.f32.gmra.mxu0 %v2617
  %v3792 = vpop.f32.mrf.mxu0
  %v3793 = vadd.f32 %v2101, %v3792
  %v3794 = vpop.f32.mrf.mxu0
  %3795 = vmatprep.mubr.f32.mxu0 0.0
  %3796 = vmatmul.mubr.f32.gmra.mxu0 %v2620
  %v3797 = vpop.f32.mrf.mxu0
  %v3798 = vadd.f32 %v2101, %v3797
  %v3799 = vpop.f32.mrf.mxu0
  %3800 = vmatprep.mubr.f32.mxu0 0.0
  %3801 = vmatmul.mubr.f32.gmra.mxu0 %v2623
  %v3802 = vpop.f32.mrf.mxu0
  %v3803 = vadd.f32 %v2101, %v3802
  %v3804 = vpop.f32.mrf.mxu0
  %3805 = vmatprep.mubr.f32.mxu0 0.0
  %3806 = vmatmul.mubr.f32.gmra.mxu0 %v2626
  %v3807 = vpop.f32.mrf.mxu0
  %v3808 = vadd.f32 %v2101, %v3807
  %v3809 = vpop.f32.mrf.mxu0
  %3810 = vmatprep.mubr.f32.mxu0 0.0
  %3811 = vmatmul.mubr.f32.gmra.mxu0 %v2629
  %v3812 = vpop.f32.mrf.mxu0
  %v3813 = vadd.f32 %v2101, %v3812
  %v3814 = vpop.f32.mrf.mxu0
  %3815 = vmatprep.mubr.f32.mxu0 0.0
  %3816 = vmatmul.mubr.f32.gmra.mxu0 %v2632
  %v3817 = vpop.f32.mrf.mxu0
  %v3818 = vadd.f32 %v2101, %v3817
  %v3819 = vpop.f32.mrf.mxu0
  %3820 = vmatprep.mubr.f32.mxu0 0.0
  %3821 = vmatmul.mubr.f32.gmra.mxu0 %v2635
  %v3822 = vpop.f32.mrf.mxu0
  %v3823 = vadd.f32 %v2101, %v3822
  %v3824 = vpop.f32.mrf.mxu0
  %3825 = vmatprep.mubr.f32.mxu0 0.0
  %3826 = vmatmul.mubr.f32.gmra.mxu0 %v2638
  %v3827 = vpop.f32.mrf.mxu0
  %v3828 = vadd.f32 %v2101, %v3827
  %v3829 = vpop.f32.mrf.mxu0
  %3830 = vmatprep.mubr.f32.mxu0 0.0
  %3831 = vmatmul.mubr.f32.gmra.mxu0 %v2641
  %v3832 = vpop.f32.mrf.mxu0
  %v3833 = vadd.f32 %v2101, %v3832
  %v3834 = vpop.f32.mrf.mxu0
  %3835 = vmatprep.mubr.f32.mxu0 0.0
  %3836 = vmatmul.mubr.f32.gmra.mxu0 %v2644
  %v3837 = vpop.f32.mrf.mxu0
  %v3838 = vadd.f32 %v2101, %v3837
  %v3839 = vpop.f32.mrf.mxu0
  %3840 = vmatprep.mubr.f32.mxu0 0.0
  %3841 = vmatmul.mubr.f32.gmra.mxu0 %v2647
  %v3842 = vpop.f32.mrf.mxu0
  %v3843 = vadd.f32 %v2101, %v3842
  %v3844 = vpop.f32.mrf.mxu0
  %3845 = vmatprep.mubr.f32.mxu0 0.0
  %3846 = vmatmul.mubr.f32.gmra.mxu0 %v2650
  %v3847 = vpop.f32.mrf.mxu0
  %v3848 = vadd.f32 %v2101, %v3847
  %v3849 = vpop.f32.mrf.mxu0
  %3850 = vmatprep.mubr.f32.mxu0 0.0
  %3851 = vmatmul.mubr.f32.gmra.mxu0 %v2653
  %v3852 = vpop.f32.mrf.mxu0
  %v3853 = vadd.f32 %v2101, %v3852
  %v3854 = vpop.f32.mrf.mxu0
  %3855 = vmatprep.mubr.f32.mxu0 0.0
  %3856 = vmatmul.mubr.f32.gmra.mxu0 %v2656
  %v3857 = vpop.f32.mrf.mxu0
  %v3858 = vadd.f32 %v2101, %v3857
  %v3859 = vpop.f32.mrf.mxu0
  %3860 = vmatprep.mubr.f32.mxu0 0.0
  %3861 = vmatmul.mubr.f32.gmra.mxu0 %v2659
  %v3862 = vpop.f32.mrf.mxu0
  %v3863 = vadd.f32 %v2101, %v3862
  %v3864 = vpop.f32.mrf.mxu0
  %3865 = vmatprep.mubr.f32.mxu0 0.0
  %3866 = vmatmul.mubr.f32.gmra.mxu0 %v2662
  %v3867 = vpop.f32.mrf.mxu0
  %v3868 = vadd.f32 %v2101, %v3867
  %v3869 = vpop.f32.mrf.mxu0
  %3870 = vmatprep.mubr.f32.mxu0 0.0
  %3871 = vmatmul.mubr.f32.gmra.mxu0 %v2665
  %v3872 = vpop.f32.mrf.mxu0
  %v3873 = vadd.f32 %v2101, %v3872
  %v3874 = vpop.f32.mrf.mxu0
  %3875 = vmatprep.mubr.f32.mxu0 0.0
  %3876 = vmatmul.mubr.f32.gmra.mxu0 %v2668
  %v3877 = vpop.f32.mrf.mxu0
  %v3878 = vadd.f32 %v2101, %v3877
  %v3879 = vpop.f32.mrf.mxu0
  %3880 = vmatprep.mubr.f32.mxu0 0.0
  %3881 = vmatmul.mubr.f32.gmra.mxu0 %v2671
  %v3882 = vpop.f32.mrf.mxu0
  %v3883 = vadd.f32 %v2101, %v3882
  %v3884 = vpop.f32.mrf.mxu0
  %3885 = vmatprep.mubr.f32.mxu0 0.0
  %3886 = vmatmul.mubr.f32.gmra.mxu0 %v2674
  %v3887 = vpop.f32.mrf.mxu0
  %v3888 = vadd.f32 %v2101, %v3887
  %v3889 = vpop.f32.mrf.mxu0
  %3890 = vmatprep.mubr.f32.mxu0 0.0
  %3891 = vmatmul.mubr.f32.gmra.mxu0 %v2677
  %v3892 = vpop.f32.mrf.mxu0
  %v3893 = vadd.f32 %v2101, %v3892
  %v3894 = vpop.f32.mrf.mxu0
  %3895 = vmatprep.mubr.f32.mxu0 0.0
  %3896 = vmatmul.mubr.f32.gmra.mxu0 %v2680
  %v3897 = vpop.f32.mrf.mxu0
  %v3898 = vadd.f32 %v2101, %v3897
  %v3899 = vpop.f32.mrf.mxu0
  %3900 = vmatprep.mubr.f32.mxu0 0.0
  %3901 = vmatmul.mubr.f32.gmra.mxu0 %v2683
  %v3902 = vpop.f32.mrf.mxu0
  %v3903 = vadd.f32 %v2101, %v3902
  %v3904 = vpop.f32.mrf.mxu0
  %3905 = vmatprep.mubr.f32.mxu0 0.0
  %3906 = vmatmul.mubr.f32.gmra.mxu0 %v2686
  %v3907 = vpop.f32.mrf.mxu0
  %v3908 = vadd.f32 %v2101, %v3907
  %v3909 = vpop.f32.mrf.mxu0
  %3910 = vmatprep.mubr.f32.mxu0 0.0
  %3911 = vmatmul.mubr.f32.gmra.mxu0 %v2689
  %v3912 = vpop.f32.mrf.mxu0
  %v3913 = vadd.f32 %v2101, %v3912
  %v3914 = vpop.f32.mrf.mxu0
  %3915 = vmatprep.mubr.f32.mxu0 0.0
  %3916 = vmatmul.mubr.f32.gmra.mxu0 %v2692
  %v3917 = vpop.f32.mrf.mxu0
  %v3918 = vadd.f32 %v2101, %v3917
  %v3919 = vpop.f32.mrf.mxu0
  %3920 = vmatprep.mubr.f32.mxu0 0.0
  %3921 = vmatmul.mubr.f32.gmra.mxu0 %v2695
  %v3922 = vpop.f32.mrf.mxu0
  %v3923 = vadd.f32 %v2101, %v3922
  %v3924 = vpop.f32.mrf.mxu0
  %3925 = vmatprep.mubr.f32.mxu0 0.0
  %3926 = vmatmul.mubr.f32.gmra.mxu0 %v2698
  %v3927 = vpop.f32.mrf.mxu0
  %v3928 = vadd.f32 %v2101, %v3927
  %v3929 = vpop.f32.mrf.mxu0
  %3930 = vmatprep.mubr.f32.mxu0 0.0
  %3931 = vmatmul.mubr.f32.gmra.mxu0 %v2701
  %v3932 = vpop.f32.mrf.mxu0
  %v3933 = vadd.f32 %v2101, %v3932
  %v3934 = vpop.f32.mrf.mxu0
  %3935 = vmatprep.mubr.f32.mxu0 0.0
  %3936 = vmatmul.mubr.f32.gmra.mxu0 %v2704
  %v3937 = vpop.f32.mrf.mxu0
  %v3938 = vadd.f32 %v2101, %v3937
  %v3939 = vpop.f32.mrf.mxu0
  %3940 = vmatprep.mubr.f32.mxu0 0.0
  %3941 = vmatmul.mubr.f32.gmra.mxu0 %v2707
  %v3942 = vpop.f32.mrf.mxu0
  %v3943 = vadd.f32 %v2101, %v3942
  %v3944 = vpop.f32.mrf.mxu0
  %3945 = vmatprep.mubr.f32.mxu0 0.0
  %3946 = vmatmul.mubr.f32.gmra.mxu0 %v2710
  %v3947 = vpop.f32.mrf.mxu0
  %v3948 = vadd.f32 %v2101, %v3947
  %v3949 = vpop.f32.mrf.mxu0
  %3950 = vmatprep.mubr.f32.mxu0 0.0
  %3951 = vmatmul.mubr.f32.gmra.mxu0 %v2713
  %v3952 = vpop.f32.mrf.mxu0
  %v3953 = vadd.f32 %v2101, %v3952
  %v3954 = vpop.f32.mrf.mxu0
  %3955 = vmatprep.mubr.f32.mxu0 0.0
  %3956 = vmatmul.mubr.f32.gmra.mxu0 %v2716
  %v3957 = vpop.f32.mrf.mxu0
  %v3958 = vadd.f32 %v2101, %v3957
  %v3959 = vpop.f32.mrf.mxu0
  %3960 = vmatprep.mubr.f32.mxu0 0.0
  %3961 = vmatmul.mubr.f32.gmra.mxu0 %v2719
  %v3962 = vpop.f32.mrf.mxu0
  %v3963 = vadd.f32 %v2101, %v3962
  %v3964 = vpop.f32.mrf.mxu0
  %3965 = vmatprep.mubr.f32.mxu0 0.0
  %3966 = vmatmul.mubr.f32.gmra.mxu0 %v2722
  %v3967 = vpop.f32.mrf.mxu0
  %v3968 = vadd.f32 %v2101, %v3967
  %v3969 = vpop.f32.mrf.mxu0
  %3970 = vmatprep.mubr.f32.mxu0 0.0
  %3971 = vmatmul.mubr.f32.gmra.mxu0 %v2725
  %v3972 = vpop.f32.mrf.mxu0
  %v3973 = vadd.f32 %v2101, %v3972
  %v3974 = vpop.f32.mrf.mxu0
  %3975 = vmatprep.mubr.f32.mxu0 0.0
  %3976 = vmatmul.mubr.f32.gmra.mxu0 %v2728
  %v3977 = vpop.f32.mrf.mxu0
  %v3978 = vadd.f32 %v2101, %v3977
  %v3979 = vpop.f32.mrf.mxu0
  %3980 = vmatprep.mubr.f32.mxu0 0.0
  %3981 = vmatmul.mubr.f32.gmra.mxu0 %v2731
  %v3982 = vpop.f32.mrf.mxu0
  %v3983 = vadd.f32 %v2101, %v3982
  %v3984 = vpop.f32.mrf.mxu0
  %3985 = vmatprep.mubr.f32.mxu0 0.0
  %3986 = vmatmul.mubr.f32.gmra.mxu0 %v2734
  %v3987 = vpop.f32.mrf.mxu0
  %v3988 = vadd.f32 %v2101, %v3987
  %v3989 = vpop.f32.mrf.mxu0
  %3990 = vmatprep.mubr.f32.mxu0 0.0
  %3991 = vmatmul.mubr.f32.gmra.mxu0 %v2737
  %v3992 = vpop.f32.mrf.mxu0
  %v3993 = vadd.f32 %v2101, %v3992
  %v3994 = vpop.f32.mrf.mxu0
  %3995 = vmatprep.mubr.f32.mxu0 0.0
  %3996 = vmatmul.mubr.f32.gmra.mxu0 %v2740
  %v3997 = vpop.f32.mrf.mxu0
  %v3998 = vadd.f32 %v2101, %v3997
  %v3999 = vpop.f32.mrf.mxu0
  %4000 = vmatprep.mubr.f32.mxu0 0.0
  %4001 = vmatmul.mubr.f32.gmra.mxu0 %v2743
  %v4002 = vpop.f32.mrf.mxu0
  %v4003 = vadd.f32 %v2101, %v4002
  %v4004 = vpop.f32.mrf.mxu0
  %4005 = vmatprep.mubr.f32.mxu0 0.0
  %4006 = vmatmul.mubr.f32.gmra.mxu0 %v2746
  %v4007 = vpop.f32.mrf.mxu0
  %v4008 = vadd.f32 %v2101, %v4007
  %v4009 = vpop.f32.mrf.mxu0
  %4010 = vmatprep.mubr.f32.mxu0 0.0
  %4011 = vmatmul.mubr.f32.gmra.mxu0 %v2749
  %v4012 = vpop.f32.mrf.mxu0
  %v4013 = vadd.f32 %v2101, %v4012
  %v4014 = vpop.f32.mrf.mxu0
  %4015 = vmatprep.mubr.f32.mxu0 0.0
  %4016 = vmatmul.mubr.f32.gmra.mxu0 %v2752
  %v4017 = vpop.f32.mrf.mxu0
  %v4018 = vadd.f32 %v2101, %v4017
  %v4019 = vpop.f32.mrf.mxu0
  %4020 = vmatprep.mubr.f32.mxu0 0.0
  %4021 = vmatmul.mubr.f32.gmra.mxu0 %v2755
  %v4022 = vpop.f32.mrf.mxu0
  %v4023 = vadd.f32 %v2101, %v4022
  %v4024 = vpop.f32.mrf.mxu0
  %4025 = vmatprep.mubr.f32.mxu0 0.0
  %4026 = vmatmul.mubr.f32.gmra.mxu0 %v2758
  %v4027 = vpop.f32.mrf.mxu0
  %v4028 = vadd.f32 %v2101, %v4027
  %v4029 = vpop.f32.mrf.mxu0
  %4030 = vmatprep.mubr.f32.mxu0 0.0
  %4031 = vmatmul.mubr.f32.gmra.mxu0 %v2761
  %v4032 = vpop.f32.mrf.mxu0
  %v4033 = vadd.f32 %v2101, %v4032
  %v4034 = vpop.f32.mrf.mxu0
  %4035 = vmatprep.mubr.f32.mxu0 0.0
  %4036 = vmatmul.mubr.f32.gmra.mxu0 %v2764
  %v4037 = vpop.f32.mrf.mxu0
  %v4038 = vadd.f32 %v2101, %v4037
  %v4039 = vpop.f32.mrf.mxu0
  %4040 = vmatprep.mubr.f32.mxu0 0.0
  %4041 = vmatmul.mubr.f32.gmra.mxu0 %v2767
  %v4042 = vpop.f32.mrf.mxu0
  %v4043 = vadd.f32 %v2101, %v4042
  %v4044 = vpop.f32.mrf.mxu0
  %4045 = vmatprep.mubr.f32.mxu0 0.0
  %4046 = vmatmul.mubr.f32.gmra.mxu0 %v2770
  %v4047 = vpop.f32.mrf.mxu0
  %v4048 = vadd.f32 %v2101, %v4047
  %v4049 = vpop.f32.mrf.mxu0
  %4050 = vmatprep.mubr.f32.mxu0 0.0
  %4051 = vmatmul.mubr.f32.gmra.mxu0 %v2773
  %v4052 = vpop.f32.mrf.mxu0
  %v4053 = vadd.f32 %v2101, %v4052
  %v4054 = vpop.f32.mrf.mxu0
  %4055 = vmatprep.mubr.f32.mxu0 0.0
  %4056 = vmatmul.mubr.f32.gmra.mxu0 %v2776
  %v4057 = vpop.f32.mrf.mxu0
  %v4058 = vadd.f32 %v2101, %v4057
  %v4059 = vpop.f32.mrf.mxu0
  %4060 = vmatprep.mubr.f32.mxu0 0.0
  %4061 = vmatmul.mubr.f32.gmra.mxu0 %v2779
  %v4062 = vpop.f32.mrf.mxu0
  %v4063 = vadd.f32 %v2101, %v4062
  %v4064 = vpop.f32.mrf.mxu0
  %4065 = vmatprep.mubr.f32.mxu0 0.0
  %4066 = vmatmul.mubr.f32.gmra.mxu0 %v2782
  %v4067 = vpop.f32.mrf.mxu0
  %v4068 = vadd.f32 %v2101, %v4067
  %v4069 = vpop.f32.mrf.mxu0
  %4070 = vmatprep.mubr.f32.mxu0 0.0
  %4071 = vmatmul.mubr.f32.gmra.mxu0 %v2785
  %v4072 = vpop.f32.mrf.mxu0
  %v4073 = vadd.f32 %v2101, %v4072
  %v4074 = vpop.f32.mrf.mxu0
  %4075 = vmatprep.mubr.f32.mxu0 0.0
  %4076 = vmatmul.mubr.f32.gmra.mxu0 %v2788
  %v4077 = vpop.f32.mrf.mxu0
  %v4078 = vadd.f32 %v2101, %v4077
  %v4079 = vpop.f32.mrf.mxu0
  %4080 = vmatprep.mubr.f32.mxu0 0.0
  %4081 = vmatmul.mubr.f32.gmra.mxu0 %v2791
  %v4082 = vpop.f32.mrf.mxu0
  %v4083 = vadd.f32 %v2101, %v4082
  %v4084 = vpop.f32.mrf.mxu0
  %4085 = vmatprep.mubr.f32.mxu0 0.0
  %4086 = vmatmul.mubr.f32.gmra.mxu0 %v2794
  %v4087 = vpop.f32.mrf.mxu0
  %v4088 = vadd.f32 %v2101, %v4087
  %v4089 = vpop.f32.mrf.mxu0
  %4090 = vmatprep.mubr.f32.mxu0 0.0
  %4091 = vmatmul.mubr.f32.gmra.mxu0 %v2797
  %v4092 = vpop.f32.mrf.mxu0
  %v4093 = vadd.f32 %v2101, %v4092
  %v4094 = vpop.f32.mrf.mxu0
  %4095 = vmatprep.mubr.f32.mxu0 0.0
  %4096 = vmatmul.mubr.f32.gmra.mxu0 %v2800
  %v4097 = vpop.f32.mrf.mxu0
  %v4098 = vadd.f32 %v2101, %v4097
  %v4099 = vpop.f32.mrf.mxu0
  %4100 = vmatprep.mubr.f32.mxu0 0.0
  %4101 = vmatmul.mubr.f32.gmra.mxu0 %v2803
  %v4102 = vpop.f32.mrf.mxu0
  %v4103 = vadd.f32 %v2101, %v4102
  %v4104 = vpop.f32.mrf.mxu0
  %4105 = vmatprep.mubr.f32.mxu0 0.0
  %4106 = vmatmul.mubr.f32.gmra.mxu0 %v2806
  %v4107 = vpop.f32.mrf.mxu0
  %v4108 = vadd.f32 %v2101, %v4107
  %v4109 = vpop.f32.mrf.mxu0
  %4110 = vmatprep.mubr.f32.mxu0 0.0
  %4111 = vmatmul.mubr.f32.gmra.mxu0 %v2809
  %v4112 = vpop.f32.mrf.mxu0
  %v4113 = vadd.f32 %v2101, %v4112
  %v4114 = vpop.f32.mrf.mxu0
  %4115 = vmatprep.mubr.f32.mxu0 0.0
  %4116 = vmatmul.mubr.f32.gmra.mxu0 %v2812
  %v4117 = vpop.f32.mrf.mxu0
  %v4118 = vadd.f32 %v2101, %v4117
  %v4119 = vpop.f32.mrf.mxu0
  %4120 = vmatprep.mubr.f32.mxu0 0.0
  %4121 = vmatmul.mubr.f32.gmra.mxu0 %v2815
  %v4122 = vpop.f32.mrf.mxu0
  %v4123 = vadd.f32 %v2101, %v4122
  %v4124 = vpop.f32.mrf.mxu0
  %4125 = vmatprep.mubr.f32.mxu0 0.0
  %4126 = vmatmul.mubr.f32.gmra.mxu0 %v2818
  %v4127 = vpop.f32.mrf.mxu0
  %v4128 = vadd.f32 %v2101, %v4127
  %v4129 = vpop.f32.mrf.mxu0
  %4130 = vmatprep.mubr.f32.mxu0 0.0
  %4131 = vmatmul.mubr.f32.gmra.mxu0 %v2821
  %v4132 = vpop.f32.mrf.mxu0
  %v4133 = vadd.f32 %v2101, %v4132
  %v4134 = vpop.f32.mrf.mxu0
  %4135 = vmatprep.mubr.f32.mxu0 0.0
  %4136 = vmatmul.mubr.f32.gmra.mxu0 %v2824
  %v4137 = vpop.f32.mrf.mxu0
  %v4138 = vadd.f32 %v2101, %v4137
  %v4139 = vpop.f32.mrf.mxu0
  %4140 = vmatprep.mubr.f32.mxu0 0.0
  %4141 = vmatmul.mubr.f32.gmra.mxu0 %v2827
  %v4142 = vpop.f32.mrf.mxu0
  %v4143 = vadd.f32 %v2101, %v4142
  %v4144 = vpop.f32.mrf.mxu0
  %4145 = vmatprep.mubr.f32.mxu0 0.0
  %4146 = vmatmul.mubr.f32.gmra.mxu0 %v2830
  %v4147 = vpop.f32.mrf.mxu0
  %v4148 = vadd.f32 %v2101, %v4147
  %v4149 = vpop.f32.mrf.mxu0
  %4150 = vmatprep.mubr.f32.mxu0 0.0
  %4151 = vmatmul.mubr.f32.gmra.mxu0 %v2833
  %v4152 = vpop.f32.mrf.mxu0
  %v4153 = vadd.f32 %v2101, %v4152
  %v4154 = vpop.f32.mrf.mxu0
  %4155 = vmatprep.mubr.f32.mxu0 0.0
  %4156 = vmatmul.mubr.f32.gmra.mxu0 %v2836
  %v4157 = vpop.f32.mrf.mxu0
  %v4158 = vadd.f32 %v2101, %v4157
  %v4159 = vpop.f32.mrf.mxu0
  %4160 = vmatprep.mubr.f32.mxu0 0.0
  %4161 = vmatmul.mubr.f32.gmra.mxu0 %v2839
  %v4162 = vpop.f32.mrf.mxu0
  %v4163 = vadd.f32 %v2101, %v4162
  %v4164 = vpop.f32.mrf.mxu0
  %4165 = vmatprep.mubr.f32.mxu0 0.0
  %4166 = vmatmul.mubr.f32.gmra.mxu0 %v2842
  %v4167 = vpop.f32.mrf.mxu0
  %v4168 = vadd.f32 %v2101, %v4167
  %v4169 = vpop.f32.mrf.mxu0
  %4170 = vmatprep.mubr.f32.mxu0 0.0
  %4171 = vmatmul.mubr.f32.gmra.mxu0 %v2845
  %v4172 = vpop.f32.mrf.mxu0
  %v4173 = vadd.f32 %v2101, %v4172
  %v4174 = vpop.f32.mrf.mxu0
  %4175 = vmatprep.mubr.f32.mxu0 0.0
  %4176 = vmatmul.mubr.f32.gmra.mxu0 %v2848
  %v4177 = vpop.f32.mrf.mxu0
  %v4178 = vadd.f32 %v2101, %v4177
  %v4179 = vpop.f32.mrf.mxu0
  %4180 = vmatprep.mubr.f32.mxu0 0.0
  %4181 = vmatmul.mubr.f32.gmra.mxu0 %v2851
  %v4182 = vpop.f32.mrf.mxu0
  %v4183 = vadd.f32 %v2101, %v4182
  %v4184 = vpop.f32.mrf.mxu0
  %4185 = vmatprep.mubr.f32.mxu0 0.0
  %4186 = vmatmul.mubr.f32.gmra.mxu0 %v2854
  %v4187 = vpop.f32.mrf.mxu0
  %v4188 = vadd.f32 %v2101, %v4187
  %v4189 = vpop.f32.mrf.mxu0
  %4190 = vmatprep.mubr.f32.mxu0 0.0
  %4191 = vmatmul.mubr.f32.gmra.mxu0 %v2857
  %v4192 = vpop.f32.mrf.mxu0
  %v4193 = vadd.f32 %v2101, %v4192
  %v4194 = vpop.f32.mrf.mxu0
  %4195 = vmatprep.mubr.f32.mxu0 0.0
  %4196 = vmatmul.mubr.f32.gmra.mxu0 %v2860
  %v4197 = vpop.f32.mrf.mxu0
  %v4198 = vadd.f32 %v2101, %v4197
  %v4199 = vpop.f32.mrf.mxu0
  %4200 = vmatprep.mubr.f32.mxu0 0.0
  %4201 = vmatmul.mubr.f32.gmra.mxu0 %v2863
  %v4202 = vpop.f32.mrf.mxu0
  %v4203 = vadd.f32 %v2101, %v4202
  %v4204 = vpop.f32.mrf.mxu0
  %4205 = vmatprep.mubr.f32.mxu0 0.0
  %4206 = vmatmul.mubr.f32.gmra.mxu0 %v2866
  %v4207 = vpop.f32.mrf.mxu0
  %v4208 = vadd.f32 %v2101, %v4207
  %v4209 = vpop.f32.mrf.mxu0
  %4210 = vmatprep.mubr.f32.mxu0 0.0
  %4211 = vmatmul.mubr.f32.gmra.mxu0 %v2869
  %v4212 = vpop.f32.mrf.mxu0
  %v4213 = vadd.f32 %v2101, %v4212
  %v4214 = vpop.f32.mrf.mxu0
  %4215 = vdwg.mxu0
  %v4216 = vsub.f32 %v2938, %v23
  %v4217 = vsub.f32 %v2943, %v24
  %v4218 = vsub.f32 %v2948, %v25
  %v4219 = vsub.f32 %v2953, %v26
  %v4220 = vsub.f32 %v2958, %v27
  %v4221 = vsub.f32 %v2963, %v28
  %v4222 = vsub.f32 %v2968, %v29
  %v4223 = vsub.f32 %v2973, %v30
  %v4224 = vsub.f32 %v2978, %v31
  %v4225 = vsub.f32 %v2983, %v32
  %v4226 = vsub.f32 %v2988, %v33
  %v4227 = vsub.f32 %v2993, %v34
  %v4228 = vsub.f32 %v2998, %v35
  %v4229 = vsub.f32 %v3003, %v36
  %v4230 = vsub.f32 %v3008, %v37
  %v4231 = vsub.f32 %v3013, %v38
  %v4232 = vsub.f32 %v3018, %v39
  %v4233 = vsub.f32 %v3023, %v40
  %v4234 = vsub.f32 %v3028, %v41
  %v4235 = vsub.f32 %v3033, %v42
  %v4236 = vsub.f32 %v3038, %v43
  %v4237 = vsub.f32 %v3043, %v44
  %v4238 = vsub.f32 %v3048, %v45
  %v4239 = vsub.f32 %v3053, %v46
  %v4240 = vsub.f32 %v3058, %v47
  %v4241 = vsub.f32 %v3063, %v48
  %v4242 = vsub.f32 %v3068, %v49
  %v4243 = vsub.f32 %v3073, %v50
  %v4244 = vsub.f32 %v3078, %v51
  %v4245 = vsub.f32 %v3083, %v52
  %v4246 = vsub.f32 %v3088, %v53
  %v4247 = vsub.f32 %v3093, %v54
  %v4248 = vsub.f32 %v3098, %v55
  %v4249 = vsub.f32 %v3103, %v56
  %v4250 = vsub.f32 %v3108, %v57
  %v4251 = vsub.f32 %v3113, %v58
  %v4252 = vsub.f32 %v3118, %v59
  %v4253 = vsub.f32 %v3123, %v60
  %v4254 = vsub.f32 %v3128, %v61
  %v4255 = vsub.f32 %v3133, %v62
  %v4256 = vsub.f32 %v3138, %v63
  %v4257 = vsub.f32 %v3143, %v64
  %v4258 = vsub.f32 %v3148, %v65
  %v4259 = vsub.f32 %v3153, %v66
  %v4260 = vsub.f32 %v3158, %v67
  %v4261 = vsub.f32 %v3163, %v68
  %v4262 = vsub.f32 %v3168, %v69
  %v4263 = vsub.f32 %v3173, %v70
  %v4264 = vsub.f32 %v3178, %v71
  %v4265 = vsub.f32 %v3183, %v72
  %v4266 = vsub.f32 %v3188, %v73
  %v4267 = vsub.f32 %v3193, %v74
  %v4268 = vsub.f32 %v3198, %v75
  %v4269 = vsub.f32 %v3203, %v76
  %v4270 = vsub.f32 %v3208, %v77
  %v4271 = vsub.f32 %v3213, %v78
  %v4272 = vsub.f32 %v3218, %v79
  %v4273 = vsub.f32 %v3223, %v80
  %v4274 = vsub.f32 %v3228, %v81
  %v4275 = vsub.f32 %v3233, %v82
  %v4276 = vsub.f32 %v3238, %v83
  %v4277 = vsub.f32 %v3243, %v84
  %v4278 = vsub.f32 %v3248, %v85
  %v4279 = vsub.f32 %v3253, %v86
  %v4280 = vsub.f32 %v3258, %v23
  %v4281 = vsub.f32 %v3263, %v24
  %v4282 = vsub.f32 %v3268, %v25
  %v4283 = vsub.f32 %v3273, %v26
  %v4284 = vsub.f32 %v3278, %v27
  %v4285 = vsub.f32 %v3283, %v28
  %v4286 = vsub.f32 %v3288, %v29
  %v4287 = vsub.f32 %v3293, %v30
  %v4288 = vsub.f32 %v3298, %v31
  %v4289 = vsub.f32 %v3303, %v32
  %v4290 = vsub.f32 %v3308, %v33
  %v4291 = vsub.f32 %v3313, %v34
  %v4292 = vsub.f32 %v3318, %v35
  %v4293 = vsub.f32 %v3323, %v36
  %v4294 = vsub.f32 %v3328, %v37
  %v4295 = vsub.f32 %v3333, %v38
  %v4296 = vsub.f32 %v3338, %v39
  %v4297 = vsub.f32 %v3343, %v40
  %v4298 = vsub.f32 %v3348, %v41
  %v4299 = vsub.f32 %v3353, %v42
  %v4300 = vsub.f32 %v3358, %v43
  %v4301 = vsub.f32 %v3363, %v44
  %v4302 = vsub.f32 %v3368, %v45
  %v4303 = vsub.f32 %v3373, %v46
  %v4304 = vsub.f32 %v3378, %v47
  %v4305 = vsub.f32 %v3383, %v48
  %v4306 = vsub.f32 %v3388, %v49
  %v4307 = vsub.f32 %v3393, %v50
  %v4308 = vsub.f32 %v3398, %v51
  %v4309 = vsub.f32 %v3403, %v52
  %v4310 = vsub.f32 %v3408, %v53
  %v4311 = vsub.f32 %v3413, %v54
  %v4312 = vsub.f32 %v3418, %v55
  %v4313 = vsub.f32 %v3423, %v56
  %v4314 = vsub.f32 %v3428, %v57
  %v4315 = vsub.f32 %v3433, %v58
  %v4316 = vsub.f32 %v3438, %v59
  %v4317 = vsub.f32 %v3443, %v60
  %v4318 = vsub.f32 %v3448, %v61
  %v4319 = vsub.f32 %v3453, %v62
  %v4320 = vsub.f32 %v3458, %v63
  %v4321 = vsub.f32 %v3463, %v64
  %v4322 = vsub.f32 %v3468, %v65
  %v4323 = vsub.f32 %v3473, %v66
  %v4324 = vsub.f32 %v3478, %v67
  %v4325 = vsub.f32 %v3483, %v68
  %v4326 = vsub.f32 %v3488, %v69
  %v4327 = vsub.f32 %v3493, %v70
  %v4328 = vsub.f32 %v3498, %v71
  %v4329 = vsub.f32 %v3503, %v72
  %v4330 = vsub.f32 %v3508, %v73
  %v4331 = vsub.f32 %v3513, %v74
  %v4332 = vsub.f32 %v3518, %v75
  %v4333 = vsub.f32 %v3523, %v76
  %v4334 = vsub.f32 %v3528, %v77
  %v4335 = vsub.f32 %v3533, %v78
  %v4336 = vsub.f32 %v3538, %v79
  %v4337 = vsub.f32 %v3543, %v80
  %v4338 = vsub.f32 %v3548, %v81
  %v4339 = vsub.f32 %v3553, %v82
  %v4340 = vsub.f32 %v3558, %v83
  %v4341 = vsub.f32 %v3563, %v84
  %v4342 = vsub.f32 %v3568, %v85
  %v4343 = vsub.f32 %v3573, %v86
  %v4344 = vsub.f32 %v3578, %v23
  %v4345 = vsub.f32 %v3583, %v24
  %v4346 = vsub.f32 %v3588, %v25
  %v4347 = vsub.f32 %v3593, %v26
  %v4348 = vsub.f32 %v3598, %v27
  %v4349 = vsub.f32 %v3603, %v28
  %v4350 = vsub.f32 %v3608, %v29
  %v4351 = vsub.f32 %v3613, %v30
  %v4352 = vsub.f32 %v3618, %v31
  %v4353 = vsub.f32 %v3623, %v32
  %v4354 = vsub.f32 %v3628, %v33
  %v4355 = vsub.f32 %v3633, %v34
  %v4356 = vsub.f32 %v3638, %v35
  %v4357 = vsub.f32 %v3643, %v36
  %v4358 = vsub.f32 %v3648, %v37
  %v4359 = vsub.f32 %v3653, %v38
  %v4360 = vsub.f32 %v3658, %v39
  %v4361 = vsub.f32 %v3663, %v40
  %v4362 = vsub.f32 %v3668, %v41
  %v4363 = vsub.f32 %v3673, %v42
  %v4364 = vsub.f32 %v3678, %v43
  %v4365 = vsub.f32 %v3683, %v44
  %v4366 = vsub.f32 %v3688, %v45
  %v4367 = vsub.f32 %v3693, %v46
  %v4368 = vsub.f32 %v3698, %v47
  %v4369 = vsub.f32 %v3703, %v48
  %v4370 = vsub.f32 %v3708, %v49
  %v4371 = vsub.f32 %v3713, %v50
  %v4372 = vsub.f32 %v3718, %v51
  %v4373 = vsub.f32 %v3723, %v52
  %v4374 = vsub.f32 %v3728, %v53
  %v4375 = vsub.f32 %v3733, %v54
  %v4376 = vsub.f32 %v3738, %v55
  %v4377 = vsub.f32 %v3743, %v56
  %v4378 = vsub.f32 %v3748, %v57
  %v4379 = vsub.f32 %v3753, %v58
  %v4380 = vsub.f32 %v3758, %v59
  %v4381 = vsub.f32 %v3763, %v60
  %v4382 = vsub.f32 %v3768, %v61
  %v4383 = vsub.f32 %v3773, %v62
  %v4384 = vsub.f32 %v3778, %v63
  %v4385 = vsub.f32 %v3783, %v64
  %v4386 = vsub.f32 %v3788, %v65
  %v4387 = vsub.f32 %v3793, %v66
  %v4388 = vsub.f32 %v3798, %v67
  %v4389 = vsub.f32 %v3803, %v68
  %v4390 = vsub.f32 %v3808, %v69
  %v4391 = vsub.f32 %v3813, %v70
  %v4392 = vsub.f32 %v3818, %v71
  %v4393 = vsub.f32 %v3823, %v72
  %v4394 = vsub.f32 %v3828, %v73
  %v4395 = vsub.f32 %v3833, %v74
  %v4396 = vsub.f32 %v3838, %v75
  %v4397 = vsub.f32 %v3843, %v76
  %v4398 = vsub.f32 %v3848, %v77
  %v4399 = vsub.f32 %v3853, %v78
  %v4400 = vsub.f32 %v3858, %v79
  %v4401 = vsub.f32 %v3863, %v80
  %v4402 = vsub.f32 %v3868, %v81
  %v4403 = vsub.f32 %v3873, %v82
  %v4404 = vsub.f32 %v3878, %v83
  %v4405 = vsub.f32 %v3883, %v84
  %v4406 = vsub.f32 %v3888, %v85
  %v4407 = vsub.f32 %v3893, %v86
  %v4408 = vsub.f32 %v3898, %v23
  %v4409 = vsub.f32 %v3903, %v24
  %v4410 = vsub.f32 %v3908, %v25
  %v4411 = vsub.f32 %v3913, %v26
  %v4412 = vsub.f32 %v3918, %v27
  %v4413 = vsub.f32 %v3923, %v28
  %v4414 = vsub.f32 %v3928, %v29
  %v4415 = vsub.f32 %v3933, %v30
  %v4416 = vsub.f32 %v3938, %v31
  %v4417 = vsub.f32 %v3943, %v32
  %v4418 = vsub.f32 %v3948, %v33
  %v4419 = vsub.f32 %v3953, %v34
  %v4420 = vsub.f32 %v3958, %v35
  %v4421 = vsub.f32 %v3963, %v36
  %v4422 = vsub.f32 %v3968, %v37
  %v4423 = vsub.f32 %v3973, %v38
  %v4424 = vsub.f32 %v3978, %v39
  %v4425 = vsub.f32 %v3983, %v40
  %v4426 = vsub.f32 %v3988, %v41
  %v4427 = vsub.f32 %v3993, %v42
  %v4428 = vsub.f32 %v3998, %v43
  %v4429 = vsub.f32 %v4003, %v44
  %v4430 = vsub.f32 %v4008, %v45
  %v4431 = vsub.f32 %v4013, %v46
  %v4432 = vsub.f32 %v4018, %v47
  %v4433 = vsub.f32 %v4023, %v48
  %v4434 = vsub.f32 %v4028, %v49
  %v4435 = vsub.f32 %v4033, %v50
  %v4436 = vsub.f32 %v4038, %v51
  %v4437 = vsub.f32 %v4043, %v52
  %v4438 = vsub.f32 %v4048, %v53
  %v4439 = vsub.f32 %v4053, %v54
  %v4440 = vsub.f32 %v4058, %v55
  %v4441 = vsub.f32 %v4063, %v56
  %v4442 = vsub.f32 %v4068, %v57
  %v4443 = vsub.f32 %v4073, %v58
  %v4444 = vsub.f32 %v4078, %v59
  %v4445 = vsub.f32 %v4083, %v60
  %v4446 = vsub.f32 %v4088, %v61
  %v4447 = vsub.f32 %v4093, %v62
  %v4448 = vsub.f32 %v4098, %v63
  %v4449 = vsub.f32 %v4103, %v64
  %v4450 = vsub.f32 %v4108, %v65
  %v4451 = vsub.f32 %v4113, %v66
  %v4452 = vsub.f32 %v4118, %v67
  %v4453 = vsub.f32 %v4123, %v68
  %v4454 = vsub.f32 %v4128, %v69
  %v4455 = vsub.f32 %v4133, %v70
  %v4456 = vsub.f32 %v4138, %v71
  %v4457 = vsub.f32 %v4143, %v72
  %v4458 = vsub.f32 %v4148, %v73
  %v4459 = vsub.f32 %v4153, %v74
  %v4460 = vsub.f32 %v4158, %v75
  %v4461 = vsub.f32 %v4163, %v76
  %v4462 = vsub.f32 %v4168, %v77
  %v4463 = vsub.f32 %v4173, %v78
  %v4464 = vsub.f32 %v4178, %v79
  %v4465 = vsub.f32 %v4183, %v80
  %v4466 = vsub.f32 %v4188, %v81
  %v4467 = vsub.f32 %v4193, %v82
  %v4468 = vsub.f32 %v4198, %v83
  %v4469 = vsub.f32 %v4203, %v84
  %v4470 = vsub.f32 %v4208, %v85
  %v4471 = vsub.f32 %v4213, %v86
  %v4472 = vmul.f32 %v343, %v343
  %v4473 = vmul.f32 %v344, %v344
  %v4474 = vmul.f32 %v345, %v345
  %v4475 = vmul.f32 %v346, %v346
  %v4476 = vmul.f32 %v347, %v347
  %v4477 = vmul.f32 %v348, %v348
  %v4478 = vmul.f32 %v349, %v349
  %v4479 = vmul.f32 %v350, %v350
  %v4480 = vmul.f32 %v351, %v351
  %v4481 = vmul.f32 %v352, %v352
  %v4482 = vmul.f32 %v353, %v353
  %v4483 = vmul.f32 %v354, %v354
  %v4484 = vmul.f32 %v355, %v355
  %v4485 = vmul.f32 %v356, %v356
  %v4486 = vmul.f32 %v357, %v357
  %v4487 = vmul.f32 %v358, %v358
  %v4488 = vmul.f32 %v359, %v359
  %v4489 = vmul.f32 %v360, %v360
  %v4490 = vmul.f32 %v361, %v361
  %v4491 = vmul.f32 %v362, %v362
  %v4492 = vmul.f32 %v363, %v363
  %v4493 = vmul.f32 %v364, %v364
  %v4494 = vmul.f32 %v365, %v365
  %v4495 = vmul.f32 %v366, %v366
  %v4496 = vmul.f32 %v367, %v367
  %v4497 = vmul.f32 %v368, %v368
  %v4498 = vmul.f32 %v369, %v369
  %v4499 = vmul.f32 %v370, %v370
  %v4500 = vmul.f32 %v371, %v371
  %v4501 = vmul.f32 %v372, %v372
  %v4502 = vmul.f32 %v373, %v373
  %v4503 = vmul.f32 %v374, %v374
  %v4504 = vmul.f32 %v375, %v375
  %v4505 = vmul.f32 %v376, %v376
  %v4506 = vmul.f32 %v377, %v377
  %v4507 = vmul.f32 %v378, %v378
  %v4508 = vmul.f32 %v379, %v379
  %v4509 = vmul.f32 %v380, %v380
  %v4510 = vmul.f32 %v381, %v381
  %v4511 = vmul.f32 %v382, %v382
  %v4512 = vmul.f32 %v383, %v383
  %v4513 = vmul.f32 %v384, %v384
  %v4514 = vmul.f32 %v385, %v385
  %v4515 = vmul.f32 %v386, %v386
  %v4516 = vmul.f32 %v387, %v387
  %v4517 = vmul.f32 %v388, %v388
  %v4518 = vmul.f32 %v389, %v389
  %v4519 = vmul.f32 %v390, %v390
  %v4520 = vmul.f32 %v391, %v391
  %v4521 = vmul.f32 %v392, %v392
  %v4522 = vmul.f32 %v393, %v393
  %v4523 = vmul.f32 %v394, %v394
  %v4524 = vmul.f32 %v395, %v395
  %v4525 = vmul.f32 %v396, %v396
  %v4526 = vmul.f32 %v397, %v397
  %v4527 = vmul.f32 %v398, %v398
  %v4528 = vmul.f32 %v399, %v399
  %v4529 = vmul.f32 %v400, %v400
  %v4530 = vmul.f32 %v401, %v401
  %v4531 = vmul.f32 %v402, %v402
  %v4532 = vmul.f32 %v403, %v403
  %v4533 = vmul.f32 %v404, %v404
  %v4534 = vmul.f32 %v405, %v405
  %v4535 = vmul.f32 %v406, %v406
  %v4536 = vmul.f32 %v407, %v407
  %v4537 = vmul.f32 %v408, %v408
  %v4538 = vmul.f32 %v409, %v409
  %v4539 = vmul.f32 %v410, %v410
  %v4540 = vmul.f32 %v411, %v411
  %v4541 = vmul.f32 %v412, %v412
  %v4542 = vmul.f32 %v413, %v413
  %v4543 = vmul.f32 %v414, %v414
  %v4544 = vmul.f32 %v415, %v415
  %v4545 = vmul.f32 %v416, %v416
  %v4546 = vmul.f32 %v417, %v417
  %v4547 = vmul.f32 %v418, %v418
  %v4548 = vmul.f32 %v419, %v419
  %v4549 = vmul.f32 %v420, %v420
  %v4550 = vmul.f32 %v421, %v421
  %v4551 = vmul.f32 %v422, %v422
  %v4552 = vmul.f32 %v423, %v423
  %v4553 = vmul.f32 %v424, %v424
  %v4554 = vmul.f32 %v425, %v425
  %v4555 = vmul.f32 %v426, %v426
  %v4556 = vmul.f32 %v427, %v427
  %v4557 = vmul.f32 %v428, %v428
  %v4558 = vmul.f32 %v429, %v429
  %v4559 = vmul.f32 %v430, %v430
  %v4560 = vmul.f32 %v431, %v431
  %v4561 = vmul.f32 %v432, %v432
  %v4562 = vmul.f32 %v433, %v433
  %v4563 = vmul.f32 %v434, %v434
  %v4564 = vmul.f32 %v435, %v435
  %v4565 = vmul.f32 %v436, %v436
  %v4566 = vmul.f32 %v437, %v437
  %v4567 = vmul.f32 %v438, %v438
  %v4568 = vmul.f32 %v439, %v439
  %v4569 = vmul.f32 %v440, %v440
  %v4570 = vmul.f32 %v441, %v441
  %v4571 = vmul.f32 %v442, %v442
  %v4572 = vmul.f32 %v443, %v443
  %v4573 = vmul.f32 %v444, %v444
  %v4574 = vmul.f32 %v445, %v445
  %v4575 = vmul.f32 %v446, %v446
  %v4576 = vmul.f32 %v447, %v447
  %v4577 = vmul.f32 %v448, %v448
  %v4578 = vmul.f32 %v449, %v449
  %v4579 = vmul.f32 %v450, %v450
  %v4580 = vmul.f32 %v451, %v451
  %v4581 = vmul.f32 %v452, %v452
  %v4582 = vmul.f32 %v453, %v453
  %v4583 = vmul.f32 %v454, %v454
  %v4584 = vmul.f32 %v455, %v455
  %v4585 = vmul.f32 %v456, %v456
  %v4586 = vmul.f32 %v457, %v457
  %v4587 = vmul.f32 %v458, %v458
  %v4588 = vmul.f32 %v459, %v459
  %v4589 = vmul.f32 %v460, %v460
  %v4590 = vmul.f32 %v461, %v461
  %v4591 = vmul.f32 %v462, %v462
  %v4592 = vmul.f32 %v463, %v463
  %v4593 = vmul.f32 %v464, %v464
  %v4594 = vmul.f32 %v465, %v465
  %v4595 = vmul.f32 %v466, %v466
  %v4596 = vmul.f32 %v467, %v467
  %v4597 = vmul.f32 %v468, %v468
  %v4598 = vmul.f32 %v469, %v469
  %v4599 = vmul.f32 %v470, %v470
  %v4600 = vmul.f32 %v471, %v471
  %v4601 = vmul.f32 %v472, %v472
  %v4602 = vmul.f32 %v473, %v473
  %v4603 = vmul.f32 %v474, %v474
  %v4604 = vmul.f32 %v475, %v475
  %v4605 = vmul.f32 %v476, %v476
  %v4606 = vmul.f32 %v477, %v477
  %v4607 = vmul.f32 %v478, %v478
  %v4608 = vmul.f32 %v479, %v479
  %v4609 = vmul.f32 %v480, %v480
  %v4610 = vmul.f32 %v481, %v481
  %v4611 = vmul.f32 %v482, %v482
  %v4612 = vmul.f32 %v483, %v483
  %v4613 = vmul.f32 %v484, %v484
  %v4614 = vmul.f32 %v485, %v485
  %v4615 = vmul.f32 %v486, %v486
  %v4616 = vmul.f32 %v487, %v487
  %v4617 = vmul.f32 %v488, %v488
  %v4618 = vmul.f32 %v489, %v489
  %v4619 = vmul.f32 %v490, %v490
  %v4620 = vmul.f32 %v491, %v491
  %v4621 = vmul.f32 %v492, %v492
  %v4622 = vmul.f32 %v493, %v493
  %v4623 = vmul.f32 %v494, %v494
  %v4624 = vmul.f32 %v495, %v495
  %v4625 = vmul.f32 %v496, %v496
  %v4626 = vmul.f32 %v497, %v497
  %v4627 = vmul.f32 %v498, %v498
  %v4628 = vmul.f32 %v499, %v499
  %v4629 = vmul.f32 %v500, %v500
  %v4630 = vmul.f32 %v501, %v501
  %v4631 = vmul.f32 %v502, %v502
  %v4632 = vmul.f32 %v503, %v503
  %v4633 = vmul.f32 %v504, %v504
  %v4634 = vmul.f32 %v505, %v505
  %v4635 = vmul.f32 %v506, %v506
  %v4636 = vmul.f32 %v507, %v507
  %v4637 = vmul.f32 %v508, %v508
  %v4638 = vmul.f32 %v509, %v509
  %v4639 = vmul.f32 %v510, %v510
  %v4640 = vmul.f32 %v511, %v511
  %v4641 = vmul.f32 %v512, %v512
  %v4642 = vmul.f32 %v513, %v513
  %v4643 = vmul.f32 %v514, %v514
  %v4644 = vmul.f32 %v515, %v515
  %v4645 = vmul.f32 %v516, %v516
  %v4646 = vmul.f32 %v517, %v517
  %v4647 = vmul.f32 %v518, %v518
  %v4648 = vmul.f32 %v519, %v519
  %v4649 = vmul.f32 %v520, %v520
  %v4650 = vmul.f32 %v521, %v521
  %v4651 = vmul.f32 %v522, %v522
  %v4652 = vmul.f32 %v523, %v523
  %v4653 = vmul.f32 %v524, %v524
  %v4654 = vmul.f32 %v525, %v525
  %v4655 = vmul.f32 %v526, %v526
  %v4656 = vmul.f32 %v527, %v527
  %v4657 = vmul.f32 %v528, %v528
  %v4658 = vmul.f32 %v529, %v529
  %v4659 = vmul.f32 %v530, %v530
  %v4660 = vmul.f32 %v531, %v531
  %v4661 = vmul.f32 %v532, %v532
  %v4662 = vmul.f32 %v533, %v533
  %v4663 = vmul.f32 %v534, %v534
  %v4664 = vmul.f32 %v535, %v535
  %v4665 = vmul.f32 %v536, %v536
  %v4666 = vmul.f32 %v537, %v537
  %v4667 = vmul.f32 %v538, %v538
  %v4668 = vmul.f32 %v539, %v539
  %v4669 = vmul.f32 %v540, %v540
  %v4670 = vmul.f32 %v541, %v541
  %v4671 = vmul.f32 %v542, %v542
  %v4672 = vmul.f32 %v543, %v543
  %v4673 = vmul.f32 %v544, %v544
  %v4674 = vmul.f32 %v545, %v545
  %v4675 = vmul.f32 %v546, %v546
  %v4676 = vmul.f32 %v547, %v547
  %v4677 = vmul.f32 %v548, %v548
  %v4678 = vmul.f32 %v549, %v549
  %v4679 = vmul.f32 %v550, %v550
  %v4680 = vmul.f32 %v551, %v551
  %v4681 = vmul.f32 %v552, %v552
  %v4682 = vmul.f32 %v553, %v553
  %v4683 = vmul.f32 %v554, %v554
  %v4684 = vmul.f32 %v555, %v555
  %v4685 = vmul.f32 %v556, %v556
  %v4686 = vmul.f32 %v557, %v557
  %v4687 = vmul.f32 %v558, %v558
  %v4688 = vmul.f32 %v559, %v559
  %v4689 = vmul.f32 %v560, %v560
  %v4690 = vmul.f32 %v561, %v561
  %v4691 = vmul.f32 %v562, %v562
  %v4692 = vmul.f32 %v563, %v563
  %v4693 = vmul.f32 %v564, %v564
  %v4694 = vmul.f32 %v565, %v565
  %v4695 = vmul.f32 %v566, %v566
  %v4696 = vmul.f32 %v567, %v567
  %v4697 = vmul.f32 %v568, %v568
  %v4698 = vmul.f32 %v569, %v569
  %v4699 = vmul.f32 %v570, %v570
  %v4700 = vmul.f32 %v571, %v571
  %v4701 = vmul.f32 %v572, %v572
  %v4702 = vmul.f32 %v573, %v573
  %v4703 = vmul.f32 %v574, %v574
  %v4704 = vmul.f32 %v575, %v575
  %v4705 = vmul.f32 %v576, %v576
  %v4706 = vmul.f32 %v577, %v577
  %v4707 = vmul.f32 %v578, %v578
  %v4708 = vmul.f32 %v579, %v579
  %v4709 = vmul.f32 %v580, %v580
  %v4710 = vmul.f32 %v581, %v581
  %v4711 = vmul.f32 %v582, %v582
  %v4712 = vmul.f32 %v583, %v583
  %v4713 = vmul.f32 %v584, %v584
  %v4714 = vmul.f32 %v585, %v585
  %v4715 = vmul.f32 %v586, %v586
  %v4716 = vmul.f32 %v587, %v587
  %v4717 = vmul.f32 %v588, %v588
  %v4718 = vmul.f32 %v589, %v589
  %v4719 = vmul.f32 %v590, %v590
  %v4720 = vmul.f32 %v591, %v591
  %v4721 = vmul.f32 %v592, %v592
  %v4722 = vmul.f32 %v593, %v593
  %v4723 = vmul.f32 %v594, %v594
  %v4724 = vmul.f32 %v595, %v595
  %v4725 = vmul.f32 %v596, %v596
  %v4726 = vmul.f32 %v597, %v597
  %v4727 = vmul.f32 %v598, %v598
  %v4728 = vmul.f32 %v1838, %v1838
  %v4729 = vmul.f32 %v1839, %v1839
  %v4730 = vmul.f32 %v1840, %v1840
  %v4731 = vmul.f32 %v1841, %v1841
  %v4732 = vmul.f32 %v1842, %v1842
  %v4733 = vmul.f32 %v1843, %v1843
  %v4734 = vmul.f32 %v1844, %v1844
  %v4735 = vmul.f32 %v1845, %v1845
  %v4736 = vmul.f32 %v1846, %v1846
  %v4737 = vmul.f32 %v1847, %v1847
  %v4738 = vmul.f32 %v1848, %v1848
  %v4739 = vmul.f32 %v1849, %v1849
  %v4740 = vmul.f32 %v1850, %v1850
  %v4741 = vmul.f32 %v1851, %v1851
  %v4742 = vmul.f32 %v1852, %v1852
  %v4743 = vmul.f32 %v1853, %v1853
  %v4744 = vmul.f32 %v1854, %v1854
  %v4745 = vmul.f32 %v1855, %v1855
  %v4746 = vmul.f32 %v1856, %v1856
  %v4747 = vmul.f32 %v1857, %v1857
  %v4748 = vmul.f32 %v1858, %v1858
  %v4749 = vmul.f32 %v1859, %v1859
  %v4750 = vmul.f32 %v1860, %v1860
  %v4751 = vmul.f32 %v1861, %v1861
  %v4752 = vmul.f32 %v1862, %v1862
  %v4753 = vmul.f32 %v1863, %v1863
  %v4754 = vmul.f32 %v1864, %v1864
  %v4755 = vmul.f32 %v1865, %v1865
  %v4756 = vmul.f32 %v1866, %v1866
  %v4757 = vmul.f32 %v1867, %v1867
  %v4758 = vmul.f32 %v1868, %v1868
  %v4759 = vmul.f32 %v1869, %v1869
  %v4760 = vmul.f32 %v1870, %v1870
  %v4761 = vmul.f32 %v1871, %v1871
  %v4762 = vmul.f32 %v1872, %v1872
  %v4763 = vmul.f32 %v1873, %v1873
  %v4764 = vmul.f32 %v1874, %v1874
  %v4765 = vmul.f32 %v1875, %v1875
  %v4766 = vmul.f32 %v1876, %v1876
  %v4767 = vmul.f32 %v1877, %v1877
  %v4768 = vmul.f32 %v1878, %v1878
  %v4769 = vmul.f32 %v1879, %v1879
  %v4770 = vmul.f32 %v1880, %v1880
  %v4771 = vmul.f32 %v1881, %v1881
  %v4772 = vmul.f32 %v1882, %v1882
  %v4773 = vmul.f32 %v1883, %v1883
  %v4774 = vmul.f32 %v1884, %v1884
  %v4775 = vmul.f32 %v1885, %v1885
  %v4776 = vmul.f32 %v1886, %v1886
  %v4777 = vmul.f32 %v1887, %v1887
  %v4778 = vmul.f32 %v1888, %v1888
  %v4779 = vmul.f32 %v1889, %v1889
  %v4780 = vmul.f32 %v1890, %v1890
  %v4781 = vmul.f32 %v1891, %v1891
  %v4782 = vmul.f32 %v1892, %v1892
  %v4783 = vmul.f32 %v1893, %v1893
  %v4784 = vmul.f32 %v1894, %v1894
  %v4785 = vmul.f32 %v1895, %v1895
  %v4786 = vmul.f32 %v1896, %v1896
  %v4787 = vmul.f32 %v1897, %v1897
  %v4788 = vmul.f32 %v1898, %v1898
  %v4789 = vmul.f32 %v1899, %v1899
  %v4790 = vmul.f32 %v1900, %v1900
  %v4791 = vmul.f32 %v1901, %v1901
  %v4792 = vmul.f32 %v1902, %v1902
  %v4793 = vmul.f32 %v1903, %v1903
  %v4794 = vmul.f32 %v1904, %v1904
  %v4795 = vmul.f32 %v1905, %v1905
  %v4796 = vmul.f32 %v1906, %v1906
  %v4797 = vmul.f32 %v1907, %v1907
  %v4798 = vmul.f32 %v1908, %v1908
  %v4799 = vmul.f32 %v1909, %v1909
  %v4800 = vmul.f32 %v1910, %v1910
  %v4801 = vmul.f32 %v1911, %v1911
  %v4802 = vmul.f32 %v1912, %v1912
  %v4803 = vmul.f32 %v1913, %v1913
  %v4804 = vmul.f32 %v1914, %v1914
  %v4805 = vmul.f32 %v1915, %v1915
  %v4806 = vmul.f32 %v1916, %v1916
  %v4807 = vmul.f32 %v1917, %v1917
  %v4808 = vmul.f32 %v1918, %v1918
  %v4809 = vmul.f32 %v1919, %v1919
  %v4810 = vmul.f32 %v1920, %v1920
  %v4811 = vmul.f32 %v1921, %v1921
  %v4812 = vmul.f32 %v1922, %v1922
  %v4813 = vmul.f32 %v1923, %v1923
  %v4814 = vmul.f32 %v1924, %v1924
  %v4815 = vmul.f32 %v1925, %v1925
  %v4816 = vmul.f32 %v1926, %v1926
  %v4817 = vmul.f32 %v1927, %v1927
  %v4818 = vmul.f32 %v1928, %v1928
  %v4819 = vmul.f32 %v1929, %v1929
  %v4820 = vmul.f32 %v1930, %v1930
  %v4821 = vmul.f32 %v1931, %v1931
  %v4822 = vmul.f32 %v1932, %v1932
  %v4823 = vmul.f32 %v1933, %v1933
  %v4824 = vmul.f32 %v1934, %v1934
  %v4825 = vmul.f32 %v1935, %v1935
  %v4826 = vmul.f32 %v1936, %v1936
  %v4827 = vmul.f32 %v1937, %v1937
  %v4828 = vmul.f32 %v1938, %v1938
  %v4829 = vmul.f32 %v1939, %v1939
  %v4830 = vmul.f32 %v1940, %v1940
  %v4831 = vmul.f32 %v1941, %v1941
  %v4832 = vmul.f32 %v1942, %v1942
  %v4833 = vmul.f32 %v1943, %v1943
  %v4834 = vmul.f32 %v1944, %v1944
  %v4835 = vmul.f32 %v1945, %v1945
  %v4836 = vmul.f32 %v1946, %v1946
  %v4837 = vmul.f32 %v1947, %v1947
  %v4838 = vmul.f32 %v1948, %v1948
  %v4839 = vmul.f32 %v1949, %v1949
  %v4840 = vmul.f32 %v1950, %v1950
  %v4841 = vmul.f32 %v1951, %v1951
  %v4842 = vmul.f32 %v1952, %v1952
  %v4843 = vmul.f32 %v1953, %v1953
  %v4844 = vmul.f32 %v1954, %v1954
  %v4845 = vmul.f32 %v1955, %v1955
  %v4846 = vmul.f32 %v1956, %v1956
  %v4847 = vmul.f32 %v1957, %v1957
  %v4848 = vmul.f32 %v1958, %v1958
  %v4849 = vmul.f32 %v1959, %v1959
  %v4850 = vmul.f32 %v1960, %v1960
  %v4851 = vmul.f32 %v1961, %v1961
  %v4852 = vmul.f32 %v1962, %v1962
  %v4853 = vmul.f32 %v1963, %v1963
  %v4854 = vmul.f32 %v1964, %v1964
  %v4855 = vmul.f32 %v1965, %v1965
  %v4856 = vmul.f32 %v1966, %v1966
  %v4857 = vmul.f32 %v1967, %v1967
  %v4858 = vmul.f32 %v1968, %v1968
  %v4859 = vmul.f32 %v1969, %v1969
  %v4860 = vmul.f32 %v1970, %v1970
  %v4861 = vmul.f32 %v1971, %v1971
  %v4862 = vmul.f32 %v1972, %v1972
  %v4863 = vmul.f32 %v1973, %v1973
  %v4864 = vmul.f32 %v1974, %v1974
  %v4865 = vmul.f32 %v1975, %v1975
  %v4866 = vmul.f32 %v1976, %v1976
  %v4867 = vmul.f32 %v1977, %v1977
  %v4868 = vmul.f32 %v1978, %v1978
  %v4869 = vmul.f32 %v1979, %v1979
  %v4870 = vmul.f32 %v1980, %v1980
  %v4871 = vmul.f32 %v1981, %v1981
  %v4872 = vmul.f32 %v1982, %v1982
  %v4873 = vmul.f32 %v1983, %v1983
  %v4874 = vmul.f32 %v1984, %v1984
  %v4875 = vmul.f32 %v1985, %v1985
  %v4876 = vmul.f32 %v1986, %v1986
  %v4877 = vmul.f32 %v1987, %v1987
  %v4878 = vmul.f32 %v1988, %v1988
  %v4879 = vmul.f32 %v1989, %v1989
  %v4880 = vmul.f32 %v1990, %v1990
  %v4881 = vmul.f32 %v1991, %v1991
  %v4882 = vmul.f32 %v1992, %v1992
  %v4883 = vmul.f32 %v1993, %v1993
  %v4884 = vmul.f32 %v1994, %v1994
  %v4885 = vmul.f32 %v1995, %v1995
  %v4886 = vmul.f32 %v1996, %v1996
  %v4887 = vmul.f32 %v1997, %v1997
  %v4888 = vmul.f32 %v1998, %v1998
  %v4889 = vmul.f32 %v1999, %v1999
  %v4890 = vmul.f32 %v2000, %v2000
  %v4891 = vmul.f32 %v2001, %v2001
  %v4892 = vmul.f32 %v2002, %v2002
  %v4893 = vmul.f32 %v2003, %v2003
  %v4894 = vmul.f32 %v2004, %v2004
  %v4895 = vmul.f32 %v2005, %v2005
  %v4896 = vmul.f32 %v2006, %v2006
  %v4897 = vmul.f32 %v2007, %v2007
  %v4898 = vmul.f32 %v2008, %v2008
  %v4899 = vmul.f32 %v2009, %v2009
  %v4900 = vmul.f32 %v2010, %v2010
  %v4901 = vmul.f32 %v2011, %v2011
  %v4902 = vmul.f32 %v2012, %v2012
  %v4903 = vmul.f32 %v2013, %v2013
  %v4904 = vmul.f32 %v2014, %v2014
  %v4905 = vmul.f32 %v2015, %v2015
  %v4906 = vmul.f32 %v2016, %v2016
  %v4907 = vmul.f32 %v2017, %v2017
  %v4908 = vmul.f32 %v2018, %v2018
  %v4909 = vmul.f32 %v2019, %v2019
  %v4910 = vmul.f32 %v2020, %v2020
  %v4911 = vmul.f32 %v2021, %v2021
  %v4912 = vmul.f32 %v2022, %v2022
  %v4913 = vmul.f32 %v2023, %v2023
  %v4914 = vmul.f32 %v2024, %v2024
  %v4915 = vmul.f32 %v2025, %v2025
  %v4916 = vmul.f32 %v2026, %v2026
  %v4917 = vmul.f32 %v2027, %v2027
  %v4918 = vmul.f32 %v2028, %v2028
  %v4919 = vmul.f32 %v2029, %v2029
  %v4920 = vmul.f32 %v2030, %v2030
  %v4921 = vmul.f32 %v2031, %v2031
  %v4922 = vmul.f32 %v2032, %v2032
  %v4923 = vmul.f32 %v2033, %v2033
  %v4924 = vmul.f32 %v2034, %v2034
  %v4925 = vmul.f32 %v2035, %v2035
  %v4926 = vmul.f32 %v2036, %v2036
  %v4927 = vmul.f32 %v2037, %v2037
  %v4928 = vmul.f32 %v2038, %v2038
  %v4929 = vmul.f32 %v2039, %v2039
  %v4930 = vmul.f32 %v2040, %v2040
  %v4931 = vmul.f32 %v2041, %v2041
  %v4932 = vmul.f32 %v2042, %v2042
  %v4933 = vmul.f32 %v2043, %v2043
  %v4934 = vmul.f32 %v2044, %v2044
  %v4935 = vmul.f32 %v2045, %v2045
  %v4936 = vmul.f32 %v2046, %v2046
  %v4937 = vmul.f32 %v2047, %v2047
  %v4938 = vmul.f32 %v2048, %v2048
  %v4939 = vmul.f32 %v2049, %v2049
  %v4940 = vmul.f32 %v2050, %v2050
  %v4941 = vmul.f32 %v2051, %v2051
  %v4942 = vmul.f32 %v2052, %v2052
  %v4943 = vmul.f32 %v2053, %v2053
  %v4944 = vmul.f32 %v2054, %v2054
  %v4945 = vmul.f32 %v2055, %v2055
  %v4946 = vmul.f32 %v2056, %v2056
  %v4947 = vmul.f32 %v2057, %v2057
  %v4948 = vmul.f32 %v2058, %v2058
  %v4949 = vmul.f32 %v2059, %v2059
  %v4950 = vmul.f32 %v2060, %v2060
  %v4951 = vmul.f32 %v2061, %v2061
  %v4952 = vmul.f32 %v2062, %v2062
  %v4953 = vmul.f32 %v2063, %v2063
  %v4954 = vmul.f32 %v2064, %v2064
  %v4955 = vmul.f32 %v2065, %v2065
  %v4956 = vmul.f32 %v2066, %v2066
  %v4957 = vmul.f32 %v2067, %v2067
  %v4958 = vmul.f32 %v2068, %v2068
  %v4959 = vmul.f32 %v2069, %v2069
  %v4960 = vmul.f32 %v2070, %v2070
  %v4961 = vmul.f32 %v2071, %v2071
  %v4962 = vmul.f32 %v2072, %v2072
  %v4963 = vmul.f32 %v2073, %v2073
  %v4964 = vmul.f32 %v2074, %v2074
  %v4965 = vmul.f32 %v2075, %v2075
  %v4966 = vmul.f32 %v2076, %v2076
  %v4967 = vmul.f32 %v2077, %v2077
  %v4968 = vmul.f32 %v2078, %v2078
  %v4969 = vmul.f32 %v2079, %v2079
  %v4970 = vmul.f32 %v2080, %v2080
  %v4971 = vmul.f32 %v2081, %v2081
  %v4972 = vmul.f32 %v2082, %v2082
  %v4973 = vmul.f32 %v2083, %v2083
  %v4974 = vmul.f32 %v2084, %v2084
  %v4975 = vmul.f32 %v2085, %v2085
  %v4976 = vmul.f32 %v2086, %v2086
  %v4977 = vmul.f32 %v2087, %v2087
  %v4978 = vmul.f32 %v2088, %v2088
  %v4979 = vmul.f32 %v2089, %v2089
  %v4980 = vmul.f32 %v2090, %v2090
  %v4981 = vmul.f32 %v2091, %v2091
  %v4982 = vmul.f32 %v2092, %v2092
  %v4983 = vmul.f32 %v2093, %v2093
  %v4984 = vsub.f32 %v4472, %v4728
  %v4985 = vsub.f32 %v4473, %v4729
  %v4986 = vsub.f32 %v4474, %v4730
  %v4987 = vsub.f32 %v4475, %v4731
  %v4988 = vsub.f32 %v4476, %v4732
  %v4989 = vsub.f32 %v4477, %v4733
  %v4990 = vsub.f32 %v4478, %v4734
  %v4991 = vsub.f32 %v4479, %v4735
  %v4992 = vsub.f32 %v4480, %v4736
  %v4993 = vsub.f32 %v4481, %v4737
  %v4994 = vsub.f32 %v4482, %v4738
  %v4995 = vsub.f32 %v4483, %v4739
  %v4996 = vsub.f32 %v4484, %v4740
  %v4997 = vsub.f32 %v4485, %v4741
  %v4998 = vsub.f32 %v4486, %v4742
  %v4999 = vsub.f32 %v4487, %v4743
  %v5000 = vsub.f32 %v4488, %v4744
  %v5001 = vsub.f32 %v4489, %v4745
  %v5002 = vsub.f32 %v4490, %v4746
  %v5003 = vsub.f32 %v4491, %v4747
  %v5004 = vsub.f32 %v4492, %v4748
  %v5005 = vsub.f32 %v4493, %v4749
  %v5006 = vsub.f32 %v4494, %v4750
  %v5007 = vsub.f32 %v4495, %v4751
  %v5008 = vsub.f32 %v4496, %v4752
  %v5009 = vsub.f32 %v4497, %v4753
  %v5010 = vsub.f32 %v4498, %v4754
  %v5011 = vsub.f32 %v4499, %v4755
  %v5012 = vsub.f32 %v4500, %v4756
  %v5013 = vsub.f32 %v4501, %v4757
  %v5014 = vsub.f32 %v4502, %v4758
  %v5015 = vsub.f32 %v4503, %v4759
  %v5016 = vsub.f32 %v4504, %v4760
  %v5017 = vsub.f32 %v4505, %v4761
  %v5018 = vsub.f32 %v4506, %v4762
  %v5019 = vsub.f32 %v4507, %v4763
  %v5020 = vsub.f32 %v4508, %v4764
  %v5021 = vsub.f32 %v4509, %v4765
  %v5022 = vsub.f32 %v4510, %v4766
  %v5023 = vsub.f32 %v4511, %v4767
  %v5024 = vsub.f32 %v4512, %v4768
  %v5025 = vsub.f32 %v4513, %v4769
  %v5026 = vsub.f32 %v4514, %v4770
  %v5027 = vsub.f32 %v4515, %v4771
  %v5028 = vsub.f32 %v4516, %v4772
  %v5029 = vsub.f32 %v4517, %v4773
  %v5030 = vsub.f32 %v4518, %v4774
  %v5031 = vsub.f32 %v4519, %v4775
  %v5032 = vsub.f32 %v4520, %v4776
  %v5033 = vsub.f32 %v4521, %v4777
  %v5034 = vsub.f32 %v4522, %v4778
  %v5035 = vsub.f32 %v4523, %v4779
  %v5036 = vsub.f32 %v4524, %v4780
  %v5037 = vsub.f32 %v4525, %v4781
  %v5038 = vsub.f32 %v4526, %v4782
  %v5039 = vsub.f32 %v4527, %v4783
  %v5040 = vsub.f32 %v4528, %v4784
  %v5041 = vsub.f32 %v4529, %v4785
  %v5042 = vsub.f32 %v4530, %v4786
  %v5043 = vsub.f32 %v4531, %v4787
  %v5044 = vsub.f32 %v4532, %v4788
  %v5045 = vsub.f32 %v4533, %v4789
  %v5046 = vsub.f32 %v4534, %v4790
  %v5047 = vsub.f32 %v4535, %v4791
  %v5048 = vsub.f32 %v4536, %v4792
  %v5049 = vsub.f32 %v4537, %v4793
  %v5050 = vsub.f32 %v4538, %v4794
  %v5051 = vsub.f32 %v4539, %v4795
  %v5052 = vsub.f32 %v4540, %v4796
  %v5053 = vsub.f32 %v4541, %v4797
  %v5054 = vsub.f32 %v4542, %v4798
  %v5055 = vsub.f32 %v4543, %v4799
  %v5056 = vsub.f32 %v4544, %v4800
  %v5057 = vsub.f32 %v4545, %v4801
  %v5058 = vsub.f32 %v4546, %v4802
  %v5059 = vsub.f32 %v4547, %v4803
  %v5060 = vsub.f32 %v4548, %v4804
  %v5061 = vsub.f32 %v4549, %v4805
  %v5062 = vsub.f32 %v4550, %v4806
  %v5063 = vsub.f32 %v4551, %v4807
  %v5064 = vsub.f32 %v4552, %v4808
  %v5065 = vsub.f32 %v4553, %v4809
  %v5066 = vsub.f32 %v4554, %v4810
  %v5067 = vsub.f32 %v4555, %v4811
  %v5068 = vsub.f32 %v4556, %v4812
  %v5069 = vsub.f32 %v4557, %v4813
  %v5070 = vsub.f32 %v4558, %v4814
  %v5071 = vsub.f32 %v4559, %v4815
  %v5072 = vsub.f32 %v4560, %v4816
  %v5073 = vsub.f32 %v4561, %v4817
  %v5074 = vsub.f32 %v4562, %v4818
  %v5075 = vsub.f32 %v4563, %v4819
  %v5076 = vsub.f32 %v4564, %v4820
  %v5077 = vsub.f32 %v4565, %v4821
  %v5078 = vsub.f32 %v4566, %v4822
  %v5079 = vsub.f32 %v4567, %v4823
  %v5080 = vsub.f32 %v4568, %v4824
  %v5081 = vsub.f32 %v4569, %v4825
  %v5082 = vsub.f32 %v4570, %v4826
  %v5083 = vsub.f32 %v4571, %v4827
  %v5084 = vsub.f32 %v4572, %v4828
  %v5085 = vsub.f32 %v4573, %v4829
  %v5086 = vsub.f32 %v4574, %v4830
  %v5087 = vsub.f32 %v4575, %v4831
  %v5088 = vsub.f32 %v4576, %v4832
  %v5089 = vsub.f32 %v4577, %v4833
  %v5090 = vsub.f32 %v4578, %v4834
  %v5091 = vsub.f32 %v4579, %v4835
  %v5092 = vsub.f32 %v4580, %v4836
  %v5093 = vsub.f32 %v4581, %v4837
  %v5094 = vsub.f32 %v4582, %v4838
  %v5095 = vsub.f32 %v4583, %v4839
  %v5096 = vsub.f32 %v4584, %v4840
  %v5097 = vsub.f32 %v4585, %v4841
  %v5098 = vsub.f32 %v4586, %v4842
  %v5099 = vsub.f32 %v4587, %v4843
  %v5100 = vsub.f32 %v4588, %v4844
  %v5101 = vsub.f32 %v4589, %v4845
  %v5102 = vsub.f32 %v4590, %v4846
  %v5103 = vsub.f32 %v4591, %v4847
  %v5104 = vsub.f32 %v4592, %v4848
  %v5105 = vsub.f32 %v4593, %v4849
  %v5106 = vsub.f32 %v4594, %v4850
  %v5107 = vsub.f32 %v4595, %v4851
  %v5108 = vsub.f32 %v4596, %v4852
  %v5109 = vsub.f32 %v4597, %v4853
  %v5110 = vsub.f32 %v4598, %v4854
  %v5111 = vsub.f32 %v4599, %v4855
  %v5112 = vsub.f32 %v4600, %v4856
  %v5113 = vsub.f32 %v4601, %v4857
  %v5114 = vsub.f32 %v4602, %v4858
  %v5115 = vsub.f32 %v4603, %v4859
  %v5116 = vsub.f32 %v4604, %v4860
  %v5117 = vsub.f32 %v4605, %v4861
  %v5118 = vsub.f32 %v4606, %v4862
  %v5119 = vsub.f32 %v4607, %v4863
  %v5120 = vsub.f32 %v4608, %v4864
  %v5121 = vsub.f32 %v4609, %v4865
  %v5122 = vsub.f32 %v4610, %v4866
  %v5123 = vsub.f32 %v4611, %v4867
  %v5124 = vsub.f32 %v4612, %v4868
  %v5125 = vsub.f32 %v4613, %v4869
  %v5126 = vsub.f32 %v4614, %v4870
  %v5127 = vsub.f32 %v4615, %v4871
  %v5128 = vsub.f32 %v4616, %v4872
  %v5129 = vsub.f32 %v4617, %v4873
  %v5130 = vsub.f32 %v4618, %v4874
  %v5131 = vsub.f32 %v4619, %v4875
  %v5132 = vsub.f32 %v4620, %v4876
  %v5133 = vsub.f32 %v4621, %v4877
  %v5134 = vsub.f32 %v4622, %v4878
  %v5135 = vsub.f32 %v4623, %v4879
  %v5136 = vsub.f32 %v4624, %v4880
  %v5137 = vsub.f32 %v4625, %v4881
  %v5138 = vsub.f32 %v4626, %v4882
  %v5139 = vsub.f32 %v4627, %v4883
  %v5140 = vsub.f32 %v4628, %v4884
  %v5141 = vsub.f32 %v4629, %v4885
  %v5142 = vsub.f32 %v4630, %v4886
  %v5143 = vsub.f32 %v4631, %v4887
  %v5144 = vsub.f32 %v4632, %v4888
  %v5145 = vsub.f32 %v4633, %v4889
  %v5146 = vsub.f32 %v4634, %v4890
  %v5147 = vsub.f32 %v4635, %v4891
  %v5148 = vsub.f32 %v4636, %v4892
  %v5149 = vsub.f32 %v4637, %v4893
  %v5150 = vsub.f32 %v4638, %v4894
  %v5151 = vsub.f32 %v4639, %v4895
  %v5152 = vsub.f32 %v4640, %v4896
  %v5153 = vsub.f32 %v4641, %v4897
  %v5154 = vsub.f32 %v4642, %v4898
  %v5155 = vsub.f32 %v4643, %v4899
  %v5156 = vsub.f32 %v4644, %v4900
  %v5157 = vsub.f32 %v4645, %v4901
  %v5158 = vsub.f32 %v4646, %v4902
  %v5159 = vsub.f32 %v4647, %v4903
  %v5160 = vsub.f32 %v4648, %v4904
  %v5161 = vsub.f32 %v4649, %v4905
  %v5162 = vsub.f32 %v4650, %v4906
  %v5163 = vsub.f32 %v4651, %v4907
  %v5164 = vsub.f32 %v4652, %v4908
  %v5165 = vsub.f32 %v4653, %v4909
  %v5166 = vsub.f32 %v4654, %v4910
  %v5167 = vsub.f32 %v4655, %v4911
  %v5168 = vsub.f32 %v4656, %v4912
  %v5169 = vsub.f32 %v4657, %v4913
  %v5170 = vsub.f32 %v4658, %v4914
  %v5171 = vsub.f32 %v4659, %v4915
  %v5172 = vsub.f32 %v4660, %v4916
  %v5173 = vsub.f32 %v4661, %v4917
  %v5174 = vsub.f32 %v4662, %v4918
  %v5175 = vsub.f32 %v4663, %v4919
  %v5176 = vsub.f32 %v4664, %v4920
  %v5177 = vsub.f32 %v4665, %v4921
  %v5178 = vsub.f32 %v4666, %v4922
  %v5179 = vsub.f32 %v4667, %v4923
  %v5180 = vsub.f32 %v4668, %v4924
  %v5181 = vsub.f32 %v4669, %v4925
  %v5182 = vsub.f32 %v4670, %v4926
  %v5183 = vsub.f32 %v4671, %v4927
  %v5184 = vsub.f32 %v4672, %v4928
  %v5185 = vsub.f32 %v4673, %v4929
  %v5186 = vsub.f32 %v4674, %v4930
  %v5187 = vsub.f32 %v4675, %v4931
  %v5188 = vsub.f32 %v4676, %v4932
  %v5189 = vsub.f32 %v4677, %v4933
  %v5190 = vsub.f32 %v4678, %v4934
  %v5191 = vsub.f32 %v4679, %v4935
  %v5192 = vsub.f32 %v4680, %v4936
  %v5193 = vsub.f32 %v4681, %v4937
  %v5194 = vsub.f32 %v4682, %v4938
  %v5195 = vsub.f32 %v4683, %v4939
  %v5196 = vsub.f32 %v4684, %v4940
  %v5197 = vsub.f32 %v4685, %v4941
  %v5198 = vsub.f32 %v4686, %v4942
  %v5199 = vsub.f32 %v4687, %v4943
  %v5200 = vsub.f32 %v4688, %v4944
  %v5201 = vsub.f32 %v4689, %v4945
  %v5202 = vsub.f32 %v4690, %v4946
  %v5203 = vsub.f32 %v4691, %v4947
  %v5204 = vsub.f32 %v4692, %v4948
  %v5205 = vsub.f32 %v4693, %v4949
  %v5206 = vsub.f32 %v4694, %v4950
  %v5207 = vsub.f32 %v4695, %v4951
  %v5208 = vsub.f32 %v4696, %v4952
  %v5209 = vsub.f32 %v4697, %v4953
  %v5210 = vsub.f32 %v4698, %v4954
  %v5211 = vsub.f32 %v4699, %v4955
  %v5212 = vsub.f32 %v4700, %v4956
  %v5213 = vsub.f32 %v4701, %v4957
  %v5214 = vsub.f32 %v4702, %v4958
  %v5215 = vsub.f32 %v4703, %v4959
  %v5216 = vsub.f32 %v4704, %v4960
  %v5217 = vsub.f32 %v4705, %v4961
  %v5218 = vsub.f32 %v4706, %v4962
  %v5219 = vsub.f32 %v4707, %v4963
  %v5220 = vsub.f32 %v4708, %v4964
  %v5221 = vsub.f32 %v4709, %v4965
  %v5222 = vsub.f32 %v4710, %v4966
  %v5223 = vsub.f32 %v4711, %v4967
  %v5224 = vsub.f32 %v4712, %v4968
  %v5225 = vsub.f32 %v4713, %v4969
  %v5226 = vsub.f32 %v4714, %v4970
  %v5227 = vsub.f32 %v4715, %v4971
  %v5228 = vsub.f32 %v4716, %v4972
  %v5229 = vsub.f32 %v4717, %v4973
  %v5230 = vsub.f32 %v4718, %v4974
  %v5231 = vsub.f32 %v4719, %v4975
  %v5232 = vsub.f32 %v4720, %v4976
  %v5233 = vsub.f32 %v4721, %v4977
  %v5234 = vsub.f32 %v4722, %v4978
  %v5235 = vsub.f32 %v4723, %v4979
  %v5236 = vsub.f32 %v4724, %v4980
  %v5237 = vsub.f32 %v4725, %v4981
  %v5238 = vsub.f32 %v4726, %v4982
  %v5239 = vsub.f32 %v4727, %v4983
  %v5240 = vsel %vm1389, %v4984, 0.0
  %5241 = vadd.xlane.f32.xlu0 %v5240
  %v5242 = vpop.xlane.xlu0 %5241
  %v5243 = vsel %vm1389, %v4985, 0.0
  %5244 = vadd.xlane.f32.xlu0 %v5243
  %v5245 = vpop.xlane.xlu0 %5244
  %v5246 = vsel %vm1389, %v4986, 0.0
  %5247 = vadd.xlane.f32.xlu0 %v5246
  %v5248 = vpop.xlane.xlu0 %5247
  %v5249 = vsel %vm1389, %v4987, 0.0
  %5250 = vadd.xlane.f32.xlu0 %v5249
  %v5251 = vpop.xlane.xlu0 %5250
  %v5252 = vsel %vm1389, %v4988, 0.0
  %5253 = vadd.xlane.f32.xlu0 %v5252
  %v5254 = vpop.xlane.xlu0 %5253
  %v5255 = vsel %vm1389, %v4989, 0.0
  %5256 = vadd.xlane.f32.xlu0 %v5255
  %v5257 = vpop.xlane.xlu0 %5256
  %v5258 = vsel %vm1389, %v4990, 0.0
  %5259 = vadd.xlane.f32.xlu0 %v5258
  %v5260 = vpop.xlane.xlu0 %5259
  %v5261 = vsel %vm1389, %v4991, 0.0
  %5262 = vadd.xlane.f32.xlu0 %v5261
  %v5263 = vpop.xlane.xlu0 %5262
  %v5264 = vsel %vm1389, %v4992, 0.0
  %5265 = vadd.xlane.f32.xlu0 %v5264
  %v5266 = vpop.xlane.xlu0 %5265
  %v5267 = vsel %vm1389, %v4993, 0.0
  %5268 = vadd.xlane.f32.xlu0 %v5267
  %v5269 = vpop.xlane.xlu0 %5268
  %v5270 = vsel %vm1389, %v4994, 0.0
  %5271 = vadd.xlane.f32.xlu0 %v5270
  %v5272 = vpop.xlane.xlu0 %5271
  %v5273 = vsel %vm1389, %v4995, 0.0
  %5274 = vadd.xlane.f32.xlu0 %v5273
  %v5275 = vpop.xlane.xlu0 %5274
  %v5276 = vsel %vm1389, %v4996, 0.0
  %5277 = vadd.xlane.f32.xlu0 %v5276
  %v5278 = vpop.xlane.xlu0 %5277
  %v5279 = vsel %vm1389, %v4997, 0.0
  %5280 = vadd.xlane.f32.xlu0 %v5279
  %v5281 = vpop.xlane.xlu0 %5280
  %v5282 = vsel %vm1389, %v4998, 0.0
  %5283 = vadd.xlane.f32.xlu0 %v5282
  %v5284 = vpop.xlane.xlu0 %5283
  %v5285 = vsel %vm1389, %v4999, 0.0
  %5286 = vadd.xlane.f32.xlu0 %v5285
  %v5287 = vpop.xlane.xlu0 %5286
  %v5288 = vsel %vm1389, %v5000, 0.0
  %5289 = vadd.xlane.f32.xlu0 %v5288
  %v5290 = vpop.xlane.xlu0 %5289
  %v5291 = vsel %vm1389, %v5001, 0.0
  %5292 = vadd.xlane.f32.xlu0 %v5291
  %v5293 = vpop.xlane.xlu0 %5292
  %v5294 = vsel %vm1389, %v5002, 0.0
  %5295 = vadd.xlane.f32.xlu0 %v5294
  %v5296 = vpop.xlane.xlu0 %5295
  %v5297 = vsel %vm1389, %v5003, 0.0
  %5298 = vadd.xlane.f32.xlu0 %v5297
  %v5299 = vpop.xlane.xlu0 %5298
  %v5300 = vsel %vm1389, %v5004, 0.0
  %5301 = vadd.xlane.f32.xlu0 %v5300
  %v5302 = vpop.xlane.xlu0 %5301
  %v5303 = vsel %vm1389, %v5005, 0.0
  %5304 = vadd.xlane.f32.xlu0 %v5303
  %v5305 = vpop.xlane.xlu0 %5304
  %v5306 = vsel %vm1389, %v5006, 0.0
  %5307 = vadd.xlane.f32.xlu0 %v5306
  %v5308 = vpop.xlane.xlu0 %5307
  %v5309 = vsel %vm1389, %v5007, 0.0
  %5310 = vadd.xlane.f32.xlu0 %v5309
  %v5311 = vpop.xlane.xlu0 %5310
  %v5312 = vsel %vm1389, %v5008, 0.0
  %5313 = vadd.xlane.f32.xlu0 %v5312
  %v5314 = vpop.xlane.xlu0 %5313
  %v5315 = vsel %vm1389, %v5009, 0.0
  %5316 = vadd.xlane.f32.xlu0 %v5315
  %v5317 = vpop.xlane.xlu0 %5316
  %v5318 = vsel %vm1389, %v5010, 0.0
  %5319 = vadd.xlane.f32.xlu0 %v5318
  %v5320 = vpop.xlane.xlu0 %5319
  %v5321 = vsel %vm1389, %v5011, 0.0
  %5322 = vadd.xlane.f32.xlu0 %v5321
  %v5323 = vpop.xlane.xlu0 %5322
  %v5324 = vsel %vm1389, %v5012, 0.0
  %5325 = vadd.xlane.f32.xlu0 %v5324
  %v5326 = vpop.xlane.xlu0 %5325
  %v5327 = vsel %vm1389, %v5013, 0.0
  %5328 = vadd.xlane.f32.xlu0 %v5327
  %v5329 = vpop.xlane.xlu0 %5328
  %v5330 = vsel %vm1389, %v5014, 0.0
  %5331 = vadd.xlane.f32.xlu0 %v5330
  %v5332 = vpop.xlane.xlu0 %5331
  %v5333 = vsel %vm1389, %v5015, 0.0
  %5334 = vadd.xlane.f32.xlu0 %v5333
  %v5335 = vpop.xlane.xlu0 %5334
  %v5336 = vsel %vm1389, %v5016, 0.0
  %5337 = vadd.xlane.f32.xlu0 %v5336
  %v5338 = vpop.xlane.xlu0 %5337
  %v5339 = vsel %vm1389, %v5017, 0.0
  %5340 = vadd.xlane.f32.xlu0 %v5339
  %v5341 = vpop.xlane.xlu0 %5340
  %v5342 = vsel %vm1389, %v5018, 0.0
  %5343 = vadd.xlane.f32.xlu0 %v5342
  %v5344 = vpop.xlane.xlu0 %5343
  %v5345 = vsel %vm1389, %v5019, 0.0
  %5346 = vadd.xlane.f32.xlu0 %v5345
  %v5347 = vpop.xlane.xlu0 %5346
  %v5348 = vsel %vm1389, %v5020, 0.0
  %5349 = vadd.xlane.f32.xlu0 %v5348
  %v5350 = vpop.xlane.xlu0 %5349
  %v5351 = vsel %vm1389, %v5021, 0.0
  %5352 = vadd.xlane.f32.xlu0 %v5351
  %v5353 = vpop.xlane.xlu0 %5352
  %v5354 = vsel %vm1389, %v5022, 0.0
  %5355 = vadd.xlane.f32.xlu0 %v5354
  %v5356 = vpop.xlane.xlu0 %5355
  %v5357 = vsel %vm1389, %v5023, 0.0
  %5358 = vadd.xlane.f32.xlu0 %v5357
  %v5359 = vpop.xlane.xlu0 %5358
  %v5360 = vsel %vm1389, %v5024, 0.0
  %5361 = vadd.xlane.f32.xlu0 %v5360
  %v5362 = vpop.xlane.xlu0 %5361
  %v5363 = vsel %vm1389, %v5025, 0.0
  %5364 = vadd.xlane.f32.xlu0 %v5363
  %v5365 = vpop.xlane.xlu0 %5364
  %v5366 = vsel %vm1389, %v5026, 0.0
  %5367 = vadd.xlane.f32.xlu0 %v5366
  %v5368 = vpop.xlane.xlu0 %5367
  %v5369 = vsel %vm1389, %v5027, 0.0
  %5370 = vadd.xlane.f32.xlu0 %v5369
  %v5371 = vpop.xlane.xlu0 %5370
  %v5372 = vsel %vm1389, %v5028, 0.0
  %5373 = vadd.xlane.f32.xlu0 %v5372
  %v5374 = vpop.xlane.xlu0 %5373
  %v5375 = vsel %vm1389, %v5029, 0.0
  %5376 = vadd.xlane.f32.xlu0 %v5375
  %v5377 = vpop.xlane.xlu0 %5376
  %v5378 = vsel %vm1389, %v5030, 0.0
  %5379 = vadd.xlane.f32.xlu0 %v5378
  %v5380 = vpop.xlane.xlu0 %5379
  %v5381 = vsel %vm1389, %v5031, 0.0
  %5382 = vadd.xlane.f32.xlu0 %v5381
  %v5383 = vpop.xlane.xlu0 %5382
  %v5384 = vsel %vm1389, %v5032, 0.0
  %5385 = vadd.xlane.f32.xlu0 %v5384
  %v5386 = vpop.xlane.xlu0 %5385
  %v5387 = vsel %vm1389, %v5033, 0.0
  %5388 = vadd.xlane.f32.xlu0 %v5387
  %v5389 = vpop.xlane.xlu0 %5388
  %v5390 = vsel %vm1389, %v5034, 0.0
  %5391 = vadd.xlane.f32.xlu0 %v5390
  %v5392 = vpop.xlane.xlu0 %5391
  %v5393 = vsel %vm1389, %v5035, 0.0
  %5394 = vadd.xlane.f32.xlu0 %v5393
  %v5395 = vpop.xlane.xlu0 %5394
  %v5396 = vsel %vm1389, %v5036, 0.0
  %5397 = vadd.xlane.f32.xlu0 %v5396
  %v5398 = vpop.xlane.xlu0 %5397
  %v5399 = vsel %vm1389, %v5037, 0.0
  %5400 = vadd.xlane.f32.xlu0 %v5399
  %v5401 = vpop.xlane.xlu0 %5400
  %v5402 = vsel %vm1389, %v5038, 0.0
  %5403 = vadd.xlane.f32.xlu0 %v5402
  %v5404 = vpop.xlane.xlu0 %5403
  %v5405 = vsel %vm1389, %v5039, 0.0
  %5406 = vadd.xlane.f32.xlu0 %v5405
  %v5407 = vpop.xlane.xlu0 %5406
  %v5408 = vsel %vm1389, %v5040, 0.0
  %5409 = vadd.xlane.f32.xlu0 %v5408
  %v5410 = vpop.xlane.xlu0 %5409
  %v5411 = vsel %vm1389, %v5041, 0.0
  %5412 = vadd.xlane.f32.xlu0 %v5411
  %v5413 = vpop.xlane.xlu0 %5412
  %v5414 = vsel %vm1389, %v5042, 0.0
  %5415 = vadd.xlane.f32.xlu0 %v5414
  %v5416 = vpop.xlane.xlu0 %5415
  %v5417 = vsel %vm1389, %v5043, 0.0
  %5418 = vadd.xlane.f32.xlu0 %v5417
  %v5419 = vpop.xlane.xlu0 %5418
  %v5420 = vsel %vm1389, %v5044, 0.0
  %5421 = vadd.xlane.f32.xlu0 %v5420
  %v5422 = vpop.xlane.xlu0 %5421
  %v5423 = vsel %vm1389, %v5045, 0.0
  %5424 = vadd.xlane.f32.xlu0 %v5423
  %v5425 = vpop.xlane.xlu0 %5424
  %v5426 = vsel %vm1389, %v5046, 0.0
  %5427 = vadd.xlane.f32.xlu0 %v5426
  %v5428 = vpop.xlane.xlu0 %5427
  %v5429 = vsel %vm1389, %v5047, 0.0
  %5430 = vadd.xlane.f32.xlu0 %v5429
  %v5431 = vpop.xlane.xlu0 %5430
  %v5432 = vsel %vm1389, %v5048, 0.0
  %5433 = vadd.xlane.f32.xlu0 %v5432
  %v5434 = vpop.xlane.xlu0 %5433
  %v5435 = vsel %vm1389, %v5049, 0.0
  %5436 = vadd.xlane.f32.xlu0 %v5435
  %v5437 = vpop.xlane.xlu0 %5436
  %v5438 = vsel %vm1389, %v5050, 0.0
  %5439 = vadd.xlane.f32.xlu0 %v5438
  %v5440 = vpop.xlane.xlu0 %5439
  %v5441 = vsel %vm1389, %v5051, 0.0
  %5442 = vadd.xlane.f32.xlu0 %v5441
  %v5443 = vpop.xlane.xlu0 %5442
  %v5444 = vsel %vm1389, %v5052, 0.0
  %5445 = vadd.xlane.f32.xlu0 %v5444
  %v5446 = vpop.xlane.xlu0 %5445
  %v5447 = vsel %vm1389, %v5053, 0.0
  %5448 = vadd.xlane.f32.xlu0 %v5447
  %v5449 = vpop.xlane.xlu0 %5448
  %v5450 = vsel %vm1389, %v5054, 0.0
  %5451 = vadd.xlane.f32.xlu0 %v5450
  %v5452 = vpop.xlane.xlu0 %5451
  %v5453 = vsel %vm1389, %v5055, 0.0
  %5454 = vadd.xlane.f32.xlu0 %v5453
  %v5455 = vpop.xlane.xlu0 %5454
  %v5456 = vsel %vm1389, %v5056, 0.0
  %5457 = vadd.xlane.f32.xlu0 %v5456
  %v5458 = vpop.xlane.xlu0 %5457
  %v5459 = vsel %vm1389, %v5057, 0.0
  %5460 = vadd.xlane.f32.xlu0 %v5459
  %v5461 = vpop.xlane.xlu0 %5460
  %v5462 = vsel %vm1389, %v5058, 0.0
  %5463 = vadd.xlane.f32.xlu0 %v5462
  %v5464 = vpop.xlane.xlu0 %5463
  %v5465 = vsel %vm1389, %v5059, 0.0
  %5466 = vadd.xlane.f32.xlu0 %v5465
  %v5467 = vpop.xlane.xlu0 %5466
  %v5468 = vsel %vm1389, %v5060, 0.0
  %5469 = vadd.xlane.f32.xlu0 %v5468
  %v5470 = vpop.xlane.xlu0 %5469
  %v5471 = vsel %vm1389, %v5061, 0.0
  %5472 = vadd.xlane.f32.xlu0 %v5471
  %v5473 = vpop.xlane.xlu0 %5472
  %v5474 = vsel %vm1389, %v5062, 0.0
  %5475 = vadd.xlane.f32.xlu0 %v5474
  %v5476 = vpop.xlane.xlu0 %5475
  %v5477 = vsel %vm1389, %v5063, 0.0
  %5478 = vadd.xlane.f32.xlu0 %v5477
  %v5479 = vpop.xlane.xlu0 %5478
  %v5480 = vsel %vm1389, %v5064, 0.0
  %5481 = vadd.xlane.f32.xlu0 %v5480
  %v5482 = vpop.xlane.xlu0 %5481
  %v5483 = vsel %vm1389, %v5065, 0.0
  %5484 = vadd.xlane.f32.xlu0 %v5483
  %v5485 = vpop.xlane.xlu0 %5484
  %v5486 = vsel %vm1389, %v5066, 0.0
  %5487 = vadd.xlane.f32.xlu0 %v5486
  %v5488 = vpop.xlane.xlu0 %5487
  %v5489 = vsel %vm1389, %v5067, 0.0
  %5490 = vadd.xlane.f32.xlu0 %v5489
  %v5491 = vpop.xlane.xlu0 %5490
  %v5492 = vsel %vm1389, %v5068, 0.0
  %5493 = vadd.xlane.f32.xlu0 %v5492
  %v5494 = vpop.xlane.xlu0 %5493
  %v5495 = vsel %vm1389, %v5069, 0.0
  %5496 = vadd.xlane.f32.xlu0 %v5495
  %v5497 = vpop.xlane.xlu0 %5496
  %v5498 = vsel %vm1389, %v5070, 0.0
  %5499 = vadd.xlane.f32.xlu0 %v5498
  %v5500 = vpop.xlane.xlu0 %5499
  %v5501 = vsel %vm1389, %v5071, 0.0
  %5502 = vadd.xlane.f32.xlu0 %v5501
  %v5503 = vpop.xlane.xlu0 %5502
  %v5504 = vsel %vm1389, %v5072, 0.0
  %5505 = vadd.xlane.f32.xlu0 %v5504
  %v5506 = vpop.xlane.xlu0 %5505
  %v5507 = vsel %vm1389, %v5073, 0.0
  %5508 = vadd.xlane.f32.xlu0 %v5507
  %v5509 = vpop.xlane.xlu0 %5508
  %v5510 = vsel %vm1389, %v5074, 0.0
  %5511 = vadd.xlane.f32.xlu0 %v5510
  %v5512 = vpop.xlane.xlu0 %5511
  %v5513 = vsel %vm1389, %v5075, 0.0
  %5514 = vadd.xlane.f32.xlu0 %v5513
  %v5515 = vpop.xlane.xlu0 %5514
  %v5516 = vsel %vm1389, %v5076, 0.0
  %5517 = vadd.xlane.f32.xlu0 %v5516
  %v5518 = vpop.xlane.xlu0 %5517
  %v5519 = vsel %vm1389, %v5077, 0.0
  %5520 = vadd.xlane.f32.xlu0 %v5519
  %v5521 = vpop.xlane.xlu0 %5520
  %v5522 = vsel %vm1389, %v5078, 0.0
  %5523 = vadd.xlane.f32.xlu0 %v5522
  %v5524 = vpop.xlane.xlu0 %5523
  %v5525 = vsel %vm1389, %v5079, 0.0
  %5526 = vadd.xlane.f32.xlu0 %v5525
  %v5527 = vpop.xlane.xlu0 %5526
  %v5528 = vsel %vm1389, %v5080, 0.0
  %5529 = vadd.xlane.f32.xlu0 %v5528
  %v5530 = vpop.xlane.xlu0 %5529
  %v5531 = vsel %vm1389, %v5081, 0.0
  %5532 = vadd.xlane.f32.xlu0 %v5531
  %v5533 = vpop.xlane.xlu0 %5532
  %v5534 = vsel %vm1389, %v5082, 0.0
  %5535 = vadd.xlane.f32.xlu0 %v5534
  %v5536 = vpop.xlane.xlu0 %5535
  %v5537 = vsel %vm1389, %v5083, 0.0
  %5538 = vadd.xlane.f32.xlu0 %v5537
  %v5539 = vpop.xlane.xlu0 %5538
  %v5540 = vsel %vm1389, %v5084, 0.0
  %5541 = vadd.xlane.f32.xlu0 %v5540
  %v5542 = vpop.xlane.xlu0 %5541
  %v5543 = vsel %vm1389, %v5085, 0.0
  %5544 = vadd.xlane.f32.xlu0 %v5543
  %v5545 = vpop.xlane.xlu0 %5544
  %v5546 = vsel %vm1389, %v5086, 0.0
  %5547 = vadd.xlane.f32.xlu0 %v5546
  %v5548 = vpop.xlane.xlu0 %5547
  %v5549 = vsel %vm1389, %v5087, 0.0
  %5550 = vadd.xlane.f32.xlu0 %v5549
  %v5551 = vpop.xlane.xlu0 %5550
  %v5552 = vsel %vm1389, %v5088, 0.0
  %5553 = vadd.xlane.f32.xlu0 %v5552
  %v5554 = vpop.xlane.xlu0 %5553
  %v5555 = vsel %vm1389, %v5089, 0.0
  %5556 = vadd.xlane.f32.xlu0 %v5555
  %v5557 = vpop.xlane.xlu0 %5556
  %v5558 = vsel %vm1389, %v5090, 0.0
  %5559 = vadd.xlane.f32.xlu0 %v5558
  %v5560 = vpop.xlane.xlu0 %5559
  %v5561 = vsel %vm1389, %v5091, 0.0
  %5562 = vadd.xlane.f32.xlu0 %v5561
  %v5563 = vpop.xlane.xlu0 %5562
  %v5564 = vsel %vm1389, %v5092, 0.0
  %5565 = vadd.xlane.f32.xlu0 %v5564
  %v5566 = vpop.xlane.xlu0 %5565
  %v5567 = vsel %vm1389, %v5093, 0.0
  %5568 = vadd.xlane.f32.xlu0 %v5567
  %v5569 = vpop.xlane.xlu0 %5568
  %v5570 = vsel %vm1389, %v5094, 0.0
  %5571 = vadd.xlane.f32.xlu0 %v5570
  %v5572 = vpop.xlane.xlu0 %5571
  %v5573 = vsel %vm1389, %v5095, 0.0
  %5574 = vadd.xlane.f32.xlu0 %v5573
  %v5575 = vpop.xlane.xlu0 %5574
  %v5576 = vsel %vm1389, %v5096, 0.0
  %5577 = vadd.xlane.f32.xlu0 %v5576
  %v5578 = vpop.xlane.xlu0 %5577
  %v5579 = vsel %vm1389, %v5097, 0.0
  %5580 = vadd.xlane.f32.xlu0 %v5579
  %v5581 = vpop.xlane.xlu0 %5580
  %v5582 = vsel %vm1389, %v5098, 0.0
  %5583 = vadd.xlane.f32.xlu0 %v5582
  %v5584 = vpop.xlane.xlu0 %5583
  %v5585 = vsel %vm1389, %v5099, 0.0
  %5586 = vadd.xlane.f32.xlu0 %v5585
  %v5587 = vpop.xlane.xlu0 %5586
  %v5588 = vsel %vm1389, %v5100, 0.0
  %5589 = vadd.xlane.f32.xlu0 %v5588
  %v5590 = vpop.xlane.xlu0 %5589
  %v5591 = vsel %vm1389, %v5101, 0.0
  %5592 = vadd.xlane.f32.xlu0 %v5591
  %v5593 = vpop.xlane.xlu0 %5592
  %v5594 = vsel %vm1389, %v5102, 0.0
  %5595 = vadd.xlane.f32.xlu0 %v5594
  %v5596 = vpop.xlane.xlu0 %5595
  %v5597 = vsel %vm1389, %v5103, 0.0
  %5598 = vadd.xlane.f32.xlu0 %v5597
  %v5599 = vpop.xlane.xlu0 %5598
  %v5600 = vsel %vm1389, %v5104, 0.0
  %5601 = vadd.xlane.f32.xlu0 %v5600
  %v5602 = vpop.xlane.xlu0 %5601
  %v5603 = vsel %vm1389, %v5105, 0.0
  %5604 = vadd.xlane.f32.xlu0 %v5603
  %v5605 = vpop.xlane.xlu0 %5604
  %v5606 = vsel %vm1389, %v5106, 0.0
  %5607 = vadd.xlane.f32.xlu0 %v5606
  %v5608 = vpop.xlane.xlu0 %5607
  %v5609 = vsel %vm1389, %v5107, 0.0
  %5610 = vadd.xlane.f32.xlu0 %v5609
  %v5611 = vpop.xlane.xlu0 %5610
  %v5612 = vsel %vm1389, %v5108, 0.0
  %5613 = vadd.xlane.f32.xlu0 %v5612
  %v5614 = vpop.xlane.xlu0 %5613
  %v5615 = vsel %vm1389, %v5109, 0.0
  %5616 = vadd.xlane.f32.xlu0 %v5615
  %v5617 = vpop.xlane.xlu0 %5616
  %v5618 = vsel %vm1389, %v5110, 0.0
  %5619 = vadd.xlane.f32.xlu0 %v5618
  %v5620 = vpop.xlane.xlu0 %5619
  %v5621 = vsel %vm1389, %v5111, 0.0
  %5622 = vadd.xlane.f32.xlu0 %v5621
  %v5623 = vpop.xlane.xlu0 %5622
  %v5624 = vsel %vm1389, %v5112, 0.0
  %5625 = vadd.xlane.f32.xlu0 %v5624
  %v5626 = vpop.xlane.xlu0 %5625
  %v5627 = vsel %vm1389, %v5113, 0.0
  %5628 = vadd.xlane.f32.xlu0 %v5627
  %v5629 = vpop.xlane.xlu0 %5628
  %v5630 = vsel %vm1389, %v5114, 0.0
  %5631 = vadd.xlane.f32.xlu0 %v5630
  %v5632 = vpop.xlane.xlu0 %5631
  %v5633 = vsel %vm1389, %v5115, 0.0
  %5634 = vadd.xlane.f32.xlu0 %v5633
  %v5635 = vpop.xlane.xlu0 %5634
  %v5636 = vsel %vm1389, %v5116, 0.0
  %5637 = vadd.xlane.f32.xlu0 %v5636
  %v5638 = vpop.xlane.xlu0 %5637
  %v5639 = vsel %vm1389, %v5117, 0.0
  %5640 = vadd.xlane.f32.xlu0 %v5639
  %v5641 = vpop.xlane.xlu0 %5640
  %v5642 = vsel %vm1389, %v5118, 0.0
  %5643 = vadd.xlane.f32.xlu0 %v5642
  %v5644 = vpop.xlane.xlu0 %5643
  %v5645 = vsel %vm1389, %v5119, 0.0
  %5646 = vadd.xlane.f32.xlu0 %v5645
  %v5647 = vpop.xlane.xlu0 %5646
  %v5648 = vsel %vm1389, %v5120, 0.0
  %5649 = vadd.xlane.f32.xlu0 %v5648
  %v5650 = vpop.xlane.xlu0 %5649
  %v5651 = vsel %vm1389, %v5121, 0.0
  %5652 = vadd.xlane.f32.xlu0 %v5651
  %v5653 = vpop.xlane.xlu0 %5652
  %v5654 = vsel %vm1389, %v5122, 0.0
  %5655 = vadd.xlane.f32.xlu0 %v5654
  %v5656 = vpop.xlane.xlu0 %5655
  %v5657 = vsel %vm1389, %v5123, 0.0
  %5658 = vadd.xlane.f32.xlu0 %v5657
  %v5659 = vpop.xlane.xlu0 %5658
  %v5660 = vsel %vm1389, %v5124, 0.0
  %5661 = vadd.xlane.f32.xlu0 %v5660
  %v5662 = vpop.xlane.xlu0 %5661
  %v5663 = vsel %vm1389, %v5125, 0.0
  %5664 = vadd.xlane.f32.xlu0 %v5663
  %v5665 = vpop.xlane.xlu0 %5664
  %v5666 = vsel %vm1389, %v5126, 0.0
  %5667 = vadd.xlane.f32.xlu0 %v5666
  %v5668 = vpop.xlane.xlu0 %5667
  %v5669 = vsel %vm1389, %v5127, 0.0
  %5670 = vadd.xlane.f32.xlu0 %v5669
  %v5671 = vpop.xlane.xlu0 %5670
  %v5672 = vsel %vm1389, %v5128, 0.0
  %5673 = vadd.xlane.f32.xlu0 %v5672
  %v5674 = vpop.xlane.xlu0 %5673
  %v5675 = vsel %vm1389, %v5129, 0.0
  %5676 = vadd.xlane.f32.xlu0 %v5675
  %v5677 = vpop.xlane.xlu0 %5676
  %v5678 = vsel %vm1389, %v5130, 0.0
  %5679 = vadd.xlane.f32.xlu0 %v5678
  %v5680 = vpop.xlane.xlu0 %5679
  %v5681 = vsel %vm1389, %v5131, 0.0
  %5682 = vadd.xlane.f32.xlu0 %v5681
  %v5683 = vpop.xlane.xlu0 %5682
  %v5684 = vsel %vm1389, %v5132, 0.0
  %5685 = vadd.xlane.f32.xlu0 %v5684
  %v5686 = vpop.xlane.xlu0 %5685
  %v5687 = vsel %vm1389, %v5133, 0.0
  %5688 = vadd.xlane.f32.xlu0 %v5687
  %v5689 = vpop.xlane.xlu0 %5688
  %v5690 = vsel %vm1389, %v5134, 0.0
  %5691 = vadd.xlane.f32.xlu0 %v5690
  %v5692 = vpop.xlane.xlu0 %5691
  %v5693 = vsel %vm1389, %v5135, 0.0
  %5694 = vadd.xlane.f32.xlu0 %v5693
  %v5695 = vpop.xlane.xlu0 %5694
  %v5696 = vsel %vm1389, %v5136, 0.0
  %5697 = vadd.xlane.f32.xlu0 %v5696
  %v5698 = vpop.xlane.xlu0 %5697
  %v5699 = vsel %vm1389, %v5137, 0.0
  %5700 = vadd.xlane.f32.xlu0 %v5699
  %v5701 = vpop.xlane.xlu0 %5700
  %v5702 = vsel %vm1389, %v5138, 0.0
  %5703 = vadd.xlane.f32.xlu0 %v5702
  %v5704 = vpop.xlane.xlu0 %5703
  %v5705 = vsel %vm1389, %v5139, 0.0
  %5706 = vadd.xlane.f32.xlu0 %v5705
  %v5707 = vpop.xlane.xlu0 %5706
  %v5708 = vsel %vm1389, %v5140, 0.0
  %5709 = vadd.xlane.f32.xlu0 %v5708
  %v5710 = vpop.xlane.xlu0 %5709
  %v5711 = vsel %vm1389, %v5141, 0.0
  %5712 = vadd.xlane.f32.xlu0 %v5711
  %v5713 = vpop.xlane.xlu0 %5712
  %v5714 = vsel %vm1389, %v5142, 0.0
  %5715 = vadd.xlane.f32.xlu0 %v5714
  %v5716 = vpop.xlane.xlu0 %5715
  %v5717 = vsel %vm1389, %v5143, 0.0
  %5718 = vadd.xlane.f32.xlu0 %v5717
  %v5719 = vpop.xlane.xlu0 %5718
  %v5720 = vsel %vm1389, %v5144, 0.0
  %5721 = vadd.xlane.f32.xlu0 %v5720
  %v5722 = vpop.xlane.xlu0 %5721
  %v5723 = vsel %vm1389, %v5145, 0.0
  %5724 = vadd.xlane.f32.xlu0 %v5723
  %v5725 = vpop.xlane.xlu0 %5724
  %v5726 = vsel %vm1389, %v5146, 0.0
  %5727 = vadd.xlane.f32.xlu0 %v5726
  %v5728 = vpop.xlane.xlu0 %5727
  %v5729 = vsel %vm1389, %v5147, 0.0
  %5730 = vadd.xlane.f32.xlu0 %v5729
  %v5731 = vpop.xlane.xlu0 %5730
  %v5732 = vsel %vm1389, %v5148, 0.0
  %5733 = vadd.xlane.f32.xlu0 %v5732
  %v5734 = vpop.xlane.xlu0 %5733
  %v5735 = vsel %vm1389, %v5149, 0.0
  %5736 = vadd.xlane.f32.xlu0 %v5735
  %v5737 = vpop.xlane.xlu0 %5736
  %v5738 = vsel %vm1389, %v5150, 0.0
  %5739 = vadd.xlane.f32.xlu0 %v5738
  %v5740 = vpop.xlane.xlu0 %5739
  %v5741 = vsel %vm1389, %v5151, 0.0
  %5742 = vadd.xlane.f32.xlu0 %v5741
  %v5743 = vpop.xlane.xlu0 %5742
  %v5744 = vsel %vm1389, %v5152, 0.0
  %5745 = vadd.xlane.f32.xlu0 %v5744
  %v5746 = vpop.xlane.xlu0 %5745
  %v5747 = vsel %vm1389, %v5153, 0.0
  %5748 = vadd.xlane.f32.xlu0 %v5747
  %v5749 = vpop.xlane.xlu0 %5748
  %v5750 = vsel %vm1389, %v5154, 0.0
  %5751 = vadd.xlane.f32.xlu0 %v5750
  %v5752 = vpop.xlane.xlu0 %5751
  %v5753 = vsel %vm1389, %v5155, 0.0
  %5754 = vadd.xlane.f32.xlu0 %v5753
  %v5755 = vpop.xlane.xlu0 %5754
  %v5756 = vsel %vm1389, %v5156, 0.0
  %5757 = vadd.xlane.f32.xlu0 %v5756
  %v5758 = vpop.xlane.xlu0 %5757
  %v5759 = vsel %vm1389, %v5157, 0.0
  %5760 = vadd.xlane.f32.xlu0 %v5759
  %v5761 = vpop.xlane.xlu0 %5760
  %v5762 = vsel %vm1389, %v5158, 0.0
  %5763 = vadd.xlane.f32.xlu0 %v5762
  %v5764 = vpop.xlane.xlu0 %5763
  %v5765 = vsel %vm1389, %v5159, 0.0
  %5766 = vadd.xlane.f32.xlu0 %v5765
  %v5767 = vpop.xlane.xlu0 %5766
  %v5768 = vsel %vm1389, %v5160, 0.0
  %5769 = vadd.xlane.f32.xlu0 %v5768
  %v5770 = vpop.xlane.xlu0 %5769
  %v5771 = vsel %vm1389, %v5161, 0.0
  %5772 = vadd.xlane.f32.xlu0 %v5771
  %v5773 = vpop.xlane.xlu0 %5772
  %v5774 = vsel %vm1389, %v5162, 0.0
  %5775 = vadd.xlane.f32.xlu0 %v5774
  %v5776 = vpop.xlane.xlu0 %5775
  %v5777 = vsel %vm1389, %v5163, 0.0
  %5778 = vadd.xlane.f32.xlu0 %v5777
  %v5779 = vpop.xlane.xlu0 %5778
  %v5780 = vsel %vm1389, %v5164, 0.0
  %5781 = vadd.xlane.f32.xlu0 %v5780
  %v5782 = vpop.xlane.xlu0 %5781
  %v5783 = vsel %vm1389, %v5165, 0.0
  %5784 = vadd.xlane.f32.xlu0 %v5783
  %v5785 = vpop.xlane.xlu0 %5784
  %v5786 = vsel %vm1389, %v5166, 0.0
  %5787 = vadd.xlane.f32.xlu0 %v5786
  %v5788 = vpop.xlane.xlu0 %5787
  %v5789 = vsel %vm1389, %v5167, 0.0
  %5790 = vadd.xlane.f32.xlu0 %v5789
  %v5791 = vpop.xlane.xlu0 %5790
  %v5792 = vsel %vm1389, %v5168, 0.0
  %5793 = vadd.xlane.f32.xlu0 %v5792
  %v5794 = vpop.xlane.xlu0 %5793
  %v5795 = vsel %vm1389, %v5169, 0.0
  %5796 = vadd.xlane.f32.xlu0 %v5795
  %v5797 = vpop.xlane.xlu0 %5796
  %v5798 = vsel %vm1389, %v5170, 0.0
  %5799 = vadd.xlane.f32.xlu0 %v5798
  %v5800 = vpop.xlane.xlu0 %5799
  %v5801 = vsel %vm1389, %v5171, 0.0
  %5802 = vadd.xlane.f32.xlu0 %v5801
  %v5803 = vpop.xlane.xlu0 %5802
  %v5804 = vsel %vm1389, %v5172, 0.0
  %5805 = vadd.xlane.f32.xlu0 %v5804
  %v5806 = vpop.xlane.xlu0 %5805
  %v5807 = vsel %vm1389, %v5173, 0.0
  %5808 = vadd.xlane.f32.xlu0 %v5807
  %v5809 = vpop.xlane.xlu0 %5808
  %v5810 = vsel %vm1389, %v5174, 0.0
  %5811 = vadd.xlane.f32.xlu0 %v5810
  %v5812 = vpop.xlane.xlu0 %5811
  %v5813 = vsel %vm1389, %v5175, 0.0
  %5814 = vadd.xlane.f32.xlu0 %v5813
  %v5815 = vpop.xlane.xlu0 %5814
  %v5816 = vsel %vm1389, %v5176, 0.0
  %5817 = vadd.xlane.f32.xlu0 %v5816
  %v5818 = vpop.xlane.xlu0 %5817
  %v5819 = vsel %vm1389, %v5177, 0.0
  %5820 = vadd.xlane.f32.xlu0 %v5819
  %v5821 = vpop.xlane.xlu0 %5820
  %v5822 = vsel %vm1389, %v5178, 0.0
  %5823 = vadd.xlane.f32.xlu0 %v5822
  %v5824 = vpop.xlane.xlu0 %5823
  %v5825 = vsel %vm1389, %v5179, 0.0
  %5826 = vadd.xlane.f32.xlu0 %v5825
  %v5827 = vpop.xlane.xlu0 %5826
  %v5828 = vsel %vm1389, %v5180, 0.0
  %5829 = vadd.xlane.f32.xlu0 %v5828
  %v5830 = vpop.xlane.xlu0 %5829
  %v5831 = vsel %vm1389, %v5181, 0.0
  %5832 = vadd.xlane.f32.xlu0 %v5831
  %v5833 = vpop.xlane.xlu0 %5832
  %v5834 = vsel %vm1389, %v5182, 0.0
  %5835 = vadd.xlane.f32.xlu0 %v5834
  %v5836 = vpop.xlane.xlu0 %5835
  %v5837 = vsel %vm1389, %v5183, 0.0
  %5838 = vadd.xlane.f32.xlu0 %v5837
  %v5839 = vpop.xlane.xlu0 %5838
  %v5840 = vsel %vm1389, %v5184, 0.0
  %5841 = vadd.xlane.f32.xlu0 %v5840
  %v5842 = vpop.xlane.xlu0 %5841
  %v5843 = vsel %vm1389, %v5185, 0.0
  %5844 = vadd.xlane.f32.xlu0 %v5843
  %v5845 = vpop.xlane.xlu0 %5844
  %v5846 = vsel %vm1389, %v5186, 0.0
  %5847 = vadd.xlane.f32.xlu0 %v5846
  %v5848 = vpop.xlane.xlu0 %5847
  %v5849 = vsel %vm1389, %v5187, 0.0
  %5850 = vadd.xlane.f32.xlu0 %v5849
  %v5851 = vpop.xlane.xlu0 %5850
  %v5852 = vsel %vm1389, %v5188, 0.0
  %5853 = vadd.xlane.f32.xlu0 %v5852
  %v5854 = vpop.xlane.xlu0 %5853
  %v5855 = vsel %vm1389, %v5189, 0.0
  %5856 = vadd.xlane.f32.xlu0 %v5855
  %v5857 = vpop.xlane.xlu0 %5856
  %v5858 = vsel %vm1389, %v5190, 0.0
  %5859 = vadd.xlane.f32.xlu0 %v5858
  %v5860 = vpop.xlane.xlu0 %5859
  %v5861 = vsel %vm1389, %v5191, 0.0
  %5862 = vadd.xlane.f32.xlu0 %v5861
  %v5863 = vpop.xlane.xlu0 %5862
  %v5864 = vsel %vm1389, %v5192, 0.0
  %5865 = vadd.xlane.f32.xlu0 %v5864
  %v5866 = vpop.xlane.xlu0 %5865
  %v5867 = vsel %vm1389, %v5193, 0.0
  %5868 = vadd.xlane.f32.xlu0 %v5867
  %v5869 = vpop.xlane.xlu0 %5868
  %v5870 = vsel %vm1389, %v5194, 0.0
  %5871 = vadd.xlane.f32.xlu0 %v5870
  %v5872 = vpop.xlane.xlu0 %5871
  %v5873 = vsel %vm1389, %v5195, 0.0
  %5874 = vadd.xlane.f32.xlu0 %v5873
  %v5875 = vpop.xlane.xlu0 %5874
  %v5876 = vsel %vm1389, %v5196, 0.0
  %5877 = vadd.xlane.f32.xlu0 %v5876
  %v5878 = vpop.xlane.xlu0 %5877
  %v5879 = vsel %vm1389, %v5197, 0.0
  %5880 = vadd.xlane.f32.xlu0 %v5879
  %v5881 = vpop.xlane.xlu0 %5880
  %v5882 = vsel %vm1389, %v5198, 0.0
  %5883 = vadd.xlane.f32.xlu0 %v5882
  %v5884 = vpop.xlane.xlu0 %5883
  %v5885 = vsel %vm1389, %v5199, 0.0
  %5886 = vadd.xlane.f32.xlu0 %v5885
  %v5887 = vpop.xlane.xlu0 %5886
  %v5888 = vsel %vm1389, %v5200, 0.0
  %5889 = vadd.xlane.f32.xlu0 %v5888
  %v5890 = vpop.xlane.xlu0 %5889
  %v5891 = vsel %vm1389, %v5201, 0.0
  %5892 = vadd.xlane.f32.xlu0 %v5891
  %v5893 = vpop.xlane.xlu0 %5892
  %v5894 = vsel %vm1389, %v5202, 0.0
  %5895 = vadd.xlane.f32.xlu0 %v5894
  %v5896 = vpop.xlane.xlu0 %5895
  %v5897 = vsel %vm1389, %v5203, 0.0
  %5898 = vadd.xlane.f32.xlu0 %v5897
  %v5899 = vpop.xlane.xlu0 %5898
  %v5900 = vsel %vm1389, %v5204, 0.0
  %5901 = vadd.xlane.f32.xlu0 %v5900
  %v5902 = vpop.xlane.xlu0 %5901
  %v5903 = vsel %vm1389, %v5205, 0.0
  %5904 = vadd.xlane.f32.xlu0 %v5903
  %v5905 = vpop.xlane.xlu0 %5904
  %v5906 = vsel %vm1389, %v5206, 0.0
  %5907 = vadd.xlane.f32.xlu0 %v5906
  %v5908 = vpop.xlane.xlu0 %5907
  %v5909 = vsel %vm1389, %v5207, 0.0
  %5910 = vadd.xlane.f32.xlu0 %v5909
  %v5911 = vpop.xlane.xlu0 %5910
  %v5912 = vsel %vm1389, %v5208, 0.0
  %5913 = vadd.xlane.f32.xlu0 %v5912
  %v5914 = vpop.xlane.xlu0 %5913
  %v5915 = vsel %vm1389, %v5209, 0.0
  %5916 = vadd.xlane.f32.xlu0 %v5915
  %v5917 = vpop.xlane.xlu0 %5916
  %v5918 = vsel %vm1389, %v5210, 0.0
  %5919 = vadd.xlane.f32.xlu0 %v5918
  %v5920 = vpop.xlane.xlu0 %5919
  %v5921 = vsel %vm1389, %v5211, 0.0
  %5922 = vadd.xlane.f32.xlu0 %v5921
  %v5923 = vpop.xlane.xlu0 %5922
  %v5924 = vsel %vm1389, %v5212, 0.0
  %5925 = vadd.xlane.f32.xlu0 %v5924
  %v5926 = vpop.xlane.xlu0 %5925
  %v5927 = vsel %vm1389, %v5213, 0.0
  %5928 = vadd.xlane.f32.xlu0 %v5927
  %v5929 = vpop.xlane.xlu0 %5928
  %v5930 = vsel %vm1389, %v5214, 0.0
  %5931 = vadd.xlane.f32.xlu0 %v5930
  %v5932 = vpop.xlane.xlu0 %5931
  %v5933 = vsel %vm1389, %v5215, 0.0
  %5934 = vadd.xlane.f32.xlu0 %v5933
  %v5935 = vpop.xlane.xlu0 %5934
  %v5936 = vsel %vm1389, %v5216, 0.0
  %5937 = vadd.xlane.f32.xlu0 %v5936
  %v5938 = vpop.xlane.xlu0 %5937
  %v5939 = vsel %vm1389, %v5217, 0.0
  %5940 = vadd.xlane.f32.xlu0 %v5939
  %v5941 = vpop.xlane.xlu0 %5940
  %v5942 = vsel %vm1389, %v5218, 0.0
  %5943 = vadd.xlane.f32.xlu0 %v5942
  %v5944 = vpop.xlane.xlu0 %5943
  %v5945 = vsel %vm1389, %v5219, 0.0
  %5946 = vadd.xlane.f32.xlu0 %v5945
  %v5947 = vpop.xlane.xlu0 %5946
  %v5948 = vsel %vm1389, %v5220, 0.0
  %5949 = vadd.xlane.f32.xlu0 %v5948
  %v5950 = vpop.xlane.xlu0 %5949
  %v5951 = vsel %vm1389, %v5221, 0.0
  %5952 = vadd.xlane.f32.xlu0 %v5951
  %v5953 = vpop.xlane.xlu0 %5952
  %v5954 = vsel %vm1389, %v5222, 0.0
  %5955 = vadd.xlane.f32.xlu0 %v5954
  %v5956 = vpop.xlane.xlu0 %5955
  %v5957 = vsel %vm1389, %v5223, 0.0
  %5958 = vadd.xlane.f32.xlu0 %v5957
  %v5959 = vpop.xlane.xlu0 %5958
  %v5960 = vsel %vm1389, %v5224, 0.0
  %5961 = vadd.xlane.f32.xlu0 %v5960
  %v5962 = vpop.xlane.xlu0 %5961
  %v5963 = vsel %vm1389, %v5225, 0.0
  %5964 = vadd.xlane.f32.xlu0 %v5963
  %v5965 = vpop.xlane.xlu0 %5964
  %v5966 = vsel %vm1389, %v5226, 0.0
  %5967 = vadd.xlane.f32.xlu0 %v5966
  %v5968 = vpop.xlane.xlu0 %5967
  %v5969 = vsel %vm1389, %v5227, 0.0
  %5970 = vadd.xlane.f32.xlu0 %v5969
  %v5971 = vpop.xlane.xlu0 %5970
  %v5972 = vsel %vm1389, %v5228, 0.0
  %5973 = vadd.xlane.f32.xlu0 %v5972
  %v5974 = vpop.xlane.xlu0 %5973
  %v5975 = vsel %vm1389, %v5229, 0.0
  %5976 = vadd.xlane.f32.xlu0 %v5975
  %v5977 = vpop.xlane.xlu0 %5976
  %v5978 = vsel %vm1389, %v5230, 0.0
  %5979 = vadd.xlane.f32.xlu0 %v5978
  %v5980 = vpop.xlane.xlu0 %5979
  %v5981 = vsel %vm1389, %v5231, 0.0
  %5982 = vadd.xlane.f32.xlu0 %v5981
  %v5983 = vpop.xlane.xlu0 %5982
  %v5984 = vsel %vm1389, %v5232, 0.0
  %5985 = vadd.xlane.f32.xlu0 %v5984
  %v5986 = vpop.xlane.xlu0 %5985
  %v5987 = vsel %vm1389, %v5233, 0.0
  %5988 = vadd.xlane.f32.xlu0 %v5987
  %v5989 = vpop.xlane.xlu0 %5988
  %v5990 = vsel %vm1389, %v5234, 0.0
  %5991 = vadd.xlane.f32.xlu0 %v5990
  %v5992 = vpop.xlane.xlu0 %5991
  %v5993 = vsel %vm1389, %v5235, 0.0
  %5994 = vadd.xlane.f32.xlu0 %v5993
  %v5995 = vpop.xlane.xlu0 %5994
  %v5996 = vsel %vm1389, %v5236, 0.0
  %5997 = vadd.xlane.f32.xlu0 %v5996
  %v5998 = vpop.xlane.xlu0 %5997
  %v5999 = vsel %vm1389, %v5237, 0.0
  %6000 = vadd.xlane.f32.xlu0 %v5999
  %v6001 = vpop.xlane.xlu0 %6000
  %v6002 = vsel %vm1389, %v5238, 0.0
  %6003 = vadd.xlane.f32.xlu0 %v6002
  %v6004 = vpop.xlane.xlu0 %6003
  %v6005 = vsel %vm1389, %v5239, 0.0
  %6006 = vadd.xlane.f32.xlu0 %v6005
  %v6007 = vpop.xlane.xlu0 %6006
  %v6008 = vmul.f32 %v5242, 0.5
  %v6009 = vmul.f32 %v5245, 0.5
  %v6010 = vmul.f32 %v5248, 0.5
  %v6011 = vmul.f32 %v5251, 0.5
  %v6012 = vmul.f32 %v5254, 0.5
  %v6013 = vmul.f32 %v5257, 0.5
  %v6014 = vmul.f32 %v5260, 0.5
  %v6015 = vmul.f32 %v5263, 0.5
  %v6016 = vmul.f32 %v5266, 0.5
  %v6017 = vmul.f32 %v5269, 0.5
  %v6018 = vmul.f32 %v5272, 0.5
  %v6019 = vmul.f32 %v5275, 0.5
  %v6020 = vmul.f32 %v5278, 0.5
  %v6021 = vmul.f32 %v5281, 0.5
  %v6022 = vmul.f32 %v5284, 0.5
  %v6023 = vmul.f32 %v5287, 0.5
  %v6024 = vmul.f32 %v5290, 0.5
  %v6025 = vmul.f32 %v5293, 0.5
  %v6026 = vmul.f32 %v5296, 0.5
  %v6027 = vmul.f32 %v5299, 0.5
  %v6028 = vmul.f32 %v5302, 0.5
  %v6029 = vmul.f32 %v5305, 0.5
  %v6030 = vmul.f32 %v5308, 0.5
  %v6031 = vmul.f32 %v5311, 0.5
  %v6032 = vmul.f32 %v5314, 0.5
  %v6033 = vmul.f32 %v5317, 0.5
  %v6034 = vmul.f32 %v5320, 0.5
  %v6035 = vmul.f32 %v5323, 0.5
  %v6036 = vmul.f32 %v5326, 0.5
  %v6037 = vmul.f32 %v5329, 0.5
  %v6038 = vmul.f32 %v5332, 0.5
  %v6039 = vmul.f32 %v5335, 0.5
  %v6040 = vmul.f32 %v5338, 0.5
  %v6041 = vmul.f32 %v5341, 0.5
  %v6042 = vmul.f32 %v5344, 0.5
  %v6043 = vmul.f32 %v5347, 0.5
  %v6044 = vmul.f32 %v5350, 0.5
  %v6045 = vmul.f32 %v5353, 0.5
  %v6046 = vmul.f32 %v5356, 0.5
  %v6047 = vmul.f32 %v5359, 0.5
  %v6048 = vmul.f32 %v5362, 0.5
  %v6049 = vmul.f32 %v5365, 0.5
  %v6050 = vmul.f32 %v5368, 0.5
  %v6051 = vmul.f32 %v5371, 0.5
  %v6052 = vmul.f32 %v5374, 0.5
  %v6053 = vmul.f32 %v5377, 0.5
  %v6054 = vmul.f32 %v5380, 0.5
  %v6055 = vmul.f32 %v5383, 0.5
  %v6056 = vmul.f32 %v5386, 0.5
  %v6057 = vmul.f32 %v5389, 0.5
  %v6058 = vmul.f32 %v5392, 0.5
  %v6059 = vmul.f32 %v5395, 0.5
  %v6060 = vmul.f32 %v5398, 0.5
  %v6061 = vmul.f32 %v5401, 0.5
  %v6062 = vmul.f32 %v5404, 0.5
  %v6063 = vmul.f32 %v5407, 0.5
  %v6064 = vmul.f32 %v5410, 0.5
  %v6065 = vmul.f32 %v5413, 0.5
  %v6066 = vmul.f32 %v5416, 0.5
  %v6067 = vmul.f32 %v5419, 0.5
  %v6068 = vmul.f32 %v5422, 0.5
  %v6069 = vmul.f32 %v5425, 0.5
  %v6070 = vmul.f32 %v5428, 0.5
  %v6071 = vmul.f32 %v5431, 0.5
  %v6072 = vmul.f32 %v5434, 0.5
  %v6073 = vmul.f32 %v5437, 0.5
  %v6074 = vmul.f32 %v5440, 0.5
  %v6075 = vmul.f32 %v5443, 0.5
  %v6076 = vmul.f32 %v5446, 0.5
  %v6077 = vmul.f32 %v5449, 0.5
  %v6078 = vmul.f32 %v5452, 0.5
  %v6079 = vmul.f32 %v5455, 0.5
  %v6080 = vmul.f32 %v5458, 0.5
  %v6081 = vmul.f32 %v5461, 0.5
  %v6082 = vmul.f32 %v5464, 0.5
  %v6083 = vmul.f32 %v5467, 0.5
  %v6084 = vmul.f32 %v5470, 0.5
  %v6085 = vmul.f32 %v5473, 0.5
  %v6086 = vmul.f32 %v5476, 0.5
  %v6087 = vmul.f32 %v5479, 0.5
  %v6088 = vmul.f32 %v5482, 0.5
  %v6089 = vmul.f32 %v5485, 0.5
  %v6090 = vmul.f32 %v5488, 0.5
  %v6091 = vmul.f32 %v5491, 0.5
  %v6092 = vmul.f32 %v5494, 0.5
  %v6093 = vmul.f32 %v5497, 0.5
  %v6094 = vmul.f32 %v5500, 0.5
  %v6095 = vmul.f32 %v5503, 0.5
  %v6096 = vmul.f32 %v5506, 0.5
  %v6097 = vmul.f32 %v5509, 0.5
  %v6098 = vmul.f32 %v5512, 0.5
  %v6099 = vmul.f32 %v5515, 0.5
  %v6100 = vmul.f32 %v5518, 0.5
  %v6101 = vmul.f32 %v5521, 0.5
  %v6102 = vmul.f32 %v5524, 0.5
  %v6103 = vmul.f32 %v5527, 0.5
  %v6104 = vmul.f32 %v5530, 0.5
  %v6105 = vmul.f32 %v5533, 0.5
  %v6106 = vmul.f32 %v5536, 0.5
  %v6107 = vmul.f32 %v5539, 0.5
  %v6108 = vmul.f32 %v5542, 0.5
  %v6109 = vmul.f32 %v5545, 0.5
  %v6110 = vmul.f32 %v5548, 0.5
  %v6111 = vmul.f32 %v5551, 0.5
  %v6112 = vmul.f32 %v5554, 0.5
  %v6113 = vmul.f32 %v5557, 0.5
  %v6114 = vmul.f32 %v5560, 0.5
  %v6115 = vmul.f32 %v5563, 0.5
  %v6116 = vmul.f32 %v5566, 0.5
  %v6117 = vmul.f32 %v5569, 0.5
  %v6118 = vmul.f32 %v5572, 0.5
  %v6119 = vmul.f32 %v5575, 0.5
  %v6120 = vmul.f32 %v5578, 0.5
  %v6121 = vmul.f32 %v5581, 0.5
  %v6122 = vmul.f32 %v5584, 0.5
  %v6123 = vmul.f32 %v5587, 0.5
  %v6124 = vmul.f32 %v5590, 0.5
  %v6125 = vmul.f32 %v5593, 0.5
  %v6126 = vmul.f32 %v5596, 0.5
  %v6127 = vmul.f32 %v5599, 0.5
  %v6128 = vmul.f32 %v5602, 0.5
  %v6129 = vmul.f32 %v5605, 0.5
  %v6130 = vmul.f32 %v5608, 0.5
  %v6131 = vmul.f32 %v5611, 0.5
  %v6132 = vmul.f32 %v5614, 0.5
  %v6133 = vmul.f32 %v5617, 0.5
  %v6134 = vmul.f32 %v5620, 0.5
  %v6135 = vmul.f32 %v5623, 0.5
  %v6136 = vmul.f32 %v5626, 0.5
  %v6137 = vmul.f32 %v5629, 0.5
  %v6138 = vmul.f32 %v5632, 0.5
  %v6139 = vmul.f32 %v5635, 0.5
  %v6140 = vmul.f32 %v5638, 0.5
  %v6141 = vmul.f32 %v5641, 0.5
  %v6142 = vmul.f32 %v5644, 0.5
  %v6143 = vmul.f32 %v5647, 0.5
  %v6144 = vmul.f32 %v5650, 0.5
  %v6145 = vmul.f32 %v5653, 0.5
  %v6146 = vmul.f32 %v5656, 0.5
  %v6147 = vmul.f32 %v5659, 0.5
  %v6148 = vmul.f32 %v5662, 0.5
  %v6149 = vmul.f32 %v5665, 0.5
  %v6150 = vmul.f32 %v5668, 0.5
  %v6151 = vmul.f32 %v5671, 0.5
  %v6152 = vmul.f32 %v5674, 0.5
  %v6153 = vmul.f32 %v5677, 0.5
  %v6154 = vmul.f32 %v5680, 0.5
  %v6155 = vmul.f32 %v5683, 0.5
  %v6156 = vmul.f32 %v5686, 0.5
  %v6157 = vmul.f32 %v5689, 0.5
  %v6158 = vmul.f32 %v5692, 0.5
  %v6159 = vmul.f32 %v5695, 0.5
  %v6160 = vmul.f32 %v5698, 0.5
  %v6161 = vmul.f32 %v5701, 0.5
  %v6162 = vmul.f32 %v5704, 0.5
  %v6163 = vmul.f32 %v5707, 0.5
  %v6164 = vmul.f32 %v5710, 0.5
  %v6165 = vmul.f32 %v5713, 0.5
  %v6166 = vmul.f32 %v5716, 0.5
  %v6167 = vmul.f32 %v5719, 0.5
  %v6168 = vmul.f32 %v5722, 0.5
  %v6169 = vmul.f32 %v5725, 0.5
  %v6170 = vmul.f32 %v5728, 0.5
  %v6171 = vmul.f32 %v5731, 0.5
  %v6172 = vmul.f32 %v5734, 0.5
  %v6173 = vmul.f32 %v5737, 0.5
  %v6174 = vmul.f32 %v5740, 0.5
  %v6175 = vmul.f32 %v5743, 0.5
  %v6176 = vmul.f32 %v5746, 0.5
  %v6177 = vmul.f32 %v5749, 0.5
  %v6178 = vmul.f32 %v5752, 0.5
  %v6179 = vmul.f32 %v5755, 0.5
  %v6180 = vmul.f32 %v5758, 0.5
  %v6181 = vmul.f32 %v5761, 0.5
  %v6182 = vmul.f32 %v5764, 0.5
  %v6183 = vmul.f32 %v5767, 0.5
  %v6184 = vmul.f32 %v5770, 0.5
  %v6185 = vmul.f32 %v5773, 0.5
  %v6186 = vmul.f32 %v5776, 0.5
  %v6187 = vmul.f32 %v5779, 0.5
  %v6188 = vmul.f32 %v5782, 0.5
  %v6189 = vmul.f32 %v5785, 0.5
  %v6190 = vmul.f32 %v5788, 0.5
  %v6191 = vmul.f32 %v5791, 0.5
  %v6192 = vmul.f32 %v5794, 0.5
  %v6193 = vmul.f32 %v5797, 0.5
  %v6194 = vmul.f32 %v5800, 0.5
  %v6195 = vmul.f32 %v5803, 0.5
  %v6196 = vmul.f32 %v5806, 0.5
  %v6197 = vmul.f32 %v5809, 0.5
  %v6198 = vmul.f32 %v5812, 0.5
  %v6199 = vmul.f32 %v5815, 0.5
  %v6200 = vmul.f32 %v5818, 0.5
  %v6201 = vmul.f32 %v5821, 0.5
  %v6202 = vmul.f32 %v5824, 0.5
  %v6203 = vmul.f32 %v5827, 0.5
  %v6204 = vmul.f32 %v5830, 0.5
  %v6205 = vmul.f32 %v5833, 0.5
  %v6206 = vmul.f32 %v5836, 0.5
  %v6207 = vmul.f32 %v5839, 0.5
  %v6208 = vmul.f32 %v5842, 0.5
  %v6209 = vmul.f32 %v5845, 0.5
  %v6210 = vmul.f32 %v5848, 0.5
  %v6211 = vmul.f32 %v5851, 0.5
  %v6212 = vmul.f32 %v5854, 0.5
  %v6213 = vmul.f32 %v5857, 0.5
  %v6214 = vmul.f32 %v5860, 0.5
  %v6215 = vmul.f32 %v5863, 0.5
  %v6216 = vmul.f32 %v5866, 0.5
  %v6217 = vmul.f32 %v5869, 0.5
  %v6218 = vmul.f32 %v5872, 0.5
  %v6219 = vmul.f32 %v5875, 0.5
  %v6220 = vmul.f32 %v5878, 0.5
  %v6221 = vmul.f32 %v5881, 0.5
  %v6222 = vmul.f32 %v5884, 0.5
  %v6223 = vmul.f32 %v5887, 0.5
  %v6224 = vmul.f32 %v5890, 0.5
  %v6225 = vmul.f32 %v5893, 0.5
  %v6226 = vmul.f32 %v5896, 0.5
  %v6227 = vmul.f32 %v5899, 0.5
  %v6228 = vmul.f32 %v5902, 0.5
  %v6229 = vmul.f32 %v5905, 0.5
  %v6230 = vmul.f32 %v5908, 0.5
  %v6231 = vmul.f32 %v5911, 0.5
  %v6232 = vmul.f32 %v5914, 0.5
  %v6233 = vmul.f32 %v5917, 0.5
  %v6234 = vmul.f32 %v5920, 0.5
  %v6235 = vmul.f32 %v5923, 0.5
  %v6236 = vmul.f32 %v5926, 0.5
  %v6237 = vmul.f32 %v5929, 0.5
  %v6238 = vmul.f32 %v5932, 0.5
  %v6239 = vmul.f32 %v5935, 0.5
  %v6240 = vmul.f32 %v5938, 0.5
  %v6241 = vmul.f32 %v5941, 0.5
  %v6242 = vmul.f32 %v5944, 0.5
  %v6243 = vmul.f32 %v5947, 0.5
  %v6244 = vmul.f32 %v5950, 0.5
  %v6245 = vmul.f32 %v5953, 0.5
  %v6246 = vmul.f32 %v5956, 0.5
  %v6247 = vmul.f32 %v5959, 0.5
  %v6248 = vmul.f32 %v5962, 0.5
  %v6249 = vmul.f32 %v5965, 0.5
  %v6250 = vmul.f32 %v5968, 0.5
  %v6251 = vmul.f32 %v5971, 0.5
  %v6252 = vmul.f32 %v5974, 0.5
  %v6253 = vmul.f32 %v5977, 0.5
  %v6254 = vmul.f32 %v5980, 0.5
  %v6255 = vmul.f32 %v5983, 0.5
  %v6256 = vmul.f32 %v5986, 0.5
  %v6257 = vmul.f32 %v5989, 0.5
  %v6258 = vmul.f32 %v5992, 0.5
  %v6259 = vmul.f32 %v5995, 0.5
  %v6260 = vmul.f32 %v5998, 0.5
  %v6261 = vmul.f32 %v6001, 0.5
  %v6262 = vmul.f32 %v6004, 0.5
  %v6263 = vmul.f32 %v6007, 0.5
  %v6264 = vadd.f32 %v6008, %v1392
  %v6265 = vadd.f32 %v6009, %v1395
  %v6266 = vadd.f32 %v6010, %v1398
  %v6267 = vadd.f32 %v6011, %v1401
  %v6268 = vadd.f32 %v6012, %v1404
  %v6269 = vadd.f32 %v6013, %v1407
  %v6270 = vadd.f32 %v6014, %v1410
  %v6271 = vadd.f32 %v6015, %v1413
  %v6272 = vadd.f32 %v6016, %v1416
  %v6273 = vadd.f32 %v6017, %v1419
  %v6274 = vadd.f32 %v6018, %v1422
  %v6275 = vadd.f32 %v6019, %v1425
  %v6276 = vadd.f32 %v6020, %v1428
  %v6277 = vadd.f32 %v6021, %v1431
  %v6278 = vadd.f32 %v6022, %v1434
  %v6279 = vadd.f32 %v6023, %v1437
  %v6280 = vadd.f32 %v6024, %v1440
  %v6281 = vadd.f32 %v6025, %v1443
  %v6282 = vadd.f32 %v6026, %v1446
  %v6283 = vadd.f32 %v6027, %v1449
  %v6284 = vadd.f32 %v6028, %v1452
  %v6285 = vadd.f32 %v6029, %v1455
  %v6286 = vadd.f32 %v6030, %v1458
  %v6287 = vadd.f32 %v6031, %v1461
  %v6288 = vadd.f32 %v6032, %v1464
  %v6289 = vadd.f32 %v6033, %v1467
  %v6290 = vadd.f32 %v6034, %v1470
  %v6291 = vadd.f32 %v6035, %v1473
  %v6292 = vadd.f32 %v6036, %v1476
  %v6293 = vadd.f32 %v6037, %v1479
  %v6294 = vadd.f32 %v6038, %v1482
  %v6295 = vadd.f32 %v6039, %v1485
  %v6296 = vadd.f32 %v6040, %v1488
  %v6297 = vadd.f32 %v6041, %v1491
  %v6298 = vadd.f32 %v6042, %v1494
  %v6299 = vadd.f32 %v6043, %v1497
  %v6300 = vadd.f32 %v6044, %v1500
  %v6301 = vadd.f32 %v6045, %v1503
  %v6302 = vadd.f32 %v6046, %v1506
  %v6303 = vadd.f32 %v6047, %v1509
  %v6304 = vadd.f32 %v6048, %v1512
  %v6305 = vadd.f32 %v6049, %v1515
  %v6306 = vadd.f32 %v6050, %v1518
  %v6307 = vadd.f32 %v6051, %v1521
  %v6308 = vadd.f32 %v6052, %v1524
  %v6309 = vadd.f32 %v6053, %v1527
  %v6310 = vadd.f32 %v6054, %v1530
  %v6311 = vadd.f32 %v6055, %v1533
  %v6312 = vadd.f32 %v6056, %v1536
  %v6313 = vadd.f32 %v6057, %v1539
  %v6314 = vadd.f32 %v6058, %v1542
  %v6315 = vadd.f32 %v6059, %v1545
  %v6316 = vadd.f32 %v6060, %v1548
  %v6317 = vadd.f32 %v6061, %v1551
  %v6318 = vadd.f32 %v6062, %v1554
  %v6319 = vadd.f32 %v6063, %v1557
  %v6320 = vadd.f32 %v6064, %v1560
  %v6321 = vadd.f32 %v6065, %v1563
  %v6322 = vadd.f32 %v6066, %v1566
  %v6323 = vadd.f32 %v6067, %v1569
  %v6324 = vadd.f32 %v6068, %v1572
  %v6325 = vadd.f32 %v6069, %v1575
  %v6326 = vadd.f32 %v6070, %v1578
  %v6327 = vadd.f32 %v6071, %v1581
  %v6328 = vadd.f32 %v6072, %v1392
  %v6329 = vadd.f32 %v6073, %v1395
  %v6330 = vadd.f32 %v6074, %v1398
  %v6331 = vadd.f32 %v6075, %v1401
  %v6332 = vadd.f32 %v6076, %v1404
  %v6333 = vadd.f32 %v6077, %v1407
  %v6334 = vadd.f32 %v6078, %v1410
  %v6335 = vadd.f32 %v6079, %v1413
  %v6336 = vadd.f32 %v6080, %v1416
  %v6337 = vadd.f32 %v6081, %v1419
  %v6338 = vadd.f32 %v6082, %v1422
  %v6339 = vadd.f32 %v6083, %v1425
  %v6340 = vadd.f32 %v6084, %v1428
  %v6341 = vadd.f32 %v6085, %v1431
  %v6342 = vadd.f32 %v6086, %v1434
  %v6343 = vadd.f32 %v6087, %v1437
  %v6344 = vadd.f32 %v6088, %v1440
  %v6345 = vadd.f32 %v6089, %v1443
  %v6346 = vadd.f32 %v6090, %v1446
  %v6347 = vadd.f32 %v6091, %v1449
  %v6348 = vadd.f32 %v6092, %v1452
  %v6349 = vadd.f32 %v6093, %v1455
  %v6350 = vadd.f32 %v6094, %v1458
  %v6351 = vadd.f32 %v6095, %v1461
  %v6352 = vadd.f32 %v6096, %v1464
  %v6353 = vadd.f32 %v6097, %v1467
  %v6354 = vadd.f32 %v6098, %v1470
  %v6355 = vadd.f32 %v6099, %v1473
  %v6356 = vadd.f32 %v6100, %v1476
  %v6357 = vadd.f32 %v6101, %v1479
  %v6358 = vadd.f32 %v6102, %v1482
  %v6359 = vadd.f32 %v6103, %v1485
  %v6360 = vadd.f32 %v6104, %v1488
  %v6361 = vadd.f32 %v6105, %v1491
  %v6362 = vadd.f32 %v6106, %v1494
  %v6363 = vadd.f32 %v6107, %v1497
  %v6364 = vadd.f32 %v6108, %v1500
  %v6365 = vadd.f32 %v6109, %v1503
  %v6366 = vadd.f32 %v6110, %v1506
  %v6367 = vadd.f32 %v6111, %v1509
  %v6368 = vadd.f32 %v6112, %v1512
  %v6369 = vadd.f32 %v6113, %v1515
  %v6370 = vadd.f32 %v6114, %v1518
  %v6371 = vadd.f32 %v6115, %v1521
  %v6372 = vadd.f32 %v6116, %v1524
  %v6373 = vadd.f32 %v6117, %v1527
  %v6374 = vadd.f32 %v6118, %v1530
  %v6375 = vadd.f32 %v6119, %v1533
  %v6376 = vadd.f32 %v6120, %v1536
  %v6377 = vadd.f32 %v6121, %v1539
  %v6378 = vadd.f32 %v6122, %v1542
  %v6379 = vadd.f32 %v6123, %v1545
  %v6380 = vadd.f32 %v6124, %v1548
  %v6381 = vadd.f32 %v6125, %v1551
  %v6382 = vadd.f32 %v6126, %v1554
  %v6383 = vadd.f32 %v6127, %v1557
  %v6384 = vadd.f32 %v6128, %v1560
  %v6385 = vadd.f32 %v6129, %v1563
  %v6386 = vadd.f32 %v6130, %v1566
  %v6387 = vadd.f32 %v6131, %v1569
  %v6388 = vadd.f32 %v6132, %v1572
  %v6389 = vadd.f32 %v6133, %v1575
  %v6390 = vadd.f32 %v6134, %v1578
  %v6391 = vadd.f32 %v6135, %v1581
  %v6392 = vadd.f32 %v6136, %v1392
  %v6393 = vadd.f32 %v6137, %v1395
  %v6394 = vadd.f32 %v6138, %v1398
  %v6395 = vadd.f32 %v6139, %v1401
  %v6396 = vadd.f32 %v6140, %v1404
  %v6397 = vadd.f32 %v6141, %v1407
  %v6398 = vadd.f32 %v6142, %v1410
  %v6399 = vadd.f32 %v6143, %v1413
  %v6400 = vadd.f32 %v6144, %v1416
  %v6401 = vadd.f32 %v6145, %v1419
  %v6402 = vadd.f32 %v6146, %v1422
  %v6403 = vadd.f32 %v6147, %v1425
  %v6404 = vadd.f32 %v6148, %v1428
  %v6405 = vadd.f32 %v6149, %v1431
  %v6406 = vadd.f32 %v6150, %v1434
  %v6407 = vadd.f32 %v6151, %v1437
  %v6408 = vadd.f32 %v6152, %v1440
  %v6409 = vadd.f32 %v6153, %v1443
  %v6410 = vadd.f32 %v6154, %v1446
  %v6411 = vadd.f32 %v6155, %v1449
  %v6412 = vadd.f32 %v6156, %v1452
  %v6413 = vadd.f32 %v6157, %v1455
  %v6414 = vadd.f32 %v6158, %v1458
  %v6415 = vadd.f32 %v6159, %v1461
  %v6416 = vadd.f32 %v6160, %v1464
  %v6417 = vadd.f32 %v6161, %v1467
  %v6418 = vadd.f32 %v6162, %v1470
  %v6419 = vadd.f32 %v6163, %v1473
  %v6420 = vadd.f32 %v6164, %v1476
  %v6421 = vadd.f32 %v6165, %v1479
  %v6422 = vadd.f32 %v6166, %v1482
  %v6423 = vadd.f32 %v6167, %v1485
  %v6424 = vadd.f32 %v6168, %v1488
  %v6425 = vadd.f32 %v6169, %v1491
  %v6426 = vadd.f32 %v6170, %v1494
  %v6427 = vadd.f32 %v6171, %v1497
  %v6428 = vadd.f32 %v6172, %v1500
  %v6429 = vadd.f32 %v6173, %v1503
  %v6430 = vadd.f32 %v6174, %v1506
  %v6431 = vadd.f32 %v6175, %v1509
  %v6432 = vadd.f32 %v6176, %v1512
  %v6433 = vadd.f32 %v6177, %v1515
  %v6434 = vadd.f32 %v6178, %v1518
  %v6435 = vadd.f32 %v6179, %v1521
  %v6436 = vadd.f32 %v6180, %v1524
  %v6437 = vadd.f32 %v6181, %v1527
  %v6438 = vadd.f32 %v6182, %v1530
  %v6439 = vadd.f32 %v6183, %v1533
  %v6440 = vadd.f32 %v6184, %v1536
  %v6441 = vadd.f32 %v6185, %v1539
  %v6442 = vadd.f32 %v6186, %v1542
  %v6443 = vadd.f32 %v6187, %v1545
  %v6444 = vadd.f32 %v6188, %v1548
  %v6445 = vadd.f32 %v6189, %v1551
  %v6446 = vadd.f32 %v6190, %v1554
  %v6447 = vadd.f32 %v6191, %v1557
  %v6448 = vadd.f32 %v6192, %v1560
  %v6449 = vadd.f32 %v6193, %v1563
  %v6450 = vadd.f32 %v6194, %v1566
  %v6451 = vadd.f32 %v6195, %v1569
  %v6452 = vadd.f32 %v6196, %v1572
  %v6453 = vadd.f32 %v6197, %v1575
  %v6454 = vadd.f32 %v6198, %v1578
  %v6455 = vadd.f32 %v6199, %v1581
  %v6456 = vadd.f32 %v6200, %v1392
  %v6457 = vadd.f32 %v6201, %v1395
  %v6458 = vadd.f32 %v6202, %v1398
  %v6459 = vadd.f32 %v6203, %v1401
  %v6460 = vadd.f32 %v6204, %v1404
  %v6461 = vadd.f32 %v6205, %v1407
  %v6462 = vadd.f32 %v6206, %v1410
  %v6463 = vadd.f32 %v6207, %v1413
  %v6464 = vadd.f32 %v6208, %v1416
  %v6465 = vadd.f32 %v6209, %v1419
  %v6466 = vadd.f32 %v6210, %v1422
  %v6467 = vadd.f32 %v6211, %v1425
  %v6468 = vadd.f32 %v6212, %v1428
  %v6469 = vadd.f32 %v6213, %v1431
  %v6470 = vadd.f32 %v6214, %v1434
  %v6471 = vadd.f32 %v6215, %v1437
  %v6472 = vadd.f32 %v6216, %v1440
  %v6473 = vadd.f32 %v6217, %v1443
  %v6474 = vadd.f32 %v6218, %v1446
  %v6475 = vadd.f32 %v6219, %v1449
  %v6476 = vadd.f32 %v6220, %v1452
  %v6477 = vadd.f32 %v6221, %v1455
  %v6478 = vadd.f32 %v6222, %v1458
  %v6479 = vadd.f32 %v6223, %v1461
  %v6480 = vadd.f32 %v6224, %v1464
  %v6481 = vadd.f32 %v6225, %v1467
  %v6482 = vadd.f32 %v6226, %v1470
  %v6483 = vadd.f32 %v6227, %v1473
  %v6484 = vadd.f32 %v6228, %v1476
  %v6485 = vadd.f32 %v6229, %v1479
  %v6486 = vadd.f32 %v6230, %v1482
  %v6487 = vadd.f32 %v6231, %v1485
  %v6488 = vadd.f32 %v6232, %v1488
  %v6489 = vadd.f32 %v6233, %v1491
  %v6490 = vadd.f32 %v6234, %v1494
  %v6491 = vadd.f32 %v6235, %v1497
  %v6492 = vadd.f32 %v6236, %v1500
  %v6493 = vadd.f32 %v6237, %v1503
  %v6494 = vadd.f32 %v6238, %v1506
  %v6495 = vadd.f32 %v6239, %v1509
  %v6496 = vadd.f32 %v6240, %v1512
  %v6497 = vadd.f32 %v6241, %v1515
  %v6498 = vadd.f32 %v6242, %v1518
  %v6499 = vadd.f32 %v6243, %v1521
  %v6500 = vadd.f32 %v6244, %v1524
  %v6501 = vadd.f32 %v6245, %v1527
  %v6502 = vadd.f32 %v6246, %v1530
  %v6503 = vadd.f32 %v6247, %v1533
  %v6504 = vadd.f32 %v6248, %v1536
  %v6505 = vadd.f32 %v6249, %v1539
  %v6506 = vadd.f32 %v6250, %v1542
  %v6507 = vadd.f32 %v6251, %v1545
  %v6508 = vadd.f32 %v6252, %v1548
  %v6509 = vadd.f32 %v6253, %v1551
  %v6510 = vadd.f32 %v6254, %v1554
  %v6511 = vadd.f32 %v6255, %v1557
  %v6512 = vadd.f32 %v6256, %v1560
  %v6513 = vadd.f32 %v6257, %v1563
  %v6514 = vadd.f32 %v6258, %v1566
  %v6515 = vadd.f32 %v6259, %v1569
  %v6516 = vadd.f32 %v6260, %v1572
  %v6517 = vadd.f32 %v6261, %v1575
  %v6518 = vadd.f32 %v6262, %v1578
  %v6519 = vadd.f32 %v6263, %v1581
  %v6520 = vmul.f32 %v4216, %v4216
  %v6521 = vmul.f32 %v4217, %v4217
  %v6522 = vmul.f32 %v4218, %v4218
  %v6523 = vmul.f32 %v4219, %v4219
  %v6524 = vmul.f32 %v4220, %v4220
  %v6525 = vmul.f32 %v4221, %v4221
  %v6526 = vmul.f32 %v4222, %v4222
  %v6527 = vmul.f32 %v4223, %v4223
  %v6528 = vmul.f32 %v4224, %v4224
  %v6529 = vmul.f32 %v4225, %v4225
  %v6530 = vmul.f32 %v4226, %v4226
  %v6531 = vmul.f32 %v4227, %v4227
  %v6532 = vmul.f32 %v4228, %v4228
  %v6533 = vmul.f32 %v4229, %v4229
  %v6534 = vmul.f32 %v4230, %v4230
  %v6535 = vmul.f32 %v4231, %v4231
  %v6536 = vmul.f32 %v4232, %v4232
  %v6537 = vmul.f32 %v4233, %v4233
  %v6538 = vmul.f32 %v4234, %v4234
  %v6539 = vmul.f32 %v4235, %v4235
  %v6540 = vmul.f32 %v4236, %v4236
  %v6541 = vmul.f32 %v4237, %v4237
  %v6542 = vmul.f32 %v4238, %v4238
  %v6543 = vmul.f32 %v4239, %v4239
  %v6544 = vmul.f32 %v4240, %v4240
  %v6545 = vmul.f32 %v4241, %v4241
  %v6546 = vmul.f32 %v4242, %v4242
  %v6547 = vmul.f32 %v4243, %v4243
  %v6548 = vmul.f32 %v4244, %v4244
  %v6549 = vmul.f32 %v4245, %v4245
  %v6550 = vmul.f32 %v4246, %v4246
  %v6551 = vmul.f32 %v4247, %v4247
  %v6552 = vmul.f32 %v4248, %v4248
  %v6553 = vmul.f32 %v4249, %v4249
  %v6554 = vmul.f32 %v4250, %v4250
  %v6555 = vmul.f32 %v4251, %v4251
  %v6556 = vmul.f32 %v4252, %v4252
  %v6557 = vmul.f32 %v4253, %v4253
  %v6558 = vmul.f32 %v4254, %v4254
  %v6559 = vmul.f32 %v4255, %v4255
  %v6560 = vmul.f32 %v4256, %v4256
  %v6561 = vmul.f32 %v4257, %v4257
  %v6562 = vmul.f32 %v4258, %v4258
  %v6563 = vmul.f32 %v4259, %v4259
  %v6564 = vmul.f32 %v4260, %v4260
  %v6565 = vmul.f32 %v4261, %v4261
  %v6566 = vmul.f32 %v4262, %v4262
  %v6567 = vmul.f32 %v4263, %v4263
  %v6568 = vmul.f32 %v4264, %v4264
  %v6569 = vmul.f32 %v4265, %v4265
  %v6570 = vmul.f32 %v4266, %v4266
  %v6571 = vmul.f32 %v4267, %v4267
  %v6572 = vmul.f32 %v4268, %v4268
  %v6573 = vmul.f32 %v4269, %v4269
  %v6574 = vmul.f32 %v4270, %v4270
  %v6575 = vmul.f32 %v4271, %v4271
  %v6576 = vmul.f32 %v4272, %v4272
  %v6577 = vmul.f32 %v4273, %v4273
  %v6578 = vmul.f32 %v4274, %v4274
  %v6579 = vmul.f32 %v4275, %v4275
  %v6580 = vmul.f32 %v4276, %v4276
  %v6581 = vmul.f32 %v4277, %v4277
  %v6582 = vmul.f32 %v4278, %v4278
  %v6583 = vmul.f32 %v4279, %v4279
  %v6584 = vmul.f32 %v4280, %v4280
  %v6585 = vmul.f32 %v4281, %v4281
  %v6586 = vmul.f32 %v4282, %v4282
  %v6587 = vmul.f32 %v4283, %v4283
  %v6588 = vmul.f32 %v4284, %v4284
  %v6589 = vmul.f32 %v4285, %v4285
  %v6590 = vmul.f32 %v4286, %v4286
  %v6591 = vmul.f32 %v4287, %v4287
  %v6592 = vmul.f32 %v4288, %v4288
  %v6593 = vmul.f32 %v4289, %v4289
  %v6594 = vmul.f32 %v4290, %v4290
  %v6595 = vmul.f32 %v4291, %v4291
  %v6596 = vmul.f32 %v4292, %v4292
  %v6597 = vmul.f32 %v4293, %v4293
  %v6598 = vmul.f32 %v4294, %v4294
  %v6599 = vmul.f32 %v4295, %v4295
  %v6600 = vmul.f32 %v4296, %v4296
  %v6601 = vmul.f32 %v4297, %v4297
  %v6602 = vmul.f32 %v4298, %v4298
  %v6603 = vmul.f32 %v4299, %v4299
  %v6604 = vmul.f32 %v4300, %v4300
  %v6605 = vmul.f32 %v4301, %v4301
  %v6606 = vmul.f32 %v4302, %v4302
  %v6607 = vmul.f32 %v4303, %v4303
  %v6608 = vmul.f32 %v4304, %v4304
  %v6609 = vmul.f32 %v4305, %v4305
  %v6610 = vmul.f32 %v4306, %v4306
  %v6611 = vmul.f32 %v4307, %v4307
  %v6612 = vmul.f32 %v4308, %v4308
  %v6613 = vmul.f32 %v4309, %v4309
  %v6614 = vmul.f32 %v4310, %v4310
  %v6615 = vmul.f32 %v4311, %v4311
  %v6616 = vmul.f32 %v4312, %v4312
  %v6617 = vmul.f32 %v4313, %v4313
  %v6618 = vmul.f32 %v4314, %v4314
  %v6619 = vmul.f32 %v4315, %v4315
  %v6620 = vmul.f32 %v4316, %v4316
  %v6621 = vmul.f32 %v4317, %v4317
  %v6622 = vmul.f32 %v4318, %v4318
  %v6623 = vmul.f32 %v4319, %v4319
  %v6624 = vmul.f32 %v4320, %v4320
  %v6625 = vmul.f32 %v4321, %v4321
  %v6626 = vmul.f32 %v4322, %v4322
  %v6627 = vmul.f32 %v4323, %v4323
  %v6628 = vmul.f32 %v4324, %v4324
  %v6629 = vmul.f32 %v4325, %v4325
  %v6630 = vmul.f32 %v4326, %v4326
  %v6631 = vmul.f32 %v4327, %v4327
  %v6632 = vmul.f32 %v4328, %v4328
  %v6633 = vmul.f32 %v4329, %v4329
  %v6634 = vmul.f32 %v4330, %v4330
  %v6635 = vmul.f32 %v4331, %v4331
  %v6636 = vmul.f32 %v4332, %v4332
  %v6637 = vmul.f32 %v4333, %v4333
  %v6638 = vmul.f32 %v4334, %v4334
  %v6639 = vmul.f32 %v4335, %v4335
  %v6640 = vmul.f32 %v4336, %v4336
  %v6641 = vmul.f32 %v4337, %v4337
  %v6642 = vmul.f32 %v4338, %v4338
  %v6643 = vmul.f32 %v4339, %v4339
  %v6644 = vmul.f32 %v4340, %v4340
  %v6645 = vmul.f32 %v4341, %v4341
  %v6646 = vmul.f32 %v4342, %v4342
  %v6647 = vmul.f32 %v4343, %v4343
  %v6648 = vmul.f32 %v4344, %v4344
  %v6649 = vmul.f32 %v4345, %v4345
  %v6650 = vmul.f32 %v4346, %v4346
  %v6651 = vmul.f32 %v4347, %v4347
  %v6652 = vmul.f32 %v4348, %v4348
  %v6653 = vmul.f32 %v4349, %v4349
  %v6654 = vmul.f32 %v4350, %v4350
  %v6655 = vmul.f32 %v4351, %v4351
  %v6656 = vmul.f32 %v4352, %v4352
  %v6657 = vmul.f32 %v4353, %v4353
  %v6658 = vmul.f32 %v4354, %v4354
  %v6659 = vmul.f32 %v4355, %v4355
  %v6660 = vmul.f32 %v4356, %v4356
  %v6661 = vmul.f32 %v4357, %v4357
  %v6662 = vmul.f32 %v4358, %v4358
  %v6663 = vmul.f32 %v4359, %v4359
  %v6664 = vmul.f32 %v4360, %v4360
  %v6665 = vmul.f32 %v4361, %v4361
  %v6666 = vmul.f32 %v4362, %v4362
  %v6667 = vmul.f32 %v4363, %v4363
  %v6668 = vmul.f32 %v4364, %v4364
  %v6669 = vmul.f32 %v4365, %v4365
  %v6670 = vmul.f32 %v4366, %v4366
  %v6671 = vmul.f32 %v4367, %v4367
  %v6672 = vmul.f32 %v4368, %v4368
  %v6673 = vmul.f32 %v4369, %v4369
  %v6674 = vmul.f32 %v4370, %v4370
  %v6675 = vmul.f32 %v4371, %v4371
  %v6676 = vmul.f32 %v4372, %v4372
  %v6677 = vmul.f32 %v4373, %v4373
  %v6678 = vmul.f32 %v4374, %v4374
  %v6679 = vmul.f32 %v4375, %v4375
  %v6680 = vmul.f32 %v4376, %v4376
  %v6681 = vmul.f32 %v4377, %v4377
  %v6682 = vmul.f32 %v4378, %v4378
  %v6683 = vmul.f32 %v4379, %v4379
  %v6684 = vmul.f32 %v4380, %v4380
  %v6685 = vmul.f32 %v4381, %v4381
  %v6686 = vmul.f32 %v4382, %v4382
  %v6687 = vmul.f32 %v4383, %v4383
  %v6688 = vmul.f32 %v4384, %v4384
  %v6689 = vmul.f32 %v4385, %v4385
  %v6690 = vmul.f32 %v4386, %v4386
  %v6691 = vmul.f32 %v4387, %v4387
  %v6692 = vmul.f32 %v4388, %v4388
  %v6693 = vmul.f32 %v4389, %v4389
  %v6694 = vmul.f32 %v4390, %v4390
  %v6695 = vmul.f32 %v4391, %v4391
  %v6696 = vmul.f32 %v4392, %v4392
  %v6697 = vmul.f32 %v4393, %v4393
  %v6698 = vmul.f32 %v4394, %v4394
  %v6699 = vmul.f32 %v4395, %v4395
  %v6700 = vmul.f32 %v4396, %v4396
  %v6701 = vmul.f32 %v4397, %v4397
  %v6702 = vmul.f32 %v4398, %v4398
  %v6703 = vmul.f32 %v4399, %v4399
  %v6704 = vmul.f32 %v4400, %v4400
  %v6705 = vmul.f32 %v4401, %v4401
  %v6706 = vmul.f32 %v4402, %v4402
  %v6707 = vmul.f32 %v4403, %v4403
  %v6708 = vmul.f32 %v4404, %v4404
  %v6709 = vmul.f32 %v4405, %v4405
  %v6710 = vmul.f32 %v4406, %v4406
  %v6711 = vmul.f32 %v4407, %v4407
  %v6712 = vmul.f32 %v4408, %v4408
  %v6713 = vmul.f32 %v4409, %v4409
  %v6714 = vmul.f32 %v4410, %v4410
  %v6715 = vmul.f32 %v4411, %v4411
  %v6716 = vmul.f32 %v4412, %v4412
  %v6717 = vmul.f32 %v4413, %v4413
  %v6718 = vmul.f32 %v4414, %v4414
  %v6719 = vmul.f32 %v4415, %v4415
  %v6720 = vmul.f32 %v4416, %v4416
  %v6721 = vmul.f32 %v4417, %v4417
  %v6722 = vmul.f32 %v4418, %v4418
  %v6723 = vmul.f32 %v4419, %v4419
  %v6724 = vmul.f32 %v4420, %v4420
  %v6725 = vmul.f32 %v4421, %v4421
  %v6726 = vmul.f32 %v4422, %v4422
  %v6727 = vmul.f32 %v4423, %v4423
  %v6728 = vmul.f32 %v4424, %v4424
  %v6729 = vmul.f32 %v4425, %v4425
  %v6730 = vmul.f32 %v4426, %v4426
  %v6731 = vmul.f32 %v4427, %v4427
  %v6732 = vmul.f32 %v4428, %v4428
  %v6733 = vmul.f32 %v4429, %v4429
  %v6734 = vmul.f32 %v4430, %v4430
  %v6735 = vmul.f32 %v4431, %v4431
  %v6736 = vmul.f32 %v4432, %v4432
  %v6737 = vmul.f32 %v4433, %v4433
  %v6738 = vmul.f32 %v4434, %v4434
  %v6739 = vmul.f32 %v4435, %v4435
  %v6740 = vmul.f32 %v4436, %v4436
  %v6741 = vmul.f32 %v4437, %v4437
  %v6742 = vmul.f32 %v4438, %v4438
  %v6743 = vmul.f32 %v4439, %v4439
  %v6744 = vmul.f32 %v4440, %v4440
  %v6745 = vmul.f32 %v4441, %v4441
  %v6746 = vmul.f32 %v4442, %v4442
  %v6747 = vmul.f32 %v4443, %v4443
  %v6748 = vmul.f32 %v4444, %v4444
  %v6749 = vmul.f32 %v4445, %v4445
  %v6750 = vmul.f32 %v4446, %v4446
  %v6751 = vmul.f32 %v4447, %v4447
  %v6752 = vmul.f32 %v4448, %v4448
  %v6753 = vmul.f32 %v4449, %v4449
  %v6754 = vmul.f32 %v4450, %v4450
  %v6755 = vmul.f32 %v4451, %v4451
  %v6756 = vmul.f32 %v4452, %v4452
  %v6757 = vmul.f32 %v4453, %v4453
  %v6758 = vmul.f32 %v4454, %v4454
  %v6759 = vmul.f32 %v4455, %v4455
  %v6760 = vmul.f32 %v4456, %v4456
  %v6761 = vmul.f32 %v4457, %v4457
  %v6762 = vmul.f32 %v4458, %v4458
  %v6763 = vmul.f32 %v4459, %v4459
  %v6764 = vmul.f32 %v4460, %v4460
  %v6765 = vmul.f32 %v4461, %v4461
  %v6766 = vmul.f32 %v4462, %v4462
  %v6767 = vmul.f32 %v4463, %v4463
  %v6768 = vmul.f32 %v4464, %v4464
  %v6769 = vmul.f32 %v4465, %v4465
  %v6770 = vmul.f32 %v4466, %v4466
  %v6771 = vmul.f32 %v4467, %v4467
  %v6772 = vmul.f32 %v4468, %v4468
  %v6773 = vmul.f32 %v4469, %v4469
  %v6774 = vmul.f32 %v4470, %v4470
  %v6775 = vmul.f32 %v4471, %v4471
  %v6776 = vsel %vm619, %v6520, 0.0
  %6777 = vadd.xlane.f32.xlu0 %v6776
  %v6778 = vpop.xlane.xlu0 %6777
  %v6779 = vsel %vm619, %v6521, 0.0
  %6780 = vadd.xlane.f32.xlu0 %v6779
  %v6781 = vpop.xlane.xlu0 %6780
  %v6782 = vsel %vm619, %v6522, 0.0
  %6783 = vadd.xlane.f32.xlu0 %v6782
  %v6784 = vpop.xlane.xlu0 %6783
  %v6785 = vsel %vm619, %v6523, 0.0
  %6786 = vadd.xlane.f32.xlu0 %v6785
  %v6787 = vpop.xlane.xlu0 %6786
  %v6788 = vsel %vm619, %v6524, 0.0
  %6789 = vadd.xlane.f32.xlu0 %v6788
  %v6790 = vpop.xlane.xlu0 %6789
  %v6791 = vsel %vm619, %v6525, 0.0
  %6792 = vadd.xlane.f32.xlu0 %v6791
  %v6793 = vpop.xlane.xlu0 %6792
  %v6794 = vsel %vm619, %v6526, 0.0
  %6795 = vadd.xlane.f32.xlu0 %v6794
  %v6796 = vpop.xlane.xlu0 %6795
  %v6797 = vsel %vm619, %v6527, 0.0
  %6798 = vadd.xlane.f32.xlu0 %v6797
  %v6799 = vpop.xlane.xlu0 %6798
  %v6800 = vsel %vm619, %v6528, 0.0
  %6801 = vadd.xlane.f32.xlu0 %v6800
  %v6802 = vpop.xlane.xlu0 %6801
  %v6803 = vsel %vm619, %v6529, 0.0
  %6804 = vadd.xlane.f32.xlu0 %v6803
  %v6805 = vpop.xlane.xlu0 %6804
  %v6806 = vsel %vm619, %v6530, 0.0
  %6807 = vadd.xlane.f32.xlu0 %v6806
  %v6808 = vpop.xlane.xlu0 %6807
  %v6809 = vsel %vm619, %v6531, 0.0
  %6810 = vadd.xlane.f32.xlu0 %v6809
  %v6811 = vpop.xlane.xlu0 %6810
  %v6812 = vsel %vm619, %v6532, 0.0
  %6813 = vadd.xlane.f32.xlu0 %v6812
  %v6814 = vpop.xlane.xlu0 %6813
  %v6815 = vsel %vm619, %v6533, 0.0
  %6816 = vadd.xlane.f32.xlu0 %v6815
  %v6817 = vpop.xlane.xlu0 %6816
  %v6818 = vsel %vm619, %v6534, 0.0
  %6819 = vadd.xlane.f32.xlu0 %v6818
  %v6820 = vpop.xlane.xlu0 %6819
  %v6821 = vsel %vm619, %v6535, 0.0
  %6822 = vadd.xlane.f32.xlu0 %v6821
  %v6823 = vpop.xlane.xlu0 %6822
  %v6824 = vsel %vm619, %v6536, 0.0
  %6825 = vadd.xlane.f32.xlu0 %v6824
  %v6826 = vpop.xlane.xlu0 %6825
  %v6827 = vsel %vm619, %v6537, 0.0
  %6828 = vadd.xlane.f32.xlu0 %v6827
  %v6829 = vpop.xlane.xlu0 %6828
  %v6830 = vsel %vm619, %v6538, 0.0
  %6831 = vadd.xlane.f32.xlu0 %v6830
  %v6832 = vpop.xlane.xlu0 %6831
  %v6833 = vsel %vm619, %v6539, 0.0
  %6834 = vadd.xlane.f32.xlu0 %v6833
  %v6835 = vpop.xlane.xlu0 %6834
  %v6836 = vsel %vm619, %v6540, 0.0
  %6837 = vadd.xlane.f32.xlu0 %v6836
  %v6838 = vpop.xlane.xlu0 %6837
  %v6839 = vsel %vm619, %v6541, 0.0
  %6840 = vadd.xlane.f32.xlu0 %v6839
  %v6841 = vpop.xlane.xlu0 %6840
  %v6842 = vsel %vm619, %v6542, 0.0
  %6843 = vadd.xlane.f32.xlu0 %v6842
  %v6844 = vpop.xlane.xlu0 %6843
  %v6845 = vsel %vm619, %v6543, 0.0
  %6846 = vadd.xlane.f32.xlu0 %v6845
  %v6847 = vpop.xlane.xlu0 %6846
  %v6848 = vsel %vm619, %v6544, 0.0
  %6849 = vadd.xlane.f32.xlu0 %v6848
  %v6850 = vpop.xlane.xlu0 %6849
  %v6851 = vsel %vm619, %v6545, 0.0
  %6852 = vadd.xlane.f32.xlu0 %v6851
  %v6853 = vpop.xlane.xlu0 %6852
  %v6854 = vsel %vm619, %v6546, 0.0
  %6855 = vadd.xlane.f32.xlu0 %v6854
  %v6856 = vpop.xlane.xlu0 %6855
  %v6857 = vsel %vm619, %v6547, 0.0
  %6858 = vadd.xlane.f32.xlu0 %v6857
  %v6859 = vpop.xlane.xlu0 %6858
  %v6860 = vsel %vm619, %v6548, 0.0
  %6861 = vadd.xlane.f32.xlu0 %v6860
  %v6862 = vpop.xlane.xlu0 %6861
  %v6863 = vsel %vm619, %v6549, 0.0
  %6864 = vadd.xlane.f32.xlu0 %v6863
  %v6865 = vpop.xlane.xlu0 %6864
  %v6866 = vsel %vm619, %v6550, 0.0
  %6867 = vadd.xlane.f32.xlu0 %v6866
  %v6868 = vpop.xlane.xlu0 %6867
  %v6869 = vsel %vm619, %v6551, 0.0
  %6870 = vadd.xlane.f32.xlu0 %v6869
  %v6871 = vpop.xlane.xlu0 %6870
  %v6872 = vsel %vm619, %v6552, 0.0
  %6873 = vadd.xlane.f32.xlu0 %v6872
  %v6874 = vpop.xlane.xlu0 %6873
  %v6875 = vsel %vm619, %v6553, 0.0
  %6876 = vadd.xlane.f32.xlu0 %v6875
  %v6877 = vpop.xlane.xlu0 %6876
  %v6878 = vsel %vm619, %v6554, 0.0
  %6879 = vadd.xlane.f32.xlu0 %v6878
  %v6880 = vpop.xlane.xlu0 %6879
  %v6881 = vsel %vm619, %v6555, 0.0
  %6882 = vadd.xlane.f32.xlu0 %v6881
  %v6883 = vpop.xlane.xlu0 %6882
  %v6884 = vsel %vm619, %v6556, 0.0
  %6885 = vadd.xlane.f32.xlu0 %v6884
  %v6886 = vpop.xlane.xlu0 %6885
  %v6887 = vsel %vm619, %v6557, 0.0
  %6888 = vadd.xlane.f32.xlu0 %v6887
  %v6889 = vpop.xlane.xlu0 %6888
  %v6890 = vsel %vm619, %v6558, 0.0
  %6891 = vadd.xlane.f32.xlu0 %v6890
  %v6892 = vpop.xlane.xlu0 %6891
  %v6893 = vsel %vm619, %v6559, 0.0
  %6894 = vadd.xlane.f32.xlu0 %v6893
  %v6895 = vpop.xlane.xlu0 %6894
  %v6896 = vsel %vm619, %v6560, 0.0
  %6897 = vadd.xlane.f32.xlu0 %v6896
  %v6898 = vpop.xlane.xlu0 %6897
  %v6899 = vsel %vm619, %v6561, 0.0
  %6900 = vadd.xlane.f32.xlu0 %v6899
  %v6901 = vpop.xlane.xlu0 %6900
  %v6902 = vsel %vm619, %v6562, 0.0
  %6903 = vadd.xlane.f32.xlu0 %v6902
  %v6904 = vpop.xlane.xlu0 %6903
  %v6905 = vsel %vm619, %v6563, 0.0
  %6906 = vadd.xlane.f32.xlu0 %v6905
  %v6907 = vpop.xlane.xlu0 %6906
  %v6908 = vsel %vm619, %v6564, 0.0
  %6909 = vadd.xlane.f32.xlu0 %v6908
  %v6910 = vpop.xlane.xlu0 %6909
  %v6911 = vsel %vm619, %v6565, 0.0
  %6912 = vadd.xlane.f32.xlu0 %v6911
  %v6913 = vpop.xlane.xlu0 %6912
  %v6914 = vsel %vm619, %v6566, 0.0
  %6915 = vadd.xlane.f32.xlu0 %v6914
  %v6916 = vpop.xlane.xlu0 %6915
  %v6917 = vsel %vm619, %v6567, 0.0
  %6918 = vadd.xlane.f32.xlu0 %v6917
  %v6919 = vpop.xlane.xlu0 %6918
  %v6920 = vsel %vm619, %v6568, 0.0
  %6921 = vadd.xlane.f32.xlu0 %v6920
  %v6922 = vpop.xlane.xlu0 %6921
  %v6923 = vsel %vm619, %v6569, 0.0
  %6924 = vadd.xlane.f32.xlu0 %v6923
  %v6925 = vpop.xlane.xlu0 %6924
  %v6926 = vsel %vm619, %v6570, 0.0
  %6927 = vadd.xlane.f32.xlu0 %v6926
  %v6928 = vpop.xlane.xlu0 %6927
  %v6929 = vsel %vm619, %v6571, 0.0
  %6930 = vadd.xlane.f32.xlu0 %v6929
  %v6931 = vpop.xlane.xlu0 %6930
  %v6932 = vsel %vm619, %v6572, 0.0
  %6933 = vadd.xlane.f32.xlu0 %v6932
  %v6934 = vpop.xlane.xlu0 %6933
  %v6935 = vsel %vm619, %v6573, 0.0
  %6936 = vadd.xlane.f32.xlu0 %v6935
  %v6937 = vpop.xlane.xlu0 %6936
  %v6938 = vsel %vm619, %v6574, 0.0
  %6939 = vadd.xlane.f32.xlu0 %v6938
  %v6940 = vpop.xlane.xlu0 %6939
  %v6941 = vsel %vm619, %v6575, 0.0
  %6942 = vadd.xlane.f32.xlu0 %v6941
  %v6943 = vpop.xlane.xlu0 %6942
  %v6944 = vsel %vm619, %v6576, 0.0
  %6945 = vadd.xlane.f32.xlu0 %v6944
  %v6946 = vpop.xlane.xlu0 %6945
  %v6947 = vsel %vm619, %v6577, 0.0
  %6948 = vadd.xlane.f32.xlu0 %v6947
  %v6949 = vpop.xlane.xlu0 %6948
  %v6950 = vsel %vm619, %v6578, 0.0
  %6951 = vadd.xlane.f32.xlu0 %v6950
  %v6952 = vpop.xlane.xlu0 %6951
  %v6953 = vsel %vm619, %v6579, 0.0
  %6954 = vadd.xlane.f32.xlu0 %v6953
  %v6955 = vpop.xlane.xlu0 %6954
  %v6956 = vsel %vm619, %v6580, 0.0
  %6957 = vadd.xlane.f32.xlu0 %v6956
  %v6958 = vpop.xlane.xlu0 %6957
  %v6959 = vsel %vm619, %v6581, 0.0
  %6960 = vadd.xlane.f32.xlu0 %v6959
  %v6961 = vpop.xlane.xlu0 %6960
  %v6962 = vsel %vm619, %v6582, 0.0
  %6963 = vadd.xlane.f32.xlu0 %v6962
  %v6964 = vpop.xlane.xlu0 %6963
  %v6965 = vsel %vm619, %v6583, 0.0
  %6966 = vadd.xlane.f32.xlu0 %v6965
  %v6967 = vpop.xlane.xlu0 %6966
  %v6968 = vsel %vm619, %v6584, 0.0
  %6969 = vadd.xlane.f32.xlu0 %v6968
  %v6970 = vpop.xlane.xlu0 %6969
  %v6971 = vsel %vm619, %v6585, 0.0
  %6972 = vadd.xlane.f32.xlu0 %v6971
  %v6973 = vpop.xlane.xlu0 %6972
  %v6974 = vsel %vm619, %v6586, 0.0
  %6975 = vadd.xlane.f32.xlu0 %v6974
  %v6976 = vpop.xlane.xlu0 %6975
  %v6977 = vsel %vm619, %v6587, 0.0
  %6978 = vadd.xlane.f32.xlu0 %v6977
  %v6979 = vpop.xlane.xlu0 %6978
  %v6980 = vsel %vm619, %v6588, 0.0
  %6981 = vadd.xlane.f32.xlu0 %v6980
  %v6982 = vpop.xlane.xlu0 %6981
  %v6983 = vsel %vm619, %v6589, 0.0
  %6984 = vadd.xlane.f32.xlu0 %v6983
  %v6985 = vpop.xlane.xlu0 %6984
  %v6986 = vsel %vm619, %v6590, 0.0
  %6987 = vadd.xlane.f32.xlu0 %v6986
  %v6988 = vpop.xlane.xlu0 %6987
  %v6989 = vsel %vm619, %v6591, 0.0
  %6990 = vadd.xlane.f32.xlu0 %v6989
  %v6991 = vpop.xlane.xlu0 %6990
  %v6992 = vsel %vm619, %v6592, 0.0
  %6993 = vadd.xlane.f32.xlu0 %v6992
  %v6994 = vpop.xlane.xlu0 %6993
  %v6995 = vsel %vm619, %v6593, 0.0
  %6996 = vadd.xlane.f32.xlu0 %v6995
  %v6997 = vpop.xlane.xlu0 %6996
  %v6998 = vsel %vm619, %v6594, 0.0
  %6999 = vadd.xlane.f32.xlu0 %v6998
  %v7000 = vpop.xlane.xlu0 %6999
  %v7001 = vsel %vm619, %v6595, 0.0
  %7002 = vadd.xlane.f32.xlu0 %v7001
  %v7003 = vpop.xlane.xlu0 %7002
  %v7004 = vsel %vm619, %v6596, 0.0
  %7005 = vadd.xlane.f32.xlu0 %v7004
  %v7006 = vpop.xlane.xlu0 %7005
  %v7007 = vsel %vm619, %v6597, 0.0
  %7008 = vadd.xlane.f32.xlu0 %v7007
  %v7009 = vpop.xlane.xlu0 %7008
  %v7010 = vsel %vm619, %v6598, 0.0
  %7011 = vadd.xlane.f32.xlu0 %v7010
  %v7012 = vpop.xlane.xlu0 %7011
  %v7013 = vsel %vm619, %v6599, 0.0
  %7014 = vadd.xlane.f32.xlu0 %v7013
  %v7015 = vpop.xlane.xlu0 %7014
  %v7016 = vsel %vm619, %v6600, 0.0
  %7017 = vadd.xlane.f32.xlu0 %v7016
  %v7018 = vpop.xlane.xlu0 %7017
  %v7019 = vsel %vm619, %v6601, 0.0
  %7020 = vadd.xlane.f32.xlu0 %v7019
  %v7021 = vpop.xlane.xlu0 %7020
  %v7022 = vsel %vm619, %v6602, 0.0
  %7023 = vadd.xlane.f32.xlu0 %v7022
  %v7024 = vpop.xlane.xlu0 %7023
  %v7025 = vsel %vm619, %v6603, 0.0
  %7026 = vadd.xlane.f32.xlu0 %v7025
  %v7027 = vpop.xlane.xlu0 %7026
  %v7028 = vsel %vm619, %v6604, 0.0
  %7029 = vadd.xlane.f32.xlu0 %v7028
  %v7030 = vpop.xlane.xlu0 %7029
  %v7031 = vsel %vm619, %v6605, 0.0
  %7032 = vadd.xlane.f32.xlu0 %v7031
  %v7033 = vpop.xlane.xlu0 %7032
  %v7034 = vsel %vm619, %v6606, 0.0
  %7035 = vadd.xlane.f32.xlu0 %v7034
  %v7036 = vpop.xlane.xlu0 %7035
  %v7037 = vsel %vm619, %v6607, 0.0
  %7038 = vadd.xlane.f32.xlu0 %v7037
  %v7039 = vpop.xlane.xlu0 %7038
  %v7040 = vsel %vm619, %v6608, 0.0
  %7041 = vadd.xlane.f32.xlu0 %v7040
  %v7042 = vpop.xlane.xlu0 %7041
  %v7043 = vsel %vm619, %v6609, 0.0
  %7044 = vadd.xlane.f32.xlu0 %v7043
  %v7045 = vpop.xlane.xlu0 %7044
  %v7046 = vsel %vm619, %v6610, 0.0
  %7047 = vadd.xlane.f32.xlu0 %v7046
  %v7048 = vpop.xlane.xlu0 %7047
  %v7049 = vsel %vm619, %v6611, 0.0
  %7050 = vadd.xlane.f32.xlu0 %v7049
  %v7051 = vpop.xlane.xlu0 %7050
  %v7052 = vsel %vm619, %v6612, 0.0
  %7053 = vadd.xlane.f32.xlu0 %v7052
  %v7054 = vpop.xlane.xlu0 %7053
  %v7055 = vsel %vm619, %v6613, 0.0
  %7056 = vadd.xlane.f32.xlu0 %v7055
  %v7057 = vpop.xlane.xlu0 %7056
  %v7058 = vsel %vm619, %v6614, 0.0
  %7059 = vadd.xlane.f32.xlu0 %v7058
  %v7060 = vpop.xlane.xlu0 %7059
  %v7061 = vsel %vm619, %v6615, 0.0
  %7062 = vadd.xlane.f32.xlu0 %v7061
  %v7063 = vpop.xlane.xlu0 %7062
  %v7064 = vsel %vm619, %v6616, 0.0
  %7065 = vadd.xlane.f32.xlu0 %v7064
  %v7066 = vpop.xlane.xlu0 %7065
  %v7067 = vsel %vm619, %v6617, 0.0
  %7068 = vadd.xlane.f32.xlu0 %v7067
  %v7069 = vpop.xlane.xlu0 %7068
  %v7070 = vsel %vm619, %v6618, 0.0
  %7071 = vadd.xlane.f32.xlu0 %v7070
  %v7072 = vpop.xlane.xlu0 %7071
  %v7073 = vsel %vm619, %v6619, 0.0
  %7074 = vadd.xlane.f32.xlu0 %v7073
  %v7075 = vpop.xlane.xlu0 %7074
  %v7076 = vsel %vm619, %v6620, 0.0
  %7077 = vadd.xlane.f32.xlu0 %v7076
  %v7078 = vpop.xlane.xlu0 %7077
  %v7079 = vsel %vm619, %v6621, 0.0
  %7080 = vadd.xlane.f32.xlu0 %v7079
  %v7081 = vpop.xlane.xlu0 %7080
  %v7082 = vsel %vm619, %v6622, 0.0
  %7083 = vadd.xlane.f32.xlu0 %v7082
  %v7084 = vpop.xlane.xlu0 %7083
  %v7085 = vsel %vm619, %v6623, 0.0
  %7086 = vadd.xlane.f32.xlu0 %v7085
  %v7087 = vpop.xlane.xlu0 %7086
  %v7088 = vsel %vm619, %v6624, 0.0
  %7089 = vadd.xlane.f32.xlu0 %v7088
  %v7090 = vpop.xlane.xlu0 %7089
  %v7091 = vsel %vm619, %v6625, 0.0
  %7092 = vadd.xlane.f32.xlu0 %v7091
  %v7093 = vpop.xlane.xlu0 %7092
  %v7094 = vsel %vm619, %v6626, 0.0
  %7095 = vadd.xlane.f32.xlu0 %v7094
  %v7096 = vpop.xlane.xlu0 %7095
  %v7097 = vsel %vm619, %v6627, 0.0
  %7098 = vadd.xlane.f32.xlu0 %v7097
  %v7099 = vpop.xlane.xlu0 %7098
  %v7100 = vsel %vm619, %v6628, 0.0
  %7101 = vadd.xlane.f32.xlu0 %v7100
  %v7102 = vpop.xlane.xlu0 %7101
  %v7103 = vsel %vm619, %v6629, 0.0
  %7104 = vadd.xlane.f32.xlu0 %v7103
  %v7105 = vpop.xlane.xlu0 %7104
  %v7106 = vsel %vm619, %v6630, 0.0
  %7107 = vadd.xlane.f32.xlu0 %v7106
  %v7108 = vpop.xlane.xlu0 %7107
  %v7109 = vsel %vm619, %v6631, 0.0
  %7110 = vadd.xlane.f32.xlu0 %v7109
  %v7111 = vpop.xlane.xlu0 %7110
  %v7112 = vsel %vm619, %v6632, 0.0
  %7113 = vadd.xlane.f32.xlu0 %v7112
  %v7114 = vpop.xlane.xlu0 %7113
  %v7115 = vsel %vm619, %v6633, 0.0
  %7116 = vadd.xlane.f32.xlu0 %v7115
  %v7117 = vpop.xlane.xlu0 %7116
  %v7118 = vsel %vm619, %v6634, 0.0
  %7119 = vadd.xlane.f32.xlu0 %v7118
  %v7120 = vpop.xlane.xlu0 %7119
  %v7121 = vsel %vm619, %v6635, 0.0
  %7122 = vadd.xlane.f32.xlu0 %v7121
  %v7123 = vpop.xlane.xlu0 %7122
  %v7124 = vsel %vm619, %v6636, 0.0
  %7125 = vadd.xlane.f32.xlu0 %v7124
  %v7126 = vpop.xlane.xlu0 %7125
  %v7127 = vsel %vm619, %v6637, 0.0
  %7128 = vadd.xlane.f32.xlu0 %v7127
  %v7129 = vpop.xlane.xlu0 %7128
  %v7130 = vsel %vm619, %v6638, 0.0
  %7131 = vadd.xlane.f32.xlu0 %v7130
  %v7132 = vpop.xlane.xlu0 %7131
  %v7133 = vsel %vm619, %v6639, 0.0
  %7134 = vadd.xlane.f32.xlu0 %v7133
  %v7135 = vpop.xlane.xlu0 %7134
  %v7136 = vsel %vm619, %v6640, 0.0
  %7137 = vadd.xlane.f32.xlu0 %v7136
  %v7138 = vpop.xlane.xlu0 %7137
  %v7139 = vsel %vm619, %v6641, 0.0
  %7140 = vadd.xlane.f32.xlu0 %v7139
  %v7141 = vpop.xlane.xlu0 %7140
  %v7142 = vsel %vm619, %v6642, 0.0
  %7143 = vadd.xlane.f32.xlu0 %v7142
  %v7144 = vpop.xlane.xlu0 %7143
  %v7145 = vsel %vm619, %v6643, 0.0
  %7146 = vadd.xlane.f32.xlu0 %v7145
  %v7147 = vpop.xlane.xlu0 %7146
  %v7148 = vsel %vm619, %v6644, 0.0
  %7149 = vadd.xlane.f32.xlu0 %v7148
  %v7150 = vpop.xlane.xlu0 %7149
  %v7151 = vsel %vm619, %v6645, 0.0
  %7152 = vadd.xlane.f32.xlu0 %v7151
  %v7153 = vpop.xlane.xlu0 %7152
  %v7154 = vsel %vm619, %v6646, 0.0
  %7155 = vadd.xlane.f32.xlu0 %v7154
  %v7156 = vpop.xlane.xlu0 %7155
  %v7157 = vsel %vm619, %v6647, 0.0
  %7158 = vadd.xlane.f32.xlu0 %v7157
  %v7159 = vpop.xlane.xlu0 %7158
  %v7160 = vsel %vm619, %v6648, 0.0
  %7161 = vadd.xlane.f32.xlu0 %v7160
  %v7162 = vpop.xlane.xlu0 %7161
  %v7163 = vsel %vm619, %v6649, 0.0
  %7164 = vadd.xlane.f32.xlu0 %v7163
  %v7165 = vpop.xlane.xlu0 %7164
  %v7166 = vsel %vm619, %v6650, 0.0
  %7167 = vadd.xlane.f32.xlu0 %v7166
  %v7168 = vpop.xlane.xlu0 %7167
  %v7169 = vsel %vm619, %v6651, 0.0
  %7170 = vadd.xlane.f32.xlu0 %v7169
  %v7171 = vpop.xlane.xlu0 %7170
  %v7172 = vsel %vm619, %v6652, 0.0
  %7173 = vadd.xlane.f32.xlu0 %v7172
  %v7174 = vpop.xlane.xlu0 %7173
  %v7175 = vsel %vm619, %v6653, 0.0
  %7176 = vadd.xlane.f32.xlu0 %v7175
  %v7177 = vpop.xlane.xlu0 %7176
  %v7178 = vsel %vm619, %v6654, 0.0
  %7179 = vadd.xlane.f32.xlu0 %v7178
  %v7180 = vpop.xlane.xlu0 %7179
  %v7181 = vsel %vm619, %v6655, 0.0
  %7182 = vadd.xlane.f32.xlu0 %v7181
  %v7183 = vpop.xlane.xlu0 %7182
  %v7184 = vsel %vm619, %v6656, 0.0
  %7185 = vadd.xlane.f32.xlu0 %v7184
  %v7186 = vpop.xlane.xlu0 %7185
  %v7187 = vsel %vm619, %v6657, 0.0
  %7188 = vadd.xlane.f32.xlu0 %v7187
  %v7189 = vpop.xlane.xlu0 %7188
  %v7190 = vsel %vm619, %v6658, 0.0
  %7191 = vadd.xlane.f32.xlu0 %v7190
  %v7192 = vpop.xlane.xlu0 %7191
  %v7193 = vsel %vm619, %v6659, 0.0
  %7194 = vadd.xlane.f32.xlu0 %v7193
  %v7195 = vpop.xlane.xlu0 %7194
  %v7196 = vsel %vm619, %v6660, 0.0
  %7197 = vadd.xlane.f32.xlu0 %v7196
  %v7198 = vpop.xlane.xlu0 %7197
  %v7199 = vsel %vm619, %v6661, 0.0
  %7200 = vadd.xlane.f32.xlu0 %v7199
  %v7201 = vpop.xlane.xlu0 %7200
  %v7202 = vsel %vm619, %v6662, 0.0
  %7203 = vadd.xlane.f32.xlu0 %v7202
  %v7204 = vpop.xlane.xlu0 %7203
  %v7205 = vsel %vm619, %v6663, 0.0
  %7206 = vadd.xlane.f32.xlu0 %v7205
  %v7207 = vpop.xlane.xlu0 %7206
  %v7208 = vsel %vm619, %v6664, 0.0
  %7209 = vadd.xlane.f32.xlu0 %v7208
  %v7210 = vpop.xlane.xlu0 %7209
  %v7211 = vsel %vm619, %v6665, 0.0
  %7212 = vadd.xlane.f32.xlu0 %v7211
  %v7213 = vpop.xlane.xlu0 %7212
  %v7214 = vsel %vm619, %v6666, 0.0
  %7215 = vadd.xlane.f32.xlu0 %v7214
  %v7216 = vpop.xlane.xlu0 %7215
  %v7217 = vsel %vm619, %v6667, 0.0
  %7218 = vadd.xlane.f32.xlu0 %v7217
  %v7219 = vpop.xlane.xlu0 %7218
  %v7220 = vsel %vm619, %v6668, 0.0
  %7221 = vadd.xlane.f32.xlu0 %v7220
  %v7222 = vpop.xlane.xlu0 %7221
  %v7223 = vsel %vm619, %v6669, 0.0
  %7224 = vadd.xlane.f32.xlu0 %v7223
  %v7225 = vpop.xlane.xlu0 %7224
  %v7226 = vsel %vm619, %v6670, 0.0
  %7227 = vadd.xlane.f32.xlu0 %v7226
  %v7228 = vpop.xlane.xlu0 %7227
  %v7229 = vsel %vm619, %v6671, 0.0
  %7230 = vadd.xlane.f32.xlu0 %v7229
  %v7231 = vpop.xlane.xlu0 %7230
  %v7232 = vsel %vm619, %v6672, 0.0
  %7233 = vadd.xlane.f32.xlu0 %v7232
  %v7234 = vpop.xlane.xlu0 %7233
  %v7235 = vsel %vm619, %v6673, 0.0
  %7236 = vadd.xlane.f32.xlu0 %v7235
  %v7237 = vpop.xlane.xlu0 %7236
  %v7238 = vsel %vm619, %v6674, 0.0
  %7239 = vadd.xlane.f32.xlu0 %v7238
  %v7240 = vpop.xlane.xlu0 %7239
  %v7241 = vsel %vm619, %v6675, 0.0
  %7242 = vadd.xlane.f32.xlu0 %v7241
  %v7243 = vpop.xlane.xlu0 %7242
  %v7244 = vsel %vm619, %v6676, 0.0
  %7245 = vadd.xlane.f32.xlu0 %v7244
  %v7246 = vpop.xlane.xlu0 %7245
  %v7247 = vsel %vm619, %v6677, 0.0
  %7248 = vadd.xlane.f32.xlu0 %v7247
  %v7249 = vpop.xlane.xlu0 %7248
  %v7250 = vsel %vm619, %v6678, 0.0
  %7251 = vadd.xlane.f32.xlu0 %v7250
  %v7252 = vpop.xlane.xlu0 %7251
  %v7253 = vsel %vm619, %v6679, 0.0
  %7254 = vadd.xlane.f32.xlu0 %v7253
  %v7255 = vpop.xlane.xlu0 %7254
  %v7256 = vsel %vm619, %v6680, 0.0
  %7257 = vadd.xlane.f32.xlu0 %v7256
  %v7258 = vpop.xlane.xlu0 %7257
  %v7259 = vsel %vm619, %v6681, 0.0
  %7260 = vadd.xlane.f32.xlu0 %v7259
  %v7261 = vpop.xlane.xlu0 %7260
  %v7262 = vsel %vm619, %v6682, 0.0
  %7263 = vadd.xlane.f32.xlu0 %v7262
  %v7264 = vpop.xlane.xlu0 %7263
  %v7265 = vsel %vm619, %v6683, 0.0
  %7266 = vadd.xlane.f32.xlu0 %v7265
  %v7267 = vpop.xlane.xlu0 %7266
  %v7268 = vsel %vm619, %v6684, 0.0
  %7269 = vadd.xlane.f32.xlu0 %v7268
  %v7270 = vpop.xlane.xlu0 %7269
  %v7271 = vsel %vm619, %v6685, 0.0
  %7272 = vadd.xlane.f32.xlu0 %v7271
  %v7273 = vpop.xlane.xlu0 %7272
  %v7274 = vsel %vm619, %v6686, 0.0
  %7275 = vadd.xlane.f32.xlu0 %v7274
  %v7276 = vpop.xlane.xlu0 %7275
  %v7277 = vsel %vm619, %v6687, 0.0
  %7278 = vadd.xlane.f32.xlu0 %v7277
  %v7279 = vpop.xlane.xlu0 %7278
  %v7280 = vsel %vm619, %v6688, 0.0
  %7281 = vadd.xlane.f32.xlu0 %v7280
  %v7282 = vpop.xlane.xlu0 %7281
  %v7283 = vsel %vm619, %v6689, 0.0
  %7284 = vadd.xlane.f32.xlu0 %v7283
  %v7285 = vpop.xlane.xlu0 %7284
  %v7286 = vsel %vm619, %v6690, 0.0
  %7287 = vadd.xlane.f32.xlu0 %v7286
  %v7288 = vpop.xlane.xlu0 %7287
  %v7289 = vsel %vm619, %v6691, 0.0
  %7290 = vadd.xlane.f32.xlu0 %v7289
  %v7291 = vpop.xlane.xlu0 %7290
  %v7292 = vsel %vm619, %v6692, 0.0
  %7293 = vadd.xlane.f32.xlu0 %v7292
  %v7294 = vpop.xlane.xlu0 %7293
  %v7295 = vsel %vm619, %v6693, 0.0
  %7296 = vadd.xlane.f32.xlu0 %v7295
  %v7297 = vpop.xlane.xlu0 %7296
  %v7298 = vsel %vm619, %v6694, 0.0
  %7299 = vadd.xlane.f32.xlu0 %v7298
  %v7300 = vpop.xlane.xlu0 %7299
  %v7301 = vsel %vm619, %v6695, 0.0
  %7302 = vadd.xlane.f32.xlu0 %v7301
  %v7303 = vpop.xlane.xlu0 %7302
  %v7304 = vsel %vm619, %v6696, 0.0
  %7305 = vadd.xlane.f32.xlu0 %v7304
  %v7306 = vpop.xlane.xlu0 %7305
  %v7307 = vsel %vm619, %v6697, 0.0
  %7308 = vadd.xlane.f32.xlu0 %v7307
  %v7309 = vpop.xlane.xlu0 %7308
  %v7310 = vsel %vm619, %v6698, 0.0
  %7311 = vadd.xlane.f32.xlu0 %v7310
  %v7312 = vpop.xlane.xlu0 %7311
  %v7313 = vsel %vm619, %v6699, 0.0
  %7314 = vadd.xlane.f32.xlu0 %v7313
  %v7315 = vpop.xlane.xlu0 %7314
  %v7316 = vsel %vm619, %v6700, 0.0
  %7317 = vadd.xlane.f32.xlu0 %v7316
  %v7318 = vpop.xlane.xlu0 %7317
  %v7319 = vsel %vm619, %v6701, 0.0
  %7320 = vadd.xlane.f32.xlu0 %v7319
  %v7321 = vpop.xlane.xlu0 %7320
  %v7322 = vsel %vm619, %v6702, 0.0
  %7323 = vadd.xlane.f32.xlu0 %v7322
  %v7324 = vpop.xlane.xlu0 %7323
  %v7325 = vsel %vm619, %v6703, 0.0
  %7326 = vadd.xlane.f32.xlu0 %v7325
  %v7327 = vpop.xlane.xlu0 %7326
  %v7328 = vsel %vm619, %v6704, 0.0
  %7329 = vadd.xlane.f32.xlu0 %v7328
  %v7330 = vpop.xlane.xlu0 %7329
  %v7331 = vsel %vm619, %v6705, 0.0
  %7332 = vadd.xlane.f32.xlu0 %v7331
  %v7333 = vpop.xlane.xlu0 %7332
  %v7334 = vsel %vm619, %v6706, 0.0
  %7335 = vadd.xlane.f32.xlu0 %v7334
  %v7336 = vpop.xlane.xlu0 %7335
  %v7337 = vsel %vm619, %v6707, 0.0
  %7338 = vadd.xlane.f32.xlu0 %v7337
  %v7339 = vpop.xlane.xlu0 %7338
  %v7340 = vsel %vm619, %v6708, 0.0
  %7341 = vadd.xlane.f32.xlu0 %v7340
  %v7342 = vpop.xlane.xlu0 %7341
  %v7343 = vsel %vm619, %v6709, 0.0
  %7344 = vadd.xlane.f32.xlu0 %v7343
  %v7345 = vpop.xlane.xlu0 %7344
  %v7346 = vsel %vm619, %v6710, 0.0
  %7347 = vadd.xlane.f32.xlu0 %v7346
  %v7348 = vpop.xlane.xlu0 %7347
  %v7349 = vsel %vm619, %v6711, 0.0
  %7350 = vadd.xlane.f32.xlu0 %v7349
  %v7351 = vpop.xlane.xlu0 %7350
  %v7352 = vsel %vm619, %v6712, 0.0
  %7353 = vadd.xlane.f32.xlu0 %v7352
  %v7354 = vpop.xlane.xlu0 %7353
  %v7355 = vsel %vm619, %v6713, 0.0
  %7356 = vadd.xlane.f32.xlu0 %v7355
  %v7357 = vpop.xlane.xlu0 %7356
  %v7358 = vsel %vm619, %v6714, 0.0
  %7359 = vadd.xlane.f32.xlu0 %v7358
  %v7360 = vpop.xlane.xlu0 %7359
  %v7361 = vsel %vm619, %v6715, 0.0
  %7362 = vadd.xlane.f32.xlu0 %v7361
  %v7363 = vpop.xlane.xlu0 %7362
  %v7364 = vsel %vm619, %v6716, 0.0
  %7365 = vadd.xlane.f32.xlu0 %v7364
  %v7366 = vpop.xlane.xlu0 %7365
  %v7367 = vsel %vm619, %v6717, 0.0
  %7368 = vadd.xlane.f32.xlu0 %v7367
  %v7369 = vpop.xlane.xlu0 %7368
  %v7370 = vsel %vm619, %v6718, 0.0
  %7371 = vadd.xlane.f32.xlu0 %v7370
  %v7372 = vpop.xlane.xlu0 %7371
  %v7373 = vsel %vm619, %v6719, 0.0
  %7374 = vadd.xlane.f32.xlu0 %v7373
  %v7375 = vpop.xlane.xlu0 %7374
  %v7376 = vsel %vm619, %v6720, 0.0
  %7377 = vadd.xlane.f32.xlu0 %v7376
  %v7378 = vpop.xlane.xlu0 %7377
  %v7379 = vsel %vm619, %v6721, 0.0
  %7380 = vadd.xlane.f32.xlu0 %v7379
  %v7381 = vpop.xlane.xlu0 %7380
  %v7382 = vsel %vm619, %v6722, 0.0
  %7383 = vadd.xlane.f32.xlu0 %v7382
  %v7384 = vpop.xlane.xlu0 %7383
  %v7385 = vsel %vm619, %v6723, 0.0
  %7386 = vadd.xlane.f32.xlu0 %v7385
  %v7387 = vpop.xlane.xlu0 %7386
  %v7388 = vsel %vm619, %v6724, 0.0
  %7389 = vadd.xlane.f32.xlu0 %v7388
  %v7390 = vpop.xlane.xlu0 %7389
  %v7391 = vsel %vm619, %v6725, 0.0
  %7392 = vadd.xlane.f32.xlu0 %v7391
  %v7393 = vpop.xlane.xlu0 %7392
  %v7394 = vsel %vm619, %v6726, 0.0
  %7395 = vadd.xlane.f32.xlu0 %v7394
  %v7396 = vpop.xlane.xlu0 %7395
  %v7397 = vsel %vm619, %v6727, 0.0
  %7398 = vadd.xlane.f32.xlu0 %v7397
  %v7399 = vpop.xlane.xlu0 %7398
  %v7400 = vsel %vm619, %v6728, 0.0
  %7401 = vadd.xlane.f32.xlu0 %v7400
  %v7402 = vpop.xlane.xlu0 %7401
  %v7403 = vsel %vm619, %v6729, 0.0
  %7404 = vadd.xlane.f32.xlu0 %v7403
  %v7405 = vpop.xlane.xlu0 %7404
  %v7406 = vsel %vm619, %v6730, 0.0
  %7407 = vadd.xlane.f32.xlu0 %v7406
  %v7408 = vpop.xlane.xlu0 %7407
  %v7409 = vsel %vm619, %v6731, 0.0
  %7410 = vadd.xlane.f32.xlu0 %v7409
  %v7411 = vpop.xlane.xlu0 %7410
  %v7412 = vsel %vm619, %v6732, 0.0
  %7413 = vadd.xlane.f32.xlu0 %v7412
  %v7414 = vpop.xlane.xlu0 %7413
  %v7415 = vsel %vm619, %v6733, 0.0
  %7416 = vadd.xlane.f32.xlu0 %v7415
  %v7417 = vpop.xlane.xlu0 %7416
  %v7418 = vsel %vm619, %v6734, 0.0
  %7419 = vadd.xlane.f32.xlu0 %v7418
  %v7420 = vpop.xlane.xlu0 %7419
  %v7421 = vsel %vm619, %v6735, 0.0
  %7422 = vadd.xlane.f32.xlu0 %v7421
  %v7423 = vpop.xlane.xlu0 %7422
  %v7424 = vsel %vm619, %v6736, 0.0
  %7425 = vadd.xlane.f32.xlu0 %v7424
  %v7426 = vpop.xlane.xlu0 %7425
  %v7427 = vsel %vm619, %v6737, 0.0
  %7428 = vadd.xlane.f32.xlu0 %v7427
  %v7429 = vpop.xlane.xlu0 %7428
  %v7430 = vsel %vm619, %v6738, 0.0
  %7431 = vadd.xlane.f32.xlu0 %v7430
  %v7432 = vpop.xlane.xlu0 %7431
  %v7433 = vsel %vm619, %v6739, 0.0
  %7434 = vadd.xlane.f32.xlu0 %v7433
  %v7435 = vpop.xlane.xlu0 %7434
  %v7436 = vsel %vm619, %v6740, 0.0
  %7437 = vadd.xlane.f32.xlu0 %v7436
  %v7438 = vpop.xlane.xlu0 %7437
  %v7439 = vsel %vm619, %v6741, 0.0
  %7440 = vadd.xlane.f32.xlu0 %v7439
  %v7441 = vpop.xlane.xlu0 %7440
  %v7442 = vsel %vm619, %v6742, 0.0
  %7443 = vadd.xlane.f32.xlu0 %v7442
  %v7444 = vpop.xlane.xlu0 %7443
  %v7445 = vsel %vm619, %v6743, 0.0
  %7446 = vadd.xlane.f32.xlu0 %v7445
  %v7447 = vpop.xlane.xlu0 %7446
  %v7448 = vsel %vm619, %v6744, 0.0
  %7449 = vadd.xlane.f32.xlu0 %v7448
  %v7450 = vpop.xlane.xlu0 %7449
  %v7451 = vsel %vm619, %v6745, 0.0
  %7452 = vadd.xlane.f32.xlu0 %v7451
  %v7453 = vpop.xlane.xlu0 %7452
  %v7454 = vsel %vm619, %v6746, 0.0
  %7455 = vadd.xlane.f32.xlu0 %v7454
  %v7456 = vpop.xlane.xlu0 %7455
  %v7457 = vsel %vm619, %v6747, 0.0
  %7458 = vadd.xlane.f32.xlu0 %v7457
  %v7459 = vpop.xlane.xlu0 %7458
  %v7460 = vsel %vm619, %v6748, 0.0
  %7461 = vadd.xlane.f32.xlu0 %v7460
  %v7462 = vpop.xlane.xlu0 %7461
  %v7463 = vsel %vm619, %v6749, 0.0
  %7464 = vadd.xlane.f32.xlu0 %v7463
  %v7465 = vpop.xlane.xlu0 %7464
  %v7466 = vsel %vm619, %v6750, 0.0
  %7467 = vadd.xlane.f32.xlu0 %v7466
  %v7468 = vpop.xlane.xlu0 %7467
  %v7469 = vsel %vm619, %v6751, 0.0
  %7470 = vadd.xlane.f32.xlu0 %v7469
  %v7471 = vpop.xlane.xlu0 %7470
  %v7472 = vsel %vm619, %v6752, 0.0
  %7473 = vadd.xlane.f32.xlu0 %v7472
  %v7474 = vpop.xlane.xlu0 %7473
  %v7475 = vsel %vm619, %v6753, 0.0
  %7476 = vadd.xlane.f32.xlu0 %v7475
  %v7477 = vpop.xlane.xlu0 %7476
  %v7478 = vsel %vm619, %v6754, 0.0
  %7479 = vadd.xlane.f32.xlu0 %v7478
  %v7480 = vpop.xlane.xlu0 %7479
  %v7481 = vsel %vm619, %v6755, 0.0
  %7482 = vadd.xlane.f32.xlu0 %v7481
  %v7483 = vpop.xlane.xlu0 %7482
  %v7484 = vsel %vm619, %v6756, 0.0
  %7485 = vadd.xlane.f32.xlu0 %v7484
  %v7486 = vpop.xlane.xlu0 %7485
  %v7487 = vsel %vm619, %v6757, 0.0
  %7488 = vadd.xlane.f32.xlu0 %v7487
  %v7489 = vpop.xlane.xlu0 %7488
  %v7490 = vsel %vm619, %v6758, 0.0
  %7491 = vadd.xlane.f32.xlu0 %v7490
  %v7492 = vpop.xlane.xlu0 %7491
  %v7493 = vsel %vm619, %v6759, 0.0
  %7494 = vadd.xlane.f32.xlu0 %v7493
  %v7495 = vpop.xlane.xlu0 %7494
  %v7496 = vsel %vm619, %v6760, 0.0
  %7497 = vadd.xlane.f32.xlu0 %v7496
  %v7498 = vpop.xlane.xlu0 %7497
  %v7499 = vsel %vm619, %v6761, 0.0
  %7500 = vadd.xlane.f32.xlu0 %v7499
  %v7501 = vpop.xlane.xlu0 %7500
  %v7502 = vsel %vm619, %v6762, 0.0
  %7503 = vadd.xlane.f32.xlu0 %v7502
  %v7504 = vpop.xlane.xlu0 %7503
  %v7505 = vsel %vm619, %v6763, 0.0
  %7506 = vadd.xlane.f32.xlu0 %v7505
  %v7507 = vpop.xlane.xlu0 %7506
  %v7508 = vsel %vm619, %v6764, 0.0
  %7509 = vadd.xlane.f32.xlu0 %v7508
  %v7510 = vpop.xlane.xlu0 %7509
  %v7511 = vsel %vm619, %v6765, 0.0
  %7512 = vadd.xlane.f32.xlu0 %v7511
  %v7513 = vpop.xlane.xlu0 %7512
  %v7514 = vsel %vm619, %v6766, 0.0
  %7515 = vadd.xlane.f32.xlu0 %v7514
  %v7516 = vpop.xlane.xlu0 %7515
  %v7517 = vsel %vm619, %v6767, 0.0
  %7518 = vadd.xlane.f32.xlu0 %v7517
  %v7519 = vpop.xlane.xlu0 %7518
  %v7520 = vsel %vm619, %v6768, 0.0
  %7521 = vadd.xlane.f32.xlu0 %v7520
  %v7522 = vpop.xlane.xlu0 %7521
  %v7523 = vsel %vm619, %v6769, 0.0
  %7524 = vadd.xlane.f32.xlu0 %v7523
  %v7525 = vpop.xlane.xlu0 %7524
  %v7526 = vsel %vm619, %v6770, 0.0
  %7527 = vadd.xlane.f32.xlu0 %v7526
  %v7528 = vpop.xlane.xlu0 %7527
  %v7529 = vsel %vm619, %v6771, 0.0
  %7530 = vadd.xlane.f32.xlu0 %v7529
  %v7531 = vpop.xlane.xlu0 %7530
  %v7532 = vsel %vm619, %v6772, 0.0
  %7533 = vadd.xlane.f32.xlu0 %v7532
  %v7534 = vpop.xlane.xlu0 %7533
  %v7535 = vsel %vm619, %v6773, 0.0
  %7536 = vadd.xlane.f32.xlu0 %v7535
  %v7537 = vpop.xlane.xlu0 %7536
  %v7538 = vsel %vm619, %v6774, 0.0
  %7539 = vadd.xlane.f32.xlu0 %v7538
  %v7540 = vpop.xlane.xlu0 %7539
  %v7541 = vsel %vm619, %v6775, 0.0
  %7542 = vadd.xlane.f32.xlu0 %v7541
  %v7543 = vpop.xlane.xlu0 %7542
  %v7544 = vmul.f32 %v6778, 0.5
  %v7545 = vmul.f32 %v6781, 0.5
  %v7546 = vmul.f32 %v6784, 0.5
  %v7547 = vmul.f32 %v6787, 0.5
  %v7548 = vmul.f32 %v6790, 0.5
  %v7549 = vmul.f32 %v6793, 0.5
  %v7550 = vmul.f32 %v6796, 0.5
  %v7551 = vmul.f32 %v6799, 0.5
  %v7552 = vmul.f32 %v6802, 0.5
  %v7553 = vmul.f32 %v6805, 0.5
  %v7554 = vmul.f32 %v6808, 0.5
  %v7555 = vmul.f32 %v6811, 0.5
  %v7556 = vmul.f32 %v6814, 0.5
  %v7557 = vmul.f32 %v6817, 0.5
  %v7558 = vmul.f32 %v6820, 0.5
  %v7559 = vmul.f32 %v6823, 0.5
  %v7560 = vmul.f32 %v6826, 0.5
  %v7561 = vmul.f32 %v6829, 0.5
  %v7562 = vmul.f32 %v6832, 0.5
  %v7563 = vmul.f32 %v6835, 0.5
  %v7564 = vmul.f32 %v6838, 0.5
  %v7565 = vmul.f32 %v6841, 0.5
  %v7566 = vmul.f32 %v6844, 0.5
  %v7567 = vmul.f32 %v6847, 0.5
  %v7568 = vmul.f32 %v6850, 0.5
  %v7569 = vmul.f32 %v6853, 0.5
  %v7570 = vmul.f32 %v6856, 0.5
  %v7571 = vmul.f32 %v6859, 0.5
  %v7572 = vmul.f32 %v6862, 0.5
  %v7573 = vmul.f32 %v6865, 0.5
  %v7574 = vmul.f32 %v6868, 0.5
  %v7575 = vmul.f32 %v6871, 0.5
  %v7576 = vmul.f32 %v6874, 0.5
  %v7577 = vmul.f32 %v6877, 0.5
  %v7578 = vmul.f32 %v6880, 0.5
  %v7579 = vmul.f32 %v6883, 0.5
  %v7580 = vmul.f32 %v6886, 0.5
  %v7581 = vmul.f32 %v6889, 0.5
  %v7582 = vmul.f32 %v6892, 0.5
  %v7583 = vmul.f32 %v6895, 0.5
  %v7584 = vmul.f32 %v6898, 0.5
  %v7585 = vmul.f32 %v6901, 0.5
  %v7586 = vmul.f32 %v6904, 0.5
  %v7587 = vmul.f32 %v6907, 0.5
  %v7588 = vmul.f32 %v6910, 0.5
  %v7589 = vmul.f32 %v6913, 0.5
  %v7590 = vmul.f32 %v6916, 0.5
  %v7591 = vmul.f32 %v6919, 0.5
  %v7592 = vmul.f32 %v6922, 0.5
  %v7593 = vmul.f32 %v6925, 0.5
  %v7594 = vmul.f32 %v6928, 0.5
  %v7595 = vmul.f32 %v6931, 0.5
  %v7596 = vmul.f32 %v6934, 0.5
  %v7597 = vmul.f32 %v6937, 0.5
  %v7598 = vmul.f32 %v6940, 0.5
  %v7599 = vmul.f32 %v6943, 0.5
  %v7600 = vmul.f32 %v6946, 0.5
  %v7601 = vmul.f32 %v6949, 0.5
  %v7602 = vmul.f32 %v6952, 0.5
  %v7603 = vmul.f32 %v6955, 0.5
  %v7604 = vmul.f32 %v6958, 0.5
  %v7605 = vmul.f32 %v6961, 0.5
  %v7606 = vmul.f32 %v6964, 0.5
  %v7607 = vmul.f32 %v6967, 0.5
  %v7608 = vmul.f32 %v6970, 0.5
  %v7609 = vmul.f32 %v6973, 0.5
  %v7610 = vmul.f32 %v6976, 0.5
  %v7611 = vmul.f32 %v6979, 0.5
  %v7612 = vmul.f32 %v6982, 0.5
  %v7613 = vmul.f32 %v6985, 0.5
  %v7614 = vmul.f32 %v6988, 0.5
  %v7615 = vmul.f32 %v6991, 0.5
  %v7616 = vmul.f32 %v6994, 0.5
  %v7617 = vmul.f32 %v6997, 0.5
  %v7618 = vmul.f32 %v7000, 0.5
  %v7619 = vmul.f32 %v7003, 0.5
  %v7620 = vmul.f32 %v7006, 0.5
  %v7621 = vmul.f32 %v7009, 0.5
  %v7622 = vmul.f32 %v7012, 0.5
  %v7623 = vmul.f32 %v7015, 0.5
  %v7624 = vmul.f32 %v7018, 0.5
  %v7625 = vmul.f32 %v7021, 0.5
  %v7626 = vmul.f32 %v7024, 0.5
  %v7627 = vmul.f32 %v7027, 0.5
  %v7628 = vmul.f32 %v7030, 0.5
  %v7629 = vmul.f32 %v7033, 0.5
  %v7630 = vmul.f32 %v7036, 0.5
  %v7631 = vmul.f32 %v7039, 0.5
  %v7632 = vmul.f32 %v7042, 0.5
  %v7633 = vmul.f32 %v7045, 0.5
  %v7634 = vmul.f32 %v7048, 0.5
  %v7635 = vmul.f32 %v7051, 0.5
  %v7636 = vmul.f32 %v7054, 0.5
  %v7637 = vmul.f32 %v7057, 0.5
  %v7638 = vmul.f32 %v7060, 0.5
  %v7639 = vmul.f32 %v7063, 0.5
  %v7640 = vmul.f32 %v7066, 0.5
  %v7641 = vmul.f32 %v7069, 0.5
  %v7642 = vmul.f32 %v7072, 0.5
  %v7643 = vmul.f32 %v7075, 0.5
  %v7644 = vmul.f32 %v7078, 0.5
  %v7645 = vmul.f32 %v7081, 0.5
  %v7646 = vmul.f32 %v7084, 0.5
  %v7647 = vmul.f32 %v7087, 0.5
  %v7648 = vmul.f32 %v7090, 0.5
  %v7649 = vmul.f32 %v7093, 0.5
  %v7650 = vmul.f32 %v7096, 0.5
  %v7651 = vmul.f32 %v7099, 0.5
  %v7652 = vmul.f32 %v7102, 0.5
  %v7653 = vmul.f32 %v7105, 0.5
  %v7654 = vmul.f32 %v7108, 0.5
  %v7655 = vmul.f32 %v7111, 0.5
  %v7656 = vmul.f32 %v7114, 0.5
  %v7657 = vmul.f32 %v7117, 0.5
  %v7658 = vmul.f32 %v7120, 0.5
  %v7659 = vmul.f32 %v7123, 0.5
  %v7660 = vmul.f32 %v7126, 0.5
  %v7661 = vmul.f32 %v7129, 0.5
  %v7662 = vmul.f32 %v7132, 0.5
  %v7663 = vmul.f32 %v7135, 0.5
  %v7664 = vmul.f32 %v7138, 0.5
  %v7665 = vmul.f32 %v7141, 0.5
  %v7666 = vmul.f32 %v7144, 0.5
  %v7667 = vmul.f32 %v7147, 0.5
  %v7668 = vmul.f32 %v7150, 0.5
  %v7669 = vmul.f32 %v7153, 0.5
  %v7670 = vmul.f32 %v7156, 0.5
  %v7671 = vmul.f32 %v7159, 0.5
  %v7672 = vmul.f32 %v7162, 0.5
  %v7673 = vmul.f32 %v7165, 0.5
  %v7674 = vmul.f32 %v7168, 0.5
  %v7675 = vmul.f32 %v7171, 0.5
  %v7676 = vmul.f32 %v7174, 0.5
  %v7677 = vmul.f32 %v7177, 0.5
  %v7678 = vmul.f32 %v7180, 0.5
  %v7679 = vmul.f32 %v7183, 0.5
  %v7680 = vmul.f32 %v7186, 0.5
  %v7681 = vmul.f32 %v7189, 0.5
  %v7682 = vmul.f32 %v7192, 0.5
  %v7683 = vmul.f32 %v7195, 0.5
  %v7684 = vmul.f32 %v7198, 0.5
  %v7685 = vmul.f32 %v7201, 0.5
  %v7686 = vmul.f32 %v7204, 0.5
  %v7687 = vmul.f32 %v7207, 0.5
  %v7688 = vmul.f32 %v7210, 0.5
  %v7689 = vmul.f32 %v7213, 0.5
  %v7690 = vmul.f32 %v7216, 0.5
  %v7691 = vmul.f32 %v7219, 0.5
  %v7692 = vmul.f32 %v7222, 0.5
  %v7693 = vmul.f32 %v7225, 0.5
  %v7694 = vmul.f32 %v7228, 0.5
  %v7695 = vmul.f32 %v7231, 0.5
  %v7696 = vmul.f32 %v7234, 0.5
  %v7697 = vmul.f32 %v7237, 0.5
  %v7698 = vmul.f32 %v7240, 0.5
  %v7699 = vmul.f32 %v7243, 0.5
  %v7700 = vmul.f32 %v7246, 0.5
  %v7701 = vmul.f32 %v7249, 0.5
  %v7702 = vmul.f32 %v7252, 0.5
  %v7703 = vmul.f32 %v7255, 0.5
  %v7704 = vmul.f32 %v7258, 0.5
  %v7705 = vmul.f32 %v7261, 0.5
  %v7706 = vmul.f32 %v7264, 0.5
  %v7707 = vmul.f32 %v7267, 0.5
  %v7708 = vmul.f32 %v7270, 0.5
  %v7709 = vmul.f32 %v7273, 0.5
  %v7710 = vmul.f32 %v7276, 0.5
  %v7711 = vmul.f32 %v7279, 0.5
  %v7712 = vmul.f32 %v7282, 0.5
  %v7713 = vmul.f32 %v7285, 0.5
  %v7714 = vmul.f32 %v7288, 0.5
  %v7715 = vmul.f32 %v7291, 0.5
  %v7716 = vmul.f32 %v7294, 0.5
  %v7717 = vmul.f32 %v7297, 0.5
  %v7718 = vmul.f32 %v7300, 0.5
  %v7719 = vmul.f32 %v7303, 0.5
  %v7720 = vmul.f32 %v7306, 0.5
  %v7721 = vmul.f32 %v7309, 0.5
  %v7722 = vmul.f32 %v7312, 0.5
  %v7723 = vmul.f32 %v7315, 0.5
  %v7724 = vmul.f32 %v7318, 0.5
  %v7725 = vmul.f32 %v7321, 0.5
  %v7726 = vmul.f32 %v7324, 0.5
  %v7727 = vmul.f32 %v7327, 0.5
  %v7728 = vmul.f32 %v7330, 0.5
  %v7729 = vmul.f32 %v7333, 0.5
  %v7730 = vmul.f32 %v7336, 0.5
  %v7731 = vmul.f32 %v7339, 0.5
  %v7732 = vmul.f32 %v7342, 0.5
  %v7733 = vmul.f32 %v7345, 0.5
  %v7734 = vmul.f32 %v7348, 0.5
  %v7735 = vmul.f32 %v7351, 0.5
  %v7736 = vmul.f32 %v7354, 0.5
  %v7737 = vmul.f32 %v7357, 0.5
  %v7738 = vmul.f32 %v7360, 0.5
  %v7739 = vmul.f32 %v7363, 0.5
  %v7740 = vmul.f32 %v7366, 0.5
  %v7741 = vmul.f32 %v7369, 0.5
  %v7742 = vmul.f32 %v7372, 0.5
  %v7743 = vmul.f32 %v7375, 0.5
  %v7744 = vmul.f32 %v7378, 0.5
  %v7745 = vmul.f32 %v7381, 0.5
  %v7746 = vmul.f32 %v7384, 0.5
  %v7747 = vmul.f32 %v7387, 0.5
  %v7748 = vmul.f32 %v7390, 0.5
  %v7749 = vmul.f32 %v7393, 0.5
  %v7750 = vmul.f32 %v7396, 0.5
  %v7751 = vmul.f32 %v7399, 0.5
  %v7752 = vmul.f32 %v7402, 0.5
  %v7753 = vmul.f32 %v7405, 0.5
  %v7754 = vmul.f32 %v7408, 0.5
  %v7755 = vmul.f32 %v7411, 0.5
  %v7756 = vmul.f32 %v7414, 0.5
  %v7757 = vmul.f32 %v7417, 0.5
  %v7758 = vmul.f32 %v7420, 0.5
  %v7759 = vmul.f32 %v7423, 0.5
  %v7760 = vmul.f32 %v7426, 0.5
  %v7761 = vmul.f32 %v7429, 0.5
  %v7762 = vmul.f32 %v7432, 0.5
  %v7763 = vmul.f32 %v7435, 0.5
  %v7764 = vmul.f32 %v7438, 0.5
  %v7765 = vmul.f32 %v7441, 0.5
  %v7766 = vmul.f32 %v7444, 0.5
  %v7767 = vmul.f32 %v7447, 0.5
  %v7768 = vmul.f32 %v7450, 0.5
  %v7769 = vmul.f32 %v7453, 0.5
  %v7770 = vmul.f32 %v7456, 0.5
  %v7771 = vmul.f32 %v7459, 0.5
  %v7772 = vmul.f32 %v7462, 0.5
  %v7773 = vmul.f32 %v7465, 0.5
  %v7774 = vmul.f32 %v7468, 0.5
  %v7775 = vmul.f32 %v7471, 0.5
  %v7776 = vmul.f32 %v7474, 0.5
  %v7777 = vmul.f32 %v7477, 0.5
  %v7778 = vmul.f32 %v7480, 0.5
  %v7779 = vmul.f32 %v7483, 0.5
  %v7780 = vmul.f32 %v7486, 0.5
  %v7781 = vmul.f32 %v7489, 0.5
  %v7782 = vmul.f32 %v7492, 0.5
  %v7783 = vmul.f32 %v7495, 0.5
  %v7784 = vmul.f32 %v7498, 0.5
  %v7785 = vmul.f32 %v7501, 0.5
  %v7786 = vmul.f32 %v7504, 0.5
  %v7787 = vmul.f32 %v7507, 0.5
  %v7788 = vmul.f32 %v7510, 0.5
  %v7789 = vmul.f32 %v7513, 0.5
  %v7790 = vmul.f32 %v7516, 0.5
  %v7791 = vmul.f32 %v7519, 0.5
  %v7792 = vmul.f32 %v7522, 0.5
  %v7793 = vmul.f32 %v7525, 0.5
  %v7794 = vmul.f32 %v7528, 0.5
  %v7795 = vmul.f32 %v7531, 0.5
  %v7796 = vmul.f32 %v7534, 0.5
  %v7797 = vmul.f32 %v7537, 0.5
  %v7798 = vmul.f32 %v7540, 0.5
  %v7799 = vmul.f32 %v7543, 0.5
  %v7800 = vsub.f32 %v6264, %v7544
  %v7801 = vsub.f32 %v6265, %v7545
  %v7802 = vsub.f32 %v6266, %v7546
  %v7803 = vsub.f32 %v6267, %v7547
  %v7804 = vsub.f32 %v6268, %v7548
  %v7805 = vsub.f32 %v6269, %v7549
  %v7806 = vsub.f32 %v6270, %v7550
  %v7807 = vsub.f32 %v6271, %v7551
  %v7808 = vsub.f32 %v6272, %v7552
  %v7809 = vsub.f32 %v6273, %v7553
  %v7810 = vsub.f32 %v6274, %v7554
  %v7811 = vsub.f32 %v6275, %v7555
  %v7812 = vsub.f32 %v6276, %v7556
  %v7813 = vsub.f32 %v6277, %v7557
  %v7814 = vsub.f32 %v6278, %v7558
  %v7815 = vsub.f32 %v6279, %v7559
  %v7816 = vsub.f32 %v6280, %v7560
  %v7817 = vsub.f32 %v6281, %v7561
  %v7818 = vsub.f32 %v6282, %v7562
  %v7819 = vsub.f32 %v6283, %v7563
  %v7820 = vsub.f32 %v6284, %v7564
  %v7821 = vsub.f32 %v6285, %v7565
  %v7822 = vsub.f32 %v6286, %v7566
  %v7823 = vsub.f32 %v6287, %v7567
  %v7824 = vsub.f32 %v6288, %v7568
  %v7825 = vsub.f32 %v6289, %v7569
  %v7826 = vsub.f32 %v6290, %v7570
  %v7827 = vsub.f32 %v6291, %v7571
  %v7828 = vsub.f32 %v6292, %v7572
  %v7829 = vsub.f32 %v6293, %v7573
  %v7830 = vsub.f32 %v6294, %v7574
  %v7831 = vsub.f32 %v6295, %v7575
  %v7832 = vsub.f32 %v6296, %v7576
  %v7833 = vsub.f32 %v6297, %v7577
  %v7834 = vsub.f32 %v6298, %v7578
  %v7835 = vsub.f32 %v6299, %v7579
  %v7836 = vsub.f32 %v6300, %v7580
  %v7837 = vsub.f32 %v6301, %v7581
  %v7838 = vsub.f32 %v6302, %v7582
  %v7839 = vsub.f32 %v6303, %v7583
  %v7840 = vsub.f32 %v6304, %v7584
  %v7841 = vsub.f32 %v6305, %v7585
  %v7842 = vsub.f32 %v6306, %v7586
  %v7843 = vsub.f32 %v6307, %v7587
  %v7844 = vsub.f32 %v6308, %v7588
  %v7845 = vsub.f32 %v6309, %v7589
  %v7846 = vsub.f32 %v6310, %v7590
  %v7847 = vsub.f32 %v6311, %v7591
  %v7848 = vsub.f32 %v6312, %v7592
  %v7849 = vsub.f32 %v6313, %v7593
  %v7850 = vsub.f32 %v6314, %v7594
  %v7851 = vsub.f32 %v6315, %v7595
  %v7852 = vsub.f32 %v6316, %v7596
  %v7853 = vsub.f32 %v6317, %v7597
  %v7854 = vsub.f32 %v6318, %v7598
  %v7855 = vsub.f32 %v6319, %v7599
  %v7856 = vsub.f32 %v6320, %v7600
  %v7857 = vsub.f32 %v6321, %v7601
  %v7858 = vsub.f32 %v6322, %v7602
  %v7859 = vsub.f32 %v6323, %v7603
  %v7860 = vsub.f32 %v6324, %v7604
  %v7861 = vsub.f32 %v6325, %v7605
  %v7862 = vsub.f32 %v6326, %v7606
  %v7863 = vsub.f32 %v6327, %v7607
  %v7864 = vsub.f32 %v6328, %v7608
  %v7865 = vsub.f32 %v6329, %v7609
  %v7866 = vsub.f32 %v6330, %v7610
  %v7867 = vsub.f32 %v6331, %v7611
  %v7868 = vsub.f32 %v6332, %v7612
  %v7869 = vsub.f32 %v6333, %v7613
  %v7870 = vsub.f32 %v6334, %v7614
  %v7871 = vsub.f32 %v6335, %v7615
  %v7872 = vsub.f32 %v6336, %v7616
  %v7873 = vsub.f32 %v6337, %v7617
  %v7874 = vsub.f32 %v6338, %v7618
  %v7875 = vsub.f32 %v6339, %v7619
  %v7876 = vsub.f32 %v6340, %v7620
  %v7877 = vsub.f32 %v6341, %v7621
  %v7878 = vsub.f32 %v6342, %v7622
  %v7879 = vsub.f32 %v6343, %v7623
  %v7880 = vsub.f32 %v6344, %v7624
  %v7881 = vsub.f32 %v6345, %v7625
  %v7882 = vsub.f32 %v6346, %v7626
  %v7883 = vsub.f32 %v6347, %v7627
  %v7884 = vsub.f32 %v6348, %v7628
  %v7885 = vsub.f32 %v6349, %v7629
  %v7886 = vsub.f32 %v6350, %v7630
  %v7887 = vsub.f32 %v6351, %v7631
  %v7888 = vsub.f32 %v6352, %v7632
  %v7889 = vsub.f32 %v6353, %v7633
  %v7890 = vsub.f32 %v6354, %v7634
  %v7891 = vsub.f32 %v6355, %v7635
  %v7892 = vsub.f32 %v6356, %v7636
  %v7893 = vsub.f32 %v6357, %v7637
  %v7894 = vsub.f32 %v6358, %v7638
  %v7895 = vsub.f32 %v6359, %v7639
  %v7896 = vsub.f32 %v6360, %v7640
  %v7897 = vsub.f32 %v6361, %v7641
  %v7898 = vsub.f32 %v6362, %v7642
  %v7899 = vsub.f32 %v6363, %v7643
  %v7900 = vsub.f32 %v6364, %v7644
  %v7901 = vsub.f32 %v6365, %v7645
  %v7902 = vsub.f32 %v6366, %v7646
  %v7903 = vsub.f32 %v6367, %v7647
  %v7904 = vsub.f32 %v6368, %v7648
  %v7905 = vsub.f32 %v6369, %v7649
  %v7906 = vsub.f32 %v6370, %v7650
  %v7907 = vsub.f32 %v6371, %v7651
  %v7908 = vsub.f32 %v6372, %v7652
  %v7909 = vsub.f32 %v6373, %v7653
  %v7910 = vsub.f32 %v6374, %v7654
  %v7911 = vsub.f32 %v6375, %v7655
  %v7912 = vsub.f32 %v6376, %v7656
  %v7913 = vsub.f32 %v6377, %v7657
  %v7914 = vsub.f32 %v6378, %v7658
  %v7915 = vsub.f32 %v6379, %v7659
  %v7916 = vsub.f32 %v6380, %v7660
  %v7917 = vsub.f32 %v6381, %v7661
  %v7918 = vsub.f32 %v6382, %v7662
  %v7919 = vsub.f32 %v6383, %v7663
  %v7920 = vsub.f32 %v6384, %v7664
  %v7921 = vsub.f32 %v6385, %v7665
  %v7922 = vsub.f32 %v6386, %v7666
  %v7923 = vsub.f32 %v6387, %v7667
  %v7924 = vsub.f32 %v6388, %v7668
  %v7925 = vsub.f32 %v6389, %v7669
  %v7926 = vsub.f32 %v6390, %v7670
  %v7927 = vsub.f32 %v6391, %v7671
  %v7928 = vsub.f32 %v6392, %v7672
  %v7929 = vsub.f32 %v6393, %v7673
  %v7930 = vsub.f32 %v6394, %v7674
  %v7931 = vsub.f32 %v6395, %v7675
  %v7932 = vsub.f32 %v6396, %v7676
  %v7933 = vsub.f32 %v6397, %v7677
  %v7934 = vsub.f32 %v6398, %v7678
  %v7935 = vsub.f32 %v6399, %v7679
  %v7936 = vsub.f32 %v6400, %v7680
  %v7937 = vsub.f32 %v6401, %v7681
  %v7938 = vsub.f32 %v6402, %v7682
  %v7939 = vsub.f32 %v6403, %v7683
  %v7940 = vsub.f32 %v6404, %v7684
  %v7941 = vsub.f32 %v6405, %v7685
  %v7942 = vsub.f32 %v6406, %v7686
  %v7943 = vsub.f32 %v6407, %v7687
  %v7944 = vsub.f32 %v6408, %v7688
  %v7945 = vsub.f32 %v6409, %v7689
  %v7946 = vsub.f32 %v6410, %v7690
  %v7947 = vsub.f32 %v6411, %v7691
  %v7948 = vsub.f32 %v6412, %v7692
  %v7949 = vsub.f32 %v6413, %v7693
  %v7950 = vsub.f32 %v6414, %v7694
  %v7951 = vsub.f32 %v6415, %v7695
  %v7952 = vsub.f32 %v6416, %v7696
  %v7953 = vsub.f32 %v6417, %v7697
  %v7954 = vsub.f32 %v6418, %v7698
  %v7955 = vsub.f32 %v6419, %v7699
  %v7956 = vsub.f32 %v6420, %v7700
  %v7957 = vsub.f32 %v6421, %v7701
  %v7958 = vsub.f32 %v6422, %v7702
  %v7959 = vsub.f32 %v6423, %v7703
  %v7960 = vsub.f32 %v6424, %v7704
  %v7961 = vsub.f32 %v6425, %v7705
  %v7962 = vsub.f32 %v6426, %v7706
  %v7963 = vsub.f32 %v6427, %v7707
  %v7964 = vsub.f32 %v6428, %v7708
  %v7965 = vsub.f32 %v6429, %v7709
  %v7966 = vsub.f32 %v6430, %v7710
  %v7967 = vsub.f32 %v6431, %v7711
  %v7968 = vsub.f32 %v6432, %v7712
  %v7969 = vsub.f32 %v6433, %v7713
  %v7970 = vsub.f32 %v6434, %v7714
  %v7971 = vsub.f32 %v6435, %v7715
  %v7972 = vsub.f32 %v6436, %v7716
  %v7973 = vsub.f32 %v6437, %v7717
  %v7974 = vsub.f32 %v6438, %v7718
  %v7975 = vsub.f32 %v6439, %v7719
  %v7976 = vsub.f32 %v6440, %v7720
  %v7977 = vsub.f32 %v6441, %v7721
  %v7978 = vsub.f32 %v6442, %v7722
  %v7979 = vsub.f32 %v6443, %v7723
  %v7980 = vsub.f32 %v6444, %v7724
  %v7981 = vsub.f32 %v6445, %v7725
  %v7982 = vsub.f32 %v6446, %v7726
  %v7983 = vsub.f32 %v6447, %v7727
  %v7984 = vsub.f32 %v6448, %v7728
  %v7985 = vsub.f32 %v6449, %v7729
  %v7986 = vsub.f32 %v6450, %v7730
  %v7987 = vsub.f32 %v6451, %v7731
  %v7988 = vsub.f32 %v6452, %v7732
  %v7989 = vsub.f32 %v6453, %v7733
  %v7990 = vsub.f32 %v6454, %v7734
  %v7991 = vsub.f32 %v6455, %v7735
  %v7992 = vsub.f32 %v6456, %v7736
  %v7993 = vsub.f32 %v6457, %v7737
  %v7994 = vsub.f32 %v6458, %v7738
  %v7995 = vsub.f32 %v6459, %v7739
  %v7996 = vsub.f32 %v6460, %v7740
  %v7997 = vsub.f32 %v6461, %v7741
  %v7998 = vsub.f32 %v6462, %v7742
  %v7999 = vsub.f32 %v6463, %v7743
  %v8000 = vsub.f32 %v6464, %v7744
  %v8001 = vsub.f32 %v6465, %v7745
  %v8002 = vsub.f32 %v6466, %v7746
  %v8003 = vsub.f32 %v6467, %v7747
  %v8004 = vsub.f32 %v6468, %v7748
  %v8005 = vsub.f32 %v6469, %v7749
  %v8006 = vsub.f32 %v6470, %v7750
  %v8007 = vsub.f32 %v6471, %v7751
  %v8008 = vsub.f32 %v6472, %v7752
  %v8009 = vsub.f32 %v6473, %v7753
  %v8010 = vsub.f32 %v6474, %v7754
  %v8011 = vsub.f32 %v6475, %v7755
  %v8012 = vsub.f32 %v6476, %v7756
  %v8013 = vsub.f32 %v6477, %v7757
  %v8014 = vsub.f32 %v6478, %v7758
  %v8015 = vsub.f32 %v6479, %v7759
  %v8016 = vsub.f32 %v6480, %v7760
  %v8017 = vsub.f32 %v6481, %v7761
  %v8018 = vsub.f32 %v6482, %v7762
  %v8019 = vsub.f32 %v6483, %v7763
  %v8020 = vsub.f32 %v6484, %v7764
  %v8021 = vsub.f32 %v6485, %v7765
  %v8022 = vsub.f32 %v6486, %v7766
  %v8023 = vsub.f32 %v6487, %v7767
  %v8024 = vsub.f32 %v6488, %v7768
  %v8025 = vsub.f32 %v6489, %v7769
  %v8026 = vsub.f32 %v6490, %v7770
  %v8027 = vsub.f32 %v6491, %v7771
  %v8028 = vsub.f32 %v6492, %v7772
  %v8029 = vsub.f32 %v6493, %v7773
  %v8030 = vsub.f32 %v6494, %v7774
  %v8031 = vsub.f32 %v6495, %v7775
  %v8032 = vsub.f32 %v6496, %v7776
  %v8033 = vsub.f32 %v6497, %v7777
  %v8034 = vsub.f32 %v6498, %v7778
  %v8035 = vsub.f32 %v6499, %v7779
  %v8036 = vsub.f32 %v6500, %v7780
  %v8037 = vsub.f32 %v6501, %v7781
  %v8038 = vsub.f32 %v6502, %v7782
  %v8039 = vsub.f32 %v6503, %v7783
  %v8040 = vsub.f32 %v6504, %v7784
  %v8041 = vsub.f32 %v6505, %v7785
  %v8042 = vsub.f32 %v6506, %v7786
  %v8043 = vsub.f32 %v6507, %v7787
  %v8044 = vsub.f32 %v6508, %v7788
  %v8045 = vsub.f32 %v6509, %v7789
  %v8046 = vsub.f32 %v6510, %v7790
  %v8047 = vsub.f32 %v6511, %v7791
  %v8048 = vsub.f32 %v6512, %v7792
  %v8049 = vsub.f32 %v6513, %v7793
  %v8050 = vsub.f32 %v6514, %v7794
  %v8051 = vsub.f32 %v6515, %v7795
  %v8052 = vsub.f32 %v6516, %v7796
  %v8053 = vsub.f32 %v6517, %v7797
  %v8054 = vsub.f32 %v6518, %v7798
  %v8055 = vsub.f32 %v6519, %v7799
  %v8056 = vsub.f32 %v7800, 29.406033
  %v8057 = vsub.f32 %v7801, 29.406033
  %v8058 = vsub.f32 %v7802, 29.406033
  %v8059 = vsub.f32 %v7803, 29.406033
  %v8060 = vsub.f32 %v7804, 29.406033
  %v8061 = vsub.f32 %v7805, 29.406033
  %v8062 = vsub.f32 %v7806, 29.406033
  %v8063 = vsub.f32 %v7807, 29.406033
  %v8064 = vsub.f32 %v7808, 29.406033
  %v8065 = vsub.f32 %v7809, 29.406033
  %v8066 = vsub.f32 %v7810, 29.406033
  %v8067 = vsub.f32 %v7811, 29.406033
  %v8068 = vsub.f32 %v7812, 29.406033
  %v8069 = vsub.f32 %v7813, 29.406033
  %v8070 = vsub.f32 %v7814, 29.406033
  %v8071 = vsub.f32 %v7815, 29.406033
  %v8072 = vsub.f32 %v7816, 29.406033
  %v8073 = vsub.f32 %v7817, 29.406033
  %v8074 = vsub.f32 %v7818, 29.406033
  %v8075 = vsub.f32 %v7819, 29.406033
  %v8076 = vsub.f32 %v7820, 29.406033
  %v8077 = vsub.f32 %v7821, 29.406033
  %v8078 = vsub.f32 %v7822, 29.406033
  %v8079 = vsub.f32 %v7823, 29.406033
  %v8080 = vsub.f32 %v7824, 29.406033
  %v8081 = vsub.f32 %v7825, 29.406033
  %v8082 = vsub.f32 %v7826, 29.406033
  %v8083 = vsub.f32 %v7827, 29.406033
  %v8084 = vsub.f32 %v7828, 29.406033
  %v8085 = vsub.f32 %v7829, 29.406033
  %v8086 = vsub.f32 %v7830, 29.406033
  %v8087 = vsub.f32 %v7831, 29.406033
  %v8088 = vsub.f32 %v7832, 29.406033
  %v8089 = vsub.f32 %v7833, 29.406033
  %v8090 = vsub.f32 %v7834, 29.406033
  %v8091 = vsub.f32 %v7835, 29.406033
  %v8092 = vsub.f32 %v7836, 29.406033
  %v8093 = vsub.f32 %v7837, 29.406033
  %v8094 = vsub.f32 %v7838, 29.406033
  %v8095 = vsub.f32 %v7839, 29.406033
  %v8096 = vsub.f32 %v7840, 29.406033
  %v8097 = vsub.f32 %v7841, 29.406033
  %v8098 = vsub.f32 %v7842, 29.406033
  %v8099 = vsub.f32 %v7843, 29.406033
  %v8100 = vsub.f32 %v7844, 29.406033
  %v8101 = vsub.f32 %v7845, 29.406033
  %v8102 = vsub.f32 %v7846, 29.406033
  %v8103 = vsub.f32 %v7847, 29.406033
  %v8104 = vsub.f32 %v7848, 29.406033
  %v8105 = vsub.f32 %v7849, 29.406033
  %v8106 = vsub.f32 %v7850, 29.406033
  %v8107 = vsub.f32 %v7851, 29.406033
  %v8108 = vsub.f32 %v7852, 29.406033
  %v8109 = vsub.f32 %v7853, 29.406033
  %v8110 = vsub.f32 %v7854, 29.406033
  %v8111 = vsub.f32 %v7855, 29.406033
  %v8112 = vsub.f32 %v7856, 29.406033
  %v8113 = vsub.f32 %v7857, 29.406033
  %v8114 = vsub.f32 %v7858, 29.406033
  %v8115 = vsub.f32 %v7859, 29.406033
  %v8116 = vsub.f32 %v7860, 29.406033
  %v8117 = vsub.f32 %v7861, 29.406033
  %v8118 = vsub.f32 %v7862, 29.406033
  %v8119 = vsub.f32 %v7863, 29.406033
  %v8120 = vsub.f32 %v7864, 29.406033
  %v8121 = vsub.f32 %v7865, 29.406033
  %v8122 = vsub.f32 %v7866, 29.406033
  %v8123 = vsub.f32 %v7867, 29.406033
  %v8124 = vsub.f32 %v7868, 29.406033
  %v8125 = vsub.f32 %v7869, 29.406033
  %v8126 = vsub.f32 %v7870, 29.406033
  %v8127 = vsub.f32 %v7871, 29.406033
  %v8128 = vsub.f32 %v7872, 29.406033
  %v8129 = vsub.f32 %v7873, 29.406033
  %v8130 = vsub.f32 %v7874, 29.406033
  %v8131 = vsub.f32 %v7875, 29.406033
  %v8132 = vsub.f32 %v7876, 29.406033
  %v8133 = vsub.f32 %v7877, 29.406033
  %v8134 = vsub.f32 %v7878, 29.406033
  %v8135 = vsub.f32 %v7879, 29.406033
  %v8136 = vsub.f32 %v7880, 29.406033
  %v8137 = vsub.f32 %v7881, 29.406033
  %v8138 = vsub.f32 %v7882, 29.406033
  %v8139 = vsub.f32 %v7883, 29.406033
  %v8140 = vsub.f32 %v7884, 29.406033
  %v8141 = vsub.f32 %v7885, 29.406033
  %v8142 = vsub.f32 %v7886, 29.406033
  %v8143 = vsub.f32 %v7887, 29.406033
  %v8144 = vsub.f32 %v7888, 29.406033
  %v8145 = vsub.f32 %v7889, 29.406033
  %v8146 = vsub.f32 %v7890, 29.406033
  %v8147 = vsub.f32 %v7891, 29.406033
  %v8148 = vsub.f32 %v7892, 29.406033
  %v8149 = vsub.f32 %v7893, 29.406033
  %v8150 = vsub.f32 %v7894, 29.406033
  %v8151 = vsub.f32 %v7895, 29.406033
  %v8152 = vsub.f32 %v7896, 29.406033
  %v8153 = vsub.f32 %v7897, 29.406033
  %v8154 = vsub.f32 %v7898, 29.406033
  %v8155 = vsub.f32 %v7899, 29.406033
  %v8156 = vsub.f32 %v7900, 29.406033
  %v8157 = vsub.f32 %v7901, 29.406033
  %v8158 = vsub.f32 %v7902, 29.406033
  %v8159 = vsub.f32 %v7903, 29.406033
  %v8160 = vsub.f32 %v7904, 29.406033
  %v8161 = vsub.f32 %v7905, 29.406033
  %v8162 = vsub.f32 %v7906, 29.406033
  %v8163 = vsub.f32 %v7907, 29.406033
  %v8164 = vsub.f32 %v7908, 29.406033
  %v8165 = vsub.f32 %v7909, 29.406033
  %v8166 = vsub.f32 %v7910, 29.406033
  %v8167 = vsub.f32 %v7911, 29.406033
  %v8168 = vsub.f32 %v7912, 29.406033
  %v8169 = vsub.f32 %v7913, 29.406033
  %v8170 = vsub.f32 %v7914, 29.406033
  %v8171 = vsub.f32 %v7915, 29.406033
  %v8172 = vsub.f32 %v7916, 29.406033
  %v8173 = vsub.f32 %v7917, 29.406033
  %v8174 = vsub.f32 %v7918, 29.406033
  %v8175 = vsub.f32 %v7919, 29.406033
  %v8176 = vsub.f32 %v7920, 29.406033
  %v8177 = vsub.f32 %v7921, 29.406033
  %v8178 = vsub.f32 %v7922, 29.406033
  %v8179 = vsub.f32 %v7923, 29.406033
  %v8180 = vsub.f32 %v7924, 29.406033
  %v8181 = vsub.f32 %v7925, 29.406033
  %v8182 = vsub.f32 %v7926, 29.406033
  %v8183 = vsub.f32 %v7927, 29.406033
  %v8184 = vsub.f32 %v7928, 29.406033
  %v8185 = vsub.f32 %v7929, 29.406033
  %v8186 = vsub.f32 %v7930, 29.406033
  %v8187 = vsub.f32 %v7931, 29.406033
  %v8188 = vsub.f32 %v7932, 29.406033
  %v8189 = vsub.f32 %v7933, 29.406033
  %v8190 = vsub.f32 %v7934, 29.406033
  %v8191 = vsub.f32 %v7935, 29.406033
  %v8192 = vsub.f32 %v7936, 29.406033
  %v8193 = vsub.f32 %v7937, 29.406033
  %v8194 = vsub.f32 %v7938, 29.406033
  %v8195 = vsub.f32 %v7939, 29.406033
  %v8196 = vsub.f32 %v7940, 29.406033
  %v8197 = vsub.f32 %v7941, 29.406033
  %v8198 = vsub.f32 %v7942, 29.406033
  %v8199 = vsub.f32 %v7943, 29.406033
  %v8200 = vsub.f32 %v7944, 29.406033
  %v8201 = vsub.f32 %v7945, 29.406033
  %v8202 = vsub.f32 %v7946, 29.406033
  %v8203 = vsub.f32 %v7947, 29.406033
  %v8204 = vsub.f32 %v7948, 29.406033
  %v8205 = vsub.f32 %v7949, 29.406033
  %v8206 = vsub.f32 %v7950, 29.406033
  %v8207 = vsub.f32 %v7951, 29.406033
  %v8208 = vsub.f32 %v7952, 29.406033
  %v8209 = vsub.f32 %v7953, 29.406033
  %v8210 = vsub.f32 %v7954, 29.406033
  %v8211 = vsub.f32 %v7955, 29.406033
  %v8212 = vsub.f32 %v7956, 29.406033
  %v8213 = vsub.f32 %v7957, 29.406033
  %v8214 = vsub.f32 %v7958, 29.406033
  %v8215 = vsub.f32 %v7959, 29.406033
  %v8216 = vsub.f32 %v7960, 29.406033
  %v8217 = vsub.f32 %v7961, 29.406033
  %v8218 = vsub.f32 %v7962, 29.406033
  %v8219 = vsub.f32 %v7963, 29.406033
  %v8220 = vsub.f32 %v7964, 29.406033
  %v8221 = vsub.f32 %v7965, 29.406033
  %v8222 = vsub.f32 %v7966, 29.406033
  %v8223 = vsub.f32 %v7967, 29.406033
  %v8224 = vsub.f32 %v7968, 29.406033
  %v8225 = vsub.f32 %v7969, 29.406033
  %v8226 = vsub.f32 %v7970, 29.406033
  %v8227 = vsub.f32 %v7971, 29.406033
  %v8228 = vsub.f32 %v7972, 29.406033
  %v8229 = vsub.f32 %v7973, 29.406033
  %v8230 = vsub.f32 %v7974, 29.406033
  %v8231 = vsub.f32 %v7975, 29.406033
  %v8232 = vsub.f32 %v7976, 29.406033
  %v8233 = vsub.f32 %v7977, 29.406033
  %v8234 = vsub.f32 %v7978, 29.406033
  %v8235 = vsub.f32 %v7979, 29.406033
  %v8236 = vsub.f32 %v7980, 29.406033
  %v8237 = vsub.f32 %v7981, 29.406033
  %v8238 = vsub.f32 %v7982, 29.406033
  %v8239 = vsub.f32 %v7983, 29.406033
  %v8240 = vsub.f32 %v7984, 29.406033
  %v8241 = vsub.f32 %v7985, 29.406033
  %v8242 = vsub.f32 %v7986, 29.406033
  %v8243 = vsub.f32 %v7987, 29.406033
  %v8244 = vsub.f32 %v7988, 29.406033
  %v8245 = vsub.f32 %v7989, 29.406033
  %v8246 = vsub.f32 %v7990, 29.406033
  %v8247 = vsub.f32 %v7991, 29.406033
  %v8248 = vsub.f32 %v7992, 29.406033
  %v8249 = vsub.f32 %v7993, 29.406033
  %v8250 = vsub.f32 %v7994, 29.406033
  %v8251 = vsub.f32 %v7995, 29.406033
  %v8252 = vsub.f32 %v7996, 29.406033
  %v8253 = vsub.f32 %v7997, 29.406033
  %v8254 = vsub.f32 %v7998, 29.406033
  %v8255 = vsub.f32 %v7999, 29.406033
  %v8256 = vsub.f32 %v8000, 29.406033
  %v8257 = vsub.f32 %v8001, 29.406033
  %v8258 = vsub.f32 %v8002, 29.406033
  %v8259 = vsub.f32 %v8003, 29.406033
  %v8260 = vsub.f32 %v8004, 29.406033
  %v8261 = vsub.f32 %v8005, 29.406033
  %v8262 = vsub.f32 %v8006, 29.406033
  %v8263 = vsub.f32 %v8007, 29.406033
  %v8264 = vsub.f32 %v8008, 29.406033
  %v8265 = vsub.f32 %v8009, 29.406033
  %v8266 = vsub.f32 %v8010, 29.406033
  %v8267 = vsub.f32 %v8011, 29.406033
  %v8268 = vsub.f32 %v8012, 29.406033
  %v8269 = vsub.f32 %v8013, 29.406033
  %v8270 = vsub.f32 %v8014, 29.406033
  %v8271 = vsub.f32 %v8015, 29.406033
  %v8272 = vsub.f32 %v8016, 29.406033
  %v8273 = vsub.f32 %v8017, 29.406033
  %v8274 = vsub.f32 %v8018, 29.406033
  %v8275 = vsub.f32 %v8019, 29.406033
  %v8276 = vsub.f32 %v8020, 29.406033
  %v8277 = vsub.f32 %v8021, 29.406033
  %v8278 = vsub.f32 %v8022, 29.406033
  %v8279 = vsub.f32 %v8023, 29.406033
  %v8280 = vsub.f32 %v8024, 29.406033
  %v8281 = vsub.f32 %v8025, 29.406033
  %v8282 = vsub.f32 %v8026, 29.406033
  %v8283 = vsub.f32 %v8027, 29.406033
  %v8284 = vsub.f32 %v8028, 29.406033
  %v8285 = vsub.f32 %v8029, 29.406033
  %v8286 = vsub.f32 %v8030, 29.406033
  %v8287 = vsub.f32 %v8031, 29.406033
  %v8288 = vsub.f32 %v8032, 29.406033
  %v8289 = vsub.f32 %v8033, 29.406033
  %v8290 = vsub.f32 %v8034, 29.406033
  %v8291 = vsub.f32 %v8035, 29.406033
  %v8292 = vsub.f32 %v8036, 29.406033
  %v8293 = vsub.f32 %v8037, 29.406033
  %v8294 = vsub.f32 %v8038, 29.406033
  %v8295 = vsub.f32 %v8039, 29.406033
  %v8296 = vsub.f32 %v8040, 29.406033
  %v8297 = vsub.f32 %v8041, 29.406033
  %v8298 = vsub.f32 %v8042, 29.406033
  %v8299 = vsub.f32 %v8043, 29.406033
  %v8300 = vsub.f32 %v8044, 29.406033
  %v8301 = vsub.f32 %v8045, 29.406033
  %v8302 = vsub.f32 %v8046, 29.406033
  %v8303 = vsub.f32 %v8047, 29.406033
  %v8304 = vsub.f32 %v8048, 29.406033
  %v8305 = vsub.f32 %v8049, 29.406033
  %v8306 = vsub.f32 %v8050, 29.406033
  %v8307 = vsub.f32 %v8051, 29.406033
  %v8308 = vsub.f32 %v8052, 29.406033
  %v8309 = vsub.f32 %v8053, 29.406033
  %v8310 = vsub.f32 %v8054, 29.406033
  %v8311 = vsub.f32 %v8055, 29.406033
  %v8569 = vunpack.c.l.s4 839922192
  %v8570 = vunpack.c.0.s8 %v8569
  %v8571 = vlaneseq
  %v8572 = vshrl.u32 %v8571, 7
  %v8573 = vsub.s32 %v8570, %v8572
  %v8574 = vrot.slane %v8056, %v8573
  %v8576 = vunpack.c.l.s4 1985246804
  %v8577 = vunpack.c.0.s8 %v8576
  %v8578 = vlaneseq
  %v8579 = vshrl.u32 %v8578, 7
  %v8580 = vsub.s32 %v8577, %v8579
  %v8581 = vrot.slane %v8056, %v8580
  %v8583 = vunpack.c.l.s4 839922192
  %v8584 = vunpack.c.0.s8 %v8583
  %v8585 = vlaneseq
  %v8586 = vshrl.u32 %v8585, 7
  %v8587 = vsub.s32 %v8584, %v8586
  %v8588 = vrot.slane %v8057, %v8587
  %v8590 = vunpack.c.l.s4 1985246804
  %v8591 = vunpack.c.0.s8 %v8590
  %v8592 = vlaneseq
  %v8593 = vshrl.u32 %v8592, 7
  %v8594 = vsub.s32 %v8591, %v8593
  %v8595 = vrot.slane %v8057, %v8594
  %v8597 = vunpack.c.l.s4 839922192
  %v8598 = vunpack.c.0.s8 %v8597
  %v8599 = vlaneseq
  %v8600 = vshrl.u32 %v8599, 7
  %v8601 = vsub.s32 %v8598, %v8600
  %v8602 = vrot.slane %v8058, %v8601
  %v8604 = vunpack.c.l.s4 1985246804
  %v8605 = vunpack.c.0.s8 %v8604
  %v8606 = vlaneseq
  %v8607 = vshrl.u32 %v8606, 7
  %v8608 = vsub.s32 %v8605, %v8607
  %v8609 = vrot.slane %v8058, %v8608
  %v8611 = vunpack.c.l.s4 839922192
  %v8612 = vunpack.c.0.s8 %v8611
  %v8613 = vlaneseq
  %v8614 = vshrl.u32 %v8613, 7
  %v8615 = vsub.s32 %v8612, %v8614
  %v8616 = vrot.slane %v8059, %v8615
  %v8618 = vunpack.c.l.s4 1985246804
  %v8619 = vunpack.c.0.s8 %v8618
  %v8620 = vlaneseq
  %v8621 = vshrl.u32 %v8620, 7
  %v8622 = vsub.s32 %v8619, %v8621
  %v8623 = vrot.slane %v8059, %v8622
  %v8625 = vunpack.c.l.s4 839922192
  %v8626 = vunpack.c.0.s8 %v8625
  %v8627 = vlaneseq
  %v8628 = vshrl.u32 %v8627, 7
  %v8629 = vsub.s32 %v8626, %v8628
  %v8630 = vrot.slane %v8060, %v8629
  %v8632 = vunpack.c.l.s4 1985246804
  %v8633 = vunpack.c.0.s8 %v8632
  %v8634 = vlaneseq
  %v8635 = vshrl.u32 %v8634, 7
  %v8636 = vsub.s32 %v8633, %v8635
  %v8637 = vrot.slane %v8060, %v8636
  %v8639 = vunpack.c.l.s4 839922192
  %v8640 = vunpack.c.0.s8 %v8639
  %v8641 = vlaneseq
  %v8642 = vshrl.u32 %v8641, 7
  %v8643 = vsub.s32 %v8640, %v8642
  %v8644 = vrot.slane %v8061, %v8643
  %v8646 = vunpack.c.l.s4 1985246804
  %v8647 = vunpack.c.0.s8 %v8646
  %v8648 = vlaneseq
  %v8649 = vshrl.u32 %v8648, 7
  %v8650 = vsub.s32 %v8647, %v8649
  %v8651 = vrot.slane %v8061, %v8650
  %v8653 = vunpack.c.l.s4 839922192
  %v8654 = vunpack.c.0.s8 %v8653
  %v8655 = vlaneseq
  %v8656 = vshrl.u32 %v8655, 7
  %v8657 = vsub.s32 %v8654, %v8656
  %v8658 = vrot.slane %v8062, %v8657
  %v8660 = vunpack.c.l.s4 1985246804
  %v8661 = vunpack.c.0.s8 %v8660
  %v8662 = vlaneseq
  %v8663 = vshrl.u32 %v8662, 7
  %v8664 = vsub.s32 %v8661, %v8663
  %v8665 = vrot.slane %v8062, %v8664
  %v8667 = vunpack.c.l.s4 839922192
  %v8668 = vunpack.c.0.s8 %v8667
  %v8669 = vlaneseq
  %v8670 = vshrl.u32 %v8669, 7
  %v8671 = vsub.s32 %v8668, %v8670
  %v8672 = vrot.slane %v8063, %v8671
  %v8674 = vunpack.c.l.s4 1985246804
  %v8675 = vunpack.c.0.s8 %v8674
  %v8676 = vlaneseq
  %v8677 = vshrl.u32 %v8676, 7
  %v8678 = vsub.s32 %v8675, %v8677
  %v8679 = vrot.slane %v8063, %v8678
  %v8681 = vunpack.c.l.s4 839922192
  %v8682 = vunpack.c.0.s8 %v8681
  %v8683 = vlaneseq
  %v8684 = vshrl.u32 %v8683, 7
  %v8685 = vsub.s32 %v8682, %v8684
  %v8686 = vrot.slane %v8064, %v8685
  %v8688 = vunpack.c.l.s4 1985246804
  %v8689 = vunpack.c.0.s8 %v8688
  %v8690 = vlaneseq
  %v8691 = vshrl.u32 %v8690, 7
  %v8692 = vsub.s32 %v8689, %v8691
  %v8693 = vrot.slane %v8064, %v8692
  %v8695 = vunpack.c.l.s4 839922192
  %v8696 = vunpack.c.0.s8 %v8695
  %v8697 = vlaneseq
  %v8698 = vshrl.u32 %v8697, 7
  %v8699 = vsub.s32 %v8696, %v8698
  %v8700 = vrot.slane %v8065, %v8699
  %v8702 = vunpack.c.l.s4 1985246804
  %v8703 = vunpack.c.0.s8 %v8702
  %v8704 = vlaneseq
  %v8705 = vshrl.u32 %v8704, 7
  %v8706 = vsub.s32 %v8703, %v8705
  %v8707 = vrot.slane %v8065, %v8706
  %v8709 = vunpack.c.l.s4 839922192
  %v8710 = vunpack.c.0.s8 %v8709
  %v8711 = vlaneseq
  %v8712 = vshrl.u32 %v8711, 7
  %v8713 = vsub.s32 %v8710, %v8712
  %v8714 = vrot.slane %v8066, %v8713
  %v8716 = vunpack.c.l.s4 1985246804
  %v8717 = vunpack.c.0.s8 %v8716
  %v8718 = vlaneseq
  %v8719 = vshrl.u32 %v8718, 7
  %v8720 = vsub.s32 %v8717, %v8719
  %v8721 = vrot.slane %v8066, %v8720
  %v8723 = vunpack.c.l.s4 839922192
  %v8724 = vunpack.c.0.s8 %v8723
  %v8725 = vlaneseq
  %v8726 = vshrl.u32 %v8725, 7
  %v8727 = vsub.s32 %v8724, %v8726
  %v8728 = vrot.slane %v8067, %v8727
  %v8730 = vunpack.c.l.s4 1985246804
  %v8731 = vunpack.c.0.s8 %v8730
  %v8732 = vlaneseq
  %v8733 = vshrl.u32 %v8732, 7
  %v8734 = vsub.s32 %v8731, %v8733
  %v8735 = vrot.slane %v8067, %v8734
  %v8737 = vunpack.c.l.s4 839922192
  %v8738 = vunpack.c.0.s8 %v8737
  %v8739 = vlaneseq
  %v8740 = vshrl.u32 %v8739, 7
  %v8741 = vsub.s32 %v8738, %v8740
  %v8742 = vrot.slane %v8068, %v8741
  %v8744 = vunpack.c.l.s4 1985246804
  %v8745 = vunpack.c.0.s8 %v8744
  %v8746 = vlaneseq
  %v8747 = vshrl.u32 %v8746, 7
  %v8748 = vsub.s32 %v8745, %v8747
  %v8749 = vrot.slane %v8068, %v8748
  %v8751 = vunpack.c.l.s4 839922192
  %v8752 = vunpack.c.0.s8 %v8751
  %v8753 = vlaneseq
  %v8754 = vshrl.u32 %v8753, 7
  %v8755 = vsub.s32 %v8752, %v8754
  %v8756 = vrot.slane %v8069, %v8755
  %v8758 = vunpack.c.l.s4 1985246804
  %v8759 = vunpack.c.0.s8 %v8758
  %v8760 = vlaneseq
  %v8761 = vshrl.u32 %v8760, 7
  %v8762 = vsub.s32 %v8759, %v8761
  %v8763 = vrot.slane %v8069, %v8762
  %v8765 = vunpack.c.l.s4 839922192
  %v8766 = vunpack.c.0.s8 %v8765
  %v8767 = vlaneseq
  %v8768 = vshrl.u32 %v8767, 7
  %v8769 = vsub.s32 %v8766, %v8768
  %v8770 = vrot.slane %v8070, %v8769
  %v8772 = vunpack.c.l.s4 1985246804
  %v8773 = vunpack.c.0.s8 %v8772
  %v8774 = vlaneseq
  %v8775 = vshrl.u32 %v8774, 7
  %v8776 = vsub.s32 %v8773, %v8775
  %v8777 = vrot.slane %v8070, %v8776
  %v8779 = vunpack.c.l.s4 839922192
  %v8780 = vunpack.c.0.s8 %v8779
  %v8781 = vlaneseq
  %v8782 = vshrl.u32 %v8781, 7
  %v8783 = vsub.s32 %v8780, %v8782
  %v8784 = vrot.slane %v8071, %v8783
  %v8786 = vunpack.c.l.s4 1985246804
  %v8787 = vunpack.c.0.s8 %v8786
  %v8788 = vlaneseq
  %v8789 = vshrl.u32 %v8788, 7
  %v8790 = vsub.s32 %v8787, %v8789
  %v8791 = vrot.slane %v8071, %v8790
  %v8793 = vunpack.c.l.s4 839922192
  %v8794 = vunpack.c.0.s8 %v8793
  %v8795 = vlaneseq
  %v8796 = vshrl.u32 %v8795, 7
  %v8797 = vsub.s32 %v8794, %v8796
  %v8798 = vrot.slane %v8072, %v8797
  %v8800 = vunpack.c.l.s4 1985246804
  %v8801 = vunpack.c.0.s8 %v8800
  %v8802 = vlaneseq
  %v8803 = vshrl.u32 %v8802, 7
  %v8804 = vsub.s32 %v8801, %v8803
  %v8805 = vrot.slane %v8072, %v8804
  %v8807 = vunpack.c.l.s4 839922192
  %v8808 = vunpack.c.0.s8 %v8807
  %v8809 = vlaneseq
  %v8810 = vshrl.u32 %v8809, 7
  %v8811 = vsub.s32 %v8808, %v8810
  %v8812 = vrot.slane %v8073, %v8811
  %v8814 = vunpack.c.l.s4 1985246804
  %v8815 = vunpack.c.0.s8 %v8814
  %v8816 = vlaneseq
  %v8817 = vshrl.u32 %v8816, 7
  %v8818 = vsub.s32 %v8815, %v8817
  %v8819 = vrot.slane %v8073, %v8818
  %v8821 = vunpack.c.l.s4 839922192
  %v8822 = vunpack.c.0.s8 %v8821
  %v8823 = vlaneseq
  %v8824 = vshrl.u32 %v8823, 7
  %v8825 = vsub.s32 %v8822, %v8824
  %v8826 = vrot.slane %v8074, %v8825
  %v8828 = vunpack.c.l.s4 1985246804
  %v8829 = vunpack.c.0.s8 %v8828
  %v8830 = vlaneseq
  %v8831 = vshrl.u32 %v8830, 7
  %v8832 = vsub.s32 %v8829, %v8831
  %v8833 = vrot.slane %v8074, %v8832
  %v8835 = vunpack.c.l.s4 839922192
  %v8836 = vunpack.c.0.s8 %v8835
  %v8837 = vlaneseq
  %v8838 = vshrl.u32 %v8837, 7
  %v8839 = vsub.s32 %v8836, %v8838
  %v8840 = vrot.slane %v8075, %v8839
  %v8842 = vunpack.c.l.s4 1985246804
  %v8843 = vunpack.c.0.s8 %v8842
  %v8844 = vlaneseq
  %v8845 = vshrl.u32 %v8844, 7
  %v8846 = vsub.s32 %v8843, %v8845
  %v8847 = vrot.slane %v8075, %v8846
  %v8849 = vunpack.c.l.s4 839922192
  %v8850 = vunpack.c.0.s8 %v8849
  %v8851 = vlaneseq
  %v8852 = vshrl.u32 %v8851, 7
  %v8853 = vsub.s32 %v8850, %v8852
  %v8854 = vrot.slane %v8076, %v8853
  %v8856 = vunpack.c.l.s4 1985246804
  %v8857 = vunpack.c.0.s8 %v8856
  %v8858 = vlaneseq
  %v8859 = vshrl.u32 %v8858, 7
  %v8860 = vsub.s32 %v8857, %v8859
  %v8861 = vrot.slane %v8076, %v8860
  %v8863 = vunpack.c.l.s4 839922192
  %v8864 = vunpack.c.0.s8 %v8863
  %v8865 = vlaneseq
  %v8866 = vshrl.u32 %v8865, 7
  %v8867 = vsub.s32 %v8864, %v8866
  %v8868 = vrot.slane %v8077, %v8867
  %v8870 = vunpack.c.l.s4 1985246804
  %v8871 = vunpack.c.0.s8 %v8870
  %v8872 = vlaneseq
  %v8873 = vshrl.u32 %v8872, 7
  %v8874 = vsub.s32 %v8871, %v8873
  %v8875 = vrot.slane %v8077, %v8874
  %v8877 = vunpack.c.l.s4 839922192
  %v8878 = vunpack.c.0.s8 %v8877
  %v8879 = vlaneseq
  %v8880 = vshrl.u32 %v8879, 7
  %v8881 = vsub.s32 %v8878, %v8880
  %v8882 = vrot.slane %v8078, %v8881
  %v8884 = vunpack.c.l.s4 1985246804
  %v8885 = vunpack.c.0.s8 %v8884
  %v8886 = vlaneseq
  %v8887 = vshrl.u32 %v8886, 7
  %v8888 = vsub.s32 %v8885, %v8887
  %v8889 = vrot.slane %v8078, %v8888
  %v8891 = vunpack.c.l.s4 839922192
  %v8892 = vunpack.c.0.s8 %v8891
  %v8893 = vlaneseq
  %v8894 = vshrl.u32 %v8893, 7
  %v8895 = vsub.s32 %v8892, %v8894
  %v8896 = vrot.slane %v8079, %v8895
  %v8898 = vunpack.c.l.s4 1985246804
  %v8899 = vunpack.c.0.s8 %v8898
  %v8900 = vlaneseq
  %v8901 = vshrl.u32 %v8900, 7
  %v8902 = vsub.s32 %v8899, %v8901
  %v8903 = vrot.slane %v8079, %v8902
  %v8905 = vunpack.c.l.s4 839922192
  %v8906 = vunpack.c.0.s8 %v8905
  %v8907 = vlaneseq
  %v8908 = vshrl.u32 %v8907, 7
  %v8909 = vsub.s32 %v8906, %v8908
  %v8910 = vrot.slane %v8080, %v8909
  %v8912 = vunpack.c.l.s4 1985246804
  %v8913 = vunpack.c.0.s8 %v8912
  %v8914 = vlaneseq
  %v8915 = vshrl.u32 %v8914, 7
  %v8916 = vsub.s32 %v8913, %v8915
  %v8917 = vrot.slane %v8080, %v8916
  %v8919 = vunpack.c.l.s4 839922192
  %v8920 = vunpack.c.0.s8 %v8919
  %v8921 = vlaneseq
  %v8922 = vshrl.u32 %v8921, 7
  %v8923 = vsub.s32 %v8920, %v8922
  %v8924 = vrot.slane %v8081, %v8923
  %v8926 = vunpack.c.l.s4 1985246804
  %v8927 = vunpack.c.0.s8 %v8926
  %v8928 = vlaneseq
  %v8929 = vshrl.u32 %v8928, 7
  %v8930 = vsub.s32 %v8927, %v8929
  %v8931 = vrot.slane %v8081, %v8930
  %v8933 = vunpack.c.l.s4 839922192
  %v8934 = vunpack.c.0.s8 %v8933
  %v8935 = vlaneseq
  %v8936 = vshrl.u32 %v8935, 7
  %v8937 = vsub.s32 %v8934, %v8936
  %v8938 = vrot.slane %v8082, %v8937
  %v8940 = vunpack.c.l.s4 1985246804
  %v8941 = vunpack.c.0.s8 %v8940
  %v8942 = vlaneseq
  %v8943 = vshrl.u32 %v8942, 7
  %v8944 = vsub.s32 %v8941, %v8943
  %v8945 = vrot.slane %v8082, %v8944
  %v8947 = vunpack.c.l.s4 839922192
  %v8948 = vunpack.c.0.s8 %v8947
  %v8949 = vlaneseq
  %v8950 = vshrl.u32 %v8949, 7
  %v8951 = vsub.s32 %v8948, %v8950
  %v8952 = vrot.slane %v8083, %v8951
  %v8954 = vunpack.c.l.s4 1985246804
  %v8955 = vunpack.c.0.s8 %v8954
  %v8956 = vlaneseq
  %v8957 = vshrl.u32 %v8956, 7
  %v8958 = vsub.s32 %v8955, %v8957
  %v8959 = vrot.slane %v8083, %v8958
  %v8961 = vunpack.c.l.s4 839922192
  %v8962 = vunpack.c.0.s8 %v8961
  %v8963 = vlaneseq
  %v8964 = vshrl.u32 %v8963, 7
  %v8965 = vsub.s32 %v8962, %v8964
  %v8966 = vrot.slane %v8084, %v8965
  %v8968 = vunpack.c.l.s4 1985246804
  %v8969 = vunpack.c.0.s8 %v8968
  %v8970 = vlaneseq
  %v8971 = vshrl.u32 %v8970, 7
  %v8972 = vsub.s32 %v8969, %v8971
  %v8973 = vrot.slane %v8084, %v8972
  %v8975 = vunpack.c.l.s4 839922192
  %v8976 = vunpack.c.0.s8 %v8975
  %v8977 = vlaneseq
  %v8978 = vshrl.u32 %v8977, 7
  %v8979 = vsub.s32 %v8976, %v8978
  %v8980 = vrot.slane %v8085, %v8979
  %v8982 = vunpack.c.l.s4 1985246804
  %v8983 = vunpack.c.0.s8 %v8982
  %v8984 = vlaneseq
  %v8985 = vshrl.u32 %v8984, 7
  %v8986 = vsub.s32 %v8983, %v8985
  %v8987 = vrot.slane %v8085, %v8986
  %v8989 = vunpack.c.l.s4 839922192
  %v8990 = vunpack.c.0.s8 %v8989
  %v8991 = vlaneseq
  %v8992 = vshrl.u32 %v8991, 7
  %v8993 = vsub.s32 %v8990, %v8992
  %v8994 = vrot.slane %v8086, %v8993
  %v8996 = vunpack.c.l.s4 1985246804
  %v8997 = vunpack.c.0.s8 %v8996
  %v8998 = vlaneseq
  %v8999 = vshrl.u32 %v8998, 7
  %v9000 = vsub.s32 %v8997, %v8999
  %v9001 = vrot.slane %v8086, %v9000
  %v9003 = vunpack.c.l.s4 839922192
  %v9004 = vunpack.c.0.s8 %v9003
  %v9005 = vlaneseq
  %v9006 = vshrl.u32 %v9005, 7
  %v9007 = vsub.s32 %v9004, %v9006
  %v9008 = vrot.slane %v8087, %v9007
  %v9010 = vunpack.c.l.s4 1985246804
  %v9011 = vunpack.c.0.s8 %v9010
  %v9012 = vlaneseq
  %v9013 = vshrl.u32 %v9012, 7
  %v9014 = vsub.s32 %v9011, %v9013
  %v9015 = vrot.slane %v8087, %v9014
  %v9017 = vunpack.c.l.s4 839922192
  %v9018 = vunpack.c.0.s8 %v9017
  %v9019 = vlaneseq
  %v9020 = vshrl.u32 %v9019, 7
  %v9021 = vsub.s32 %v9018, %v9020
  %v9022 = vrot.slane %v8088, %v9021
  %v9024 = vunpack.c.l.s4 1985246804
  %v9025 = vunpack.c.0.s8 %v9024
  %v9026 = vlaneseq
  %v9027 = vshrl.u32 %v9026, 7
  %v9028 = vsub.s32 %v9025, %v9027
  %v9029 = vrot.slane %v8088, %v9028
  %v9031 = vunpack.c.l.s4 839922192
  %v9032 = vunpack.c.0.s8 %v9031
  %v9033 = vlaneseq
  %v9034 = vshrl.u32 %v9033, 7
  %v9035 = vsub.s32 %v9032, %v9034
  %v9036 = vrot.slane %v8089, %v9035
  %v9038 = vunpack.c.l.s4 1985246804
  %v9039 = vunpack.c.0.s8 %v9038
  %v9040 = vlaneseq
  %v9041 = vshrl.u32 %v9040, 7
  %v9042 = vsub.s32 %v9039, %v9041
  %v9043 = vrot.slane %v8089, %v9042
  %v9045 = vunpack.c.l.s4 839922192
  %v9046 = vunpack.c.0.s8 %v9045
  %v9047 = vlaneseq
  %v9048 = vshrl.u32 %v9047, 7
  %v9049 = vsub.s32 %v9046, %v9048
  %v9050 = vrot.slane %v8090, %v9049
  %v9052 = vunpack.c.l.s4 1985246804
  %v9053 = vunpack.c.0.s8 %v9052
  %v9054 = vlaneseq
  %v9055 = vshrl.u32 %v9054, 7
  %v9056 = vsub.s32 %v9053, %v9055
  %v9057 = vrot.slane %v8090, %v9056
  %v9059 = vunpack.c.l.s4 839922192
  %v9060 = vunpack.c.0.s8 %v9059
  %v9061 = vlaneseq
  %v9062 = vshrl.u32 %v9061, 7
  %v9063 = vsub.s32 %v9060, %v9062
  %v9064 = vrot.slane %v8091, %v9063
  %v9066 = vunpack.c.l.s4 1985246804
  %v9067 = vunpack.c.0.s8 %v9066
  %v9068 = vlaneseq
  %v9069 = vshrl.u32 %v9068, 7
  %v9070 = vsub.s32 %v9067, %v9069
  %v9071 = vrot.slane %v8091, %v9070
  %v9073 = vunpack.c.l.s4 839922192
  %v9074 = vunpack.c.0.s8 %v9073
  %v9075 = vlaneseq
  %v9076 = vshrl.u32 %v9075, 7
  %v9077 = vsub.s32 %v9074, %v9076
  %v9078 = vrot.slane %v8092, %v9077
  %v9080 = vunpack.c.l.s4 1985246804
  %v9081 = vunpack.c.0.s8 %v9080
  %v9082 = vlaneseq
  %v9083 = vshrl.u32 %v9082, 7
  %v9084 = vsub.s32 %v9081, %v9083
  %v9085 = vrot.slane %v8092, %v9084
  %v9087 = vunpack.c.l.s4 839922192
  %v9088 = vunpack.c.0.s8 %v9087
  %v9089 = vlaneseq
  %v9090 = vshrl.u32 %v9089, 7
  %v9091 = vsub.s32 %v9088, %v9090
  %v9092 = vrot.slane %v8093, %v9091
  %v9094 = vunpack.c.l.s4 1985246804
  %v9095 = vunpack.c.0.s8 %v9094
  %v9096 = vlaneseq
  %v9097 = vshrl.u32 %v9096, 7
  %v9098 = vsub.s32 %v9095, %v9097
  %v9099 = vrot.slane %v8093, %v9098
  %v9101 = vunpack.c.l.s4 839922192
  %v9102 = vunpack.c.0.s8 %v9101
  %v9103 = vlaneseq
  %v9104 = vshrl.u32 %v9103, 7
  %v9105 = vsub.s32 %v9102, %v9104
  %v9106 = vrot.slane %v8094, %v9105
  %v9108 = vunpack.c.l.s4 1985246804
  %v9109 = vunpack.c.0.s8 %v9108
  %v9110 = vlaneseq
  %v9111 = vshrl.u32 %v9110, 7
  %v9112 = vsub.s32 %v9109, %v9111
  %v9113 = vrot.slane %v8094, %v9112
  %v9115 = vunpack.c.l.s4 839922192
  %v9116 = vunpack.c.0.s8 %v9115
  %v9117 = vlaneseq
  %v9118 = vshrl.u32 %v9117, 7
  %v9119 = vsub.s32 %v9116, %v9118
  %v9120 = vrot.slane %v8095, %v9119
  %v9122 = vunpack.c.l.s4 1985246804
  %v9123 = vunpack.c.0.s8 %v9122
  %v9124 = vlaneseq
  %v9125 = vshrl.u32 %v9124, 7
  %v9126 = vsub.s32 %v9123, %v9125
  %v9127 = vrot.slane %v8095, %v9126
  %v9129 = vunpack.c.l.s4 839922192
  %v9130 = vunpack.c.0.s8 %v9129
  %v9131 = vlaneseq
  %v9132 = vshrl.u32 %v9131, 7
  %v9133 = vsub.s32 %v9130, %v9132
  %v9134 = vrot.slane %v8096, %v9133
  %v9136 = vunpack.c.l.s4 1985246804
  %v9137 = vunpack.c.0.s8 %v9136
  %v9138 = vlaneseq
  %v9139 = vshrl.u32 %v9138, 7
  %v9140 = vsub.s32 %v9137, %v9139
  %v9141 = vrot.slane %v8096, %v9140
  %v9143 = vunpack.c.l.s4 839922192
  %v9144 = vunpack.c.0.s8 %v9143
  %v9145 = vlaneseq
  %v9146 = vshrl.u32 %v9145, 7
  %v9147 = vsub.s32 %v9144, %v9146
  %v9148 = vrot.slane %v8097, %v9147
  %v9150 = vunpack.c.l.s4 1985246804
  %v9151 = vunpack.c.0.s8 %v9150
  %v9152 = vlaneseq
  %v9153 = vshrl.u32 %v9152, 7
  %v9154 = vsub.s32 %v9151, %v9153
  %v9155 = vrot.slane %v8097, %v9154
  %v9157 = vunpack.c.l.s4 839922192
  %v9158 = vunpack.c.0.s8 %v9157
  %v9159 = vlaneseq
  %v9160 = vshrl.u32 %v9159, 7
  %v9161 = vsub.s32 %v9158, %v9160
  %v9162 = vrot.slane %v8098, %v9161
  %v9164 = vunpack.c.l.s4 1985246804
  %v9165 = vunpack.c.0.s8 %v9164
  %v9166 = vlaneseq
  %v9167 = vshrl.u32 %v9166, 7
  %v9168 = vsub.s32 %v9165, %v9167
  %v9169 = vrot.slane %v8098, %v9168
  %v9171 = vunpack.c.l.s4 839922192
  %v9172 = vunpack.c.0.s8 %v9171
  %v9173 = vlaneseq
  %v9174 = vshrl.u32 %v9173, 7
  %v9175 = vsub.s32 %v9172, %v9174
  %v9176 = vrot.slane %v8099, %v9175
  %v9178 = vunpack.c.l.s4 1985246804
  %v9179 = vunpack.c.0.s8 %v9178
  %v9180 = vlaneseq
  %v9181 = vshrl.u32 %v9180, 7
  %v9182 = vsub.s32 %v9179, %v9181
  %v9183 = vrot.slane %v8099, %v9182
  %v9185 = vunpack.c.l.s4 839922192
  %v9186 = vunpack.c.0.s8 %v9185
  %v9187 = vlaneseq
  %v9188 = vshrl.u32 %v9187, 7
  %v9189 = vsub.s32 %v9186, %v9188
  %v9190 = vrot.slane %v8100, %v9189
  %v9192 = vunpack.c.l.s4 1985246804
  %v9193 = vunpack.c.0.s8 %v9192
  %v9194 = vlaneseq
  %v9195 = vshrl.u32 %v9194, 7
  %v9196 = vsub.s32 %v9193, %v9195
  %v9197 = vrot.slane %v8100, %v9196
  %v9199 = vunpack.c.l.s4 839922192
  %v9200 = vunpack.c.0.s8 %v9199
  %v9201 = vlaneseq
  %v9202 = vshrl.u32 %v9201, 7
  %v9203 = vsub.s32 %v9200, %v9202
  %v9204 = vrot.slane %v8101, %v9203
  %v9206 = vunpack.c.l.s4 1985246804
  %v9207 = vunpack.c.0.s8 %v9206
  %v9208 = vlaneseq
  %v9209 = vshrl.u32 %v9208, 7
  %v9210 = vsub.s32 %v9207, %v9209
  %v9211 = vrot.slane %v8101, %v9210
  %v9213 = vunpack.c.l.s4 839922192
  %v9214 = vunpack.c.0.s8 %v9213
  %v9215 = vlaneseq
  %v9216 = vshrl.u32 %v9215, 7
  %v9217 = vsub.s32 %v9214, %v9216
  %v9218 = vrot.slane %v8102, %v9217
  %v9220 = vunpack.c.l.s4 1985246804
  %v9221 = vunpack.c.0.s8 %v9220
  %v9222 = vlaneseq
  %v9223 = vshrl.u32 %v9222, 7
  %v9224 = vsub.s32 %v9221, %v9223
  %v9225 = vrot.slane %v8102, %v9224
  %v9227 = vunpack.c.l.s4 839922192
  %v9228 = vunpack.c.0.s8 %v9227
  %v9229 = vlaneseq
  %v9230 = vshrl.u32 %v9229, 7
  %v9231 = vsub.s32 %v9228, %v9230
  %v9232 = vrot.slane %v8103, %v9231
  %v9234 = vunpack.c.l.s4 1985246804
  %v9235 = vunpack.c.0.s8 %v9234
  %v9236 = vlaneseq
  %v9237 = vshrl.u32 %v9236, 7
  %v9238 = vsub.s32 %v9235, %v9237
  %v9239 = vrot.slane %v8103, %v9238
  %v9241 = vunpack.c.l.s4 839922192
  %v9242 = vunpack.c.0.s8 %v9241
  %v9243 = vlaneseq
  %v9244 = vshrl.u32 %v9243, 7
  %v9245 = vsub.s32 %v9242, %v9244
  %v9246 = vrot.slane %v8104, %v9245
  %v9248 = vunpack.c.l.s4 1985246804
  %v9249 = vunpack.c.0.s8 %v9248
  %v9250 = vlaneseq
  %v9251 = vshrl.u32 %v9250, 7
  %v9252 = vsub.s32 %v9249, %v9251
  %v9253 = vrot.slane %v8104, %v9252
  %v9255 = vunpack.c.l.s4 839922192
  %v9256 = vunpack.c.0.s8 %v9255
  %v9257 = vlaneseq
  %v9258 = vshrl.u32 %v9257, 7
  %v9259 = vsub.s32 %v9256, %v9258
  %v9260 = vrot.slane %v8105, %v9259
  %v9262 = vunpack.c.l.s4 1985246804
  %v9263 = vunpack.c.0.s8 %v9262
  %v9264 = vlaneseq
  %v9265 = vshrl.u32 %v9264, 7
  %v9266 = vsub.s32 %v9263, %v9265
  %v9267 = vrot.slane %v8105, %v9266
  %v9269 = vunpack.c.l.s4 839922192
  %v9270 = vunpack.c.0.s8 %v9269
  %v9271 = vlaneseq
  %v9272 = vshrl.u32 %v9271, 7
  %v9273 = vsub.s32 %v9270, %v9272
  %v9274 = vrot.slane %v8106, %v9273
  %v9276 = vunpack.c.l.s4 1985246804
  %v9277 = vunpack.c.0.s8 %v9276
  %v9278 = vlaneseq
  %v9279 = vshrl.u32 %v9278, 7
  %v9280 = vsub.s32 %v9277, %v9279
  %v9281 = vrot.slane %v8106, %v9280
  %v9283 = vunpack.c.l.s4 839922192
  %v9284 = vunpack.c.0.s8 %v9283
  %v9285 = vlaneseq
  %v9286 = vshrl.u32 %v9285, 7
  %v9287 = vsub.s32 %v9284, %v9286
  %v9288 = vrot.slane %v8107, %v9287
  %v9290 = vunpack.c.l.s4 1985246804
  %v9291 = vunpack.c.0.s8 %v9290
  %v9292 = vlaneseq
  %v9293 = vshrl.u32 %v9292, 7
  %v9294 = vsub.s32 %v9291, %v9293
  %v9295 = vrot.slane %v8107, %v9294
  %v9297 = vunpack.c.l.s4 839922192
  %v9298 = vunpack.c.0.s8 %v9297
  %v9299 = vlaneseq
  %v9300 = vshrl.u32 %v9299, 7
  %v9301 = vsub.s32 %v9298, %v9300
  %v9302 = vrot.slane %v8108, %v9301
  %v9304 = vunpack.c.l.s4 1985246804
  %v9305 = vunpack.c.0.s8 %v9304
  %v9306 = vlaneseq
  %v9307 = vshrl.u32 %v9306, 7
  %v9308 = vsub.s32 %v9305, %v9307
  %v9309 = vrot.slane %v8108, %v9308
  %v9311 = vunpack.c.l.s4 839922192
  %v9312 = vunpack.c.0.s8 %v9311
  %v9313 = vlaneseq
  %v9314 = vshrl.u32 %v9313, 7
  %v9315 = vsub.s32 %v9312, %v9314
  %v9316 = vrot.slane %v8109, %v9315
  %v9318 = vunpack.c.l.s4 1985246804
  %v9319 = vunpack.c.0.s8 %v9318
  %v9320 = vlaneseq
  %v9321 = vshrl.u32 %v9320, 7
  %v9322 = vsub.s32 %v9319, %v9321
  %v9323 = vrot.slane %v8109, %v9322
  %v9325 = vunpack.c.l.s4 839922192
  %v9326 = vunpack.c.0.s8 %v9325
  %v9327 = vlaneseq
  %v9328 = vshrl.u32 %v9327, 7
  %v9329 = vsub.s32 %v9326, %v9328
  %v9330 = vrot.slane %v8110, %v9329
  %v9332 = vunpack.c.l.s4 1985246804
  %v9333 = vunpack.c.0.s8 %v9332
  %v9334 = vlaneseq
  %v9335 = vshrl.u32 %v9334, 7
  %v9336 = vsub.s32 %v9333, %v9335
  %v9337 = vrot.slane %v8110, %v9336
  %v9339 = vunpack.c.l.s4 839922192
  %v9340 = vunpack.c.0.s8 %v9339
  %v9341 = vlaneseq
  %v9342 = vshrl.u32 %v9341, 7
  %v9343 = vsub.s32 %v9340, %v9342
  %v9344 = vrot.slane %v8111, %v9343
  %v9346 = vunpack.c.l.s4 1985246804
  %v9347 = vunpack.c.0.s8 %v9346
  %v9348 = vlaneseq
  %v9349 = vshrl.u32 %v9348, 7
  %v9350 = vsub.s32 %v9347, %v9349
  %v9351 = vrot.slane %v8111, %v9350
  %v9353 = vunpack.c.l.s4 839922192
  %v9354 = vunpack.c.0.s8 %v9353
  %v9355 = vlaneseq
  %v9356 = vshrl.u32 %v9355, 7
  %v9357 = vsub.s32 %v9354, %v9356
  %v9358 = vrot.slane %v8112, %v9357
  %v9360 = vunpack.c.l.s4 1985246804
  %v9361 = vunpack.c.0.s8 %v9360
  %v9362 = vlaneseq
  %v9363 = vshrl.u32 %v9362, 7
  %v9364 = vsub.s32 %v9361, %v9363
  %v9365 = vrot.slane %v8112, %v9364
  %v9367 = vunpack.c.l.s4 839922192
  %v9368 = vunpack.c.0.s8 %v9367
  %v9369 = vlaneseq
  %v9370 = vshrl.u32 %v9369, 7
  %v9371 = vsub.s32 %v9368, %v9370
  %v9372 = vrot.slane %v8113, %v9371
  %v9374 = vunpack.c.l.s4 1985246804
  %v9375 = vunpack.c.0.s8 %v9374
  %v9376 = vlaneseq
  %v9377 = vshrl.u32 %v9376, 7
  %v9378 = vsub.s32 %v9375, %v9377
  %v9379 = vrot.slane %v8113, %v9378
  %v9381 = vunpack.c.l.s4 839922192
  %v9382 = vunpack.c.0.s8 %v9381
  %v9383 = vlaneseq
  %v9384 = vshrl.u32 %v9383, 7
  %v9385 = vsub.s32 %v9382, %v9384
  %v9386 = vrot.slane %v8114, %v9385
  %v9388 = vunpack.c.l.s4 1985246804
  %v9389 = vunpack.c.0.s8 %v9388
  %v9390 = vlaneseq
  %v9391 = vshrl.u32 %v9390, 7
  %v9392 = vsub.s32 %v9389, %v9391
  %v9393 = vrot.slane %v8114, %v9392
  %v9395 = vunpack.c.l.s4 839922192
  %v9396 = vunpack.c.0.s8 %v9395
  %v9397 = vlaneseq
  %v9398 = vshrl.u32 %v9397, 7
  %v9399 = vsub.s32 %v9396, %v9398
  %v9400 = vrot.slane %v8115, %v9399
  %v9402 = vunpack.c.l.s4 1985246804
  %v9403 = vunpack.c.0.s8 %v9402
  %v9404 = vlaneseq
  %v9405 = vshrl.u32 %v9404, 7
  %v9406 = vsub.s32 %v9403, %v9405
  %v9407 = vrot.slane %v8115, %v9406
  %v9409 = vunpack.c.l.s4 839922192
  %v9410 = vunpack.c.0.s8 %v9409
  %v9411 = vlaneseq
  %v9412 = vshrl.u32 %v9411, 7
  %v9413 = vsub.s32 %v9410, %v9412
  %v9414 = vrot.slane %v8116, %v9413
  %v9416 = vunpack.c.l.s4 1985246804
  %v9417 = vunpack.c.0.s8 %v9416
  %v9418 = vlaneseq
  %v9419 = vshrl.u32 %v9418, 7
  %v9420 = vsub.s32 %v9417, %v9419
  %v9421 = vrot.slane %v8116, %v9420
  %v9423 = vunpack.c.l.s4 839922192
  %v9424 = vunpack.c.0.s8 %v9423
  %v9425 = vlaneseq
  %v9426 = vshrl.u32 %v9425, 7
  %v9427 = vsub.s32 %v9424, %v9426
  %v9428 = vrot.slane %v8117, %v9427
  %v9430 = vunpack.c.l.s4 1985246804
  %v9431 = vunpack.c.0.s8 %v9430
  %v9432 = vlaneseq
  %v9433 = vshrl.u32 %v9432, 7
  %v9434 = vsub.s32 %v9431, %v9433
  %v9435 = vrot.slane %v8117, %v9434
  %v9437 = vunpack.c.l.s4 839922192
  %v9438 = vunpack.c.0.s8 %v9437
  %v9439 = vlaneseq
  %v9440 = vshrl.u32 %v9439, 7
  %v9441 = vsub.s32 %v9438, %v9440
  %v9442 = vrot.slane %v8118, %v9441
  %v9444 = vunpack.c.l.s4 1985246804
  %v9445 = vunpack.c.0.s8 %v9444
  %v9446 = vlaneseq
  %v9447 = vshrl.u32 %v9446, 7
  %v9448 = vsub.s32 %v9445, %v9447
  %v9449 = vrot.slane %v8118, %v9448
  %v9451 = vunpack.c.l.s4 839922192
  %v9452 = vunpack.c.0.s8 %v9451
  %v9453 = vlaneseq
  %v9454 = vshrl.u32 %v9453, 7
  %v9455 = vsub.s32 %v9452, %v9454
  %v9456 = vrot.slane %v8119, %v9455
  %v9458 = vunpack.c.l.s4 1985246804
  %v9459 = vunpack.c.0.s8 %v9458
  %v9460 = vlaneseq
  %v9461 = vshrl.u32 %v9460, 7
  %v9462 = vsub.s32 %v9459, %v9461
  %v9463 = vrot.slane %v8119, %v9462
  %v9465 = vunpack.c.l.s4 839922192
  %v9466 = vunpack.c.0.s8 %v9465
  %v9467 = vlaneseq
  %v9468 = vshrl.u32 %v9467, 7
  %v9469 = vsub.s32 %v9466, %v9468
  %v9470 = vrot.slane %v8120, %v9469
  %v9472 = vunpack.c.l.s4 1985246804
  %v9473 = vunpack.c.0.s8 %v9472
  %v9474 = vlaneseq
  %v9475 = vshrl.u32 %v9474, 7
  %v9476 = vsub.s32 %v9473, %v9475
  %v9477 = vrot.slane %v8120, %v9476
  %v9479 = vunpack.c.l.s4 839922192
  %v9480 = vunpack.c.0.s8 %v9479
  %v9481 = vlaneseq
  %v9482 = vshrl.u32 %v9481, 7
  %v9483 = vsub.s32 %v9480, %v9482
  %v9484 = vrot.slane %v8121, %v9483
  %v9486 = vunpack.c.l.s4 1985246804
  %v9487 = vunpack.c.0.s8 %v9486
  %v9488 = vlaneseq
  %v9489 = vshrl.u32 %v9488, 7
  %v9490 = vsub.s32 %v9487, %v9489
  %v9491 = vrot.slane %v8121, %v9490
  %v9493 = vunpack.c.l.s4 839922192
  %v9494 = vunpack.c.0.s8 %v9493
  %v9495 = vlaneseq
  %v9496 = vshrl.u32 %v9495, 7
  %v9497 = vsub.s32 %v9494, %v9496
  %v9498 = vrot.slane %v8122, %v9497
  %v9500 = vunpack.c.l.s4 1985246804
  %v9501 = vunpack.c.0.s8 %v9500
  %v9502 = vlaneseq
  %v9503 = vshrl.u32 %v9502, 7
  %v9504 = vsub.s32 %v9501, %v9503
  %v9505 = vrot.slane %v8122, %v9504
  %v9507 = vunpack.c.l.s4 839922192
  %v9508 = vunpack.c.0.s8 %v9507
  %v9509 = vlaneseq
  %v9510 = vshrl.u32 %v9509, 7
  %v9511 = vsub.s32 %v9508, %v9510
  %v9512 = vrot.slane %v8123, %v9511
  %v9514 = vunpack.c.l.s4 1985246804
  %v9515 = vunpack.c.0.s8 %v9514
  %v9516 = vlaneseq
  %v9517 = vshrl.u32 %v9516, 7
  %v9518 = vsub.s32 %v9515, %v9517
  %v9519 = vrot.slane %v8123, %v9518
  %v9521 = vunpack.c.l.s4 839922192
  %v9522 = vunpack.c.0.s8 %v9521
  %v9523 = vlaneseq
  %v9524 = vshrl.u32 %v9523, 7
  %v9525 = vsub.s32 %v9522, %v9524
  %v9526 = vrot.slane %v8124, %v9525
  %v9528 = vunpack.c.l.s4 1985246804
  %v9529 = vunpack.c.0.s8 %v9528
  %v9530 = vlaneseq
  %v9531 = vshrl.u32 %v9530, 7
  %v9532 = vsub.s32 %v9529, %v9531
  %v9533 = vrot.slane %v8124, %v9532
  %v9535 = vunpack.c.l.s4 839922192
  %v9536 = vunpack.c.0.s8 %v9535
  %v9537 = vlaneseq
  %v9538 = vshrl.u32 %v9537, 7
  %v9539 = vsub.s32 %v9536, %v9538
  %v9540 = vrot.slane %v8125, %v9539
  %v9542 = vunpack.c.l.s4 1985246804
  %v9543 = vunpack.c.0.s8 %v9542
  %v9544 = vlaneseq
  %v9545 = vshrl.u32 %v9544, 7
  %v9546 = vsub.s32 %v9543, %v9545
  %v9547 = vrot.slane %v8125, %v9546
  %v9549 = vunpack.c.l.s4 839922192
  %v9550 = vunpack.c.0.s8 %v9549
  %v9551 = vlaneseq
  %v9552 = vshrl.u32 %v9551, 7
  %v9553 = vsub.s32 %v9550, %v9552
  %v9554 = vrot.slane %v8126, %v9553
  %v9556 = vunpack.c.l.s4 1985246804
  %v9557 = vunpack.c.0.s8 %v9556
  %v9558 = vlaneseq
  %v9559 = vshrl.u32 %v9558, 7
  %v9560 = vsub.s32 %v9557, %v9559
  %v9561 = vrot.slane %v8126, %v9560
  %v9563 = vunpack.c.l.s4 839922192
  %v9564 = vunpack.c.0.s8 %v9563
  %v9565 = vlaneseq
  %v9566 = vshrl.u32 %v9565, 7
  %v9567 = vsub.s32 %v9564, %v9566
  %v9568 = vrot.slane %v8127, %v9567
  %v9570 = vunpack.c.l.s4 1985246804
  %v9571 = vunpack.c.0.s8 %v9570
  %v9572 = vlaneseq
  %v9573 = vshrl.u32 %v9572, 7
  %v9574 = vsub.s32 %v9571, %v9573
  %v9575 = vrot.slane %v8127, %v9574
  %v9577 = vunpack.c.l.s4 839922192
  %v9578 = vunpack.c.0.s8 %v9577
  %v9579 = vlaneseq
  %v9580 = vshrl.u32 %v9579, 7
  %v9581 = vsub.s32 %v9578, %v9580
  %v9582 = vrot.slane %v8128, %v9581
  %v9584 = vunpack.c.l.s4 1985246804
  %v9585 = vunpack.c.0.s8 %v9584
  %v9586 = vlaneseq
  %v9587 = vshrl.u32 %v9586, 7
  %v9588 = vsub.s32 %v9585, %v9587
  %v9589 = vrot.slane %v8128, %v9588
  %v9591 = vunpack.c.l.s4 839922192
  %v9592 = vunpack.c.0.s8 %v9591
  %v9593 = vlaneseq
  %v9594 = vshrl.u32 %v9593, 7
  %v9595 = vsub.s32 %v9592, %v9594
  %v9596 = vrot.slane %v8129, %v9595
  %v9598 = vunpack.c.l.s4 1985246804
  %v9599 = vunpack.c.0.s8 %v9598
  %v9600 = vlaneseq
  %v9601 = vshrl.u32 %v9600, 7
  %v9602 = vsub.s32 %v9599, %v9601
  %v9603 = vrot.slane %v8129, %v9602
  %v9605 = vunpack.c.l.s4 839922192
  %v9606 = vunpack.c.0.s8 %v9605
  %v9607 = vlaneseq
  %v9608 = vshrl.u32 %v9607, 7
  %v9609 = vsub.s32 %v9606, %v9608
  %v9610 = vrot.slane %v8130, %v9609
  %v9612 = vunpack.c.l.s4 1985246804
  %v9613 = vunpack.c.0.s8 %v9612
  %v9614 = vlaneseq
  %v9615 = vshrl.u32 %v9614, 7
  %v9616 = vsub.s32 %v9613, %v9615
  %v9617 = vrot.slane %v8130, %v9616
  %v9619 = vunpack.c.l.s4 839922192
  %v9620 = vunpack.c.0.s8 %v9619
  %v9621 = vlaneseq
  %v9622 = vshrl.u32 %v9621, 7
  %v9623 = vsub.s32 %v9620, %v9622
  %v9624 = vrot.slane %v8131, %v9623
  %v9626 = vunpack.c.l.s4 1985246804
  %v9627 = vunpack.c.0.s8 %v9626
  %v9628 = vlaneseq
  %v9629 = vshrl.u32 %v9628, 7
  %v9630 = vsub.s32 %v9627, %v9629
  %v9631 = vrot.slane %v8131, %v9630
  %v9633 = vunpack.c.l.s4 839922192
  %v9634 = vunpack.c.0.s8 %v9633
  %v9635 = vlaneseq
  %v9636 = vshrl.u32 %v9635, 7
  %v9637 = vsub.s32 %v9634, %v9636
  %v9638 = vrot.slane %v8132, %v9637
  %v9640 = vunpack.c.l.s4 1985246804
  %v9641 = vunpack.c.0.s8 %v9640
  %v9642 = vlaneseq
  %v9643 = vshrl.u32 %v9642, 7
  %v9644 = vsub.s32 %v9641, %v9643
  %v9645 = vrot.slane %v8132, %v9644
  %v9647 = vunpack.c.l.s4 839922192
  %v9648 = vunpack.c.0.s8 %v9647
  %v9649 = vlaneseq
  %v9650 = vshrl.u32 %v9649, 7
  %v9651 = vsub.s32 %v9648, %v9650
  %v9652 = vrot.slane %v8133, %v9651
  %v9654 = vunpack.c.l.s4 1985246804
  %v9655 = vunpack.c.0.s8 %v9654
  %v9656 = vlaneseq
  %v9657 = vshrl.u32 %v9656, 7
  %v9658 = vsub.s32 %v9655, %v9657
  %v9659 = vrot.slane %v8133, %v9658
  %v9661 = vunpack.c.l.s4 839922192
  %v9662 = vunpack.c.0.s8 %v9661
  %v9663 = vlaneseq
  %v9664 = vshrl.u32 %v9663, 7
  %v9665 = vsub.s32 %v9662, %v9664
  %v9666 = vrot.slane %v8134, %v9665
  %v9668 = vunpack.c.l.s4 1985246804
  %v9669 = vunpack.c.0.s8 %v9668
  %v9670 = vlaneseq
  %v9671 = vshrl.u32 %v9670, 7
  %v9672 = vsub.s32 %v9669, %v9671
  %v9673 = vrot.slane %v8134, %v9672
  %v9675 = vunpack.c.l.s4 839922192
  %v9676 = vunpack.c.0.s8 %v9675
  %v9677 = vlaneseq
  %v9678 = vshrl.u32 %v9677, 7
  %v9679 = vsub.s32 %v9676, %v9678
  %v9680 = vrot.slane %v8135, %v9679
  %v9682 = vunpack.c.l.s4 1985246804
  %v9683 = vunpack.c.0.s8 %v9682
  %v9684 = vlaneseq
  %v9685 = vshrl.u32 %v9684, 7
  %v9686 = vsub.s32 %v9683, %v9685
  %v9687 = vrot.slane %v8135, %v9686
  %v9689 = vunpack.c.l.s4 839922192
  %v9690 = vunpack.c.0.s8 %v9689
  %v9691 = vlaneseq
  %v9692 = vshrl.u32 %v9691, 7
  %v9693 = vsub.s32 %v9690, %v9692
  %v9694 = vrot.slane %v8136, %v9693
  %v9696 = vunpack.c.l.s4 1985246804
  %v9697 = vunpack.c.0.s8 %v9696
  %v9698 = vlaneseq
  %v9699 = vshrl.u32 %v9698, 7
  %v9700 = vsub.s32 %v9697, %v9699
  %v9701 = vrot.slane %v8136, %v9700
  %v9703 = vunpack.c.l.s4 839922192
  %v9704 = vunpack.c.0.s8 %v9703
  %v9705 = vlaneseq
  %v9706 = vshrl.u32 %v9705, 7
  %v9707 = vsub.s32 %v9704, %v9706
  %v9708 = vrot.slane %v8137, %v9707
  %v9710 = vunpack.c.l.s4 1985246804
  %v9711 = vunpack.c.0.s8 %v9710
  %v9712 = vlaneseq
  %v9713 = vshrl.u32 %v9712, 7
  %v9714 = vsub.s32 %v9711, %v9713
  %v9715 = vrot.slane %v8137, %v9714
  %v9717 = vunpack.c.l.s4 839922192
  %v9718 = vunpack.c.0.s8 %v9717
  %v9719 = vlaneseq
  %v9720 = vshrl.u32 %v9719, 7
  %v9721 = vsub.s32 %v9718, %v9720
  %v9722 = vrot.slane %v8138, %v9721
  %v9724 = vunpack.c.l.s4 1985246804
  %v9725 = vunpack.c.0.s8 %v9724
  %v9726 = vlaneseq
  %v9727 = vshrl.u32 %v9726, 7
  %v9728 = vsub.s32 %v9725, %v9727
  %v9729 = vrot.slane %v8138, %v9728
  %v9731 = vunpack.c.l.s4 839922192
  %v9732 = vunpack.c.0.s8 %v9731
  %v9733 = vlaneseq
  %v9734 = vshrl.u32 %v9733, 7
  %v9735 = vsub.s32 %v9732, %v9734
  %v9736 = vrot.slane %v8139, %v9735
  %v9738 = vunpack.c.l.s4 1985246804
  %v9739 = vunpack.c.0.s8 %v9738
  %v9740 = vlaneseq
  %v9741 = vshrl.u32 %v9740, 7
  %v9742 = vsub.s32 %v9739, %v9741
  %v9743 = vrot.slane %v8139, %v9742
  %v9745 = vunpack.c.l.s4 839922192
  %v9746 = vunpack.c.0.s8 %v9745
  %v9747 = vlaneseq
  %v9748 = vshrl.u32 %v9747, 7
  %v9749 = vsub.s32 %v9746, %v9748
  %v9750 = vrot.slane %v8140, %v9749
  %v9752 = vunpack.c.l.s4 1985246804
  %v9753 = vunpack.c.0.s8 %v9752
  %v9754 = vlaneseq
  %v9755 = vshrl.u32 %v9754, 7
  %v9756 = vsub.s32 %v9753, %v9755
  %v9757 = vrot.slane %v8140, %v9756
  %v9759 = vunpack.c.l.s4 839922192
  %v9760 = vunpack.c.0.s8 %v9759
  %v9761 = vlaneseq
  %v9762 = vshrl.u32 %v9761, 7
  %v9763 = vsub.s32 %v9760, %v9762
  %v9764 = vrot.slane %v8141, %v9763
  %v9766 = vunpack.c.l.s4 1985246804
  %v9767 = vunpack.c.0.s8 %v9766
  %v9768 = vlaneseq
  %v9769 = vshrl.u32 %v9768, 7
  %v9770 = vsub.s32 %v9767, %v9769
  %v9771 = vrot.slane %v8141, %v9770
  %v9773 = vunpack.c.l.s4 839922192
  %v9774 = vunpack.c.0.s8 %v9773
  %v9775 = vlaneseq
  %v9776 = vshrl.u32 %v9775, 7
  %v9777 = vsub.s32 %v9774, %v9776
  %v9778 = vrot.slane %v8142, %v9777
  %v9780 = vunpack.c.l.s4 1985246804
  %v9781 = vunpack.c.0.s8 %v9780
  %v9782 = vlaneseq
  %v9783 = vshrl.u32 %v9782, 7
  %v9784 = vsub.s32 %v9781, %v9783
  %v9785 = vrot.slane %v8142, %v9784
  %v9787 = vunpack.c.l.s4 839922192
  %v9788 = vunpack.c.0.s8 %v9787
  %v9789 = vlaneseq
  %v9790 = vshrl.u32 %v9789, 7
  %v9791 = vsub.s32 %v9788, %v9790
  %v9792 = vrot.slane %v8143, %v9791
  %v9794 = vunpack.c.l.s4 1985246804
  %v9795 = vunpack.c.0.s8 %v9794
  %v9796 = vlaneseq
  %v9797 = vshrl.u32 %v9796, 7
  %v9798 = vsub.s32 %v9795, %v9797
  %v9799 = vrot.slane %v8143, %v9798
  %v9801 = vunpack.c.l.s4 839922192
  %v9802 = vunpack.c.0.s8 %v9801
  %v9803 = vlaneseq
  %v9804 = vshrl.u32 %v9803, 7
  %v9805 = vsub.s32 %v9802, %v9804
  %v9806 = vrot.slane %v8144, %v9805
  %v9808 = vunpack.c.l.s4 1985246804
  %v9809 = vunpack.c.0.s8 %v9808
  %v9810 = vlaneseq
  %v9811 = vshrl.u32 %v9810, 7
  %v9812 = vsub.s32 %v9809, %v9811
  %v9813 = vrot.slane %v8144, %v9812
  %v9815 = vunpack.c.l.s4 839922192
  %v9816 = vunpack.c.0.s8 %v9815
  %v9817 = vlaneseq
  %v9818 = vshrl.u32 %v9817, 7
  %v9819 = vsub.s32 %v9816, %v9818
  %v9820 = vrot.slane %v8145, %v9819
  %v9822 = vunpack.c.l.s4 1985246804
  %v9823 = vunpack.c.0.s8 %v9822
  %v9824 = vlaneseq
  %v9825 = vshrl.u32 %v9824, 7
  %v9826 = vsub.s32 %v9823, %v9825
  %v9827 = vrot.slane %v8145, %v9826
  %v9829 = vunpack.c.l.s4 839922192
  %v9830 = vunpack.c.0.s8 %v9829
  %v9831 = vlaneseq
  %v9832 = vshrl.u32 %v9831, 7
  %v9833 = vsub.s32 %v9830, %v9832
  %v9834 = vrot.slane %v8146, %v9833
  %v9836 = vunpack.c.l.s4 1985246804
  %v9837 = vunpack.c.0.s8 %v9836
  %v9838 = vlaneseq
  %v9839 = vshrl.u32 %v9838, 7
  %v9840 = vsub.s32 %v9837, %v9839
  %v9841 = vrot.slane %v8146, %v9840
  %v9843 = vunpack.c.l.s4 839922192
  %v9844 = vunpack.c.0.s8 %v9843
  %v9845 = vlaneseq
  %v9846 = vshrl.u32 %v9845, 7
  %v9847 = vsub.s32 %v9844, %v9846
  %v9848 = vrot.slane %v8147, %v9847
  %v9850 = vunpack.c.l.s4 1985246804
  %v9851 = vunpack.c.0.s8 %v9850
  %v9852 = vlaneseq
  %v9853 = vshrl.u32 %v9852, 7
  %v9854 = vsub.s32 %v9851, %v9853
  %v9855 = vrot.slane %v8147, %v9854
  %v9857 = vunpack.c.l.s4 839922192
  %v9858 = vunpack.c.0.s8 %v9857
  %v9859 = vlaneseq
  %v9860 = vshrl.u32 %v9859, 7
  %v9861 = vsub.s32 %v9858, %v9860
  %v9862 = vrot.slane %v8148, %v9861
  %v9864 = vunpack.c.l.s4 1985246804
  %v9865 = vunpack.c.0.s8 %v9864
  %v9866 = vlaneseq
  %v9867 = vshrl.u32 %v9866, 7
  %v9868 = vsub.s32 %v9865, %v9867
  %v9869 = vrot.slane %v8148, %v9868
  %v9871 = vunpack.c.l.s4 839922192
  %v9872 = vunpack.c.0.s8 %v9871
  %v9873 = vlaneseq
  %v9874 = vshrl.u32 %v9873, 7
  %v9875 = vsub.s32 %v9872, %v9874
  %v9876 = vrot.slane %v8149, %v9875
  %v9878 = vunpack.c.l.s4 1985246804
  %v9879 = vunpack.c.0.s8 %v9878
  %v9880 = vlaneseq
  %v9881 = vshrl.u32 %v9880, 7
  %v9882 = vsub.s32 %v9879, %v9881
  %v9883 = vrot.slane %v8149, %v9882
  %v9885 = vunpack.c.l.s4 839922192
  %v9886 = vunpack.c.0.s8 %v9885
  %v9887 = vlaneseq
  %v9888 = vshrl.u32 %v9887, 7
  %v9889 = vsub.s32 %v9886, %v9888
  %v9890 = vrot.slane %v8150, %v9889
  %v9892 = vunpack.c.l.s4 1985246804
  %v9893 = vunpack.c.0.s8 %v9892
  %v9894 = vlaneseq
  %v9895 = vshrl.u32 %v9894, 7
  %v9896 = vsub.s32 %v9893, %v9895
  %v9897 = vrot.slane %v8150, %v9896
  %v9899 = vunpack.c.l.s4 839922192
  %v9900 = vunpack.c.0.s8 %v9899
  %v9901 = vlaneseq
  %v9902 = vshrl.u32 %v9901, 7
  %v9903 = vsub.s32 %v9900, %v9902
  %v9904 = vrot.slane %v8151, %v9903
  %v9906 = vunpack.c.l.s4 1985246804
  %v9907 = vunpack.c.0.s8 %v9906
  %v9908 = vlaneseq
  %v9909 = vshrl.u32 %v9908, 7
  %v9910 = vsub.s32 %v9907, %v9909
  %v9911 = vrot.slane %v8151, %v9910
  %v9913 = vunpack.c.l.s4 839922192
  %v9914 = vunpack.c.0.s8 %v9913
  %v9915 = vlaneseq
  %v9916 = vshrl.u32 %v9915, 7
  %v9917 = vsub.s32 %v9914, %v9916
  %v9918 = vrot.slane %v8152, %v9917
  %v9920 = vunpack.c.l.s4 1985246804
  %v9921 = vunpack.c.0.s8 %v9920
  %v9922 = vlaneseq
  %v9923 = vshrl.u32 %v9922, 7
  %v9924 = vsub.s32 %v9921, %v9923
  %v9925 = vrot.slane %v8152, %v9924
  %v9927 = vunpack.c.l.s4 839922192
  %v9928 = vunpack.c.0.s8 %v9927
  %v9929 = vlaneseq
  %v9930 = vshrl.u32 %v9929, 7
  %v9931 = vsub.s32 %v9928, %v9930
  %v9932 = vrot.slane %v8153, %v9931
  %v9934 = vunpack.c.l.s4 1985246804
  %v9935 = vunpack.c.0.s8 %v9934
  %v9936 = vlaneseq
  %v9937 = vshrl.u32 %v9936, 7
  %v9938 = vsub.s32 %v9935, %v9937
  %v9939 = vrot.slane %v8153, %v9938
  %v9941 = vunpack.c.l.s4 839922192
  %v9942 = vunpack.c.0.s8 %v9941
  %v9943 = vlaneseq
  %v9944 = vshrl.u32 %v9943, 7
  %v9945 = vsub.s32 %v9942, %v9944
  %v9946 = vrot.slane %v8154, %v9945
  %v9948 = vunpack.c.l.s4 1985246804
  %v9949 = vunpack.c.0.s8 %v9948
  %v9950 = vlaneseq
  %v9951 = vshrl.u32 %v9950, 7
  %v9952 = vsub.s32 %v9949, %v9951
  %v9953 = vrot.slane %v8154, %v9952
  %v9955 = vunpack.c.l.s4 839922192
  %v9956 = vunpack.c.0.s8 %v9955
  %v9957 = vlaneseq
  %v9958 = vshrl.u32 %v9957, 7
  %v9959 = vsub.s32 %v9956, %v9958
  %v9960 = vrot.slane %v8155, %v9959
  %v9962 = vunpack.c.l.s4 1985246804
  %v9963 = vunpack.c.0.s8 %v9962
  %v9964 = vlaneseq
  %v9965 = vshrl.u32 %v9964, 7
  %v9966 = vsub.s32 %v9963, %v9965
  %v9967 = vrot.slane %v8155, %v9966
  %v9969 = vunpack.c.l.s4 839922192
  %v9970 = vunpack.c.0.s8 %v9969
  %v9971 = vlaneseq
  %v9972 = vshrl.u32 %v9971, 7
  %v9973 = vsub.s32 %v9970, %v9972
  %v9974 = vrot.slane %v8156, %v9973
  %v9976 = vunpack.c.l.s4 1985246804
  %v9977 = vunpack.c.0.s8 %v9976
  %v9978 = vlaneseq
  %v9979 = vshrl.u32 %v9978, 7
  %v9980 = vsub.s32 %v9977, %v9979
  %v9981 = vrot.slane %v8156, %v9980
  %v9983 = vunpack.c.l.s4 839922192
  %v9984 = vunpack.c.0.s8 %v9983
  %v9985 = vlaneseq
  %v9986 = vshrl.u32 %v9985, 7
  %v9987 = vsub.s32 %v9984, %v9986
  %v9988 = vrot.slane %v8157, %v9987
  %v9990 = vunpack.c.l.s4 1985246804
  %v9991 = vunpack.c.0.s8 %v9990
  %v9992 = vlaneseq
  %v9993 = vshrl.u32 %v9992, 7
  %v9994 = vsub.s32 %v9991, %v9993
  %v9995 = vrot.slane %v8157, %v9994
  %v9997 = vunpack.c.l.s4 839922192
  %v9998 = vunpack.c.0.s8 %v9997
  %v9999 = vlaneseq
  %v10000 = vshrl.u32 %v9999, 7
  %v10001 = vsub.s32 %v9998, %v10000
  %v10002 = vrot.slane %v8158, %v10001
  %v10004 = vunpack.c.l.s4 1985246804
  %v10005 = vunpack.c.0.s8 %v10004
  %v10006 = vlaneseq
  %v10007 = vshrl.u32 %v10006, 7
  %v10008 = vsub.s32 %v10005, %v10007
  %v10009 = vrot.slane %v8158, %v10008
  %v10011 = vunpack.c.l.s4 839922192
  %v10012 = vunpack.c.0.s8 %v10011
  %v10013 = vlaneseq
  %v10014 = vshrl.u32 %v10013, 7
  %v10015 = vsub.s32 %v10012, %v10014
  %v10016 = vrot.slane %v8159, %v10015
  %v10018 = vunpack.c.l.s4 1985246804
  %v10019 = vunpack.c.0.s8 %v10018
  %v10020 = vlaneseq
  %v10021 = vshrl.u32 %v10020, 7
  %v10022 = vsub.s32 %v10019, %v10021
  %v10023 = vrot.slane %v8159, %v10022
  %v10025 = vunpack.c.l.s4 839922192
  %v10026 = vunpack.c.0.s8 %v10025
  %v10027 = vlaneseq
  %v10028 = vshrl.u32 %v10027, 7
  %v10029 = vsub.s32 %v10026, %v10028
  %v10030 = vrot.slane %v8160, %v10029
  %v10032 = vunpack.c.l.s4 1985246804
  %v10033 = vunpack.c.0.s8 %v10032
  %v10034 = vlaneseq
  %v10035 = vshrl.u32 %v10034, 7
  %v10036 = vsub.s32 %v10033, %v10035
  %v10037 = vrot.slane %v8160, %v10036
  %v10039 = vunpack.c.l.s4 839922192
  %v10040 = vunpack.c.0.s8 %v10039
  %v10041 = vlaneseq
  %v10042 = vshrl.u32 %v10041, 7
  %v10043 = vsub.s32 %v10040, %v10042
  %v10044 = vrot.slane %v8161, %v10043
  %v10046 = vunpack.c.l.s4 1985246804
  %v10047 = vunpack.c.0.s8 %v10046
  %v10048 = vlaneseq
  %v10049 = vshrl.u32 %v10048, 7
  %v10050 = vsub.s32 %v10047, %v10049
  %v10051 = vrot.slane %v8161, %v10050
  %v10053 = vunpack.c.l.s4 839922192
  %v10054 = vunpack.c.0.s8 %v10053
  %v10055 = vlaneseq
  %v10056 = vshrl.u32 %v10055, 7
  %v10057 = vsub.s32 %v10054, %v10056
  %v10058 = vrot.slane %v8162, %v10057
  %v10060 = vunpack.c.l.s4 1985246804
  %v10061 = vunpack.c.0.s8 %v10060
  %v10062 = vlaneseq
  %v10063 = vshrl.u32 %v10062, 7
  %v10064 = vsub.s32 %v10061, %v10063
  %v10065 = vrot.slane %v8162, %v10064
  %v10067 = vunpack.c.l.s4 839922192
  %v10068 = vunpack.c.0.s8 %v10067
  %v10069 = vlaneseq
  %v10070 = vshrl.u32 %v10069, 7
  %v10071 = vsub.s32 %v10068, %v10070
  %v10072 = vrot.slane %v8163, %v10071
  %v10074 = vunpack.c.l.s4 1985246804
  %v10075 = vunpack.c.0.s8 %v10074
  %v10076 = vlaneseq
  %v10077 = vshrl.u32 %v10076, 7
  %v10078 = vsub.s32 %v10075, %v10077
  %v10079 = vrot.slane %v8163, %v10078
  %v10081 = vunpack.c.l.s4 839922192
  %v10082 = vunpack.c.0.s8 %v10081
  %v10083 = vlaneseq
  %v10084 = vshrl.u32 %v10083, 7
  %v10085 = vsub.s32 %v10082, %v10084
  %v10086 = vrot.slane %v8164, %v10085
  %v10088 = vunpack.c.l.s4 1985246804
  %v10089 = vunpack.c.0.s8 %v10088
  %v10090 = vlaneseq
  %v10091 = vshrl.u32 %v10090, 7
  %v10092 = vsub.s32 %v10089, %v10091
  %v10093 = vrot.slane %v8164, %v10092
  %v10095 = vunpack.c.l.s4 839922192
  %v10096 = vunpack.c.0.s8 %v10095
  %v10097 = vlaneseq
  %v10098 = vshrl.u32 %v10097, 7
  %v10099 = vsub.s32 %v10096, %v10098
  %v10100 = vrot.slane %v8165, %v10099
  %v10102 = vunpack.c.l.s4 1985246804
  %v10103 = vunpack.c.0.s8 %v10102
  %v10104 = vlaneseq
  %v10105 = vshrl.u32 %v10104, 7
  %v10106 = vsub.s32 %v10103, %v10105
  %v10107 = vrot.slane %v8165, %v10106
  %v10109 = vunpack.c.l.s4 839922192
  %v10110 = vunpack.c.0.s8 %v10109
  %v10111 = vlaneseq
  %v10112 = vshrl.u32 %v10111, 7
  %v10113 = vsub.s32 %v10110, %v10112
  %v10114 = vrot.slane %v8166, %v10113
  %v10116 = vunpack.c.l.s4 1985246804
  %v10117 = vunpack.c.0.s8 %v10116
  %v10118 = vlaneseq
  %v10119 = vshrl.u32 %v10118, 7
  %v10120 = vsub.s32 %v10117, %v10119
  %v10121 = vrot.slane %v8166, %v10120
  %v10123 = vunpack.c.l.s4 839922192
  %v10124 = vunpack.c.0.s8 %v10123
  %v10125 = vlaneseq
  %v10126 = vshrl.u32 %v10125, 7
  %v10127 = vsub.s32 %v10124, %v10126
  %v10128 = vrot.slane %v8167, %v10127
  %v10130 = vunpack.c.l.s4 1985246804
  %v10131 = vunpack.c.0.s8 %v10130
  %v10132 = vlaneseq
  %v10133 = vshrl.u32 %v10132, 7
  %v10134 = vsub.s32 %v10131, %v10133
  %v10135 = vrot.slane %v8167, %v10134
  %v10137 = vunpack.c.l.s4 839922192
  %v10138 = vunpack.c.0.s8 %v10137
  %v10139 = vlaneseq
  %v10140 = vshrl.u32 %v10139, 7
  %v10141 = vsub.s32 %v10138, %v10140
  %v10142 = vrot.slane %v8168, %v10141
  %v10144 = vunpack.c.l.s4 1985246804
  %v10145 = vunpack.c.0.s8 %v10144
  %v10146 = vlaneseq
  %v10147 = vshrl.u32 %v10146, 7
  %v10148 = vsub.s32 %v10145, %v10147
  %v10149 = vrot.slane %v8168, %v10148
  %v10151 = vunpack.c.l.s4 839922192
  %v10152 = vunpack.c.0.s8 %v10151
  %v10153 = vlaneseq
  %v10154 = vshrl.u32 %v10153, 7
  %v10155 = vsub.s32 %v10152, %v10154
  %v10156 = vrot.slane %v8169, %v10155
  %v10158 = vunpack.c.l.s4 1985246804
  %v10159 = vunpack.c.0.s8 %v10158
  %v10160 = vlaneseq
  %v10161 = vshrl.u32 %v10160, 7
  %v10162 = vsub.s32 %v10159, %v10161
  %v10163 = vrot.slane %v8169, %v10162
  %v10165 = vunpack.c.l.s4 839922192
  %v10166 = vunpack.c.0.s8 %v10165
  %v10167 = vlaneseq
  %v10168 = vshrl.u32 %v10167, 7
  %v10169 = vsub.s32 %v10166, %v10168
  %v10170 = vrot.slane %v8170, %v10169
  %v10172 = vunpack.c.l.s4 1985246804
  %v10173 = vunpack.c.0.s8 %v10172
  %v10174 = vlaneseq
  %v10175 = vshrl.u32 %v10174, 7
  %v10176 = vsub.s32 %v10173, %v10175
  %v10177 = vrot.slane %v8170, %v10176
  %v10179 = vunpack.c.l.s4 839922192
  %v10180 = vunpack.c.0.s8 %v10179
  %v10181 = vlaneseq
  %v10182 = vshrl.u32 %v10181, 7
  %v10183 = vsub.s32 %v10180, %v10182
  %v10184 = vrot.slane %v8171, %v10183
  %v10186 = vunpack.c.l.s4 1985246804
  %v10187 = vunpack.c.0.s8 %v10186
  %v10188 = vlaneseq
  %v10189 = vshrl.u32 %v10188, 7
  %v10190 = vsub.s32 %v10187, %v10189
  %v10191 = vrot.slane %v8171, %v10190
  %v10193 = vunpack.c.l.s4 839922192
  %v10194 = vunpack.c.0.s8 %v10193
  %v10195 = vlaneseq
  %v10196 = vshrl.u32 %v10195, 7
  %v10197 = vsub.s32 %v10194, %v10196
  %v10198 = vrot.slane %v8172, %v10197
  %v10200 = vunpack.c.l.s4 1985246804
  %v10201 = vunpack.c.0.s8 %v10200
  %v10202 = vlaneseq
  %v10203 = vshrl.u32 %v10202, 7
  %v10204 = vsub.s32 %v10201, %v10203
  %v10205 = vrot.slane %v8172, %v10204
  %v10207 = vunpack.c.l.s4 839922192
  %v10208 = vunpack.c.0.s8 %v10207
  %v10209 = vlaneseq
  %v10210 = vshrl.u32 %v10209, 7
  %v10211 = vsub.s32 %v10208, %v10210
  %v10212 = vrot.slane %v8173, %v10211
  %v10214 = vunpack.c.l.s4 1985246804
  %v10215 = vunpack.c.0.s8 %v10214
  %v10216 = vlaneseq
  %v10217 = vshrl.u32 %v10216, 7
  %v10218 = vsub.s32 %v10215, %v10217
  %v10219 = vrot.slane %v8173, %v10218
  %v10221 = vunpack.c.l.s4 839922192
  %v10222 = vunpack.c.0.s8 %v10221
  %v10223 = vlaneseq
  %v10224 = vshrl.u32 %v10223, 7
  %v10225 = vsub.s32 %v10222, %v10224
  %v10226 = vrot.slane %v8174, %v10225
  %v10228 = vunpack.c.l.s4 1985246804
  %v10229 = vunpack.c.0.s8 %v10228
  %v10230 = vlaneseq
  %v10231 = vshrl.u32 %v10230, 7
  %v10232 = vsub.s32 %v10229, %v10231
  %v10233 = vrot.slane %v8174, %v10232
  %v10235 = vunpack.c.l.s4 839922192
  %v10236 = vunpack.c.0.s8 %v10235
  %v10237 = vlaneseq
  %v10238 = vshrl.u32 %v10237, 7
  %v10239 = vsub.s32 %v10236, %v10238
  %v10240 = vrot.slane %v8175, %v10239
  %v10242 = vunpack.c.l.s4 1985246804
  %v10243 = vunpack.c.0.s8 %v10242
  %v10244 = vlaneseq
  %v10245 = vshrl.u32 %v10244, 7
  %v10246 = vsub.s32 %v10243, %v10245
  %v10247 = vrot.slane %v8175, %v10246
  %v10249 = vunpack.c.l.s4 839922192
  %v10250 = vunpack.c.0.s8 %v10249
  %v10251 = vlaneseq
  %v10252 = vshrl.u32 %v10251, 7
  %v10253 = vsub.s32 %v10250, %v10252
  %v10254 = vrot.slane %v8176, %v10253
  %v10256 = vunpack.c.l.s4 1985246804
  %v10257 = vunpack.c.0.s8 %v10256
  %v10258 = vlaneseq
  %v10259 = vshrl.u32 %v10258, 7
  %v10260 = vsub.s32 %v10257, %v10259
  %v10261 = vrot.slane %v8176, %v10260
  %v10263 = vunpack.c.l.s4 839922192
  %v10264 = vunpack.c.0.s8 %v10263
  %v10265 = vlaneseq
  %v10266 = vshrl.u32 %v10265, 7
  %v10267 = vsub.s32 %v10264, %v10266
  %v10268 = vrot.slane %v8177, %v10267
  %v10270 = vunpack.c.l.s4 1985246804
  %v10271 = vunpack.c.0.s8 %v10270
  %v10272 = vlaneseq
  %v10273 = vshrl.u32 %v10272, 7
  %v10274 = vsub.s32 %v10271, %v10273
  %v10275 = vrot.slane %v8177, %v10274
  %v10277 = vunpack.c.l.s4 839922192
  %v10278 = vunpack.c.0.s8 %v10277
  %v10279 = vlaneseq
  %v10280 = vshrl.u32 %v10279, 7
  %v10281 = vsub.s32 %v10278, %v10280
  %v10282 = vrot.slane %v8178, %v10281
  %v10284 = vunpack.c.l.s4 1985246804
  %v10285 = vunpack.c.0.s8 %v10284
  %v10286 = vlaneseq
  %v10287 = vshrl.u32 %v10286, 7
  %v10288 = vsub.s32 %v10285, %v10287
  %v10289 = vrot.slane %v8178, %v10288
  %v10291 = vunpack.c.l.s4 839922192
  %v10292 = vunpack.c.0.s8 %v10291
  %v10293 = vlaneseq
  %v10294 = vshrl.u32 %v10293, 7
  %v10295 = vsub.s32 %v10292, %v10294
  %v10296 = vrot.slane %v8179, %v10295
  %v10298 = vunpack.c.l.s4 1985246804
  %v10299 = vunpack.c.0.s8 %v10298
  %v10300 = vlaneseq
  %v10301 = vshrl.u32 %v10300, 7
  %v10302 = vsub.s32 %v10299, %v10301
  %v10303 = vrot.slane %v8179, %v10302
  %v10305 = vunpack.c.l.s4 839922192
  %v10306 = vunpack.c.0.s8 %v10305
  %v10307 = vlaneseq
  %v10308 = vshrl.u32 %v10307, 7
  %v10309 = vsub.s32 %v10306, %v10308
  %v10310 = vrot.slane %v8180, %v10309
  %v10312 = vunpack.c.l.s4 1985246804
  %v10313 = vunpack.c.0.s8 %v10312
  %v10314 = vlaneseq
  %v10315 = vshrl.u32 %v10314, 7
  %v10316 = vsub.s32 %v10313, %v10315
  %v10317 = vrot.slane %v8180, %v10316
  %v10319 = vunpack.c.l.s4 839922192
  %v10320 = vunpack.c.0.s8 %v10319
  %v10321 = vlaneseq
  %v10322 = vshrl.u32 %v10321, 7
  %v10323 = vsub.s32 %v10320, %v10322
  %v10324 = vrot.slane %v8181, %v10323
  %v10326 = vunpack.c.l.s4 1985246804
  %v10327 = vunpack.c.0.s8 %v10326
  %v10328 = vlaneseq
  %v10329 = vshrl.u32 %v10328, 7
  %v10330 = vsub.s32 %v10327, %v10329
  %v10331 = vrot.slane %v8181, %v10330
  %v10333 = vunpack.c.l.s4 839922192
  %v10334 = vunpack.c.0.s8 %v10333
  %v10335 = vlaneseq
  %v10336 = vshrl.u32 %v10335, 7
  %v10337 = vsub.s32 %v10334, %v10336
  %v10338 = vrot.slane %v8182, %v10337
  %v10340 = vunpack.c.l.s4 1985246804
  %v10341 = vunpack.c.0.s8 %v10340
  %v10342 = vlaneseq
  %v10343 = vshrl.u32 %v10342, 7
  %v10344 = vsub.s32 %v10341, %v10343
  %v10345 = vrot.slane %v8182, %v10344
  %v10347 = vunpack.c.l.s4 839922192
  %v10348 = vunpack.c.0.s8 %v10347
  %v10349 = vlaneseq
  %v10350 = vshrl.u32 %v10349, 7
  %v10351 = vsub.s32 %v10348, %v10350
  %v10352 = vrot.slane %v8183, %v10351
  %v10354 = vunpack.c.l.s4 1985246804
  %v10355 = vunpack.c.0.s8 %v10354
  %v10356 = vlaneseq
  %v10357 = vshrl.u32 %v10356, 7
  %v10358 = vsub.s32 %v10355, %v10357
  %v10359 = vrot.slane %v8183, %v10358
  %v10361 = vunpack.c.l.s4 839922192
  %v10362 = vunpack.c.0.s8 %v10361
  %v10363 = vlaneseq
  %v10364 = vshrl.u32 %v10363, 7
  %v10365 = vsub.s32 %v10362, %v10364
  %v10366 = vrot.slane %v8184, %v10365
  %v10368 = vunpack.c.l.s4 1985246804
  %v10369 = vunpack.c.0.s8 %v10368
  %v10370 = vlaneseq
  %v10371 = vshrl.u32 %v10370, 7
  %v10372 = vsub.s32 %v10369, %v10371
  %v10373 = vrot.slane %v8184, %v10372
  %v10375 = vunpack.c.l.s4 839922192
  %v10376 = vunpack.c.0.s8 %v10375
  %v10377 = vlaneseq
  %v10378 = vshrl.u32 %v10377, 7
  %v10379 = vsub.s32 %v10376, %v10378
  %v10380 = vrot.slane %v8185, %v10379
  %v10382 = vunpack.c.l.s4 1985246804
  %v10383 = vunpack.c.0.s8 %v10382
  %v10384 = vlaneseq
  %v10385 = vshrl.u32 %v10384, 7
  %v10386 = vsub.s32 %v10383, %v10385
  %v10387 = vrot.slane %v8185, %v10386
  %v10389 = vunpack.c.l.s4 839922192
  %v10390 = vunpack.c.0.s8 %v10389
  %v10391 = vlaneseq
  %v10392 = vshrl.u32 %v10391, 7
  %v10393 = vsub.s32 %v10390, %v10392
  %v10394 = vrot.slane %v8186, %v10393
  %v10396 = vunpack.c.l.s4 1985246804
  %v10397 = vunpack.c.0.s8 %v10396
  %v10398 = vlaneseq
  %v10399 = vshrl.u32 %v10398, 7
  %v10400 = vsub.s32 %v10397, %v10399
  %v10401 = vrot.slane %v8186, %v10400
  %v10403 = vunpack.c.l.s4 839922192
  %v10404 = vunpack.c.0.s8 %v10403
  %v10405 = vlaneseq
  %v10406 = vshrl.u32 %v10405, 7
  %v10407 = vsub.s32 %v10404, %v10406
  %v10408 = vrot.slane %v8187, %v10407
  %v10410 = vunpack.c.l.s4 1985246804
  %v10411 = vunpack.c.0.s8 %v10410
  %v10412 = vlaneseq
  %v10413 = vshrl.u32 %v10412, 7
  %v10414 = vsub.s32 %v10411, %v10413
  %v10415 = vrot.slane %v8187, %v10414
  %v10417 = vunpack.c.l.s4 839922192
  %v10418 = vunpack.c.0.s8 %v10417
  %v10419 = vlaneseq
  %v10420 = vshrl.u32 %v10419, 7
  %v10421 = vsub.s32 %v10418, %v10420
  %v10422 = vrot.slane %v8188, %v10421
  %v10424 = vunpack.c.l.s4 1985246804
  %v10425 = vunpack.c.0.s8 %v10424
  %v10426 = vlaneseq
  %v10427 = vshrl.u32 %v10426, 7
  %v10428 = vsub.s32 %v10425, %v10427
  %v10429 = vrot.slane %v8188, %v10428
  %v10431 = vunpack.c.l.s4 839922192
  %v10432 = vunpack.c.0.s8 %v10431
  %v10433 = vlaneseq
  %v10434 = vshrl.u32 %v10433, 7
  %v10435 = vsub.s32 %v10432, %v10434
  %v10436 = vrot.slane %v8189, %v10435
  %v10438 = vunpack.c.l.s4 1985246804
  %v10439 = vunpack.c.0.s8 %v10438
  %v10440 = vlaneseq
  %v10441 = vshrl.u32 %v10440, 7
  %v10442 = vsub.s32 %v10439, %v10441
  %v10443 = vrot.slane %v8189, %v10442
  %v10445 = vunpack.c.l.s4 839922192
  %v10446 = vunpack.c.0.s8 %v10445
  %v10447 = vlaneseq
  %v10448 = vshrl.u32 %v10447, 7
  %v10449 = vsub.s32 %v10446, %v10448
  %v10450 = vrot.slane %v8190, %v10449
  %v10452 = vunpack.c.l.s4 1985246804
  %v10453 = vunpack.c.0.s8 %v10452
  %v10454 = vlaneseq
  %v10455 = vshrl.u32 %v10454, 7
  %v10456 = vsub.s32 %v10453, %v10455
  %v10457 = vrot.slane %v8190, %v10456
  %v10459 = vunpack.c.l.s4 839922192
  %v10460 = vunpack.c.0.s8 %v10459
  %v10461 = vlaneseq
  %v10462 = vshrl.u32 %v10461, 7
  %v10463 = vsub.s32 %v10460, %v10462
  %v10464 = vrot.slane %v8191, %v10463
  %v10466 = vunpack.c.l.s4 1985246804
  %v10467 = vunpack.c.0.s8 %v10466
  %v10468 = vlaneseq
  %v10469 = vshrl.u32 %v10468, 7
  %v10470 = vsub.s32 %v10467, %v10469
  %v10471 = vrot.slane %v8191, %v10470
  %v10473 = vunpack.c.l.s4 839922192
  %v10474 = vunpack.c.0.s8 %v10473
  %v10475 = vlaneseq
  %v10476 = vshrl.u32 %v10475, 7
  %v10477 = vsub.s32 %v10474, %v10476
  %v10478 = vrot.slane %v8192, %v10477
  %v10480 = vunpack.c.l.s4 1985246804
  %v10481 = vunpack.c.0.s8 %v10480
  %v10482 = vlaneseq
  %v10483 = vshrl.u32 %v10482, 7
  %v10484 = vsub.s32 %v10481, %v10483
  %v10485 = vrot.slane %v8192, %v10484
  %v10487 = vunpack.c.l.s4 839922192
  %v10488 = vunpack.c.0.s8 %v10487
  %v10489 = vlaneseq
  %v10490 = vshrl.u32 %v10489, 7
  %v10491 = vsub.s32 %v10488, %v10490
  %v10492 = vrot.slane %v8193, %v10491
  %v10494 = vunpack.c.l.s4 1985246804
  %v10495 = vunpack.c.0.s8 %v10494
  %v10496 = vlaneseq
  %v10497 = vshrl.u32 %v10496, 7
  %v10498 = vsub.s32 %v10495, %v10497
  %v10499 = vrot.slane %v8193, %v10498
  %v10501 = vunpack.c.l.s4 839922192
  %v10502 = vunpack.c.0.s8 %v10501
  %v10503 = vlaneseq
  %v10504 = vshrl.u32 %v10503, 7
  %v10505 = vsub.s32 %v10502, %v10504
  %v10506 = vrot.slane %v8194, %v10505
  %v10508 = vunpack.c.l.s4 1985246804
  %v10509 = vunpack.c.0.s8 %v10508
  %v10510 = vlaneseq
  %v10511 = vshrl.u32 %v10510, 7
  %v10512 = vsub.s32 %v10509, %v10511
  %v10513 = vrot.slane %v8194, %v10512
  %v10515 = vunpack.c.l.s4 839922192
  %v10516 = vunpack.c.0.s8 %v10515
  %v10517 = vlaneseq
  %v10518 = vshrl.u32 %v10517, 7
  %v10519 = vsub.s32 %v10516, %v10518
  %v10520 = vrot.slane %v8195, %v10519
  %v10522 = vunpack.c.l.s4 1985246804
  %v10523 = vunpack.c.0.s8 %v10522
  %v10524 = vlaneseq
  %v10525 = vshrl.u32 %v10524, 7
  %v10526 = vsub.s32 %v10523, %v10525
  %v10527 = vrot.slane %v8195, %v10526
  %v10529 = vunpack.c.l.s4 839922192
  %v10530 = vunpack.c.0.s8 %v10529
  %v10531 = vlaneseq
  %v10532 = vshrl.u32 %v10531, 7
  %v10533 = vsub.s32 %v10530, %v10532
  %v10534 = vrot.slane %v8196, %v10533
  %v10536 = vunpack.c.l.s4 1985246804
  %v10537 = vunpack.c.0.s8 %v10536
  %v10538 = vlaneseq
  %v10539 = vshrl.u32 %v10538, 7
  %v10540 = vsub.s32 %v10537, %v10539
  %v10541 = vrot.slane %v8196, %v10540
  %v10543 = vunpack.c.l.s4 839922192
  %v10544 = vunpack.c.0.s8 %v10543
  %v10545 = vlaneseq
  %v10546 = vshrl.u32 %v10545, 7
  %v10547 = vsub.s32 %v10544, %v10546
  %v10548 = vrot.slane %v8197, %v10547
  %v10550 = vunpack.c.l.s4 1985246804
  %v10551 = vunpack.c.0.s8 %v10550
  %v10552 = vlaneseq
  %v10553 = vshrl.u32 %v10552, 7
  %v10554 = vsub.s32 %v10551, %v10553
  %v10555 = vrot.slane %v8197, %v10554
  %v10557 = vunpack.c.l.s4 839922192
  %v10558 = vunpack.c.0.s8 %v10557
  %v10559 = vlaneseq
  %v10560 = vshrl.u32 %v10559, 7
  %v10561 = vsub.s32 %v10558, %v10560
  %v10562 = vrot.slane %v8198, %v10561
  %v10564 = vunpack.c.l.s4 1985246804
  %v10565 = vunpack.c.0.s8 %v10564
  %v10566 = vlaneseq
  %v10567 = vshrl.u32 %v10566, 7
  %v10568 = vsub.s32 %v10565, %v10567
  %v10569 = vrot.slane %v8198, %v10568
  %v10571 = vunpack.c.l.s4 839922192
  %v10572 = vunpack.c.0.s8 %v10571
  %v10573 = vlaneseq
  %v10574 = vshrl.u32 %v10573, 7
  %v10575 = vsub.s32 %v10572, %v10574
  %v10576 = vrot.slane %v8199, %v10575
  %v10578 = vunpack.c.l.s4 1985246804
  %v10579 = vunpack.c.0.s8 %v10578
  %v10580 = vlaneseq
  %v10581 = vshrl.u32 %v10580, 7
  %v10582 = vsub.s32 %v10579, %v10581
  %v10583 = vrot.slane %v8199, %v10582
  %v10585 = vunpack.c.l.s4 839922192
  %v10586 = vunpack.c.0.s8 %v10585
  %v10587 = vlaneseq
  %v10588 = vshrl.u32 %v10587, 7
  %v10589 = vsub.s32 %v10586, %v10588
  %v10590 = vrot.slane %v8200, %v10589
  %v10592 = vunpack.c.l.s4 1985246804
  %v10593 = vunpack.c.0.s8 %v10592
  %v10594 = vlaneseq
  %v10595 = vshrl.u32 %v10594, 7
  %v10596 = vsub.s32 %v10593, %v10595
  %v10597 = vrot.slane %v8200, %v10596
  %v10599 = vunpack.c.l.s4 839922192
  %v10600 = vunpack.c.0.s8 %v10599
  %v10601 = vlaneseq
  %v10602 = vshrl.u32 %v10601, 7
  %v10603 = vsub.s32 %v10600, %v10602
  %v10604 = vrot.slane %v8201, %v10603
  %v10606 = vunpack.c.l.s4 1985246804
  %v10607 = vunpack.c.0.s8 %v10606
  %v10608 = vlaneseq
  %v10609 = vshrl.u32 %v10608, 7
  %v10610 = vsub.s32 %v10607, %v10609
  %v10611 = vrot.slane %v8201, %v10610
  %v10613 = vunpack.c.l.s4 839922192
  %v10614 = vunpack.c.0.s8 %v10613
  %v10615 = vlaneseq
  %v10616 = vshrl.u32 %v10615, 7
  %v10617 = vsub.s32 %v10614, %v10616
  %v10618 = vrot.slane %v8202, %v10617
  %v10620 = vunpack.c.l.s4 1985246804
  %v10621 = vunpack.c.0.s8 %v10620
  %v10622 = vlaneseq
  %v10623 = vshrl.u32 %v10622, 7
  %v10624 = vsub.s32 %v10621, %v10623
  %v10625 = vrot.slane %v8202, %v10624
  %v10627 = vunpack.c.l.s4 839922192
  %v10628 = vunpack.c.0.s8 %v10627
  %v10629 = vlaneseq
  %v10630 = vshrl.u32 %v10629, 7
  %v10631 = vsub.s32 %v10628, %v10630
  %v10632 = vrot.slane %v8203, %v10631
  %v10634 = vunpack.c.l.s4 1985246804
  %v10635 = vunpack.c.0.s8 %v10634
  %v10636 = vlaneseq
  %v10637 = vshrl.u32 %v10636, 7
  %v10638 = vsub.s32 %v10635, %v10637
  %v10639 = vrot.slane %v8203, %v10638
  %v10641 = vunpack.c.l.s4 839922192
  %v10642 = vunpack.c.0.s8 %v10641
  %v10643 = vlaneseq
  %v10644 = vshrl.u32 %v10643, 7
  %v10645 = vsub.s32 %v10642, %v10644
  %v10646 = vrot.slane %v8204, %v10645
  %v10648 = vunpack.c.l.s4 1985246804
  %v10649 = vunpack.c.0.s8 %v10648
  %v10650 = vlaneseq
  %v10651 = vshrl.u32 %v10650, 7
  %v10652 = vsub.s32 %v10649, %v10651
  %v10653 = vrot.slane %v8204, %v10652
  %v10655 = vunpack.c.l.s4 839922192
  %v10656 = vunpack.c.0.s8 %v10655
  %v10657 = vlaneseq
  %v10658 = vshrl.u32 %v10657, 7
  %v10659 = vsub.s32 %v10656, %v10658
  %v10660 = vrot.slane %v8205, %v10659
  %v10662 = vunpack.c.l.s4 1985246804
  %v10663 = vunpack.c.0.s8 %v10662
  %v10664 = vlaneseq
  %v10665 = vshrl.u32 %v10664, 7
  %v10666 = vsub.s32 %v10663, %v10665
  %v10667 = vrot.slane %v8205, %v10666
  %v10669 = vunpack.c.l.s4 839922192
  %v10670 = vunpack.c.0.s8 %v10669
  %v10671 = vlaneseq
  %v10672 = vshrl.u32 %v10671, 7
  %v10673 = vsub.s32 %v10670, %v10672
  %v10674 = vrot.slane %v8206, %v10673
  %v10676 = vunpack.c.l.s4 1985246804
  %v10677 = vunpack.c.0.s8 %v10676
  %v10678 = vlaneseq
  %v10679 = vshrl.u32 %v10678, 7
  %v10680 = vsub.s32 %v10677, %v10679
  %v10681 = vrot.slane %v8206, %v10680
  %v10683 = vunpack.c.l.s4 839922192
  %v10684 = vunpack.c.0.s8 %v10683
  %v10685 = vlaneseq
  %v10686 = vshrl.u32 %v10685, 7
  %v10687 = vsub.s32 %v10684, %v10686
  %v10688 = vrot.slane %v8207, %v10687
  %v10690 = vunpack.c.l.s4 1985246804
  %v10691 = vunpack.c.0.s8 %v10690
  %v10692 = vlaneseq
  %v10693 = vshrl.u32 %v10692, 7
  %v10694 = vsub.s32 %v10691, %v10693
  %v10695 = vrot.slane %v8207, %v10694
  %v10697 = vunpack.c.l.s4 839922192
  %v10698 = vunpack.c.0.s8 %v10697
  %v10699 = vlaneseq
  %v10700 = vshrl.u32 %v10699, 7
  %v10701 = vsub.s32 %v10698, %v10700
  %v10702 = vrot.slane %v8208, %v10701
  %v10704 = vunpack.c.l.s4 1985246804
  %v10705 = vunpack.c.0.s8 %v10704
  %v10706 = vlaneseq
  %v10707 = vshrl.u32 %v10706, 7
  %v10708 = vsub.s32 %v10705, %v10707
  %v10709 = vrot.slane %v8208, %v10708
  %v10711 = vunpack.c.l.s4 839922192
  %v10712 = vunpack.c.0.s8 %v10711
  %v10713 = vlaneseq
  %v10714 = vshrl.u32 %v10713, 7
  %v10715 = vsub.s32 %v10712, %v10714
  %v10716 = vrot.slane %v8209, %v10715
  %v10718 = vunpack.c.l.s4 1985246804
  %v10719 = vunpack.c.0.s8 %v10718
  %v10720 = vlaneseq
  %v10721 = vshrl.u32 %v10720, 7
  %v10722 = vsub.s32 %v10719, %v10721
  %v10723 = vrot.slane %v8209, %v10722
  %v10725 = vunpack.c.l.s4 839922192
  %v10726 = vunpack.c.0.s8 %v10725
  %v10727 = vlaneseq
  %v10728 = vshrl.u32 %v10727, 7
  %v10729 = vsub.s32 %v10726, %v10728
  %v10730 = vrot.slane %v8210, %v10729
  %v10732 = vunpack.c.l.s4 1985246804
  %v10733 = vunpack.c.0.s8 %v10732
  %v10734 = vlaneseq
  %v10735 = vshrl.u32 %v10734, 7
  %v10736 = vsub.s32 %v10733, %v10735
  %v10737 = vrot.slane %v8210, %v10736
  %v10739 = vunpack.c.l.s4 839922192
  %v10740 = vunpack.c.0.s8 %v10739
  %v10741 = vlaneseq
  %v10742 = vshrl.u32 %v10741, 7
  %v10743 = vsub.s32 %v10740, %v10742
  %v10744 = vrot.slane %v8211, %v10743
  %v10746 = vunpack.c.l.s4 1985246804
  %v10747 = vunpack.c.0.s8 %v10746
  %v10748 = vlaneseq
  %v10749 = vshrl.u32 %v10748, 7
  %v10750 = vsub.s32 %v10747, %v10749
  %v10751 = vrot.slane %v8211, %v10750
  %v10753 = vunpack.c.l.s4 839922192
  %v10754 = vunpack.c.0.s8 %v10753
  %v10755 = vlaneseq
  %v10756 = vshrl.u32 %v10755, 7
  %v10757 = vsub.s32 %v10754, %v10756
  %v10758 = vrot.slane %v8212, %v10757
  %v10760 = vunpack.c.l.s4 1985246804
  %v10761 = vunpack.c.0.s8 %v10760
  %v10762 = vlaneseq
  %v10763 = vshrl.u32 %v10762, 7
  %v10764 = vsub.s32 %v10761, %v10763
  %v10765 = vrot.slane %v8212, %v10764
  %v10767 = vunpack.c.l.s4 839922192
  %v10768 = vunpack.c.0.s8 %v10767
  %v10769 = vlaneseq
  %v10770 = vshrl.u32 %v10769, 7
  %v10771 = vsub.s32 %v10768, %v10770
  %v10772 = vrot.slane %v8213, %v10771
  %v10774 = vunpack.c.l.s4 1985246804
  %v10775 = vunpack.c.0.s8 %v10774
  %v10776 = vlaneseq
  %v10777 = vshrl.u32 %v10776, 7
  %v10778 = vsub.s32 %v10775, %v10777
  %v10779 = vrot.slane %v8213, %v10778
  %v10781 = vunpack.c.l.s4 839922192
  %v10782 = vunpack.c.0.s8 %v10781
  %v10783 = vlaneseq
  %v10784 = vshrl.u32 %v10783, 7
  %v10785 = vsub.s32 %v10782, %v10784
  %v10786 = vrot.slane %v8214, %v10785
  %v10788 = vunpack.c.l.s4 1985246804
  %v10789 = vunpack.c.0.s8 %v10788
  %v10790 = vlaneseq
  %v10791 = vshrl.u32 %v10790, 7
  %v10792 = vsub.s32 %v10789, %v10791
  %v10793 = vrot.slane %v8214, %v10792
  %v10795 = vunpack.c.l.s4 839922192
  %v10796 = vunpack.c.0.s8 %v10795
  %v10797 = vlaneseq
  %v10798 = vshrl.u32 %v10797, 7
  %v10799 = vsub.s32 %v10796, %v10798
  %v10800 = vrot.slane %v8215, %v10799
  %v10802 = vunpack.c.l.s4 1985246804
  %v10803 = vunpack.c.0.s8 %v10802
  %v10804 = vlaneseq
  %v10805 = vshrl.u32 %v10804, 7
  %v10806 = vsub.s32 %v10803, %v10805
  %v10807 = vrot.slane %v8215, %v10806
  %v10809 = vunpack.c.l.s4 839922192
  %v10810 = vunpack.c.0.s8 %v10809
  %v10811 = vlaneseq
  %v10812 = vshrl.u32 %v10811, 7
  %v10813 = vsub.s32 %v10810, %v10812
  %v10814 = vrot.slane %v8216, %v10813
  %v10816 = vunpack.c.l.s4 1985246804
  %v10817 = vunpack.c.0.s8 %v10816
  %v10818 = vlaneseq
  %v10819 = vshrl.u32 %v10818, 7
  %v10820 = vsub.s32 %v10817, %v10819
  %v10821 = vrot.slane %v8216, %v10820
  %v10823 = vunpack.c.l.s4 839922192
  %v10824 = vunpack.c.0.s8 %v10823
  %v10825 = vlaneseq
  %v10826 = vshrl.u32 %v10825, 7
  %v10827 = vsub.s32 %v10824, %v10826
  %v10828 = vrot.slane %v8217, %v10827
  %v10830 = vunpack.c.l.s4 1985246804
  %v10831 = vunpack.c.0.s8 %v10830
  %v10832 = vlaneseq
  %v10833 = vshrl.u32 %v10832, 7
  %v10834 = vsub.s32 %v10831, %v10833
  %v10835 = vrot.slane %v8217, %v10834
  %v10837 = vunpack.c.l.s4 839922192
  %v10838 = vunpack.c.0.s8 %v10837
  %v10839 = vlaneseq
  %v10840 = vshrl.u32 %v10839, 7
  %v10841 = vsub.s32 %v10838, %v10840
  %v10842 = vrot.slane %v8218, %v10841
  %v10844 = vunpack.c.l.s4 1985246804
  %v10845 = vunpack.c.0.s8 %v10844
  %v10846 = vlaneseq
  %v10847 = vshrl.u32 %v10846, 7
  %v10848 = vsub.s32 %v10845, %v10847
  %v10849 = vrot.slane %v8218, %v10848
  %v10851 = vunpack.c.l.s4 839922192
  %v10852 = vunpack.c.0.s8 %v10851
  %v10853 = vlaneseq
  %v10854 = vshrl.u32 %v10853, 7
  %v10855 = vsub.s32 %v10852, %v10854
  %v10856 = vrot.slane %v8219, %v10855
  %v10858 = vunpack.c.l.s4 1985246804
  %v10859 = vunpack.c.0.s8 %v10858
  %v10860 = vlaneseq
  %v10861 = vshrl.u32 %v10860, 7
  %v10862 = vsub.s32 %v10859, %v10861
  %v10863 = vrot.slane %v8219, %v10862
  %v10865 = vunpack.c.l.s4 839922192
  %v10866 = vunpack.c.0.s8 %v10865
  %v10867 = vlaneseq
  %v10868 = vshrl.u32 %v10867, 7
  %v10869 = vsub.s32 %v10866, %v10868
  %v10870 = vrot.slane %v8220, %v10869
  %v10872 = vunpack.c.l.s4 1985246804
  %v10873 = vunpack.c.0.s8 %v10872
  %v10874 = vlaneseq
  %v10875 = vshrl.u32 %v10874, 7
  %v10876 = vsub.s32 %v10873, %v10875
  %v10877 = vrot.slane %v8220, %v10876
  %v10879 = vunpack.c.l.s4 839922192
  %v10880 = vunpack.c.0.s8 %v10879
  %v10881 = vlaneseq
  %v10882 = vshrl.u32 %v10881, 7
  %v10883 = vsub.s32 %v10880, %v10882
  %v10884 = vrot.slane %v8221, %v10883
  %v10886 = vunpack.c.l.s4 1985246804
  %v10887 = vunpack.c.0.s8 %v10886
  %v10888 = vlaneseq
  %v10889 = vshrl.u32 %v10888, 7
  %v10890 = vsub.s32 %v10887, %v10889
  %v10891 = vrot.slane %v8221, %v10890
  %v10893 = vunpack.c.l.s4 839922192
  %v10894 = vunpack.c.0.s8 %v10893
  %v10895 = vlaneseq
  %v10896 = vshrl.u32 %v10895, 7
  %v10897 = vsub.s32 %v10894, %v10896
  %v10898 = vrot.slane %v8222, %v10897
  %v10900 = vunpack.c.l.s4 1985246804
  %v10901 = vunpack.c.0.s8 %v10900
  %v10902 = vlaneseq
  %v10903 = vshrl.u32 %v10902, 7
  %v10904 = vsub.s32 %v10901, %v10903
  %v10905 = vrot.slane %v8222, %v10904
  %v10907 = vunpack.c.l.s4 839922192
  %v10908 = vunpack.c.0.s8 %v10907
  %v10909 = vlaneseq
  %v10910 = vshrl.u32 %v10909, 7
  %v10911 = vsub.s32 %v10908, %v10910
  %v10912 = vrot.slane %v8223, %v10911
  %v10914 = vunpack.c.l.s4 1985246804
  %v10915 = vunpack.c.0.s8 %v10914
  %v10916 = vlaneseq
  %v10917 = vshrl.u32 %v10916, 7
  %v10918 = vsub.s32 %v10915, %v10917
  %v10919 = vrot.slane %v8223, %v10918
  %v10921 = vunpack.c.l.s4 839922192
  %v10922 = vunpack.c.0.s8 %v10921
  %v10923 = vlaneseq
  %v10924 = vshrl.u32 %v10923, 7
  %v10925 = vsub.s32 %v10922, %v10924
  %v10926 = vrot.slane %v8224, %v10925
  %v10928 = vunpack.c.l.s4 1985246804
  %v10929 = vunpack.c.0.s8 %v10928
  %v10930 = vlaneseq
  %v10931 = vshrl.u32 %v10930, 7
  %v10932 = vsub.s32 %v10929, %v10931
  %v10933 = vrot.slane %v8224, %v10932
  %v10935 = vunpack.c.l.s4 839922192
  %v10936 = vunpack.c.0.s8 %v10935
  %v10937 = vlaneseq
  %v10938 = vshrl.u32 %v10937, 7
  %v10939 = vsub.s32 %v10936, %v10938
  %v10940 = vrot.slane %v8225, %v10939
  %v10942 = vunpack.c.l.s4 1985246804
  %v10943 = vunpack.c.0.s8 %v10942
  %v10944 = vlaneseq
  %v10945 = vshrl.u32 %v10944, 7
  %v10946 = vsub.s32 %v10943, %v10945
  %v10947 = vrot.slane %v8225, %v10946
  %v10949 = vunpack.c.l.s4 839922192
  %v10950 = vunpack.c.0.s8 %v10949
  %v10951 = vlaneseq
  %v10952 = vshrl.u32 %v10951, 7
  %v10953 = vsub.s32 %v10950, %v10952
  %v10954 = vrot.slane %v8226, %v10953
  %v10956 = vunpack.c.l.s4 1985246804
  %v10957 = vunpack.c.0.s8 %v10956
  %v10958 = vlaneseq
  %v10959 = vshrl.u32 %v10958, 7
  %v10960 = vsub.s32 %v10957, %v10959
  %v10961 = vrot.slane %v8226, %v10960
  %v10963 = vunpack.c.l.s4 839922192
  %v10964 = vunpack.c.0.s8 %v10963
  %v10965 = vlaneseq
  %v10966 = vshrl.u32 %v10965, 7
  %v10967 = vsub.s32 %v10964, %v10966
  %v10968 = vrot.slane %v8227, %v10967
  %v10970 = vunpack.c.l.s4 1985246804
  %v10971 = vunpack.c.0.s8 %v10970
  %v10972 = vlaneseq
  %v10973 = vshrl.u32 %v10972, 7
  %v10974 = vsub.s32 %v10971, %v10973
  %v10975 = vrot.slane %v8227, %v10974
  %v10977 = vunpack.c.l.s4 839922192
  %v10978 = vunpack.c.0.s8 %v10977
  %v10979 = vlaneseq
  %v10980 = vshrl.u32 %v10979, 7
  %v10981 = vsub.s32 %v10978, %v10980
  %v10982 = vrot.slane %v8228, %v10981
  %v10984 = vunpack.c.l.s4 1985246804
  %v10985 = vunpack.c.0.s8 %v10984
  %v10986 = vlaneseq
  %v10987 = vshrl.u32 %v10986, 7
  %v10988 = vsub.s32 %v10985, %v10987
  %v10989 = vrot.slane %v8228, %v10988
  %v10991 = vunpack.c.l.s4 839922192
  %v10992 = vunpack.c.0.s8 %v10991
  %v10993 = vlaneseq
  %v10994 = vshrl.u32 %v10993, 7
  %v10995 = vsub.s32 %v10992, %v10994
  %v10996 = vrot.slane %v8229, %v10995
  %v10998 = vunpack.c.l.s4 1985246804
  %v10999 = vunpack.c.0.s8 %v10998
  %v11000 = vlaneseq
  %v11001 = vshrl.u32 %v11000, 7
  %v11002 = vsub.s32 %v10999, %v11001
  %v11003 = vrot.slane %v8229, %v11002
  %v11005 = vunpack.c.l.s4 839922192
  %v11006 = vunpack.c.0.s8 %v11005
  %v11007 = vlaneseq
  %v11008 = vshrl.u32 %v11007, 7
  %v11009 = vsub.s32 %v11006, %v11008
  %v11010 = vrot.slane %v8230, %v11009
  %v11012 = vunpack.c.l.s4 1985246804
  %v11013 = vunpack.c.0.s8 %v11012
  %v11014 = vlaneseq
  %v11015 = vshrl.u32 %v11014, 7
  %v11016 = vsub.s32 %v11013, %v11015
  %v11017 = vrot.slane %v8230, %v11016
  %v11019 = vunpack.c.l.s4 839922192
  %v11020 = vunpack.c.0.s8 %v11019
  %v11021 = vlaneseq
  %v11022 = vshrl.u32 %v11021, 7
  %v11023 = vsub.s32 %v11020, %v11022
  %v11024 = vrot.slane %v8231, %v11023
  %v11026 = vunpack.c.l.s4 1985246804
  %v11027 = vunpack.c.0.s8 %v11026
  %v11028 = vlaneseq
  %v11029 = vshrl.u32 %v11028, 7
  %v11030 = vsub.s32 %v11027, %v11029
  %v11031 = vrot.slane %v8231, %v11030
  %v11033 = vunpack.c.l.s4 839922192
  %v11034 = vunpack.c.0.s8 %v11033
  %v11035 = vlaneseq
  %v11036 = vshrl.u32 %v11035, 7
  %v11037 = vsub.s32 %v11034, %v11036
  %v11038 = vrot.slane %v8232, %v11037
  %v11040 = vunpack.c.l.s4 1985246804
  %v11041 = vunpack.c.0.s8 %v11040
  %v11042 = vlaneseq
  %v11043 = vshrl.u32 %v11042, 7
  %v11044 = vsub.s32 %v11041, %v11043
  %v11045 = vrot.slane %v8232, %v11044
  %v11047 = vunpack.c.l.s4 839922192
  %v11048 = vunpack.c.0.s8 %v11047
  %v11049 = vlaneseq
  %v11050 = vshrl.u32 %v11049, 7
  %v11051 = vsub.s32 %v11048, %v11050
  %v11052 = vrot.slane %v8233, %v11051
  %v11054 = vunpack.c.l.s4 1985246804
  %v11055 = vunpack.c.0.s8 %v11054
  %v11056 = vlaneseq
  %v11057 = vshrl.u32 %v11056, 7
  %v11058 = vsub.s32 %v11055, %v11057
  %v11059 = vrot.slane %v8233, %v11058
  %v11061 = vunpack.c.l.s4 839922192
  %v11062 = vunpack.c.0.s8 %v11061
  %v11063 = vlaneseq
  %v11064 = vshrl.u32 %v11063, 7
  %v11065 = vsub.s32 %v11062, %v11064
  %v11066 = vrot.slane %v8234, %v11065
  %v11068 = vunpack.c.l.s4 1985246804
  %v11069 = vunpack.c.0.s8 %v11068
  %v11070 = vlaneseq
  %v11071 = vshrl.u32 %v11070, 7
  %v11072 = vsub.s32 %v11069, %v11071
  %v11073 = vrot.slane %v8234, %v11072
  %v11075 = vunpack.c.l.s4 839922192
  %v11076 = vunpack.c.0.s8 %v11075
  %v11077 = vlaneseq
  %v11078 = vshrl.u32 %v11077, 7
  %v11079 = vsub.s32 %v11076, %v11078
  %v11080 = vrot.slane %v8235, %v11079
  %v11082 = vunpack.c.l.s4 1985246804
  %v11083 = vunpack.c.0.s8 %v11082
  %v11084 = vlaneseq
  %v11085 = vshrl.u32 %v11084, 7
  %v11086 = vsub.s32 %v11083, %v11085
  %v11087 = vrot.slane %v8235, %v11086
  %v11089 = vunpack.c.l.s4 839922192
  %v11090 = vunpack.c.0.s8 %v11089
  %v11091 = vlaneseq
  %v11092 = vshrl.u32 %v11091, 7
  %v11093 = vsub.s32 %v11090, %v11092
  %v11094 = vrot.slane %v8236, %v11093
  %v11096 = vunpack.c.l.s4 1985246804
  %v11097 = vunpack.c.0.s8 %v11096
  %v11098 = vlaneseq
  %v11099 = vshrl.u32 %v11098, 7
  %v11100 = vsub.s32 %v11097, %v11099
  %v11101 = vrot.slane %v8236, %v11100
  %v11103 = vunpack.c.l.s4 839922192
  %v11104 = vunpack.c.0.s8 %v11103
  %v11105 = vlaneseq
  %v11106 = vshrl.u32 %v11105, 7
  %v11107 = vsub.s32 %v11104, %v11106
  %v11108 = vrot.slane %v8237, %v11107
  %v11110 = vunpack.c.l.s4 1985246804
  %v11111 = vunpack.c.0.s8 %v11110
  %v11112 = vlaneseq
  %v11113 = vshrl.u32 %v11112, 7
  %v11114 = vsub.s32 %v11111, %v11113
  %v11115 = vrot.slane %v8237, %v11114
  %v11117 = vunpack.c.l.s4 839922192
  %v11118 = vunpack.c.0.s8 %v11117
  %v11119 = vlaneseq
  %v11120 = vshrl.u32 %v11119, 7
  %v11121 = vsub.s32 %v11118, %v11120
  %v11122 = vrot.slane %v8238, %v11121
  %v11124 = vunpack.c.l.s4 1985246804
  %v11125 = vunpack.c.0.s8 %v11124
  %v11126 = vlaneseq
  %v11127 = vshrl.u32 %v11126, 7
  %v11128 = vsub.s32 %v11125, %v11127
  %v11129 = vrot.slane %v8238, %v11128
  %v11131 = vunpack.c.l.s4 839922192
  %v11132 = vunpack.c.0.s8 %v11131
  %v11133 = vlaneseq
  %v11134 = vshrl.u32 %v11133, 7
  %v11135 = vsub.s32 %v11132, %v11134
  %v11136 = vrot.slane %v8239, %v11135
  %v11138 = vunpack.c.l.s4 1985246804
  %v11139 = vunpack.c.0.s8 %v11138
  %v11140 = vlaneseq
  %v11141 = vshrl.u32 %v11140, 7
  %v11142 = vsub.s32 %v11139, %v11141
  %v11143 = vrot.slane %v8239, %v11142
  %v11145 = vunpack.c.l.s4 839922192
  %v11146 = vunpack.c.0.s8 %v11145
  %v11147 = vlaneseq
  %v11148 = vshrl.u32 %v11147, 7
  %v11149 = vsub.s32 %v11146, %v11148
  %v11150 = vrot.slane %v8240, %v11149
  %v11152 = vunpack.c.l.s4 1985246804
  %v11153 = vunpack.c.0.s8 %v11152
  %v11154 = vlaneseq
  %v11155 = vshrl.u32 %v11154, 7
  %v11156 = vsub.s32 %v11153, %v11155
  %v11157 = vrot.slane %v8240, %v11156
  %v11159 = vunpack.c.l.s4 839922192
  %v11160 = vunpack.c.0.s8 %v11159
  %v11161 = vlaneseq
  %v11162 = vshrl.u32 %v11161, 7
  %v11163 = vsub.s32 %v11160, %v11162
  %v11164 = vrot.slane %v8241, %v11163
  %v11166 = vunpack.c.l.s4 1985246804
  %v11167 = vunpack.c.0.s8 %v11166
  %v11168 = vlaneseq
  %v11169 = vshrl.u32 %v11168, 7
  %v11170 = vsub.s32 %v11167, %v11169
  %v11171 = vrot.slane %v8241, %v11170
  %v11173 = vunpack.c.l.s4 839922192
  %v11174 = vunpack.c.0.s8 %v11173
  %v11175 = vlaneseq
  %v11176 = vshrl.u32 %v11175, 7
  %v11177 = vsub.s32 %v11174, %v11176
  %v11178 = vrot.slane %v8242, %v11177
  %v11180 = vunpack.c.l.s4 1985246804
  %v11181 = vunpack.c.0.s8 %v11180
  %v11182 = vlaneseq
  %v11183 = vshrl.u32 %v11182, 7
  %v11184 = vsub.s32 %v11181, %v11183
  %v11185 = vrot.slane %v8242, %v11184
  %v11187 = vunpack.c.l.s4 839922192
  %v11188 = vunpack.c.0.s8 %v11187
  %v11189 = vlaneseq
  %v11190 = vshrl.u32 %v11189, 7
  %v11191 = vsub.s32 %v11188, %v11190
  %v11192 = vrot.slane %v8243, %v11191
  %v11194 = vunpack.c.l.s4 1985246804
  %v11195 = vunpack.c.0.s8 %v11194
  %v11196 = vlaneseq
  %v11197 = vshrl.u32 %v11196, 7
  %v11198 = vsub.s32 %v11195, %v11197
  %v11199 = vrot.slane %v8243, %v11198
  %v11201 = vunpack.c.l.s4 839922192
  %v11202 = vunpack.c.0.s8 %v11201
  %v11203 = vlaneseq
  %v11204 = vshrl.u32 %v11203, 7
  %v11205 = vsub.s32 %v11202, %v11204
  %v11206 = vrot.slane %v8244, %v11205
  %v11208 = vunpack.c.l.s4 1985246804
  %v11209 = vunpack.c.0.s8 %v11208
  %v11210 = vlaneseq
  %v11211 = vshrl.u32 %v11210, 7
  %v11212 = vsub.s32 %v11209, %v11211
  %v11213 = vrot.slane %v8244, %v11212
  %v11215 = vunpack.c.l.s4 839922192
  %v11216 = vunpack.c.0.s8 %v11215
  %v11217 = vlaneseq
  %v11218 = vshrl.u32 %v11217, 7
  %v11219 = vsub.s32 %v11216, %v11218
  %v11220 = vrot.slane %v8245, %v11219
  %v11222 = vunpack.c.l.s4 1985246804
  %v11223 = vunpack.c.0.s8 %v11222
  %v11224 = vlaneseq
  %v11225 = vshrl.u32 %v11224, 7
  %v11226 = vsub.s32 %v11223, %v11225
  %v11227 = vrot.slane %v8245, %v11226
  %v11229 = vunpack.c.l.s4 839922192
  %v11230 = vunpack.c.0.s8 %v11229
  %v11231 = vlaneseq
  %v11232 = vshrl.u32 %v11231, 7
  %v11233 = vsub.s32 %v11230, %v11232
  %v11234 = vrot.slane %v8246, %v11233
  %v11236 = vunpack.c.l.s4 1985246804
  %v11237 = vunpack.c.0.s8 %v11236
  %v11238 = vlaneseq
  %v11239 = vshrl.u32 %v11238, 7
  %v11240 = vsub.s32 %v11237, %v11239
  %v11241 = vrot.slane %v8246, %v11240
  %v11243 = vunpack.c.l.s4 839922192
  %v11244 = vunpack.c.0.s8 %v11243
  %v11245 = vlaneseq
  %v11246 = vshrl.u32 %v11245, 7
  %v11247 = vsub.s32 %v11244, %v11246
  %v11248 = vrot.slane %v8247, %v11247
  %v11250 = vunpack.c.l.s4 1985246804
  %v11251 = vunpack.c.0.s8 %v11250
  %v11252 = vlaneseq
  %v11253 = vshrl.u32 %v11252, 7
  %v11254 = vsub.s32 %v11251, %v11253
  %v11255 = vrot.slane %v8247, %v11254
  %v11257 = vunpack.c.l.s4 839922192
  %v11258 = vunpack.c.0.s8 %v11257
  %v11259 = vlaneseq
  %v11260 = vshrl.u32 %v11259, 7
  %v11261 = vsub.s32 %v11258, %v11260
  %v11262 = vrot.slane %v8248, %v11261
  %v11264 = vunpack.c.l.s4 1985246804
  %v11265 = vunpack.c.0.s8 %v11264
  %v11266 = vlaneseq
  %v11267 = vshrl.u32 %v11266, 7
  %v11268 = vsub.s32 %v11265, %v11267
  %v11269 = vrot.slane %v8248, %v11268
  %v11271 = vunpack.c.l.s4 839922192
  %v11272 = vunpack.c.0.s8 %v11271
  %v11273 = vlaneseq
  %v11274 = vshrl.u32 %v11273, 7
  %v11275 = vsub.s32 %v11272, %v11274
  %v11276 = vrot.slane %v8249, %v11275
  %v11278 = vunpack.c.l.s4 1985246804
  %v11279 = vunpack.c.0.s8 %v11278
  %v11280 = vlaneseq
  %v11281 = vshrl.u32 %v11280, 7
  %v11282 = vsub.s32 %v11279, %v11281
  %v11283 = vrot.slane %v8249, %v11282
  %v11285 = vunpack.c.l.s4 839922192
  %v11286 = vunpack.c.0.s8 %v11285
  %v11287 = vlaneseq
  %v11288 = vshrl.u32 %v11287, 7
  %v11289 = vsub.s32 %v11286, %v11288
  %v11290 = vrot.slane %v8250, %v11289
  %v11292 = vunpack.c.l.s4 1985246804
  %v11293 = vunpack.c.0.s8 %v11292
  %v11294 = vlaneseq
  %v11295 = vshrl.u32 %v11294, 7
  %v11296 = vsub.s32 %v11293, %v11295
  %v11297 = vrot.slane %v8250, %v11296
  %v11299 = vunpack.c.l.s4 839922192
  %v11300 = vunpack.c.0.s8 %v11299
  %v11301 = vlaneseq
  %v11302 = vshrl.u32 %v11301, 7
  %v11303 = vsub.s32 %v11300, %v11302
  %v11304 = vrot.slane %v8251, %v11303
  %v11306 = vunpack.c.l.s4 1985246804
  %v11307 = vunpack.c.0.s8 %v11306
  %v11308 = vlaneseq
  %v11309 = vshrl.u32 %v11308, 7
  %v11310 = vsub.s32 %v11307, %v11309
  %v11311 = vrot.slane %v8251, %v11310
  %v11313 = vunpack.c.l.s4 839922192
  %v11314 = vunpack.c.0.s8 %v11313
  %v11315 = vlaneseq
  %v11316 = vshrl.u32 %v11315, 7
  %v11317 = vsub.s32 %v11314, %v11316
  %v11318 = vrot.slane %v8252, %v11317
  %v11320 = vunpack.c.l.s4 1985246804
  %v11321 = vunpack.c.0.s8 %v11320
  %v11322 = vlaneseq
  %v11323 = vshrl.u32 %v11322, 7
  %v11324 = vsub.s32 %v11321, %v11323
  %v11325 = vrot.slane %v8252, %v11324
  %v11327 = vunpack.c.l.s4 839922192
  %v11328 = vunpack.c.0.s8 %v11327
  %v11329 = vlaneseq
  %v11330 = vshrl.u32 %v11329, 7
  %v11331 = vsub.s32 %v11328, %v11330
  %v11332 = vrot.slane %v8253, %v11331
  %v11334 = vunpack.c.l.s4 1985246804
  %v11335 = vunpack.c.0.s8 %v11334
  %v11336 = vlaneseq
  %v11337 = vshrl.u32 %v11336, 7
  %v11338 = vsub.s32 %v11335, %v11337
  %v11339 = vrot.slane %v8253, %v11338
  %v11341 = vunpack.c.l.s4 839922192
  %v11342 = vunpack.c.0.s8 %v11341
  %v11343 = vlaneseq
  %v11344 = vshrl.u32 %v11343, 7
  %v11345 = vsub.s32 %v11342, %v11344
  %v11346 = vrot.slane %v8254, %v11345
  %v11348 = vunpack.c.l.s4 1985246804
  %v11349 = vunpack.c.0.s8 %v11348
  %v11350 = vlaneseq
  %v11351 = vshrl.u32 %v11350, 7
  %v11352 = vsub.s32 %v11349, %v11351
  %v11353 = vrot.slane %v8254, %v11352
  %v11355 = vunpack.c.l.s4 839922192
  %v11356 = vunpack.c.0.s8 %v11355
  %v11357 = vlaneseq
  %v11358 = vshrl.u32 %v11357, 7
  %v11359 = vsub.s32 %v11356, %v11358
  %v11360 = vrot.slane %v8255, %v11359
  %v11362 = vunpack.c.l.s4 1985246804
  %v11363 = vunpack.c.0.s8 %v11362
  %v11364 = vlaneseq
  %v11365 = vshrl.u32 %v11364, 7
  %v11366 = vsub.s32 %v11363, %v11365
  %v11367 = vrot.slane %v8255, %v11366
  %v11369 = vunpack.c.l.s4 839922192
  %v11370 = vunpack.c.0.s8 %v11369
  %v11371 = vlaneseq
  %v11372 = vshrl.u32 %v11371, 7
  %v11373 = vsub.s32 %v11370, %v11372
  %v11374 = vrot.slane %v8256, %v11373
  %v11376 = vunpack.c.l.s4 1985246804
  %v11377 = vunpack.c.0.s8 %v11376
  %v11378 = vlaneseq
  %v11379 = vshrl.u32 %v11378, 7
  %v11380 = vsub.s32 %v11377, %v11379
  %v11381 = vrot.slane %v8256, %v11380
  %v11383 = vunpack.c.l.s4 839922192
  %v11384 = vunpack.c.0.s8 %v11383
  %v11385 = vlaneseq
  %v11386 = vshrl.u32 %v11385, 7
  %v11387 = vsub.s32 %v11384, %v11386
  %v11388 = vrot.slane %v8257, %v11387
  %v11390 = vunpack.c.l.s4 1985246804
  %v11391 = vunpack.c.0.s8 %v11390
  %v11392 = vlaneseq
  %v11393 = vshrl.u32 %v11392, 7
  %v11394 = vsub.s32 %v11391, %v11393
  %v11395 = vrot.slane %v8257, %v11394
  %v11397 = vunpack.c.l.s4 839922192
  %v11398 = vunpack.c.0.s8 %v11397
  %v11399 = vlaneseq
  %v11400 = vshrl.u32 %v11399, 7
  %v11401 = vsub.s32 %v11398, %v11400
  %v11402 = vrot.slane %v8258, %v11401
  %v11404 = vunpack.c.l.s4 1985246804
  %v11405 = vunpack.c.0.s8 %v11404
  %v11406 = vlaneseq
  %v11407 = vshrl.u32 %v11406, 7
  %v11408 = vsub.s32 %v11405, %v11407
  %v11409 = vrot.slane %v8258, %v11408
  %v11411 = vunpack.c.l.s4 839922192
  %v11412 = vunpack.c.0.s8 %v11411
  %v11413 = vlaneseq
  %v11414 = vshrl.u32 %v11413, 7
  %v11415 = vsub.s32 %v11412, %v11414
  %v11416 = vrot.slane %v8259, %v11415
  %v11418 = vunpack.c.l.s4 1985246804
  %v11419 = vunpack.c.0.s8 %v11418
  %v11420 = vlaneseq
  %v11421 = vshrl.u32 %v11420, 7
  %v11422 = vsub.s32 %v11419, %v11421
  %v11423 = vrot.slane %v8259, %v11422
  %v11425 = vunpack.c.l.s4 839922192
  %v11426 = vunpack.c.0.s8 %v11425
  %v11427 = vlaneseq
  %v11428 = vshrl.u32 %v11427, 7
  %v11429 = vsub.s32 %v11426, %v11428
  %v11430 = vrot.slane %v8260, %v11429
  %v11432 = vunpack.c.l.s4 1985246804
  %v11433 = vunpack.c.0.s8 %v11432
  %v11434 = vlaneseq
  %v11435 = vshrl.u32 %v11434, 7
  %v11436 = vsub.s32 %v11433, %v11435
  %v11437 = vrot.slane %v8260, %v11436
  %v11439 = vunpack.c.l.s4 839922192
  %v11440 = vunpack.c.0.s8 %v11439
  %v11441 = vlaneseq
  %v11442 = vshrl.u32 %v11441, 7
  %v11443 = vsub.s32 %v11440, %v11442
  %v11444 = vrot.slane %v8261, %v11443
  %v11446 = vunpack.c.l.s4 1985246804
  %v11447 = vunpack.c.0.s8 %v11446
  %v11448 = vlaneseq
  %v11449 = vshrl.u32 %v11448, 7
  %v11450 = vsub.s32 %v11447, %v11449
  %v11451 = vrot.slane %v8261, %v11450
  %v11453 = vunpack.c.l.s4 839922192
  %v11454 = vunpack.c.0.s8 %v11453
  %v11455 = vlaneseq
  %v11456 = vshrl.u32 %v11455, 7
  %v11457 = vsub.s32 %v11454, %v11456
  %v11458 = vrot.slane %v8262, %v11457
  %v11460 = vunpack.c.l.s4 1985246804
  %v11461 = vunpack.c.0.s8 %v11460
  %v11462 = vlaneseq
  %v11463 = vshrl.u32 %v11462, 7
  %v11464 = vsub.s32 %v11461, %v11463
  %v11465 = vrot.slane %v8262, %v11464
  %v11467 = vunpack.c.l.s4 839922192
  %v11468 = vunpack.c.0.s8 %v11467
  %v11469 = vlaneseq
  %v11470 = vshrl.u32 %v11469, 7
  %v11471 = vsub.s32 %v11468, %v11470
  %v11472 = vrot.slane %v8263, %v11471
  %v11474 = vunpack.c.l.s4 1985246804
  %v11475 = vunpack.c.0.s8 %v11474
  %v11476 = vlaneseq
  %v11477 = vshrl.u32 %v11476, 7
  %v11478 = vsub.s32 %v11475, %v11477
  %v11479 = vrot.slane %v8263, %v11478
  %v11481 = vunpack.c.l.s4 839922192
  %v11482 = vunpack.c.0.s8 %v11481
  %v11483 = vlaneseq
  %v11484 = vshrl.u32 %v11483, 7
  %v11485 = vsub.s32 %v11482, %v11484
  %v11486 = vrot.slane %v8264, %v11485
  %v11488 = vunpack.c.l.s4 1985246804
  %v11489 = vunpack.c.0.s8 %v11488
  %v11490 = vlaneseq
  %v11491 = vshrl.u32 %v11490, 7
  %v11492 = vsub.s32 %v11489, %v11491
  %v11493 = vrot.slane %v8264, %v11492
  %v11495 = vunpack.c.l.s4 839922192
  %v11496 = vunpack.c.0.s8 %v11495
  %v11497 = vlaneseq
  %v11498 = vshrl.u32 %v11497, 7
  %v11499 = vsub.s32 %v11496, %v11498
  %v11500 = vrot.slane %v8265, %v11499
  %v11502 = vunpack.c.l.s4 1985246804
  %v11503 = vunpack.c.0.s8 %v11502
  %v11504 = vlaneseq
  %v11505 = vshrl.u32 %v11504, 7
  %v11506 = vsub.s32 %v11503, %v11505
  %v11507 = vrot.slane %v8265, %v11506
  %v11509 = vunpack.c.l.s4 839922192
  %v11510 = vunpack.c.0.s8 %v11509
  %v11511 = vlaneseq
  %v11512 = vshrl.u32 %v11511, 7
  %v11513 = vsub.s32 %v11510, %v11512
  %v11514 = vrot.slane %v8266, %v11513
  %v11516 = vunpack.c.l.s4 1985246804
  %v11517 = vunpack.c.0.s8 %v11516
  %v11518 = vlaneseq
  %v11519 = vshrl.u32 %v11518, 7
  %v11520 = vsub.s32 %v11517, %v11519
  %v11521 = vrot.slane %v8266, %v11520
  %v11523 = vunpack.c.l.s4 839922192
  %v11524 = vunpack.c.0.s8 %v11523
  %v11525 = vlaneseq
  %v11526 = vshrl.u32 %v11525, 7
  %v11527 = vsub.s32 %v11524, %v11526
  %v11528 = vrot.slane %v8267, %v11527
  %v11530 = vunpack.c.l.s4 1985246804
  %v11531 = vunpack.c.0.s8 %v11530
  %v11532 = vlaneseq
  %v11533 = vshrl.u32 %v11532, 7
  %v11534 = vsub.s32 %v11531, %v11533
  %v11535 = vrot.slane %v8267, %v11534
  %v11537 = vunpack.c.l.s4 839922192
  %v11538 = vunpack.c.0.s8 %v11537
  %v11539 = vlaneseq
  %v11540 = vshrl.u32 %v11539, 7
  %v11541 = vsub.s32 %v11538, %v11540
  %v11542 = vrot.slane %v8268, %v11541
  %v11544 = vunpack.c.l.s4 1985246804
  %v11545 = vunpack.c.0.s8 %v11544
  %v11546 = vlaneseq
  %v11547 = vshrl.u32 %v11546, 7
  %v11548 = vsub.s32 %v11545, %v11547
  %v11549 = vrot.slane %v8268, %v11548
  %v11551 = vunpack.c.l.s4 839922192
  %v11552 = vunpack.c.0.s8 %v11551
  %v11553 = vlaneseq
  %v11554 = vshrl.u32 %v11553, 7
  %v11555 = vsub.s32 %v11552, %v11554
  %v11556 = vrot.slane %v8269, %v11555
  %v11558 = vunpack.c.l.s4 1985246804
  %v11559 = vunpack.c.0.s8 %v11558
  %v11560 = vlaneseq
  %v11561 = vshrl.u32 %v11560, 7
  %v11562 = vsub.s32 %v11559, %v11561
  %v11563 = vrot.slane %v8269, %v11562
  %v11565 = vunpack.c.l.s4 839922192
  %v11566 = vunpack.c.0.s8 %v11565
  %v11567 = vlaneseq
  %v11568 = vshrl.u32 %v11567, 7
  %v11569 = vsub.s32 %v11566, %v11568
  %v11570 = vrot.slane %v8270, %v11569
  %v11572 = vunpack.c.l.s4 1985246804
  %v11573 = vunpack.c.0.s8 %v11572
  %v11574 = vlaneseq
  %v11575 = vshrl.u32 %v11574, 7
  %v11576 = vsub.s32 %v11573, %v11575
  %v11577 = vrot.slane %v8270, %v11576
  %v11579 = vunpack.c.l.s4 839922192
  %v11580 = vunpack.c.0.s8 %v11579
  %v11581 = vlaneseq
  %v11582 = vshrl.u32 %v11581, 7
  %v11583 = vsub.s32 %v11580, %v11582
  %v11584 = vrot.slane %v8271, %v11583
  %v11586 = vunpack.c.l.s4 1985246804
  %v11587 = vunpack.c.0.s8 %v11586
  %v11588 = vlaneseq
  %v11589 = vshrl.u32 %v11588, 7
  %v11590 = vsub.s32 %v11587, %v11589
  %v11591 = vrot.slane %v8271, %v11590
  %v11593 = vunpack.c.l.s4 839922192
  %v11594 = vunpack.c.0.s8 %v11593
  %v11595 = vlaneseq
  %v11596 = vshrl.u32 %v11595, 7
  %v11597 = vsub.s32 %v11594, %v11596
  %v11598 = vrot.slane %v8272, %v11597
  %v11600 = vunpack.c.l.s4 1985246804
  %v11601 = vunpack.c.0.s8 %v11600
  %v11602 = vlaneseq
  %v11603 = vshrl.u32 %v11602, 7
  %v11604 = vsub.s32 %v11601, %v11603
  %v11605 = vrot.slane %v8272, %v11604
  %v11607 = vunpack.c.l.s4 839922192
  %v11608 = vunpack.c.0.s8 %v11607
  %v11609 = vlaneseq
  %v11610 = vshrl.u32 %v11609, 7
  %v11611 = vsub.s32 %v11608, %v11610
  %v11612 = vrot.slane %v8273, %v11611
  %v11614 = vunpack.c.l.s4 1985246804
  %v11615 = vunpack.c.0.s8 %v11614
  %v11616 = vlaneseq
  %v11617 = vshrl.u32 %v11616, 7
  %v11618 = vsub.s32 %v11615, %v11617
  %v11619 = vrot.slane %v8273, %v11618
  %v11621 = vunpack.c.l.s4 839922192
  %v11622 = vunpack.c.0.s8 %v11621
  %v11623 = vlaneseq
  %v11624 = vshrl.u32 %v11623, 7
  %v11625 = vsub.s32 %v11622, %v11624
  %v11626 = vrot.slane %v8274, %v11625
  %v11628 = vunpack.c.l.s4 1985246804
  %v11629 = vunpack.c.0.s8 %v11628
  %v11630 = vlaneseq
  %v11631 = vshrl.u32 %v11630, 7
  %v11632 = vsub.s32 %v11629, %v11631
  %v11633 = vrot.slane %v8274, %v11632
  %v11635 = vunpack.c.l.s4 839922192
  %v11636 = vunpack.c.0.s8 %v11635
  %v11637 = vlaneseq
  %v11638 = vshrl.u32 %v11637, 7
  %v11639 = vsub.s32 %v11636, %v11638
  %v11640 = vrot.slane %v8275, %v11639
  %v11642 = vunpack.c.l.s4 1985246804
  %v11643 = vunpack.c.0.s8 %v11642
  %v11644 = vlaneseq
  %v11645 = vshrl.u32 %v11644, 7
  %v11646 = vsub.s32 %v11643, %v11645
  %v11647 = vrot.slane %v8275, %v11646
  %v11649 = vunpack.c.l.s4 839922192
  %v11650 = vunpack.c.0.s8 %v11649
  %v11651 = vlaneseq
  %v11652 = vshrl.u32 %v11651, 7
  %v11653 = vsub.s32 %v11650, %v11652
  %v11654 = vrot.slane %v8276, %v11653
  %v11656 = vunpack.c.l.s4 1985246804
  %v11657 = vunpack.c.0.s8 %v11656
  %v11658 = vlaneseq
  %v11659 = vshrl.u32 %v11658, 7
  %v11660 = vsub.s32 %v11657, %v11659
  %v11661 = vrot.slane %v8276, %v11660
  %v11663 = vunpack.c.l.s4 839922192
  %v11664 = vunpack.c.0.s8 %v11663
  %v11665 = vlaneseq
  %v11666 = vshrl.u32 %v11665, 7
  %v11667 = vsub.s32 %v11664, %v11666
  %v11668 = vrot.slane %v8277, %v11667
  %v11670 = vunpack.c.l.s4 1985246804
  %v11671 = vunpack.c.0.s8 %v11670
  %v11672 = vlaneseq
  %v11673 = vshrl.u32 %v11672, 7
  %v11674 = vsub.s32 %v11671, %v11673
  %v11675 = vrot.slane %v8277, %v11674
  %v11677 = vunpack.c.l.s4 839922192
  %v11678 = vunpack.c.0.s8 %v11677
  %v11679 = vlaneseq
  %v11680 = vshrl.u32 %v11679, 7
  %v11681 = vsub.s32 %v11678, %v11680
  %v11682 = vrot.slane %v8278, %v11681
  %v11684 = vunpack.c.l.s4 1985246804
  %v11685 = vunpack.c.0.s8 %v11684
  %v11686 = vlaneseq
  %v11687 = vshrl.u32 %v11686, 7
  %v11688 = vsub.s32 %v11685, %v11687
  %v11689 = vrot.slane %v8278, %v11688
  %v11691 = vunpack.c.l.s4 839922192
  %v11692 = vunpack.c.0.s8 %v11691
  %v11693 = vlaneseq
  %v11694 = vshrl.u32 %v11693, 7
  %v11695 = vsub.s32 %v11692, %v11694
  %v11696 = vrot.slane %v8279, %v11695
  %v11698 = vunpack.c.l.s4 1985246804
  %v11699 = vunpack.c.0.s8 %v11698
  %v11700 = vlaneseq
  %v11701 = vshrl.u32 %v11700, 7
  %v11702 = vsub.s32 %v11699, %v11701
  %v11703 = vrot.slane %v8279, %v11702
  %v11705 = vunpack.c.l.s4 839922192
  %v11706 = vunpack.c.0.s8 %v11705
  %v11707 = vlaneseq
  %v11708 = vshrl.u32 %v11707, 7
  %v11709 = vsub.s32 %v11706, %v11708
  %v11710 = vrot.slane %v8280, %v11709
  %v11712 = vunpack.c.l.s4 1985246804
  %v11713 = vunpack.c.0.s8 %v11712
  %v11714 = vlaneseq
  %v11715 = vshrl.u32 %v11714, 7
  %v11716 = vsub.s32 %v11713, %v11715
  %v11717 = vrot.slane %v8280, %v11716
  %v11719 = vunpack.c.l.s4 839922192
  %v11720 = vunpack.c.0.s8 %v11719
  %v11721 = vlaneseq
  %v11722 = vshrl.u32 %v11721, 7
  %v11723 = vsub.s32 %v11720, %v11722
  %v11724 = vrot.slane %v8281, %v11723
  %v11726 = vunpack.c.l.s4 1985246804
  %v11727 = vunpack.c.0.s8 %v11726
  %v11728 = vlaneseq
  %v11729 = vshrl.u32 %v11728, 7
  %v11730 = vsub.s32 %v11727, %v11729
  %v11731 = vrot.slane %v8281, %v11730
  %v11733 = vunpack.c.l.s4 839922192
  %v11734 = vunpack.c.0.s8 %v11733
  %v11735 = vlaneseq
  %v11736 = vshrl.u32 %v11735, 7
  %v11737 = vsub.s32 %v11734, %v11736
  %v11738 = vrot.slane %v8282, %v11737
  %v11740 = vunpack.c.l.s4 1985246804
  %v11741 = vunpack.c.0.s8 %v11740
  %v11742 = vlaneseq
  %v11743 = vshrl.u32 %v11742, 7
  %v11744 = vsub.s32 %v11741, %v11743
  %v11745 = vrot.slane %v8282, %v11744
  %v11747 = vunpack.c.l.s4 839922192
  %v11748 = vunpack.c.0.s8 %v11747
  %v11749 = vlaneseq
  %v11750 = vshrl.u32 %v11749, 7
  %v11751 = vsub.s32 %v11748, %v11750
  %v11752 = vrot.slane %v8283, %v11751
  %v11754 = vunpack.c.l.s4 1985246804
  %v11755 = vunpack.c.0.s8 %v11754
  %v11756 = vlaneseq
  %v11757 = vshrl.u32 %v11756, 7
  %v11758 = vsub.s32 %v11755, %v11757
  %v11759 = vrot.slane %v8283, %v11758
  %v11761 = vunpack.c.l.s4 839922192
  %v11762 = vunpack.c.0.s8 %v11761
  %v11763 = vlaneseq
  %v11764 = vshrl.u32 %v11763, 7
  %v11765 = vsub.s32 %v11762, %v11764
  %v11766 = vrot.slane %v8284, %v11765
  %v11768 = vunpack.c.l.s4 1985246804
  %v11769 = vunpack.c.0.s8 %v11768
  %v11770 = vlaneseq
  %v11771 = vshrl.u32 %v11770, 7
  %v11772 = vsub.s32 %v11769, %v11771
  %v11773 = vrot.slane %v8284, %v11772
  %v11775 = vunpack.c.l.s4 839922192
  %v11776 = vunpack.c.0.s8 %v11775
  %v11777 = vlaneseq
  %v11778 = vshrl.u32 %v11777, 7
  %v11779 = vsub.s32 %v11776, %v11778
  %v11780 = vrot.slane %v8285, %v11779
  %v11782 = vunpack.c.l.s4 1985246804
  %v11783 = vunpack.c.0.s8 %v11782
  %v11784 = vlaneseq
  %v11785 = vshrl.u32 %v11784, 7
  %v11786 = vsub.s32 %v11783, %v11785
  %v11787 = vrot.slane %v8285, %v11786
  %v11789 = vunpack.c.l.s4 839922192
  %v11790 = vunpack.c.0.s8 %v11789
  %v11791 = vlaneseq
  %v11792 = vshrl.u32 %v11791, 7
  %v11793 = vsub.s32 %v11790, %v11792
  %v11794 = vrot.slane %v8286, %v11793
  %v11796 = vunpack.c.l.s4 1985246804
  %v11797 = vunpack.c.0.s8 %v11796
  %v11798 = vlaneseq
  %v11799 = vshrl.u32 %v11798, 7
  %v11800 = vsub.s32 %v11797, %v11799
  %v11801 = vrot.slane %v8286, %v11800
  %v11803 = vunpack.c.l.s4 839922192
  %v11804 = vunpack.c.0.s8 %v11803
  %v11805 = vlaneseq
  %v11806 = vshrl.u32 %v11805, 7
  %v11807 = vsub.s32 %v11804, %v11806
  %v11808 = vrot.slane %v8287, %v11807
  %v11810 = vunpack.c.l.s4 1985246804
  %v11811 = vunpack.c.0.s8 %v11810
  %v11812 = vlaneseq
  %v11813 = vshrl.u32 %v11812, 7
  %v11814 = vsub.s32 %v11811, %v11813
  %v11815 = vrot.slane %v8287, %v11814
  %v11817 = vunpack.c.l.s4 839922192
  %v11818 = vunpack.c.0.s8 %v11817
  %v11819 = vlaneseq
  %v11820 = vshrl.u32 %v11819, 7
  %v11821 = vsub.s32 %v11818, %v11820
  %v11822 = vrot.slane %v8288, %v11821
  %v11824 = vunpack.c.l.s4 1985246804
  %v11825 = vunpack.c.0.s8 %v11824
  %v11826 = vlaneseq
  %v11827 = vshrl.u32 %v11826, 7
  %v11828 = vsub.s32 %v11825, %v11827
  %v11829 = vrot.slane %v8288, %v11828
  %v11831 = vunpack.c.l.s4 839922192
  %v11832 = vunpack.c.0.s8 %v11831
  %v11833 = vlaneseq
  %v11834 = vshrl.u32 %v11833, 7
  %v11835 = vsub.s32 %v11832, %v11834
  %v11836 = vrot.slane %v8289, %v11835
  %v11838 = vunpack.c.l.s4 1985246804
  %v11839 = vunpack.c.0.s8 %v11838
  %v11840 = vlaneseq
  %v11841 = vshrl.u32 %v11840, 7
  %v11842 = vsub.s32 %v11839, %v11841
  %v11843 = vrot.slane %v8289, %v11842
  %v11845 = vunpack.c.l.s4 839922192
  %v11846 = vunpack.c.0.s8 %v11845
  %v11847 = vlaneseq
  %v11848 = vshrl.u32 %v11847, 7
  %v11849 = vsub.s32 %v11846, %v11848
  %v11850 = vrot.slane %v8290, %v11849
  %v11852 = vunpack.c.l.s4 1985246804
  %v11853 = vunpack.c.0.s8 %v11852
  %v11854 = vlaneseq
  %v11855 = vshrl.u32 %v11854, 7
  %v11856 = vsub.s32 %v11853, %v11855
  %v11857 = vrot.slane %v8290, %v11856
  %v11859 = vunpack.c.l.s4 839922192
  %v11860 = vunpack.c.0.s8 %v11859
  %v11861 = vlaneseq
  %v11862 = vshrl.u32 %v11861, 7
  %v11863 = vsub.s32 %v11860, %v11862
  %v11864 = vrot.slane %v8291, %v11863
  %v11866 = vunpack.c.l.s4 1985246804
  %v11867 = vunpack.c.0.s8 %v11866
  %v11868 = vlaneseq
  %v11869 = vshrl.u32 %v11868, 7
  %v11870 = vsub.s32 %v11867, %v11869
  %v11871 = vrot.slane %v8291, %v11870
  %v11873 = vunpack.c.l.s4 839922192
  %v11874 = vunpack.c.0.s8 %v11873
  %v11875 = vlaneseq
  %v11876 = vshrl.u32 %v11875, 7
  %v11877 = vsub.s32 %v11874, %v11876
  %v11878 = vrot.slane %v8292, %v11877
  %v11880 = vunpack.c.l.s4 1985246804
  %v11881 = vunpack.c.0.s8 %v11880
  %v11882 = vlaneseq
  %v11883 = vshrl.u32 %v11882, 7
  %v11884 = vsub.s32 %v11881, %v11883
  %v11885 = vrot.slane %v8292, %v11884
  %v11887 = vunpack.c.l.s4 839922192
  %v11888 = vunpack.c.0.s8 %v11887
  %v11889 = vlaneseq
  %v11890 = vshrl.u32 %v11889, 7
  %v11891 = vsub.s32 %v11888, %v11890
  %v11892 = vrot.slane %v8293, %v11891
  %v11894 = vunpack.c.l.s4 1985246804
  %v11895 = vunpack.c.0.s8 %v11894
  %v11896 = vlaneseq
  %v11897 = vshrl.u32 %v11896, 7
  %v11898 = vsub.s32 %v11895, %v11897
  %v11899 = vrot.slane %v8293, %v11898
  %v11901 = vunpack.c.l.s4 839922192
  %v11902 = vunpack.c.0.s8 %v11901
  %v11903 = vlaneseq
  %v11904 = vshrl.u32 %v11903, 7
  %v11905 = vsub.s32 %v11902, %v11904
  %v11906 = vrot.slane %v8294, %v11905
  %v11908 = vunpack.c.l.s4 1985246804
  %v11909 = vunpack.c.0.s8 %v11908
  %v11910 = vlaneseq
  %v11911 = vshrl.u32 %v11910, 7
  %v11912 = vsub.s32 %v11909, %v11911
  %v11913 = vrot.slane %v8294, %v11912
  %v11915 = vunpack.c.l.s4 839922192
  %v11916 = vunpack.c.0.s8 %v11915
  %v11917 = vlaneseq
  %v11918 = vshrl.u32 %v11917, 7
  %v11919 = vsub.s32 %v11916, %v11918
  %v11920 = vrot.slane %v8295, %v11919
  %v11922 = vunpack.c.l.s4 1985246804
  %v11923 = vunpack.c.0.s8 %v11922
  %v11924 = vlaneseq
  %v11925 = vshrl.u32 %v11924, 7
  %v11926 = vsub.s32 %v11923, %v11925
  %v11927 = vrot.slane %v8295, %v11926
  %v11929 = vunpack.c.l.s4 839922192
  %v11930 = vunpack.c.0.s8 %v11929
  %v11931 = vlaneseq
  %v11932 = vshrl.u32 %v11931, 7
  %v11933 = vsub.s32 %v11930, %v11932
  %v11934 = vrot.slane %v8296, %v11933
  %v11936 = vunpack.c.l.s4 1985246804
  %v11937 = vunpack.c.0.s8 %v11936
  %v11938 = vlaneseq
  %v11939 = vshrl.u32 %v11938, 7
  %v11940 = vsub.s32 %v11937, %v11939
  %v11941 = vrot.slane %v8296, %v11940
  %v11943 = vunpack.c.l.s4 839922192
  %v11944 = vunpack.c.0.s8 %v11943
  %v11945 = vlaneseq
  %v11946 = vshrl.u32 %v11945, 7
  %v11947 = vsub.s32 %v11944, %v11946
  %v11948 = vrot.slane %v8297, %v11947
  %v11950 = vunpack.c.l.s4 1985246804
  %v11951 = vunpack.c.0.s8 %v11950
  %v11952 = vlaneseq
  %v11953 = vshrl.u32 %v11952, 7
  %v11954 = vsub.s32 %v11951, %v11953
  %v11955 = vrot.slane %v8297, %v11954
  %v11957 = vunpack.c.l.s4 839922192
  %v11958 = vunpack.c.0.s8 %v11957
  %v11959 = vlaneseq
  %v11960 = vshrl.u32 %v11959, 7
  %v11961 = vsub.s32 %v11958, %v11960
  %v11962 = vrot.slane %v8298, %v11961
  %v11964 = vunpack.c.l.s4 1985246804
  %v11965 = vunpack.c.0.s8 %v11964
  %v11966 = vlaneseq
  %v11967 = vshrl.u32 %v11966, 7
  %v11968 = vsub.s32 %v11965, %v11967
  %v11969 = vrot.slane %v8298, %v11968
  %v11971 = vunpack.c.l.s4 839922192
  %v11972 = vunpack.c.0.s8 %v11971
  %v11973 = vlaneseq
  %v11974 = vshrl.u32 %v11973, 7
  %v11975 = vsub.s32 %v11972, %v11974
  %v11976 = vrot.slane %v8299, %v11975
  %v11978 = vunpack.c.l.s4 1985246804
  %v11979 = vunpack.c.0.s8 %v11978
  %v11980 = vlaneseq
  %v11981 = vshrl.u32 %v11980, 7
  %v11982 = vsub.s32 %v11979, %v11981
  %v11983 = vrot.slane %v8299, %v11982
  %v11985 = vunpack.c.l.s4 839922192
  %v11986 = vunpack.c.0.s8 %v11985
  %v11987 = vlaneseq
  %v11988 = vshrl.u32 %v11987, 7
  %v11989 = vsub.s32 %v11986, %v11988
  %v11990 = vrot.slane %v8300, %v11989
  %v11992 = vunpack.c.l.s4 1985246804
  %v11993 = vunpack.c.0.s8 %v11992
  %v11994 = vlaneseq
  %v11995 = vshrl.u32 %v11994, 7
  %v11996 = vsub.s32 %v11993, %v11995
  %v11997 = vrot.slane %v8300, %v11996
  %v11999 = vunpack.c.l.s4 839922192
  %v12000 = vunpack.c.0.s8 %v11999
  %v12001 = vlaneseq
  %v12002 = vshrl.u32 %v12001, 7
  %v12003 = vsub.s32 %v12000, %v12002
  %v12004 = vrot.slane %v8301, %v12003
  %v12006 = vunpack.c.l.s4 1985246804
  %v12007 = vunpack.c.0.s8 %v12006
  %v12008 = vlaneseq
  %v12009 = vshrl.u32 %v12008, 7
  %v12010 = vsub.s32 %v12007, %v12009
  %v12011 = vrot.slane %v8301, %v12010
  %v12013 = vunpack.c.l.s4 839922192
  %v12014 = vunpack.c.0.s8 %v12013
  %v12015 = vlaneseq
  %v12016 = vshrl.u32 %v12015, 7
  %v12017 = vsub.s32 %v12014, %v12016
  %v12018 = vrot.slane %v8302, %v12017
  %v12020 = vunpack.c.l.s4 1985246804
  %v12021 = vunpack.c.0.s8 %v12020
  %v12022 = vlaneseq
  %v12023 = vshrl.u32 %v12022, 7
  %v12024 = vsub.s32 %v12021, %v12023
  %v12025 = vrot.slane %v8302, %v12024
  %v12027 = vunpack.c.l.s4 839922192
  %v12028 = vunpack.c.0.s8 %v12027
  %v12029 = vlaneseq
  %v12030 = vshrl.u32 %v12029, 7
  %v12031 = vsub.s32 %v12028, %v12030
  %v12032 = vrot.slane %v8303, %v12031
  %v12034 = vunpack.c.l.s4 1985246804
  %v12035 = vunpack.c.0.s8 %v12034
  %v12036 = vlaneseq
  %v12037 = vshrl.u32 %v12036, 7
  %v12038 = vsub.s32 %v12035, %v12037
  %v12039 = vrot.slane %v8303, %v12038
  %v12041 = vunpack.c.l.s4 839922192
  %v12042 = vunpack.c.0.s8 %v12041
  %v12043 = vlaneseq
  %v12044 = vshrl.u32 %v12043, 7
  %v12045 = vsub.s32 %v12042, %v12044
  %v12046 = vrot.slane %v8304, %v12045
  %v12048 = vunpack.c.l.s4 1985246804
  %v12049 = vunpack.c.0.s8 %v12048
  %v12050 = vlaneseq
  %v12051 = vshrl.u32 %v12050, 7
  %v12052 = vsub.s32 %v12049, %v12051
  %v12053 = vrot.slane %v8304, %v12052
  %v12055 = vunpack.c.l.s4 839922192
  %v12056 = vunpack.c.0.s8 %v12055
  %v12057 = vlaneseq
  %v12058 = vshrl.u32 %v12057, 7
  %v12059 = vsub.s32 %v12056, %v12058
  %v12060 = vrot.slane %v8305, %v12059
  %v12062 = vunpack.c.l.s4 1985246804
  %v12063 = vunpack.c.0.s8 %v12062
  %v12064 = vlaneseq
  %v12065 = vshrl.u32 %v12064, 7
  %v12066 = vsub.s32 %v12063, %v12065
  %v12067 = vrot.slane %v8305, %v12066
  %v12069 = vunpack.c.l.s4 839922192
  %v12070 = vunpack.c.0.s8 %v12069
  %v12071 = vlaneseq
  %v12072 = vshrl.u32 %v12071, 7
  %v12073 = vsub.s32 %v12070, %v12072
  %v12074 = vrot.slane %v8306, %v12073
  %v12076 = vunpack.c.l.s4 1985246804
  %v12077 = vunpack.c.0.s8 %v12076
  %v12078 = vlaneseq
  %v12079 = vshrl.u32 %v12078, 7
  %v12080 = vsub.s32 %v12077, %v12079
  %v12081 = vrot.slane %v8306, %v12080
  %v12083 = vunpack.c.l.s4 839922192
  %v12084 = vunpack.c.0.s8 %v12083
  %v12085 = vlaneseq
  %v12086 = vshrl.u32 %v12085, 7
  %v12087 = vsub.s32 %v12084, %v12086
  %v12088 = vrot.slane %v8307, %v12087
  %v12090 = vunpack.c.l.s4 1985246804
  %v12091 = vunpack.c.0.s8 %v12090
  %v12092 = vlaneseq
  %v12093 = vshrl.u32 %v12092, 7
  %v12094 = vsub.s32 %v12091, %v12093
  %v12095 = vrot.slane %v8307, %v12094
  %v12097 = vunpack.c.l.s4 839922192
  %v12098 = vunpack.c.0.s8 %v12097
  %v12099 = vlaneseq
  %v12100 = vshrl.u32 %v12099, 7
  %v12101 = vsub.s32 %v12098, %v12100
  %v12102 = vrot.slane %v8308, %v12101
  %v12104 = vunpack.c.l.s4 1985246804
  %v12105 = vunpack.c.0.s8 %v12104
  %v12106 = vlaneseq
  %v12107 = vshrl.u32 %v12106, 7
  %v12108 = vsub.s32 %v12105, %v12107
  %v12109 = vrot.slane %v8308, %v12108
  %v12111 = vunpack.c.l.s4 839922192
  %v12112 = vunpack.c.0.s8 %v12111
  %v12113 = vlaneseq
  %v12114 = vshrl.u32 %v12113, 7
  %v12115 = vsub.s32 %v12112, %v12114
  %v12116 = vrot.slane %v8309, %v12115
  %v12118 = vunpack.c.l.s4 1985246804
  %v12119 = vunpack.c.0.s8 %v12118
  %v12120 = vlaneseq
  %v12121 = vshrl.u32 %v12120, 7
  %v12122 = vsub.s32 %v12119, %v12121
  %v12123 = vrot.slane %v8309, %v12122
  %v12125 = vunpack.c.l.s4 839922192
  %v12126 = vunpack.c.0.s8 %v12125
  %v12127 = vlaneseq
  %v12128 = vshrl.u32 %v12127, 7
  %v12129 = vsub.s32 %v12126, %v12128
  %v12130 = vrot.slane %v8310, %v12129
  %v12132 = vunpack.c.l.s4 1985246804
  %v12133 = vunpack.c.0.s8 %v12132
  %v12134 = vlaneseq
  %v12135 = vshrl.u32 %v12134, 7
  %v12136 = vsub.s32 %v12133, %v12135
  %v12137 = vrot.slane %v8310, %v12136
  %v12139 = vunpack.c.l.s4 839922192
  %v12140 = vunpack.c.0.s8 %v12139
  %v12141 = vlaneseq
  %v12142 = vshrl.u32 %v12141, 7
  %v12143 = vsub.s32 %v12140, %v12142
  %v12144 = vrot.slane %v8311, %v12143
  %v12146 = vunpack.c.l.s4 1985246804
  %v12147 = vunpack.c.0.s8 %v12146
  %v12148 = vlaneseq
  %v12149 = vshrl.u32 %v12148, 7
  %v12150 = vsub.s32 %v12147, %v12149
  %v12151 = vrot.slane %v8311, %v12150
  %v12152 = vcombine.low %v8574, %v8581
  %v12153 = vcombine.low %v8588, %v8595
  %v12154 = vcombine.low %v8602, %v8609
  %v12155 = vcombine.low %v8616, %v8623
  %v12156 = vcombine.low %v8630, %v8637
  %v12157 = vcombine.low %v8644, %v8651
  %v12158 = vcombine.low %v8658, %v8665
  %v12159 = vcombine.low %v8672, %v8679
  %v12160 = vcombine.low %v8686, %v8693
  %v12161 = vcombine.low %v8700, %v8707
  %v12162 = vcombine.low %v8714, %v8721
  %v12163 = vcombine.low %v8728, %v8735
  %v12164 = vcombine.low %v8742, %v8749
  %v12165 = vcombine.low %v8756, %v8763
  %v12166 = vcombine.low %v8770, %v8777
  %v12167 = vcombine.low %v8784, %v8791
  %v12168 = vcombine.low %v8798, %v8805
  %v12169 = vcombine.low %v8812, %v8819
  %v12170 = vcombine.low %v8826, %v8833
  %v12171 = vcombine.low %v8840, %v8847
  %v12172 = vcombine.low %v8854, %v8861
  %v12173 = vcombine.low %v8868, %v8875
  %v12174 = vcombine.low %v8882, %v8889
  %v12175 = vcombine.low %v8896, %v8903
  %v12176 = vcombine.low %v8910, %v8917
  %v12177 = vcombine.low %v8924, %v8931
  %v12178 = vcombine.low %v8938, %v8945
  %v12179 = vcombine.low %v8952, %v8959
  %v12180 = vcombine.low %v8966, %v8973
  %v12181 = vcombine.low %v8980, %v8987
  %v12182 = vcombine.low %v8994, %v9001
  %v12183 = vcombine.low %v9008, %v9015
  %v12184 = vcombine.low %v9022, %v9029
  %v12185 = vcombine.low %v9036, %v9043
  %v12186 = vcombine.low %v9050, %v9057
  %v12187 = vcombine.low %v9064, %v9071
  %v12188 = vcombine.low %v9078, %v9085
  %v12189 = vcombine.low %v9092, %v9099
  %v12190 = vcombine.low %v9106, %v9113
  %v12191 = vcombine.low %v9120, %v9127
  %v12192 = vcombine.low %v9134, %v9141
  %v12193 = vcombine.low %v9148, %v9155
  %v12194 = vcombine.low %v9162, %v9169
  %v12195 = vcombine.low %v9176, %v9183
  %v12196 = vcombine.low %v9190, %v9197
  %v12197 = vcombine.low %v9204, %v9211
  %v12198 = vcombine.low %v9218, %v9225
  %v12199 = vcombine.low %v9232, %v9239
  %v12200 = vcombine.low %v9246, %v9253
  %v12201 = vcombine.low %v9260, %v9267
  %v12202 = vcombine.low %v9274, %v9281
  %v12203 = vcombine.low %v9288, %v9295
  %v12204 = vcombine.low %v9302, %v9309
  %v12205 = vcombine.low %v9316, %v9323
  %v12206 = vcombine.low %v9330, %v9337
  %v12207 = vcombine.low %v9344, %v9351
  %v12208 = vcombine.low %v9358, %v9365
  %v12209 = vcombine.low %v9372, %v9379
  %v12210 = vcombine.low %v9386, %v9393
  %v12211 = vcombine.low %v9400, %v9407
  %v12212 = vcombine.low %v9414, %v9421
  %v12213 = vcombine.low %v9428, %v9435
  %v12214 = vcombine.low %v9442, %v9449
  %v12215 = vcombine.low %v9456, %v9463
  %v12216 = vcombine.low %v9470, %v9477
  %v12217 = vcombine.low %v9484, %v9491
  %v12218 = vcombine.low %v9498, %v9505
  %v12219 = vcombine.low %v9512, %v9519
  %v12220 = vcombine.low %v9526, %v9533
  %v12221 = vcombine.low %v9540, %v9547
  %v12222 = vcombine.low %v9554, %v9561
  %v12223 = vcombine.low %v9568, %v9575
  %v12224 = vcombine.low %v9582, %v9589
  %v12225 = vcombine.low %v9596, %v9603
  %v12226 = vcombine.low %v9610, %v9617
  %v12227 = vcombine.low %v9624, %v9631
  %v12228 = vcombine.low %v9638, %v9645
  %v12229 = vcombine.low %v9652, %v9659
  %v12230 = vcombine.low %v9666, %v9673
  %v12231 = vcombine.low %v9680, %v9687
  %v12232 = vcombine.low %v9694, %v9701
  %v12233 = vcombine.low %v9708, %v9715
  %v12234 = vcombine.low %v9722, %v9729
  %v12235 = vcombine.low %v9736, %v9743
  %v12236 = vcombine.low %v9750, %v9757
  %v12237 = vcombine.low %v9764, %v9771
  %v12238 = vcombine.low %v9778, %v9785
  %v12239 = vcombine.low %v9792, %v9799
  %v12240 = vcombine.low %v9806, %v9813
  %v12241 = vcombine.low %v9820, %v9827
  %v12242 = vcombine.low %v9834, %v9841
  %v12243 = vcombine.low %v9848, %v9855
  %v12244 = vcombine.low %v9862, %v9869
  %v12245 = vcombine.low %v9876, %v9883
  %v12246 = vcombine.low %v9890, %v9897
  %v12247 = vcombine.low %v9904, %v9911
  %v12248 = vcombine.low %v9918, %v9925
  %v12249 = vcombine.low %v9932, %v9939
  %v12250 = vcombine.low %v9946, %v9953
  %v12251 = vcombine.low %v9960, %v9967
  %v12252 = vcombine.low %v9974, %v9981
  %v12253 = vcombine.low %v9988, %v9995
  %v12254 = vcombine.low %v10002, %v10009
  %v12255 = vcombine.low %v10016, %v10023
  %v12256 = vcombine.low %v10030, %v10037
  %v12257 = vcombine.low %v10044, %v10051
  %v12258 = vcombine.low %v10058, %v10065
  %v12259 = vcombine.low %v10072, %v10079
  %v12260 = vcombine.low %v10086, %v10093
  %v12261 = vcombine.low %v10100, %v10107
  %v12262 = vcombine.low %v10114, %v10121
  %v12263 = vcombine.low %v10128, %v10135
  %v12264 = vcombine.low %v10142, %v10149
  %v12265 = vcombine.low %v10156, %v10163
  %v12266 = vcombine.low %v10170, %v10177
  %v12267 = vcombine.low %v10184, %v10191
  %v12268 = vcombine.low %v10198, %v10205
  %v12269 = vcombine.low %v10212, %v10219
  %v12270 = vcombine.low %v10226, %v10233
  %v12271 = vcombine.low %v10240, %v10247
  %v12272 = vcombine.low %v10254, %v10261
  %v12273 = vcombine.low %v10268, %v10275
  %v12274 = vcombine.low %v10282, %v10289
  %v12275 = vcombine.low %v10296, %v10303
  %v12276 = vcombine.low %v10310, %v10317
  %v12277 = vcombine.low %v10324, %v10331
  %v12278 = vcombine.low %v10338, %v10345
  %v12279 = vcombine.low %v10352, %v10359
  %v12280 = vcombine.low %v10366, %v10373
  %v12281 = vcombine.low %v10380, %v10387
  %v12282 = vcombine.low %v10394, %v10401
  %v12283 = vcombine.low %v10408, %v10415
  %v12284 = vcombine.low %v10422, %v10429
  %v12285 = vcombine.low %v10436, %v10443
  %v12286 = vcombine.low %v10450, %v10457
  %v12287 = vcombine.low %v10464, %v10471
  %v12288 = vcombine.low %v10478, %v10485
  %v12289 = vcombine.low %v10492, %v10499
  %v12290 = vcombine.low %v10506, %v10513
  %v12291 = vcombine.low %v10520, %v10527
  %v12292 = vcombine.low %v10534, %v10541
  %v12293 = vcombine.low %v10548, %v10555
  %v12294 = vcombine.low %v10562, %v10569
  %v12295 = vcombine.low %v10576, %v10583
  %v12296 = vcombine.low %v10590, %v10597
  %v12297 = vcombine.low %v10604, %v10611
  %v12298 = vcombine.low %v10618, %v10625
  %v12299 = vcombine.low %v10632, %v10639
  %v12300 = vcombine.low %v10646, %v10653
  %v12301 = vcombine.low %v10660, %v10667
  %v12302 = vcombine.low %v10674, %v10681
  %v12303 = vcombine.low %v10688, %v10695
  %v12304 = vcombine.low %v10702, %v10709
  %v12305 = vcombine.low %v10716, %v10723
  %v12306 = vcombine.low %v10730, %v10737
  %v12307 = vcombine.low %v10744, %v10751
  %v12308 = vcombine.low %v10758, %v10765
  %v12309 = vcombine.low %v10772, %v10779
  %v12310 = vcombine.low %v10786, %v10793
  %v12311 = vcombine.low %v10800, %v10807
  %v12312 = vcombine.low %v10814, %v10821
  %v12313 = vcombine.low %v10828, %v10835
  %v12314 = vcombine.low %v10842, %v10849
  %v12315 = vcombine.low %v10856, %v10863
  %v12316 = vcombine.low %v10870, %v10877
  %v12317 = vcombine.low %v10884, %v10891
  %v12318 = vcombine.low %v10898, %v10905
  %v12319 = vcombine.low %v10912, %v10919
  %v12320 = vcombine.low %v10926, %v10933
  %v12321 = vcombine.low %v10940, %v10947
  %v12322 = vcombine.low %v10954, %v10961
  %v12323 = vcombine.low %v10968, %v10975
  %v12324 = vcombine.low %v10982, %v10989
  %v12325 = vcombine.low %v10996, %v11003
  %v12326 = vcombine.low %v11010, %v11017
  %v12327 = vcombine.low %v11024, %v11031
  %v12328 = vcombine.low %v11038, %v11045
  %v12329 = vcombine.low %v11052, %v11059
  %v12330 = vcombine.low %v11066, %v11073
  %v12331 = vcombine.low %v11080, %v11087
  %v12332 = vcombine.low %v11094, %v11101
  %v12333 = vcombine.low %v11108, %v11115
  %v12334 = vcombine.low %v11122, %v11129
  %v12335 = vcombine.low %v11136, %v11143
  %v12336 = vcombine.low %v11150, %v11157
  %v12337 = vcombine.low %v11164, %v11171
  %v12338 = vcombine.low %v11178, %v11185
  %v12339 = vcombine.low %v11192, %v11199
  %v12340 = vcombine.low %v11206, %v11213
  %v12341 = vcombine.low %v11220, %v11227
  %v12342 = vcombine.low %v11234, %v11241
  %v12343 = vcombine.low %v11248, %v11255
  %v12344 = vcombine.low %v11262, %v11269
  %v12345 = vcombine.low %v11276, %v11283
  %v12346 = vcombine.low %v11290, %v11297
  %v12347 = vcombine.low %v11304, %v11311
  %v12348 = vcombine.low %v11318, %v11325
  %v12349 = vcombine.low %v11332, %v11339
  %v12350 = vcombine.low %v11346, %v11353
  %v12351 = vcombine.low %v11360, %v11367
  %v12352 = vcombine.low %v11374, %v11381
  %v12353 = vcombine.low %v11388, %v11395
  %v12354 = vcombine.low %v11402, %v11409
  %v12355 = vcombine.low %v11416, %v11423
  %v12356 = vcombine.low %v11430, %v11437
  %v12357 = vcombine.low %v11444, %v11451
  %v12358 = vcombine.low %v11458, %v11465
  %v12359 = vcombine.low %v11472, %v11479
  %v12360 = vcombine.low %v11486, %v11493
  %v12361 = vcombine.low %v11500, %v11507
  %v12362 = vcombine.low %v11514, %v11521
  %v12363 = vcombine.low %v11528, %v11535
  %v12364 = vcombine.low %v11542, %v11549
  %v12365 = vcombine.low %v11556, %v11563
  %v12366 = vcombine.low %v11570, %v11577
  %v12367 = vcombine.low %v11584, %v11591
  %v12368 = vcombine.low %v11598, %v11605
  %v12369 = vcombine.low %v11612, %v11619
  %v12370 = vcombine.low %v11626, %v11633
  %v12371 = vcombine.low %v11640, %v11647
  %v12372 = vcombine.low %v11654, %v11661
  %v12373 = vcombine.low %v11668, %v11675
  %v12374 = vcombine.low %v11682, %v11689
  %v12375 = vcombine.low %v11696, %v11703
  %v12376 = vcombine.low %v11710, %v11717
  %v12377 = vcombine.low %v11724, %v11731
  %v12378 = vcombine.low %v11738, %v11745
  %v12379 = vcombine.low %v11752, %v11759
  %v12380 = vcombine.low %v11766, %v11773
  %v12381 = vcombine.low %v11780, %v11787
  %v12382 = vcombine.low %v11794, %v11801
  %v12383 = vcombine.low %v11808, %v11815
  %v12384 = vcombine.low %v11822, %v11829
  %v12385 = vcombine.low %v11836, %v11843
  %v12386 = vcombine.low %v11850, %v11857
  %v12387 = vcombine.low %v11864, %v11871
  %v12388 = vcombine.low %v11878, %v11885
  %v12389 = vcombine.low %v11892, %v11899
  %v12390 = vcombine.low %v11906, %v11913
  %v12391 = vcombine.low %v11920, %v11927
  %v12392 = vcombine.low %v11934, %v11941
  %v12393 = vcombine.low %v11948, %v11955
  %v12394 = vcombine.low %v11962, %v11969
  %v12395 = vcombine.low %v11976, %v11983
  %v12396 = vcombine.low %v11990, %v11997
  %v12397 = vcombine.low %v12004, %v12011
  %v12398 = vcombine.low %v12018, %v12025
  %v12399 = vcombine.low %v12032, %v12039
  %v12400 = vcombine.low %v12046, %v12053
  %v12401 = vcombine.low %v12060, %v12067
  %v12402 = vcombine.low %v12074, %v12081
  %v12403 = vcombine.low %v12088, %v12095
  %v12404 = vcombine.low %v12102, %v12109
  %v12405 = vcombine.low %v12116, %v12123
  %v12406 = vcombine.low %v12130, %v12137
  %v12407 = vcombine.low %v12144, %v12151
  %12408 = vset.pattern.permute.xlu0 0
  %12409 = vperm.xlu0 %12408, %v12152
  %v12410 = vpop.permute.xlu0 %12409
  %12411 = vset.pattern.permute.xlu0 0
  %12412 = vperm.xlu0 %12411, %v12153
  %v12413 = vpop.permute.xlu0 %12412
  %12414 = vset.pattern.permute.xlu0 0
  %12415 = vperm.xlu0 %12414, %v12154
  %v12416 = vpop.permute.xlu0 %12415
  %12417 = vset.pattern.permute.xlu0 0
  %12418 = vperm.xlu0 %12417, %v12155
  %v12419 = vpop.permute.xlu0 %12418
  %12420 = vset.pattern.permute.xlu0 0
  %12421 = vperm.xlu0 %12420, %v12156
  %v12422 = vpop.permute.xlu0 %12421
  %12423 = vset.pattern.permute.xlu0 0
  %12424 = vperm.xlu0 %12423, %v12157
  %v12425 = vpop.permute.xlu0 %12424
  %12426 = vset.pattern.permute.xlu0 0
  %12427 = vperm.xlu0 %12426, %v12158
  %v12428 = vpop.permute.xlu0 %12427
  %12429 = vset.pattern.permute.xlu0 0
  %12430 = vperm.xlu0 %12429, %v12159
  %v12431 = vpop.permute.xlu0 %12430
  %12432 = vset.pattern.permute.xlu0 0
  %12433 = vperm.xlu0 %12432, %v12160
  %v12434 = vpop.permute.xlu0 %12433
  %12435 = vset.pattern.permute.xlu0 0
  %12436 = vperm.xlu0 %12435, %v12161
  %v12437 = vpop.permute.xlu0 %12436
  %12438 = vset.pattern.permute.xlu0 0
  %12439 = vperm.xlu0 %12438, %v12162
  %v12440 = vpop.permute.xlu0 %12439
  %12441 = vset.pattern.permute.xlu0 0
  %12442 = vperm.xlu0 %12441, %v12163
  %v12443 = vpop.permute.xlu0 %12442
  %12444 = vset.pattern.permute.xlu0 0
  %12445 = vperm.xlu0 %12444, %v12164
  %v12446 = vpop.permute.xlu0 %12445
  %12447 = vset.pattern.permute.xlu0 0
  %12448 = vperm.xlu0 %12447, %v12165
  %v12449 = vpop.permute.xlu0 %12448
  %12450 = vset.pattern.permute.xlu0 0
  %12451 = vperm.xlu0 %12450, %v12166
  %v12452 = vpop.permute.xlu0 %12451
  %12453 = vset.pattern.permute.xlu0 0
  %12454 = vperm.xlu0 %12453, %v12167
  %v12455 = vpop.permute.xlu0 %12454
  %12456 = vset.pattern.permute.xlu0 0
  %12457 = vperm.xlu0 %12456, %v12168
  %v12458 = vpop.permute.xlu0 %12457
  %12459 = vset.pattern.permute.xlu0 0
  %12460 = vperm.xlu0 %12459, %v12169
  %v12461 = vpop.permute.xlu0 %12460
  %12462 = vset.pattern.permute.xlu0 0
  %12463 = vperm.xlu0 %12462, %v12170
  %v12464 = vpop.permute.xlu0 %12463
  %12465 = vset.pattern.permute.xlu0 0
  %12466 = vperm.xlu0 %12465, %v12171
  %v12467 = vpop.permute.xlu0 %12466
  %12468 = vset.pattern.permute.xlu0 0
  %12469 = vperm.xlu0 %12468, %v12172
  %v12470 = vpop.permute.xlu0 %12469
  %12471 = vset.pattern.permute.xlu0 0
  %12472 = vperm.xlu0 %12471, %v12173
  %v12473 = vpop.permute.xlu0 %12472
  %12474 = vset.pattern.permute.xlu0 0
  %12475 = vperm.xlu0 %12474, %v12174
  %v12476 = vpop.permute.xlu0 %12475
  %12477 = vset.pattern.permute.xlu0 0
  %12478 = vperm.xlu0 %12477, %v12175
  %v12479 = vpop.permute.xlu0 %12478
  %12480 = vset.pattern.permute.xlu0 0
  %12481 = vperm.xlu0 %12480, %v12176
  %v12482 = vpop.permute.xlu0 %12481
  %12483 = vset.pattern.permute.xlu0 0
  %12484 = vperm.xlu0 %12483, %v12177
  %v12485 = vpop.permute.xlu0 %12484
  %12486 = vset.pattern.permute.xlu0 0
  %12487 = vperm.xlu0 %12486, %v12178
  %v12488 = vpop.permute.xlu0 %12487
  %12489 = vset.pattern.permute.xlu0 0
  %12490 = vperm.xlu0 %12489, %v12179
  %v12491 = vpop.permute.xlu0 %12490
  %12492 = vset.pattern.permute.xlu0 0
  %12493 = vperm.xlu0 %12492, %v12180
  %v12494 = vpop.permute.xlu0 %12493
  %12495 = vset.pattern.permute.xlu0 0
  %12496 = vperm.xlu0 %12495, %v12181
  %v12497 = vpop.permute.xlu0 %12496
  %12498 = vset.pattern.permute.xlu0 0
  %12499 = vperm.xlu0 %12498, %v12182
  %v12500 = vpop.permute.xlu0 %12499
  %12501 = vset.pattern.permute.xlu0 0
  %12502 = vperm.xlu0 %12501, %v12183
  %v12503 = vpop.permute.xlu0 %12502
  %12504 = vset.pattern.permute.xlu0 0
  %12505 = vperm.xlu0 %12504, %v12184
  %v12506 = vpop.permute.xlu0 %12505
  %12507 = vset.pattern.permute.xlu0 0
  %12508 = vperm.xlu0 %12507, %v12185
  %v12509 = vpop.permute.xlu0 %12508
  %12510 = vset.pattern.permute.xlu0 0
  %12511 = vperm.xlu0 %12510, %v12186
  %v12512 = vpop.permute.xlu0 %12511
  %12513 = vset.pattern.permute.xlu0 0
  %12514 = vperm.xlu0 %12513, %v12187
  %v12515 = vpop.permute.xlu0 %12514
  %12516 = vset.pattern.permute.xlu0 0
  %12517 = vperm.xlu0 %12516, %v12188
  %v12518 = vpop.permute.xlu0 %12517
  %12519 = vset.pattern.permute.xlu0 0
  %12520 = vperm.xlu0 %12519, %v12189
  %v12521 = vpop.permute.xlu0 %12520
  %12522 = vset.pattern.permute.xlu0 0
  %12523 = vperm.xlu0 %12522, %v12190
  %v12524 = vpop.permute.xlu0 %12523
  %12525 = vset.pattern.permute.xlu0 0
  %12526 = vperm.xlu0 %12525, %v12191
  %v12527 = vpop.permute.xlu0 %12526
  %12528 = vset.pattern.permute.xlu0 0
  %12529 = vperm.xlu0 %12528, %v12192
  %v12530 = vpop.permute.xlu0 %12529
  %12531 = vset.pattern.permute.xlu0 0
  %12532 = vperm.xlu0 %12531, %v12193
  %v12533 = vpop.permute.xlu0 %12532
  %12534 = vset.pattern.permute.xlu0 0
  %12535 = vperm.xlu0 %12534, %v12194
  %v12536 = vpop.permute.xlu0 %12535
  %12537 = vset.pattern.permute.xlu0 0
  %12538 = vperm.xlu0 %12537, %v12195
  %v12539 = vpop.permute.xlu0 %12538
  %12540 = vset.pattern.permute.xlu0 0
  %12541 = vperm.xlu0 %12540, %v12196
  %v12542 = vpop.permute.xlu0 %12541
  %12543 = vset.pattern.permute.xlu0 0
  %12544 = vperm.xlu0 %12543, %v12197
  %v12545 = vpop.permute.xlu0 %12544
  %12546 = vset.pattern.permute.xlu0 0
  %12547 = vperm.xlu0 %12546, %v12198
  %v12548 = vpop.permute.xlu0 %12547
  %12549 = vset.pattern.permute.xlu0 0
  %12550 = vperm.xlu0 %12549, %v12199
  %v12551 = vpop.permute.xlu0 %12550
  %12552 = vset.pattern.permute.xlu0 0
  %12553 = vperm.xlu0 %12552, %v12200
  %v12554 = vpop.permute.xlu0 %12553
  %12555 = vset.pattern.permute.xlu0 0
  %12556 = vperm.xlu0 %12555, %v12201
  %v12557 = vpop.permute.xlu0 %12556
  %12558 = vset.pattern.permute.xlu0 0
  %12559 = vperm.xlu0 %12558, %v12202
  %v12560 = vpop.permute.xlu0 %12559
  %12561 = vset.pattern.permute.xlu0 0
  %12562 = vperm.xlu0 %12561, %v12203
  %v12563 = vpop.permute.xlu0 %12562
  %12564 = vset.pattern.permute.xlu0 0
  %12565 = vperm.xlu0 %12564, %v12204
  %v12566 = vpop.permute.xlu0 %12565
  %12567 = vset.pattern.permute.xlu0 0
  %12568 = vperm.xlu0 %12567, %v12205
  %v12569 = vpop.permute.xlu0 %12568
  %12570 = vset.pattern.permute.xlu0 0
  %12571 = vperm.xlu0 %12570, %v12206
  %v12572 = vpop.permute.xlu0 %12571
  %12573 = vset.pattern.permute.xlu0 0
  %12574 = vperm.xlu0 %12573, %v12207
  %v12575 = vpop.permute.xlu0 %12574
  %12576 = vset.pattern.permute.xlu0 0
  %12577 = vperm.xlu0 %12576, %v12208
  %v12578 = vpop.permute.xlu0 %12577
  %12579 = vset.pattern.permute.xlu0 0
  %12580 = vperm.xlu0 %12579, %v12209
  %v12581 = vpop.permute.xlu0 %12580
  %12582 = vset.pattern.permute.xlu0 0
  %12583 = vperm.xlu0 %12582, %v12210
  %v12584 = vpop.permute.xlu0 %12583
  %12585 = vset.pattern.permute.xlu0 0
  %12586 = vperm.xlu0 %12585, %v12211
  %v12587 = vpop.permute.xlu0 %12586
  %12588 = vset.pattern.permute.xlu0 0
  %12589 = vperm.xlu0 %12588, %v12212
  %v12590 = vpop.permute.xlu0 %12589
  %12591 = vset.pattern.permute.xlu0 0
  %12592 = vperm.xlu0 %12591, %v12213
  %v12593 = vpop.permute.xlu0 %12592
  %12594 = vset.pattern.permute.xlu0 0
  %12595 = vperm.xlu0 %12594, %v12214
  %v12596 = vpop.permute.xlu0 %12595
  %12597 = vset.pattern.permute.xlu0 0
  %12598 = vperm.xlu0 %12597, %v12215
  %v12599 = vpop.permute.xlu0 %12598
  %12600 = vset.pattern.permute.xlu0 0
  %12601 = vperm.xlu0 %12600, %v12216
  %v12602 = vpop.permute.xlu0 %12601
  %12603 = vset.pattern.permute.xlu0 0
  %12604 = vperm.xlu0 %12603, %v12217
  %v12605 = vpop.permute.xlu0 %12604
  %12606 = vset.pattern.permute.xlu0 0
  %12607 = vperm.xlu0 %12606, %v12218
  %v12608 = vpop.permute.xlu0 %12607
  %12609 = vset.pattern.permute.xlu0 0
  %12610 = vperm.xlu0 %12609, %v12219
  %v12611 = vpop.permute.xlu0 %12610
  %12612 = vset.pattern.permute.xlu0 0
  %12613 = vperm.xlu0 %12612, %v12220
  %v12614 = vpop.permute.xlu0 %12613
  %12615 = vset.pattern.permute.xlu0 0
  %12616 = vperm.xlu0 %12615, %v12221
  %v12617 = vpop.permute.xlu0 %12616
  %12618 = vset.pattern.permute.xlu0 0
  %12619 = vperm.xlu0 %12618, %v12222
  %v12620 = vpop.permute.xlu0 %12619
  %12621 = vset.pattern.permute.xlu0 0
  %12622 = vperm.xlu0 %12621, %v12223
  %v12623 = vpop.permute.xlu0 %12622
  %12624 = vset.pattern.permute.xlu0 0
  %12625 = vperm.xlu0 %12624, %v12224
  %v12626 = vpop.permute.xlu0 %12625
  %12627 = vset.pattern.permute.xlu0 0
  %12628 = vperm.xlu0 %12627, %v12225
  %v12629 = vpop.permute.xlu0 %12628
  %12630 = vset.pattern.permute.xlu0 0
  %12631 = vperm.xlu0 %12630, %v12226
  %v12632 = vpop.permute.xlu0 %12631
  %12633 = vset.pattern.permute.xlu0 0
  %12634 = vperm.xlu0 %12633, %v12227
  %v12635 = vpop.permute.xlu0 %12634
  %12636 = vset.pattern.permute.xlu0 0
  %12637 = vperm.xlu0 %12636, %v12228
  %v12638 = vpop.permute.xlu0 %12637
  %12639 = vset.pattern.permute.xlu0 0
  %12640 = vperm.xlu0 %12639, %v12229
  %v12641 = vpop.permute.xlu0 %12640
  %12642 = vset.pattern.permute.xlu0 0
  %12643 = vperm.xlu0 %12642, %v12230
  %v12644 = vpop.permute.xlu0 %12643
  %12645 = vset.pattern.permute.xlu0 0
  %12646 = vperm.xlu0 %12645, %v12231
  %v12647 = vpop.permute.xlu0 %12646
  %12648 = vset.pattern.permute.xlu0 0
  %12649 = vperm.xlu0 %12648, %v12232
  %v12650 = vpop.permute.xlu0 %12649
  %12651 = vset.pattern.permute.xlu0 0
  %12652 = vperm.xlu0 %12651, %v12233
  %v12653 = vpop.permute.xlu0 %12652
  %12654 = vset.pattern.permute.xlu0 0
  %12655 = vperm.xlu0 %12654, %v12234
  %v12656 = vpop.permute.xlu0 %12655
  %12657 = vset.pattern.permute.xlu0 0
  %12658 = vperm.xlu0 %12657, %v12235
  %v12659 = vpop.permute.xlu0 %12658
  %12660 = vset.pattern.permute.xlu0 0
  %12661 = vperm.xlu0 %12660, %v12236
  %v12662 = vpop.permute.xlu0 %12661
  %12663 = vset.pattern.permute.xlu0 0
  %12664 = vperm.xlu0 %12663, %v12237
  %v12665 = vpop.permute.xlu0 %12664
  %12666 = vset.pattern.permute.xlu0 0
  %12667 = vperm.xlu0 %12666, %v12238
  %v12668 = vpop.permute.xlu0 %12667
  %12669 = vset.pattern.permute.xlu0 0
  %12670 = vperm.xlu0 %12669, %v12239
  %v12671 = vpop.permute.xlu0 %12670
  %12672 = vset.pattern.permute.xlu0 0
  %12673 = vperm.xlu0 %12672, %v12240
  %v12674 = vpop.permute.xlu0 %12673
  %12675 = vset.pattern.permute.xlu0 0
  %12676 = vperm.xlu0 %12675, %v12241
  %v12677 = vpop.permute.xlu0 %12676
  %12678 = vset.pattern.permute.xlu0 0
  %12679 = vperm.xlu0 %12678, %v12242
  %v12680 = vpop.permute.xlu0 %12679
  %12681 = vset.pattern.permute.xlu0 0
  %12682 = vperm.xlu0 %12681, %v12243
  %v12683 = vpop.permute.xlu0 %12682
  %12684 = vset.pattern.permute.xlu0 0
  %12685 = vperm.xlu0 %12684, %v12244
  %v12686 = vpop.permute.xlu0 %12685
  %12687 = vset.pattern.permute.xlu0 0
  %12688 = vperm.xlu0 %12687, %v12245
  %v12689 = vpop.permute.xlu0 %12688
  %12690 = vset.pattern.permute.xlu0 0
  %12691 = vperm.xlu0 %12690, %v12246
  %v12692 = vpop.permute.xlu0 %12691
  %12693 = vset.pattern.permute.xlu0 0
  %12694 = vperm.xlu0 %12693, %v12247
  %v12695 = vpop.permute.xlu0 %12694
  %12696 = vset.pattern.permute.xlu0 0
  %12697 = vperm.xlu0 %12696, %v12248
  %v12698 = vpop.permute.xlu0 %12697
  %12699 = vset.pattern.permute.xlu0 0
  %12700 = vperm.xlu0 %12699, %v12249
  %v12701 = vpop.permute.xlu0 %12700
  %12702 = vset.pattern.permute.xlu0 0
  %12703 = vperm.xlu0 %12702, %v12250
  %v12704 = vpop.permute.xlu0 %12703
  %12705 = vset.pattern.permute.xlu0 0
  %12706 = vperm.xlu0 %12705, %v12251
  %v12707 = vpop.permute.xlu0 %12706
  %12708 = vset.pattern.permute.xlu0 0
  %12709 = vperm.xlu0 %12708, %v12252
  %v12710 = vpop.permute.xlu0 %12709
  %12711 = vset.pattern.permute.xlu0 0
  %12712 = vperm.xlu0 %12711, %v12253
  %v12713 = vpop.permute.xlu0 %12712
  %12714 = vset.pattern.permute.xlu0 0
  %12715 = vperm.xlu0 %12714, %v12254
  %v12716 = vpop.permute.xlu0 %12715
  %12717 = vset.pattern.permute.xlu0 0
  %12718 = vperm.xlu0 %12717, %v12255
  %v12719 = vpop.permute.xlu0 %12718
  %12720 = vset.pattern.permute.xlu0 0
  %12721 = vperm.xlu0 %12720, %v12256
  %v12722 = vpop.permute.xlu0 %12721
  %12723 = vset.pattern.permute.xlu0 0
  %12724 = vperm.xlu0 %12723, %v12257
  %v12725 = vpop.permute.xlu0 %12724
  %12726 = vset.pattern.permute.xlu0 0
  %12727 = vperm.xlu0 %12726, %v12258
  %v12728 = vpop.permute.xlu0 %12727
  %12729 = vset.pattern.permute.xlu0 0
  %12730 = vperm.xlu0 %12729, %v12259
  %v12731 = vpop.permute.xlu0 %12730
  %12732 = vset.pattern.permute.xlu0 0
  %12733 = vperm.xlu0 %12732, %v12260
  %v12734 = vpop.permute.xlu0 %12733
  %12735 = vset.pattern.permute.xlu0 0
  %12736 = vperm.xlu0 %12735, %v12261
  %v12737 = vpop.permute.xlu0 %12736
  %12738 = vset.pattern.permute.xlu0 0
  %12739 = vperm.xlu0 %12738, %v12262
  %v12740 = vpop.permute.xlu0 %12739
  %12741 = vset.pattern.permute.xlu0 0
  %12742 = vperm.xlu0 %12741, %v12263
  %v12743 = vpop.permute.xlu0 %12742
  %12744 = vset.pattern.permute.xlu0 0
  %12745 = vperm.xlu0 %12744, %v12264
  %v12746 = vpop.permute.xlu0 %12745
  %12747 = vset.pattern.permute.xlu0 0
  %12748 = vperm.xlu0 %12747, %v12265
  %v12749 = vpop.permute.xlu0 %12748
  %12750 = vset.pattern.permute.xlu0 0
  %12751 = vperm.xlu0 %12750, %v12266
  %v12752 = vpop.permute.xlu0 %12751
  %12753 = vset.pattern.permute.xlu0 0
  %12754 = vperm.xlu0 %12753, %v12267
  %v12755 = vpop.permute.xlu0 %12754
  %12756 = vset.pattern.permute.xlu0 0
  %12757 = vperm.xlu0 %12756, %v12268
  %v12758 = vpop.permute.xlu0 %12757
  %12759 = vset.pattern.permute.xlu0 0
  %12760 = vperm.xlu0 %12759, %v12269
  %v12761 = vpop.permute.xlu0 %12760
  %12762 = vset.pattern.permute.xlu0 0
  %12763 = vperm.xlu0 %12762, %v12270
  %v12764 = vpop.permute.xlu0 %12763
  %12765 = vset.pattern.permute.xlu0 0
  %12766 = vperm.xlu0 %12765, %v12271
  %v12767 = vpop.permute.xlu0 %12766
  %12768 = vset.pattern.permute.xlu0 0
  %12769 = vperm.xlu0 %12768, %v12272
  %v12770 = vpop.permute.xlu0 %12769
  %12771 = vset.pattern.permute.xlu0 0
  %12772 = vperm.xlu0 %12771, %v12273
  %v12773 = vpop.permute.xlu0 %12772
  %12774 = vset.pattern.permute.xlu0 0
  %12775 = vperm.xlu0 %12774, %v12274
  %v12776 = vpop.permute.xlu0 %12775
  %12777 = vset.pattern.permute.xlu0 0
  %12778 = vperm.xlu0 %12777, %v12275
  %v12779 = vpop.permute.xlu0 %12778
  %12780 = vset.pattern.permute.xlu0 0
  %12781 = vperm.xlu0 %12780, %v12276
  %v12782 = vpop.permute.xlu0 %12781
  %12783 = vset.pattern.permute.xlu0 0
  %12784 = vperm.xlu0 %12783, %v12277
  %v12785 = vpop.permute.xlu0 %12784
  %12786 = vset.pattern.permute.xlu0 0
  %12787 = vperm.xlu0 %12786, %v12278
  %v12788 = vpop.permute.xlu0 %12787
  %12789 = vset.pattern.permute.xlu0 0
  %12790 = vperm.xlu0 %12789, %v12279
  %v12791 = vpop.permute.xlu0 %12790
  %12792 = vset.pattern.permute.xlu0 0
  %12793 = vperm.xlu0 %12792, %v12280
  %v12794 = vpop.permute.xlu0 %12793
  %12795 = vset.pattern.permute.xlu0 0
  %12796 = vperm.xlu0 %12795, %v12281
  %v12797 = vpop.permute.xlu0 %12796
  %12798 = vset.pattern.permute.xlu0 0
  %12799 = vperm.xlu0 %12798, %v12282
  %v12800 = vpop.permute.xlu0 %12799
  %12801 = vset.pattern.permute.xlu0 0
  %12802 = vperm.xlu0 %12801, %v12283
  %v12803 = vpop.permute.xlu0 %12802
  %12804 = vset.pattern.permute.xlu0 0
  %12805 = vperm.xlu0 %12804, %v12284
  %v12806 = vpop.permute.xlu0 %12805
  %12807 = vset.pattern.permute.xlu0 0
  %12808 = vperm.xlu0 %12807, %v12285
  %v12809 = vpop.permute.xlu0 %12808
  %12810 = vset.pattern.permute.xlu0 0
  %12811 = vperm.xlu0 %12810, %v12286
  %v12812 = vpop.permute.xlu0 %12811
  %12813 = vset.pattern.permute.xlu0 0
  %12814 = vperm.xlu0 %12813, %v12287
  %v12815 = vpop.permute.xlu0 %12814
  %12816 = vset.pattern.permute.xlu0 0
  %12817 = vperm.xlu0 %12816, %v12288
  %v12818 = vpop.permute.xlu0 %12817
  %12819 = vset.pattern.permute.xlu0 0
  %12820 = vperm.xlu0 %12819, %v12289
  %v12821 = vpop.permute.xlu0 %12820
  %12822 = vset.pattern.permute.xlu0 0
  %12823 = vperm.xlu0 %12822, %v12290
  %v12824 = vpop.permute.xlu0 %12823
  %12825 = vset.pattern.permute.xlu0 0
  %12826 = vperm.xlu0 %12825, %v12291
  %v12827 = vpop.permute.xlu0 %12826
  %12828 = vset.pattern.permute.xlu0 0
  %12829 = vperm.xlu0 %12828, %v12292
  %v12830 = vpop.permute.xlu0 %12829
  %12831 = vset.pattern.permute.xlu0 0
  %12832 = vperm.xlu0 %12831, %v12293
  %v12833 = vpop.permute.xlu0 %12832
  %12834 = vset.pattern.permute.xlu0 0
  %12835 = vperm.xlu0 %12834, %v12294
  %v12836 = vpop.permute.xlu0 %12835
  %12837 = vset.pattern.permute.xlu0 0
  %12838 = vperm.xlu0 %12837, %v12295
  %v12839 = vpop.permute.xlu0 %12838
  %12840 = vset.pattern.permute.xlu0 0
  %12841 = vperm.xlu0 %12840, %v12296
  %v12842 = vpop.permute.xlu0 %12841
  %12843 = vset.pattern.permute.xlu0 0
  %12844 = vperm.xlu0 %12843, %v12297
  %v12845 = vpop.permute.xlu0 %12844
  %12846 = vset.pattern.permute.xlu0 0
  %12847 = vperm.xlu0 %12846, %v12298
  %v12848 = vpop.permute.xlu0 %12847
  %12849 = vset.pattern.permute.xlu0 0
  %12850 = vperm.xlu0 %12849, %v12299
  %v12851 = vpop.permute.xlu0 %12850
  %12852 = vset.pattern.permute.xlu0 0
  %12853 = vperm.xlu0 %12852, %v12300
  %v12854 = vpop.permute.xlu0 %12853
  %12855 = vset.pattern.permute.xlu0 0
  %12856 = vperm.xlu0 %12855, %v12301
  %v12857 = vpop.permute.xlu0 %12856
  %12858 = vset.pattern.permute.xlu0 0
  %12859 = vperm.xlu0 %12858, %v12302
  %v12860 = vpop.permute.xlu0 %12859
  %12861 = vset.pattern.permute.xlu0 0
  %12862 = vperm.xlu0 %12861, %v12303
  %v12863 = vpop.permute.xlu0 %12862
  %12864 = vset.pattern.permute.xlu0 0
  %12865 = vperm.xlu0 %12864, %v12304
  %v12866 = vpop.permute.xlu0 %12865
  %12867 = vset.pattern.permute.xlu0 0
  %12868 = vperm.xlu0 %12867, %v12305
  %v12869 = vpop.permute.xlu0 %12868
  %12870 = vset.pattern.permute.xlu0 0
  %12871 = vperm.xlu0 %12870, %v12306
  %v12872 = vpop.permute.xlu0 %12871
  %12873 = vset.pattern.permute.xlu0 0
  %12874 = vperm.xlu0 %12873, %v12307
  %v12875 = vpop.permute.xlu0 %12874
  %12876 = vset.pattern.permute.xlu0 0
  %12877 = vperm.xlu0 %12876, %v12308
  %v12878 = vpop.permute.xlu0 %12877
  %12879 = vset.pattern.permute.xlu0 0
  %12880 = vperm.xlu0 %12879, %v12309
  %v12881 = vpop.permute.xlu0 %12880
  %12882 = vset.pattern.permute.xlu0 0
  %12883 = vperm.xlu0 %12882, %v12310
  %v12884 = vpop.permute.xlu0 %12883
  %12885 = vset.pattern.permute.xlu0 0
  %12886 = vperm.xlu0 %12885, %v12311
  %v12887 = vpop.permute.xlu0 %12886
  %12888 = vset.pattern.permute.xlu0 0
  %12889 = vperm.xlu0 %12888, %v12312
  %v12890 = vpop.permute.xlu0 %12889
  %12891 = vset.pattern.permute.xlu0 0
  %12892 = vperm.xlu0 %12891, %v12313
  %v12893 = vpop.permute.xlu0 %12892
  %12894 = vset.pattern.permute.xlu0 0
  %12895 = vperm.xlu0 %12894, %v12314
  %v12896 = vpop.permute.xlu0 %12895
  %12897 = vset.pattern.permute.xlu0 0
  %12898 = vperm.xlu0 %12897, %v12315
  %v12899 = vpop.permute.xlu0 %12898
  %12900 = vset.pattern.permute.xlu0 0
  %12901 = vperm.xlu0 %12900, %v12316
  %v12902 = vpop.permute.xlu0 %12901
  %12903 = vset.pattern.permute.xlu0 0
  %12904 = vperm.xlu0 %12903, %v12317
  %v12905 = vpop.permute.xlu0 %12904
  %12906 = vset.pattern.permute.xlu0 0
  %12907 = vperm.xlu0 %12906, %v12318
  %v12908 = vpop.permute.xlu0 %12907
  %12909 = vset.pattern.permute.xlu0 0
  %12910 = vperm.xlu0 %12909, %v12319
  %v12911 = vpop.permute.xlu0 %12910
  %12912 = vset.pattern.permute.xlu0 0
  %12913 = vperm.xlu0 %12912, %v12320
  %v12914 = vpop.permute.xlu0 %12913
  %12915 = vset.pattern.permute.xlu0 0
  %12916 = vperm.xlu0 %12915, %v12321
  %v12917 = vpop.permute.xlu0 %12916
  %12918 = vset.pattern.permute.xlu0 0
  %12919 = vperm.xlu0 %12918, %v12322
  %v12920 = vpop.permute.xlu0 %12919
  %12921 = vset.pattern.permute.xlu0 0
  %12922 = vperm.xlu0 %12921, %v12323
  %v12923 = vpop.permute.xlu0 %12922
  %12924 = vset.pattern.permute.xlu0 0
  %12925 = vperm.xlu0 %12924, %v12324
  %v12926 = vpop.permute.xlu0 %12925
  %12927 = vset.pattern.permute.xlu0 0
  %12928 = vperm.xlu0 %12927, %v12325
  %v12929 = vpop.permute.xlu0 %12928
  %12930 = vset.pattern.permute.xlu0 0
  %12931 = vperm.xlu0 %12930, %v12326
  %v12932 = vpop.permute.xlu0 %12931
  %12933 = vset.pattern.permute.xlu0 0
  %12934 = vperm.xlu0 %12933, %v12327
  %v12935 = vpop.permute.xlu0 %12934
  %12936 = vset.pattern.permute.xlu0 0
  %12937 = vperm.xlu0 %12936, %v12328
  %v12938 = vpop.permute.xlu0 %12937
  %12939 = vset.pattern.permute.xlu0 0
  %12940 = vperm.xlu0 %12939, %v12329
  %v12941 = vpop.permute.xlu0 %12940
  %12942 = vset.pattern.permute.xlu0 0
  %12943 = vperm.xlu0 %12942, %v12330
  %v12944 = vpop.permute.xlu0 %12943
  %12945 = vset.pattern.permute.xlu0 0
  %12946 = vperm.xlu0 %12945, %v12331
  %v12947 = vpop.permute.xlu0 %12946
  %12948 = vset.pattern.permute.xlu0 0
  %12949 = vperm.xlu0 %12948, %v12332
  %v12950 = vpop.permute.xlu0 %12949
  %12951 = vset.pattern.permute.xlu0 0
  %12952 = vperm.xlu0 %12951, %v12333
  %v12953 = vpop.permute.xlu0 %12952
  %12954 = vset.pattern.permute.xlu0 0
  %12955 = vperm.xlu0 %12954, %v12334
  %v12956 = vpop.permute.xlu0 %12955
  %12957 = vset.pattern.permute.xlu0 0
  %12958 = vperm.xlu0 %12957, %v12335
  %v12959 = vpop.permute.xlu0 %12958
  %12960 = vset.pattern.permute.xlu0 0
  %12961 = vperm.xlu0 %12960, %v12336
  %v12962 = vpop.permute.xlu0 %12961
  %12963 = vset.pattern.permute.xlu0 0
  %12964 = vperm.xlu0 %12963, %v12337
  %v12965 = vpop.permute.xlu0 %12964
  %12966 = vset.pattern.permute.xlu0 0
  %12967 = vperm.xlu0 %12966, %v12338
  %v12968 = vpop.permute.xlu0 %12967
  %12969 = vset.pattern.permute.xlu0 0
  %12970 = vperm.xlu0 %12969, %v12339
  %v12971 = vpop.permute.xlu0 %12970
  %12972 = vset.pattern.permute.xlu0 0
  %12973 = vperm.xlu0 %12972, %v12340
  %v12974 = vpop.permute.xlu0 %12973
  %12975 = vset.pattern.permute.xlu0 0
  %12976 = vperm.xlu0 %12975, %v12341
  %v12977 = vpop.permute.xlu0 %12976
  %12978 = vset.pattern.permute.xlu0 0
  %12979 = vperm.xlu0 %12978, %v12342
  %v12980 = vpop.permute.xlu0 %12979
  %12981 = vset.pattern.permute.xlu0 0
  %12982 = vperm.xlu0 %12981, %v12343
  %v12983 = vpop.permute.xlu0 %12982
  %12984 = vset.pattern.permute.xlu0 0
  %12985 = vperm.xlu0 %12984, %v12344
  %v12986 = vpop.permute.xlu0 %12985
  %12987 = vset.pattern.permute.xlu0 0
  %12988 = vperm.xlu0 %12987, %v12345
  %v12989 = vpop.permute.xlu0 %12988
  %12990 = vset.pattern.permute.xlu0 0
  %12991 = vperm.xlu0 %12990, %v12346
  %v12992 = vpop.permute.xlu0 %12991
  %12993 = vset.pattern.permute.xlu0 0
  %12994 = vperm.xlu0 %12993, %v12347
  %v12995 = vpop.permute.xlu0 %12994
  %12996 = vset.pattern.permute.xlu0 0
  %12997 = vperm.xlu0 %12996, %v12348
  %v12998 = vpop.permute.xlu0 %12997
  %12999 = vset.pattern.permute.xlu0 0
  %13000 = vperm.xlu0 %12999, %v12349
  %v13001 = vpop.permute.xlu0 %13000
  %13002 = vset.pattern.permute.xlu0 0
  %13003 = vperm.xlu0 %13002, %v12350
  %v13004 = vpop.permute.xlu0 %13003
  %13005 = vset.pattern.permute.xlu0 0
  %13006 = vperm.xlu0 %13005, %v12351
  %v13007 = vpop.permute.xlu0 %13006
  %13008 = vset.pattern.permute.xlu0 0
  %13009 = vperm.xlu0 %13008, %v12352
  %v13010 = vpop.permute.xlu0 %13009
  %13011 = vset.pattern.permute.xlu0 0
  %13012 = vperm.xlu0 %13011, %v12353
  %v13013 = vpop.permute.xlu0 %13012
  %13014 = vset.pattern.permute.xlu0 0
  %13015 = vperm.xlu0 %13014, %v12354
  %v13016 = vpop.permute.xlu0 %13015
  %13017 = vset.pattern.permute.xlu0 0
  %13018 = vperm.xlu0 %13017, %v12355
  %v13019 = vpop.permute.xlu0 %13018
  %13020 = vset.pattern.permute.xlu0 0
  %13021 = vperm.xlu0 %13020, %v12356
  %v13022 = vpop.permute.xlu0 %13021
  %13023 = vset.pattern.permute.xlu0 0
  %13024 = vperm.xlu0 %13023, %v12357
  %v13025 = vpop.permute.xlu0 %13024
  %13026 = vset.pattern.permute.xlu0 0
  %13027 = vperm.xlu0 %13026, %v12358
  %v13028 = vpop.permute.xlu0 %13027
  %13029 = vset.pattern.permute.xlu0 0
  %13030 = vperm.xlu0 %13029, %v12359
  %v13031 = vpop.permute.xlu0 %13030
  %13032 = vset.pattern.permute.xlu0 0
  %13033 = vperm.xlu0 %13032, %v12360
  %v13034 = vpop.permute.xlu0 %13033
  %13035 = vset.pattern.permute.xlu0 0
  %13036 = vperm.xlu0 %13035, %v12361
  %v13037 = vpop.permute.xlu0 %13036
  %13038 = vset.pattern.permute.xlu0 0
  %13039 = vperm.xlu0 %13038, %v12362
  %v13040 = vpop.permute.xlu0 %13039
  %13041 = vset.pattern.permute.xlu0 0
  %13042 = vperm.xlu0 %13041, %v12363
  %v13043 = vpop.permute.xlu0 %13042
  %13044 = vset.pattern.permute.xlu0 0
  %13045 = vperm.xlu0 %13044, %v12364
  %v13046 = vpop.permute.xlu0 %13045
  %13047 = vset.pattern.permute.xlu0 0
  %13048 = vperm.xlu0 %13047, %v12365
  %v13049 = vpop.permute.xlu0 %13048
  %13050 = vset.pattern.permute.xlu0 0
  %13051 = vperm.xlu0 %13050, %v12366
  %v13052 = vpop.permute.xlu0 %13051
  %13053 = vset.pattern.permute.xlu0 0
  %13054 = vperm.xlu0 %13053, %v12367
  %v13055 = vpop.permute.xlu0 %13054
  %13056 = vset.pattern.permute.xlu0 0
  %13057 = vperm.xlu0 %13056, %v12368
  %v13058 = vpop.permute.xlu0 %13057
  %13059 = vset.pattern.permute.xlu0 0
  %13060 = vperm.xlu0 %13059, %v12369
  %v13061 = vpop.permute.xlu0 %13060
  %13062 = vset.pattern.permute.xlu0 0
  %13063 = vperm.xlu0 %13062, %v12370
  %v13064 = vpop.permute.xlu0 %13063
  %13065 = vset.pattern.permute.xlu0 0
  %13066 = vperm.xlu0 %13065, %v12371
  %v13067 = vpop.permute.xlu0 %13066
  %13068 = vset.pattern.permute.xlu0 0
  %13069 = vperm.xlu0 %13068, %v12372
  %v13070 = vpop.permute.xlu0 %13069
  %13071 = vset.pattern.permute.xlu0 0
  %13072 = vperm.xlu0 %13071, %v12373
  %v13073 = vpop.permute.xlu0 %13072
  %13074 = vset.pattern.permute.xlu0 0
  %13075 = vperm.xlu0 %13074, %v12374
  %v13076 = vpop.permute.xlu0 %13075
  %13077 = vset.pattern.permute.xlu0 0
  %13078 = vperm.xlu0 %13077, %v12375
  %v13079 = vpop.permute.xlu0 %13078
  %13080 = vset.pattern.permute.xlu0 0
  %13081 = vperm.xlu0 %13080, %v12376
  %v13082 = vpop.permute.xlu0 %13081
  %13083 = vset.pattern.permute.xlu0 0
  %13084 = vperm.xlu0 %13083, %v12377
  %v13085 = vpop.permute.xlu0 %13084
  %13086 = vset.pattern.permute.xlu0 0
  %13087 = vperm.xlu0 %13086, %v12378
  %v13088 = vpop.permute.xlu0 %13087
  %13089 = vset.pattern.permute.xlu0 0
  %13090 = vperm.xlu0 %13089, %v12379
  %v13091 = vpop.permute.xlu0 %13090
  %13092 = vset.pattern.permute.xlu0 0
  %13093 = vperm.xlu0 %13092, %v12380
  %v13094 = vpop.permute.xlu0 %13093
  %13095 = vset.pattern.permute.xlu0 0
  %13096 = vperm.xlu0 %13095, %v12381
  %v13097 = vpop.permute.xlu0 %13096
  %13098 = vset.pattern.permute.xlu0 0
  %13099 = vperm.xlu0 %13098, %v12382
  %v13100 = vpop.permute.xlu0 %13099
  %13101 = vset.pattern.permute.xlu0 0
  %13102 = vperm.xlu0 %13101, %v12383
  %v13103 = vpop.permute.xlu0 %13102
  %13104 = vset.pattern.permute.xlu0 0
  %13105 = vperm.xlu0 %13104, %v12384
  %v13106 = vpop.permute.xlu0 %13105
  %13107 = vset.pattern.permute.xlu0 0
  %13108 = vperm.xlu0 %13107, %v12385
  %v13109 = vpop.permute.xlu0 %13108
  %13110 = vset.pattern.permute.xlu0 0
  %13111 = vperm.xlu0 %13110, %v12386
  %v13112 = vpop.permute.xlu0 %13111
  %13113 = vset.pattern.permute.xlu0 0
  %13114 = vperm.xlu0 %13113, %v12387
  %v13115 = vpop.permute.xlu0 %13114
  %13116 = vset.pattern.permute.xlu0 0
  %13117 = vperm.xlu0 %13116, %v12388
  %v13118 = vpop.permute.xlu0 %13117
  %13119 = vset.pattern.permute.xlu0 0
  %13120 = vperm.xlu0 %13119, %v12389
  %v13121 = vpop.permute.xlu0 %13120
  %13122 = vset.pattern.permute.xlu0 0
  %13123 = vperm.xlu0 %13122, %v12390
  %v13124 = vpop.permute.xlu0 %13123
  %13125 = vset.pattern.permute.xlu0 0
  %13126 = vperm.xlu0 %13125, %v12391
  %v13127 = vpop.permute.xlu0 %13126
  %13128 = vset.pattern.permute.xlu0 0
  %13129 = vperm.xlu0 %13128, %v12392
  %v13130 = vpop.permute.xlu0 %13129
  %13131 = vset.pattern.permute.xlu0 0
  %13132 = vperm.xlu0 %13131, %v12393
  %v13133 = vpop.permute.xlu0 %13132
  %13134 = vset.pattern.permute.xlu0 0
  %13135 = vperm.xlu0 %13134, %v12394
  %v13136 = vpop.permute.xlu0 %13135
  %13137 = vset.pattern.permute.xlu0 0
  %13138 = vperm.xlu0 %13137, %v12395
  %v13139 = vpop.permute.xlu0 %13138
  %13140 = vset.pattern.permute.xlu0 0
  %13141 = vperm.xlu0 %13140, %v12396
  %v13142 = vpop.permute.xlu0 %13141
  %13143 = vset.pattern.permute.xlu0 0
  %13144 = vperm.xlu0 %13143, %v12397
  %v13145 = vpop.permute.xlu0 %13144
  %13146 = vset.pattern.permute.xlu0 0
  %13147 = vperm.xlu0 %13146, %v12398
  %v13148 = vpop.permute.xlu0 %13147
  %13149 = vset.pattern.permute.xlu0 0
  %13150 = vperm.xlu0 %13149, %v12399
  %v13151 = vpop.permute.xlu0 %13150
  %13152 = vset.pattern.permute.xlu0 0
  %13153 = vperm.xlu0 %13152, %v12400
  %v13154 = vpop.permute.xlu0 %13153
  %13155 = vset.pattern.permute.xlu0 0
  %13156 = vperm.xlu0 %13155, %v12401
  %v13157 = vpop.permute.xlu0 %13156
  %13158 = vset.pattern.permute.xlu0 0
  %13159 = vperm.xlu0 %13158, %v12402
  %v13160 = vpop.permute.xlu0 %13159
  %13161 = vset.pattern.permute.xlu0 0
  %13162 = vperm.xlu0 %13161, %v12403
  %v13163 = vpop.permute.xlu0 %13162
  %13164 = vset.pattern.permute.xlu0 0
  %13165 = vperm.xlu0 %13164, %v12404
  %v13166 = vpop.permute.xlu0 %13165
  %13167 = vset.pattern.permute.xlu0 0
  %13168 = vperm.xlu0 %13167, %v12405
  %v13169 = vpop.permute.xlu0 %13168
  %13170 = vset.pattern.permute.xlu0 0
  %13171 = vperm.xlu0 %13170, %v12406
  %v13172 = vpop.permute.xlu0 %13171
  %13173 = vset.pattern.permute.xlu0 0
  %13174 = vperm.xlu0 %13173, %v12407
  %v13175 = vpop.permute.xlu0 %13174
  %v13176 = vlaneseq
  %v13177 = vand.u32 %v13176, 127
  %v13178 = vlaneseq
  %v13179 = vshrl.u32 %v13178, 7
  %v13180 = vsub.s32 %v13177, %v13179
  %v13181 = vrot.slane %v12410, %v13180
  %v13182 = vadd.s32 %v13177, 4294967288
  %v13183 = vlaneseq
  %v13184 = vshrl.u32 %v13183, 7
  %v13185 = vsub.s32 %v13182, %v13184
  %v13186 = vrot.slane %v12413, %v13185
  %vm13187 = vcmask 130112
  %v13188 = vsel %vm13187, %v13186, %v13181
  %v13189 = vadd.s32 %v13177, 4294967280
  %v13190 = vlaneseq
  %v13191 = vshrl.u32 %v13190, 7
  %v13192 = vsub.s32 %v13189, %v13191
  %v13193 = vrot.slane %v12416, %v13192
  %vm13194 = vcmask 195712
  %v13195 = vsel %vm13194, %v13193, %v13188
  %v13196 = vadd.s32 %v13177, 4294967272
  %v13197 = vlaneseq
  %v13198 = vshrl.u32 %v13197, 7
  %v13199 = vsub.s32 %v13196, %v13198
  %v13200 = vrot.slane %v12419, %v13199
  %vm13201 = vcmask 261312
  %v13202 = vsel %vm13201, %v13200, %v13195
  %v13203 = vadd.s32 %v13177, 4294967264
  %v13204 = vlaneseq
  %v13205 = vshrl.u32 %v13204, 7
  %v13206 = vsub.s32 %v13203, %v13205
  %v13207 = vrot.slane %v12422, %v13206
  %vm13208 = vcmask 326912
  %v13209 = vsel %vm13208, %v13207, %v13202
  %v13210 = vadd.s32 %v13177, 4294967256
  %v13211 = vlaneseq
  %v13212 = vshrl.u32 %v13211, 7
  %v13213 = vsub.s32 %v13210, %v13212
  %v13214 = vrot.slane %v12425, %v13213
  %vm13215 = vcmask 392512
  %v13216 = vsel %vm13215, %v13214, %v13209
  %v13217 = vadd.s32 %v13177, 4294967248
  %v13218 = vlaneseq
  %v13219 = vshrl.u32 %v13218, 7
  %v13220 = vsub.s32 %v13217, %v13219
  %v13221 = vrot.slane %v12428, %v13220
  %vm13222 = vcmask 458112
  %v13223 = vsel %vm13222, %v13221, %v13216
  %v13224 = vadd.s32 %v13177, 4294967240
  %v13225 = vlaneseq
  %v13226 = vshrl.u32 %v13225, 7
  %v13227 = vsub.s32 %v13224, %v13226
  %v13228 = vrot.slane %v12431, %v13227
  %vm13229 = vcmask 523712
  %v13230 = vsel %vm13229, %v13228, %v13223
  %v13231 = vadd.s32 %v13177, 4294967232
  %v13232 = vlaneseq
  %v13233 = vshrl.u32 %v13232, 7
  %v13234 = vsub.s32 %v13231, %v13233
  %v13235 = vrot.slane %v12434, %v13234
  %vm13236 = vcmask 589312
  %v13237 = vsel %vm13236, %v13235, %v13230
  %v13238 = vadd.s32 %v13177, 4294967224
  %v13239 = vlaneseq
  %v13240 = vshrl.u32 %v13239, 7
  %v13241 = vsub.s32 %v13238, %v13240
  %v13242 = vrot.slane %v12437, %v13241
  %vm13243 = vcmask 654912
  %v13244 = vsel %vm13243, %v13242, %v13237
  %v13245 = vadd.s32 %v13177, 4294967216
  %v13246 = vlaneseq
  %v13247 = vshrl.u32 %v13246, 7
  %v13248 = vsub.s32 %v13245, %v13247
  %v13249 = vrot.slane %v12440, %v13248
  %vm13250 = vcmask 720512
  %v13251 = vsel %vm13250, %v13249, %v13244
  %v13252 = vadd.s32 %v13177, 4294967208
  %v13253 = vlaneseq
  %v13254 = vshrl.u32 %v13253, 7
  %v13255 = vsub.s32 %v13252, %v13254
  %v13256 = vrot.slane %v12443, %v13255
  %vm13257 = vcmask 786112
  %v13258 = vsel %vm13257, %v13256, %v13251
  %v13259 = vadd.s32 %v13177, 4294967200
  %v13260 = vlaneseq
  %v13261 = vshrl.u32 %v13260, 7
  %v13262 = vsub.s32 %v13259, %v13261
  %v13263 = vrot.slane %v12446, %v13262
  %vm13264 = vcmask 851712
  %v13265 = vsel %vm13264, %v13263, %v13258
  %v13266 = vadd.s32 %v13177, 4294967192
  %v13267 = vlaneseq
  %v13268 = vshrl.u32 %v13267, 7
  %v13269 = vsub.s32 %v13266, %v13268
  %v13270 = vrot.slane %v12449, %v13269
  %vm13271 = vcmask 917312
  %v13272 = vsel %vm13271, %v13270, %v13265
  %v13273 = vadd.s32 %v13177, 4294967184
  %v13274 = vlaneseq
  %v13275 = vshrl.u32 %v13274, 7
  %v13276 = vsub.s32 %v13273, %v13275
  %v13277 = vrot.slane %v12452, %v13276
  %vm13278 = vcmask 982912
  %v13279 = vsel %vm13278, %v13277, %v13272
  %v13280 = vadd.s32 %v13177, 4294967176
  %v13281 = vlaneseq
  %v13282 = vshrl.u32 %v13281, 7
  %v13283 = vsub.s32 %v13280, %v13282
  %v13284 = vrot.slane %v12455, %v13283
  %vm13285 = vcmask 1048512
  %v13286 = vsel %vm13285, %v13284, %v13279
  %v13287 = vlaneseq
  %v13288 = vshrl.u32 %v13287, 7
  %v13289 = vsub.s32 %v13177, %v13288
  %v13290 = vrot.slane %v12458, %v13289
  %v13291 = vlaneseq
  %v13292 = vshrl.u32 %v13291, 7
  %v13293 = vsub.s32 %v13182, %v13292
  %v13294 = vrot.slane %v12461, %v13293
  %v13295 = vsel %vm13187, %v13294, %v13290
  %v13296 = vlaneseq
  %v13297 = vshrl.u32 %v13296, 7
  %v13298 = vsub.s32 %v13189, %v13297
  %v13299 = vrot.slane %v12464, %v13298
  %v13300 = vsel %vm13194, %v13299, %v13295
  %v13301 = vlaneseq
  %v13302 = vshrl.u32 %v13301, 7
  %v13303 = vsub.s32 %v13196, %v13302
  %v13304 = vrot.slane %v12467, %v13303
  %v13305 = vsel %vm13201, %v13304, %v13300
  %v13306 = vlaneseq
  %v13307 = vshrl.u32 %v13306, 7
  %v13308 = vsub.s32 %v13203, %v13307
  %v13309 = vrot.slane %v12470, %v13308
  %v13310 = vsel %vm13208, %v13309, %v13305
  %v13311 = vlaneseq
  %v13312 = vshrl.u32 %v13311, 7
  %v13313 = vsub.s32 %v13210, %v13312
  %v13314 = vrot.slane %v12473, %v13313
  %v13315 = vsel %vm13215, %v13314, %v13310
  %v13316 = vlaneseq
  %v13317 = vshrl.u32 %v13316, 7
  %v13318 = vsub.s32 %v13217, %v13317
  %v13319 = vrot.slane %v12476, %v13318
  %v13320 = vsel %vm13222, %v13319, %v13315
  %v13321 = vlaneseq
  %v13322 = vshrl.u32 %v13321, 7
  %v13323 = vsub.s32 %v13224, %v13322
  %v13324 = vrot.slane %v12479, %v13323
  %v13325 = vsel %vm13229, %v13324, %v13320
  %v13326 = vlaneseq
  %v13327 = vshrl.u32 %v13326, 7
  %v13328 = vsub.s32 %v13231, %v13327
  %v13329 = vrot.slane %v12482, %v13328
  %v13330 = vsel %vm13236, %v13329, %v13325
  %v13331 = vlaneseq
  %v13332 = vshrl.u32 %v13331, 7
  %v13333 = vsub.s32 %v13238, %v13332
  %v13334 = vrot.slane %v12485, %v13333
  %v13335 = vsel %vm13243, %v13334, %v13330
  %v13336 = vlaneseq
  %v13337 = vshrl.u32 %v13336, 7
  %v13338 = vsub.s32 %v13245, %v13337
  %v13339 = vrot.slane %v12488, %v13338
  %v13340 = vsel %vm13250, %v13339, %v13335
  %v13341 = vlaneseq
  %v13342 = vshrl.u32 %v13341, 7
  %v13343 = vsub.s32 %v13252, %v13342
  %v13344 = vrot.slane %v12491, %v13343
  %v13345 = vsel %vm13257, %v13344, %v13340
  %v13346 = vlaneseq
  %v13347 = vshrl.u32 %v13346, 7
  %v13348 = vsub.s32 %v13259, %v13347
  %v13349 = vrot.slane %v12494, %v13348
  %v13350 = vsel %vm13264, %v13349, %v13345
  %v13351 = vlaneseq
  %v13352 = vshrl.u32 %v13351, 7
  %v13353 = vsub.s32 %v13266, %v13352
  %v13354 = vrot.slane %v12497, %v13353
  %v13355 = vsel %vm13271, %v13354, %v13350
  %v13356 = vlaneseq
  %v13357 = vshrl.u32 %v13356, 7
  %v13358 = vsub.s32 %v13273, %v13357
  %v13359 = vrot.slane %v12500, %v13358
  %v13360 = vsel %vm13278, %v13359, %v13355
  %v13361 = vlaneseq
  %v13362 = vshrl.u32 %v13361, 7
  %v13363 = vsub.s32 %v13280, %v13362
  %v13364 = vrot.slane %v12503, %v13363
  %v13365 = vsel %vm13285, %v13364, %v13360
  %v13366 = vlaneseq
  %v13367 = vshrl.u32 %v13366, 7
  %v13368 = vsub.s32 %v13177, %v13367
  %v13369 = vrot.slane %v12506, %v13368
  %v13370 = vlaneseq
  %v13371 = vshrl.u32 %v13370, 7
  %v13372 = vsub.s32 %v13182, %v13371
  %v13373 = vrot.slane %v12509, %v13372
  %v13374 = vsel %vm13187, %v13373, %v13369
  %v13375 = vlaneseq
  %v13376 = vshrl.u32 %v13375, 7
  %v13377 = vsub.s32 %v13189, %v13376
  %v13378 = vrot.slane %v12512, %v13377
  %v13379 = vsel %vm13194, %v13378, %v13374
  %v13380 = vlaneseq
  %v13381 = vshrl.u32 %v13380, 7
  %v13382 = vsub.s32 %v13196, %v13381
  %v13383 = vrot.slane %v12515, %v13382
  %v13384 = vsel %vm13201, %v13383, %v13379
  %v13385 = vlaneseq
  %v13386 = vshrl.u32 %v13385, 7
  %v13387 = vsub.s32 %v13203, %v13386
  %v13388 = vrot.slane %v12518, %v13387
  %v13389 = vsel %vm13208, %v13388, %v13384
  %v13390 = vlaneseq
  %v13391 = vshrl.u32 %v13390, 7
  %v13392 = vsub.s32 %v13210, %v13391
  %v13393 = vrot.slane %v12521, %v13392
  %v13394 = vsel %vm13215, %v13393, %v13389
  %v13395 = vlaneseq
  %v13396 = vshrl.u32 %v13395, 7
  %v13397 = vsub.s32 %v13217, %v13396
  %v13398 = vrot.slane %v12524, %v13397
  %v13399 = vsel %vm13222, %v13398, %v13394
  %v13400 = vlaneseq
  %v13401 = vshrl.u32 %v13400, 7
  %v13402 = vsub.s32 %v13224, %v13401
  %v13403 = vrot.slane %v12527, %v13402
  %v13404 = vsel %vm13229, %v13403, %v13399
  %v13405 = vlaneseq
  %v13406 = vshrl.u32 %v13405, 7
  %v13407 = vsub.s32 %v13231, %v13406
  %v13408 = vrot.slane %v12530, %v13407
  %v13409 = vsel %vm13236, %v13408, %v13404
  %v13410 = vlaneseq
  %v13411 = vshrl.u32 %v13410, 7
  %v13412 = vsub.s32 %v13238, %v13411
  %v13413 = vrot.slane %v12533, %v13412
  %v13414 = vsel %vm13243, %v13413, %v13409
  %v13415 = vlaneseq
  %v13416 = vshrl.u32 %v13415, 7
  %v13417 = vsub.s32 %v13245, %v13416
  %v13418 = vrot.slane %v12536, %v13417
  %v13419 = vsel %vm13250, %v13418, %v13414
  %v13420 = vlaneseq
  %v13421 = vshrl.u32 %v13420, 7
  %v13422 = vsub.s32 %v13252, %v13421
  %v13423 = vrot.slane %v12539, %v13422
  %v13424 = vsel %vm13257, %v13423, %v13419
  %v13425 = vlaneseq
  %v13426 = vshrl.u32 %v13425, 7
  %v13427 = vsub.s32 %v13259, %v13426
  %v13428 = vrot.slane %v12542, %v13427
  %v13429 = vsel %vm13264, %v13428, %v13424
  %v13430 = vlaneseq
  %v13431 = vshrl.u32 %v13430, 7
  %v13432 = vsub.s32 %v13266, %v13431
  %v13433 = vrot.slane %v12545, %v13432
  %v13434 = vsel %vm13271, %v13433, %v13429
  %v13435 = vlaneseq
  %v13436 = vshrl.u32 %v13435, 7
  %v13437 = vsub.s32 %v13273, %v13436
  %v13438 = vrot.slane %v12548, %v13437
  %v13439 = vsel %vm13278, %v13438, %v13434
  %v13440 = vlaneseq
  %v13441 = vshrl.u32 %v13440, 7
  %v13442 = vsub.s32 %v13280, %v13441
  %v13443 = vrot.slane %v12551, %v13442
  %v13444 = vsel %vm13285, %v13443, %v13439
  %v13445 = vlaneseq
  %v13446 = vshrl.u32 %v13445, 7
  %v13447 = vsub.s32 %v13177, %v13446
  %v13448 = vrot.slane %v12554, %v13447
  %v13449 = vlaneseq
  %v13450 = vshrl.u32 %v13449, 7
  %v13451 = vsub.s32 %v13182, %v13450
  %v13452 = vrot.slane %v12557, %v13451
  %v13453 = vsel %vm13187, %v13452, %v13448
  %v13454 = vlaneseq
  %v13455 = vshrl.u32 %v13454, 7
  %v13456 = vsub.s32 %v13189, %v13455
  %v13457 = vrot.slane %v12560, %v13456
  %v13458 = vsel %vm13194, %v13457, %v13453
  %v13459 = vlaneseq
  %v13460 = vshrl.u32 %v13459, 7
  %v13461 = vsub.s32 %v13196, %v13460
  %v13462 = vrot.slane %v12563, %v13461
  %v13463 = vsel %vm13201, %v13462, %v13458
  %v13464 = vlaneseq
  %v13465 = vshrl.u32 %v13464, 7
  %v13466 = vsub.s32 %v13203, %v13465
  %v13467 = vrot.slane %v12566, %v13466
  %v13468 = vsel %vm13208, %v13467, %v13463
  %v13469 = vlaneseq
  %v13470 = vshrl.u32 %v13469, 7
  %v13471 = vsub.s32 %v13210, %v13470
  %v13472 = vrot.slane %v12569, %v13471
  %v13473 = vsel %vm13215, %v13472, %v13468
  %v13474 = vlaneseq
  %v13475 = vshrl.u32 %v13474, 7
  %v13476 = vsub.s32 %v13217, %v13475
  %v13477 = vrot.slane %v12572, %v13476
  %v13478 = vsel %vm13222, %v13477, %v13473
  %v13479 = vlaneseq
  %v13480 = vshrl.u32 %v13479, 7
  %v13481 = vsub.s32 %v13224, %v13480
  %v13482 = vrot.slane %v12575, %v13481
  %v13483 = vsel %vm13229, %v13482, %v13478
  %v13484 = vlaneseq
  %v13485 = vshrl.u32 %v13484, 7
  %v13486 = vsub.s32 %v13231, %v13485
  %v13487 = vrot.slane %v12578, %v13486
  %v13488 = vsel %vm13236, %v13487, %v13483
  %v13489 = vlaneseq
  %v13490 = vshrl.u32 %v13489, 7
  %v13491 = vsub.s32 %v13238, %v13490
  %v13492 = vrot.slane %v12581, %v13491
  %v13493 = vsel %vm13243, %v13492, %v13488
  %v13494 = vlaneseq
  %v13495 = vshrl.u32 %v13494, 7
  %v13496 = vsub.s32 %v13245, %v13495
  %v13497 = vrot.slane %v12584, %v13496
  %v13498 = vsel %vm13250, %v13497, %v13493
  %v13499 = vlaneseq
  %v13500 = vshrl.u32 %v13499, 7
  %v13501 = vsub.s32 %v13252, %v13500
  %v13502 = vrot.slane %v12587, %v13501
  %v13503 = vsel %vm13257, %v13502, %v13498
  %v13504 = vlaneseq
  %v13505 = vshrl.u32 %v13504, 7
  %v13506 = vsub.s32 %v13259, %v13505
  %v13507 = vrot.slane %v12590, %v13506
  %v13508 = vsel %vm13264, %v13507, %v13503
  %v13509 = vlaneseq
  %v13510 = vshrl.u32 %v13509, 7
  %v13511 = vsub.s32 %v13266, %v13510
  %v13512 = vrot.slane %v12593, %v13511
  %v13513 = vsel %vm13271, %v13512, %v13508
  %v13514 = vlaneseq
  %v13515 = vshrl.u32 %v13514, 7
  %v13516 = vsub.s32 %v13273, %v13515
  %v13517 = vrot.slane %v12596, %v13516
  %v13518 = vsel %vm13278, %v13517, %v13513
  %v13519 = vlaneseq
  %v13520 = vshrl.u32 %v13519, 7
  %v13521 = vsub.s32 %v13280, %v13520
  %v13522 = vrot.slane %v12599, %v13521
  %v13523 = vsel %vm13285, %v13522, %v13518
  %v13524 = vlaneseq
  %v13525 = vshrl.u32 %v13524, 7
  %v13526 = vsub.s32 %v13177, %v13525
  %v13527 = vrot.slane %v12602, %v13526
  %v13528 = vlaneseq
  %v13529 = vshrl.u32 %v13528, 7
  %v13530 = vsub.s32 %v13182, %v13529
  %v13531 = vrot.slane %v12605, %v13530
  %v13532 = vsel %vm13187, %v13531, %v13527
  %v13533 = vlaneseq
  %v13534 = vshrl.u32 %v13533, 7
  %v13535 = vsub.s32 %v13189, %v13534
  %v13536 = vrot.slane %v12608, %v13535
  %v13537 = vsel %vm13194, %v13536, %v13532
  %v13538 = vlaneseq
  %v13539 = vshrl.u32 %v13538, 7
  %v13540 = vsub.s32 %v13196, %v13539
  %v13541 = vrot.slane %v12611, %v13540
  %v13542 = vsel %vm13201, %v13541, %v13537
  %v13543 = vlaneseq
  %v13544 = vshrl.u32 %v13543, 7
  %v13545 = vsub.s32 %v13203, %v13544
  %v13546 = vrot.slane %v12614, %v13545
  %v13547 = vsel %vm13208, %v13546, %v13542
  %v13548 = vlaneseq
  %v13549 = vshrl.u32 %v13548, 7
  %v13550 = vsub.s32 %v13210, %v13549
  %v13551 = vrot.slane %v12617, %v13550
  %v13552 = vsel %vm13215, %v13551, %v13547
  %v13553 = vlaneseq
  %v13554 = vshrl.u32 %v13553, 7
  %v13555 = vsub.s32 %v13217, %v13554
  %v13556 = vrot.slane %v12620, %v13555
  %v13557 = vsel %vm13222, %v13556, %v13552
  %v13558 = vlaneseq
  %v13559 = vshrl.u32 %v13558, 7
  %v13560 = vsub.s32 %v13224, %v13559
  %v13561 = vrot.slane %v12623, %v13560
  %v13562 = vsel %vm13229, %v13561, %v13557
  %v13563 = vlaneseq
  %v13564 = vshrl.u32 %v13563, 7
  %v13565 = vsub.s32 %v13231, %v13564
  %v13566 = vrot.slane %v12626, %v13565
  %v13567 = vsel %vm13236, %v13566, %v13562
  %v13568 = vlaneseq
  %v13569 = vshrl.u32 %v13568, 7
  %v13570 = vsub.s32 %v13238, %v13569
  %v13571 = vrot.slane %v12629, %v13570
  %v13572 = vsel %vm13243, %v13571, %v13567
  %v13573 = vlaneseq
  %v13574 = vshrl.u32 %v13573, 7
  %v13575 = vsub.s32 %v13245, %v13574
  %v13576 = vrot.slane %v12632, %v13575
  %v13577 = vsel %vm13250, %v13576, %v13572
  %v13578 = vlaneseq
  %v13579 = vshrl.u32 %v13578, 7
  %v13580 = vsub.s32 %v13252, %v13579
  %v13581 = vrot.slane %v12635, %v13580
  %v13582 = vsel %vm13257, %v13581, %v13577
  %v13583 = vlaneseq
  %v13584 = vshrl.u32 %v13583, 7
  %v13585 = vsub.s32 %v13259, %v13584
  %v13586 = vrot.slane %v12638, %v13585
  %v13587 = vsel %vm13264, %v13586, %v13582
  %v13588 = vlaneseq
  %v13589 = vshrl.u32 %v13588, 7
  %v13590 = vsub.s32 %v13266, %v13589
  %v13591 = vrot.slane %v12641, %v13590
  %v13592 = vsel %vm13271, %v13591, %v13587
  %v13593 = vlaneseq
  %v13594 = vshrl.u32 %v13593, 7
  %v13595 = vsub.s32 %v13273, %v13594
  %v13596 = vrot.slane %v12644, %v13595
  %v13597 = vsel %vm13278, %v13596, %v13592
  %v13598 = vlaneseq
  %v13599 = vshrl.u32 %v13598, 7
  %v13600 = vsub.s32 %v13280, %v13599
  %v13601 = vrot.slane %v12647, %v13600
  %v13602 = vsel %vm13285, %v13601, %v13597
  %v13603 = vlaneseq
  %v13604 = vshrl.u32 %v13603, 7
  %v13605 = vsub.s32 %v13177, %v13604
  %v13606 = vrot.slane %v12650, %v13605
  %v13607 = vlaneseq
  %v13608 = vshrl.u32 %v13607, 7
  %v13609 = vsub.s32 %v13182, %v13608
  %v13610 = vrot.slane %v12653, %v13609
  %v13611 = vsel %vm13187, %v13610, %v13606
  %v13612 = vlaneseq
  %v13613 = vshrl.u32 %v13612, 7
  %v13614 = vsub.s32 %v13189, %v13613
  %v13615 = vrot.slane %v12656, %v13614
  %v13616 = vsel %vm13194, %v13615, %v13611
  %v13617 = vlaneseq
  %v13618 = vshrl.u32 %v13617, 7
  %v13619 = vsub.s32 %v13196, %v13618
  %v13620 = vrot.slane %v12659, %v13619
  %v13621 = vsel %vm13201, %v13620, %v13616
  %v13622 = vlaneseq
  %v13623 = vshrl.u32 %v13622, 7
  %v13624 = vsub.s32 %v13203, %v13623
  %v13625 = vrot.slane %v12662, %v13624
  %v13626 = vsel %vm13208, %v13625, %v13621
  %v13627 = vlaneseq
  %v13628 = vshrl.u32 %v13627, 7
  %v13629 = vsub.s32 %v13210, %v13628
  %v13630 = vrot.slane %v12665, %v13629
  %v13631 = vsel %vm13215, %v13630, %v13626
  %v13632 = vlaneseq
  %v13633 = vshrl.u32 %v13632, 7
  %v13634 = vsub.s32 %v13217, %v13633
  %v13635 = vrot.slane %v12668, %v13634
  %v13636 = vsel %vm13222, %v13635, %v13631
  %v13637 = vlaneseq
  %v13638 = vshrl.u32 %v13637, 7
  %v13639 = vsub.s32 %v13224, %v13638
  %v13640 = vrot.slane %v12671, %v13639
  %v13641 = vsel %vm13229, %v13640, %v13636
  %v13642 = vlaneseq
  %v13643 = vshrl.u32 %v13642, 7
  %v13644 = vsub.s32 %v13231, %v13643
  %v13645 = vrot.slane %v12674, %v13644
  %v13646 = vsel %vm13236, %v13645, %v13641
  %v13647 = vlaneseq
  %v13648 = vshrl.u32 %v13647, 7
  %v13649 = vsub.s32 %v13238, %v13648
  %v13650 = vrot.slane %v12677, %v13649
  %v13651 = vsel %vm13243, %v13650, %v13646
  %v13652 = vlaneseq
  %v13653 = vshrl.u32 %v13652, 7
  %v13654 = vsub.s32 %v13245, %v13653
  %v13655 = vrot.slane %v12680, %v13654
  %v13656 = vsel %vm13250, %v13655, %v13651
  %v13657 = vlaneseq
  %v13658 = vshrl.u32 %v13657, 7
  %v13659 = vsub.s32 %v13252, %v13658
  %v13660 = vrot.slane %v12683, %v13659
  %v13661 = vsel %vm13257, %v13660, %v13656
  %v13662 = vlaneseq
  %v13663 = vshrl.u32 %v13662, 7
  %v13664 = vsub.s32 %v13259, %v13663
  %v13665 = vrot.slane %v12686, %v13664
  %v13666 = vsel %vm13264, %v13665, %v13661
  %v13667 = vlaneseq
  %v13668 = vshrl.u32 %v13667, 7
  %v13669 = vsub.s32 %v13266, %v13668
  %v13670 = vrot.slane %v12689, %v13669
  %v13671 = vsel %vm13271, %v13670, %v13666
  %v13672 = vlaneseq
  %v13673 = vshrl.u32 %v13672, 7
  %v13674 = vsub.s32 %v13273, %v13673
  %v13675 = vrot.slane %v12692, %v13674
  %v13676 = vsel %vm13278, %v13675, %v13671
  %v13677 = vlaneseq
  %v13678 = vshrl.u32 %v13677, 7
  %v13679 = vsub.s32 %v13280, %v13678
  %v13680 = vrot.slane %v12695, %v13679
  %v13681 = vsel %vm13285, %v13680, %v13676
  %v13682 = vlaneseq
  %v13683 = vshrl.u32 %v13682, 7
  %v13684 = vsub.s32 %v13177, %v13683
  %v13685 = vrot.slane %v12698, %v13684
  %v13686 = vlaneseq
  %v13687 = vshrl.u32 %v13686, 7
  %v13688 = vsub.s32 %v13182, %v13687
  %v13689 = vrot.slane %v12701, %v13688
  %v13690 = vsel %vm13187, %v13689, %v13685
  %v13691 = vlaneseq
  %v13692 = vshrl.u32 %v13691, 7
  %v13693 = vsub.s32 %v13189, %v13692
  %v13694 = vrot.slane %v12704, %v13693
  %v13695 = vsel %vm13194, %v13694, %v13690
  %v13696 = vlaneseq
  %v13697 = vshrl.u32 %v13696, 7
  %v13698 = vsub.s32 %v13196, %v13697
  %v13699 = vrot.slane %v12707, %v13698
  %v13700 = vsel %vm13201, %v13699, %v13695
  %v13701 = vlaneseq
  %v13702 = vshrl.u32 %v13701, 7
  %v13703 = vsub.s32 %v13203, %v13702
  %v13704 = vrot.slane %v12710, %v13703
  %v13705 = vsel %vm13208, %v13704, %v13700
  %v13706 = vlaneseq
  %v13707 = vshrl.u32 %v13706, 7
  %v13708 = vsub.s32 %v13210, %v13707
  %v13709 = vrot.slane %v12713, %v13708
  %v13710 = vsel %vm13215, %v13709, %v13705
  %v13711 = vlaneseq
  %v13712 = vshrl.u32 %v13711, 7
  %v13713 = vsub.s32 %v13217, %v13712
  %v13714 = vrot.slane %v12716, %v13713
  %v13715 = vsel %vm13222, %v13714, %v13710
  %v13716 = vlaneseq
  %v13717 = vshrl.u32 %v13716, 7
  %v13718 = vsub.s32 %v13224, %v13717
  %v13719 = vrot.slane %v12719, %v13718
  %v13720 = vsel %vm13229, %v13719, %v13715
  %v13721 = vlaneseq
  %v13722 = vshrl.u32 %v13721, 7
  %v13723 = vsub.s32 %v13231, %v13722
  %v13724 = vrot.slane %v12722, %v13723
  %v13725 = vsel %vm13236, %v13724, %v13720
  %v13726 = vlaneseq
  %v13727 = vshrl.u32 %v13726, 7
  %v13728 = vsub.s32 %v13238, %v13727
  %v13729 = vrot.slane %v12725, %v13728
  %v13730 = vsel %vm13243, %v13729, %v13725
  %v13731 = vlaneseq
  %v13732 = vshrl.u32 %v13731, 7
  %v13733 = vsub.s32 %v13245, %v13732
  %v13734 = vrot.slane %v12728, %v13733
  %v13735 = vsel %vm13250, %v13734, %v13730
  %v13736 = vlaneseq
  %v13737 = vshrl.u32 %v13736, 7
  %v13738 = vsub.s32 %v13252, %v13737
  %v13739 = vrot.slane %v12731, %v13738
  %v13740 = vsel %vm13257, %v13739, %v13735
  %v13741 = vlaneseq
  %v13742 = vshrl.u32 %v13741, 7
  %v13743 = vsub.s32 %v13259, %v13742
  %v13744 = vrot.slane %v12734, %v13743
  %v13745 = vsel %vm13264, %v13744, %v13740
  %v13746 = vlaneseq
  %v13747 = vshrl.u32 %v13746, 7
  %v13748 = vsub.s32 %v13266, %v13747
  %v13749 = vrot.slane %v12737, %v13748
  %v13750 = vsel %vm13271, %v13749, %v13745
  %v13751 = vlaneseq
  %v13752 = vshrl.u32 %v13751, 7
  %v13753 = vsub.s32 %v13273, %v13752
  %v13754 = vrot.slane %v12740, %v13753
  %v13755 = vsel %vm13278, %v13754, %v13750
  %v13756 = vlaneseq
  %v13757 = vshrl.u32 %v13756, 7
  %v13758 = vsub.s32 %v13280, %v13757
  %v13759 = vrot.slane %v12743, %v13758
  %v13760 = vsel %vm13285, %v13759, %v13755
  %v13761 = vlaneseq
  %v13762 = vshrl.u32 %v13761, 7
  %v13763 = vsub.s32 %v13177, %v13762
  %v13764 = vrot.slane %v12746, %v13763
  %v13765 = vlaneseq
  %v13766 = vshrl.u32 %v13765, 7
  %v13767 = vsub.s32 %v13182, %v13766
  %v13768 = vrot.slane %v12749, %v13767
  %v13769 = vsel %vm13187, %v13768, %v13764
  %v13770 = vlaneseq
  %v13771 = vshrl.u32 %v13770, 7
  %v13772 = vsub.s32 %v13189, %v13771
  %v13773 = vrot.slane %v12752, %v13772
  %v13774 = vsel %vm13194, %v13773, %v13769
  %v13775 = vlaneseq
  %v13776 = vshrl.u32 %v13775, 7
  %v13777 = vsub.s32 %v13196, %v13776
  %v13778 = vrot.slane %v12755, %v13777
  %v13779 = vsel %vm13201, %v13778, %v13774
  %v13780 = vlaneseq
  %v13781 = vshrl.u32 %v13780, 7
  %v13782 = vsub.s32 %v13203, %v13781
  %v13783 = vrot.slane %v12758, %v13782
  %v13784 = vsel %vm13208, %v13783, %v13779
  %v13785 = vlaneseq
  %v13786 = vshrl.u32 %v13785, 7
  %v13787 = vsub.s32 %v13210, %v13786
  %v13788 = vrot.slane %v12761, %v13787
  %v13789 = vsel %vm13215, %v13788, %v13784
  %v13790 = vlaneseq
  %v13791 = vshrl.u32 %v13790, 7
  %v13792 = vsub.s32 %v13217, %v13791
  %v13793 = vrot.slane %v12764, %v13792
  %v13794 = vsel %vm13222, %v13793, %v13789
  %v13795 = vlaneseq
  %v13796 = vshrl.u32 %v13795, 7
  %v13797 = vsub.s32 %v13224, %v13796
  %v13798 = vrot.slane %v12767, %v13797
  %v13799 = vsel %vm13229, %v13798, %v13794
  %v13800 = vlaneseq
  %v13801 = vshrl.u32 %v13800, 7
  %v13802 = vsub.s32 %v13231, %v13801
  %v13803 = vrot.slane %v12770, %v13802
  %v13804 = vsel %vm13236, %v13803, %v13799
  %v13805 = vlaneseq
  %v13806 = vshrl.u32 %v13805, 7
  %v13807 = vsub.s32 %v13238, %v13806
  %v13808 = vrot.slane %v12773, %v13807
  %v13809 = vsel %vm13243, %v13808, %v13804
  %v13810 = vlaneseq
  %v13811 = vshrl.u32 %v13810, 7
  %v13812 = vsub.s32 %v13245, %v13811
  %v13813 = vrot.slane %v12776, %v13812
  %v13814 = vsel %vm13250, %v13813, %v13809
  %v13815 = vlaneseq
  %v13816 = vshrl.u32 %v13815, 7
  %v13817 = vsub.s32 %v13252, %v13816
  %v13818 = vrot.slane %v12779, %v13817
  %v13819 = vsel %vm13257, %v13818, %v13814
  %v13820 = vlaneseq
  %v13821 = vshrl.u32 %v13820, 7
  %v13822 = vsub.s32 %v13259, %v13821
  %v13823 = vrot.slane %v12782, %v13822
  %v13824 = vsel %vm13264, %v13823, %v13819
  %v13825 = vlaneseq
  %v13826 = vshrl.u32 %v13825, 7
  %v13827 = vsub.s32 %v13266, %v13826
  %v13828 = vrot.slane %v12785, %v13827
  %v13829 = vsel %vm13271, %v13828, %v13824
  %v13830 = vlaneseq
  %v13831 = vshrl.u32 %v13830, 7
  %v13832 = vsub.s32 %v13273, %v13831
  %v13833 = vrot.slane %v12788, %v13832
  %v13834 = vsel %vm13278, %v13833, %v13829
  %v13835 = vlaneseq
  %v13836 = vshrl.u32 %v13835, 7
  %v13837 = vsub.s32 %v13280, %v13836
  %v13838 = vrot.slane %v12791, %v13837
  %v13839 = vsel %vm13285, %v13838, %v13834
  %v13840 = vlaneseq
  %v13841 = vshrl.u32 %v13840, 7
  %v13842 = vsub.s32 %v13177, %v13841
  %v13843 = vrot.slane %v12794, %v13842
  %v13844 = vlaneseq
  %v13845 = vshrl.u32 %v13844, 7
  %v13846 = vsub.s32 %v13182, %v13845
  %v13847 = vrot.slane %v12797, %v13846
  %v13848 = vsel %vm13187, %v13847, %v13843
  %v13849 = vlaneseq
  %v13850 = vshrl.u32 %v13849, 7
  %v13851 = vsub.s32 %v13189, %v13850
  %v13852 = vrot.slane %v12800, %v13851
  %v13853 = vsel %vm13194, %v13852, %v13848
  %v13854 = vlaneseq
  %v13855 = vshrl.u32 %v13854, 7
  %v13856 = vsub.s32 %v13196, %v13855
  %v13857 = vrot.slane %v12803, %v13856
  %v13858 = vsel %vm13201, %v13857, %v13853
  %v13859 = vlaneseq
  %v13860 = vshrl.u32 %v13859, 7
  %v13861 = vsub.s32 %v13203, %v13860
  %v13862 = vrot.slane %v12806, %v13861
  %v13863 = vsel %vm13208, %v13862, %v13858
  %v13864 = vlaneseq
  %v13865 = vshrl.u32 %v13864, 7
  %v13866 = vsub.s32 %v13210, %v13865
  %v13867 = vrot.slane %v12809, %v13866
  %v13868 = vsel %vm13215, %v13867, %v13863
  %v13869 = vlaneseq
  %v13870 = vshrl.u32 %v13869, 7
  %v13871 = vsub.s32 %v13217, %v13870
  %v13872 = vrot.slane %v12812, %v13871
  %v13873 = vsel %vm13222, %v13872, %v13868
  %v13874 = vlaneseq
  %v13875 = vshrl.u32 %v13874, 7
  %v13876 = vsub.s32 %v13224, %v13875
  %v13877 = vrot.slane %v12815, %v13876
  %v13878 = vsel %vm13229, %v13877, %v13873
  %v13879 = vlaneseq
  %v13880 = vshrl.u32 %v13879, 7
  %v13881 = vsub.s32 %v13231, %v13880
  %v13882 = vrot.slane %v12818, %v13881
  %v13883 = vsel %vm13236, %v13882, %v13878
  %v13884 = vlaneseq
  %v13885 = vshrl.u32 %v13884, 7
  %v13886 = vsub.s32 %v13238, %v13885
  %v13887 = vrot.slane %v12821, %v13886
  %v13888 = vsel %vm13243, %v13887, %v13883
  %v13889 = vlaneseq
  %v13890 = vshrl.u32 %v13889, 7
  %v13891 = vsub.s32 %v13245, %v13890
  %v13892 = vrot.slane %v12824, %v13891
  %v13893 = vsel %vm13250, %v13892, %v13888
  %v13894 = vlaneseq
  %v13895 = vshrl.u32 %v13894, 7
  %v13896 = vsub.s32 %v13252, %v13895
  %v13897 = vrot.slane %v12827, %v13896
  %v13898 = vsel %vm13257, %v13897, %v13893
  %v13899 = vlaneseq
  %v13900 = vshrl.u32 %v13899, 7
  %v13901 = vsub.s32 %v13259, %v13900
  %v13902 = vrot.slane %v12830, %v13901
  %v13903 = vsel %vm13264, %v13902, %v13898
  %v13904 = vlaneseq
  %v13905 = vshrl.u32 %v13904, 7
  %v13906 = vsub.s32 %v13266, %v13905
  %v13907 = vrot.slane %v12833, %v13906
  %v13908 = vsel %vm13271, %v13907, %v13903
  %v13909 = vlaneseq
  %v13910 = vshrl.u32 %v13909, 7
  %v13911 = vsub.s32 %v13273, %v13910
  %v13912 = vrot.slane %v12836, %v13911
  %v13913 = vsel %vm13278, %v13912, %v13908
  %v13914 = vlaneseq
  %v13915 = vshrl.u32 %v13914, 7
  %v13916 = vsub.s32 %v13280, %v13915
  %v13917 = vrot.slane %v12839, %v13916
  %v13918 = vsel %vm13285, %v13917, %v13913
  %v13919 = vlaneseq
  %v13920 = vshrl.u32 %v13919, 7
  %v13921 = vsub.s32 %v13177, %v13920
  %v13922 = vrot.slane %v12842, %v13921
  %v13923 = vlaneseq
  %v13924 = vshrl.u32 %v13923, 7
  %v13925 = vsub.s32 %v13182, %v13924
  %v13926 = vrot.slane %v12845, %v13925
  %v13927 = vsel %vm13187, %v13926, %v13922
  %v13928 = vlaneseq
  %v13929 = vshrl.u32 %v13928, 7
  %v13930 = vsub.s32 %v13189, %v13929
  %v13931 = vrot.slane %v12848, %v13930
  %v13932 = vsel %vm13194, %v13931, %v13927
  %v13933 = vlaneseq
  %v13934 = vshrl.u32 %v13933, 7
  %v13935 = vsub.s32 %v13196, %v13934
  %v13936 = vrot.slane %v12851, %v13935
  %v13937 = vsel %vm13201, %v13936, %v13932
  %v13938 = vlaneseq
  %v13939 = vshrl.u32 %v13938, 7
  %v13940 = vsub.s32 %v13203, %v13939
  %v13941 = vrot.slane %v12854, %v13940
  %v13942 = vsel %vm13208, %v13941, %v13937
  %v13943 = vlaneseq
  %v13944 = vshrl.u32 %v13943, 7
  %v13945 = vsub.s32 %v13210, %v13944
  %v13946 = vrot.slane %v12857, %v13945
  %v13947 = vsel %vm13215, %v13946, %v13942
  %v13948 = vlaneseq
  %v13949 = vshrl.u32 %v13948, 7
  %v13950 = vsub.s32 %v13217, %v13949
  %v13951 = vrot.slane %v12860, %v13950
  %v13952 = vsel %vm13222, %v13951, %v13947
  %v13953 = vlaneseq
  %v13954 = vshrl.u32 %v13953, 7
  %v13955 = vsub.s32 %v13224, %v13954
  %v13956 = vrot.slane %v12863, %v13955
  %v13957 = vsel %vm13229, %v13956, %v13952
  %v13958 = vlaneseq
  %v13959 = vshrl.u32 %v13958, 7
  %v13960 = vsub.s32 %v13231, %v13959
  %v13961 = vrot.slane %v12866, %v13960
  %v13962 = vsel %vm13236, %v13961, %v13957
  %v13963 = vlaneseq
  %v13964 = vshrl.u32 %v13963, 7
  %v13965 = vsub.s32 %v13238, %v13964
  %v13966 = vrot.slane %v12869, %v13965
  %v13967 = vsel %vm13243, %v13966, %v13962
  %v13968 = vlaneseq
  %v13969 = vshrl.u32 %v13968, 7
  %v13970 = vsub.s32 %v13245, %v13969
  %v13971 = vrot.slane %v12872, %v13970
  %v13972 = vsel %vm13250, %v13971, %v13967
  %v13973 = vlaneseq
  %v13974 = vshrl.u32 %v13973, 7
  %v13975 = vsub.s32 %v13252, %v13974
  %v13976 = vrot.slane %v12875, %v13975
  %v13977 = vsel %vm13257, %v13976, %v13972
  %v13978 = vlaneseq
  %v13979 = vshrl.u32 %v13978, 7
  %v13980 = vsub.s32 %v13259, %v13979
  %v13981 = vrot.slane %v12878, %v13980
  %v13982 = vsel %vm13264, %v13981, %v13977
  %v13983 = vlaneseq
  %v13984 = vshrl.u32 %v13983, 7
  %v13985 = vsub.s32 %v13266, %v13984
  %v13986 = vrot.slane %v12881, %v13985
  %v13987 = vsel %vm13271, %v13986, %v13982
  %v13988 = vlaneseq
  %v13989 = vshrl.u32 %v13988, 7
  %v13990 = vsub.s32 %v13273, %v13989
  %v13991 = vrot.slane %v12884, %v13990
  %v13992 = vsel %vm13278, %v13991, %v13987
  %v13993 = vlaneseq
  %v13994 = vshrl.u32 %v13993, 7
  %v13995 = vsub.s32 %v13280, %v13994
  %v13996 = vrot.slane %v12887, %v13995
  %v13997 = vsel %vm13285, %v13996, %v13992
  %v13998 = vlaneseq
  %v13999 = vshrl.u32 %v13998, 7
  %v14000 = vsub.s32 %v13177, %v13999
  %v14001 = vrot.slane %v12890, %v14000
  %v14002 = vlaneseq
  %v14003 = vshrl.u32 %v14002, 7
  %v14004 = vsub.s32 %v13182, %v14003
  %v14005 = vrot.slane %v12893, %v14004
  %v14006 = vsel %vm13187, %v14005, %v14001
  %v14007 = vlaneseq
  %v14008 = vshrl.u32 %v14007, 7
  %v14009 = vsub.s32 %v13189, %v14008
  %v14010 = vrot.slane %v12896, %v14009
  %v14011 = vsel %vm13194, %v14010, %v14006
  %v14012 = vlaneseq
  %v14013 = vshrl.u32 %v14012, 7
  %v14014 = vsub.s32 %v13196, %v14013
  %v14015 = vrot.slane %v12899, %v14014
  %v14016 = vsel %vm13201, %v14015, %v14011
  %v14017 = vlaneseq
  %v14018 = vshrl.u32 %v14017, 7
  %v14019 = vsub.s32 %v13203, %v14018
  %v14020 = vrot.slane %v12902, %v14019
  %v14021 = vsel %vm13208, %v14020, %v14016
  %v14022 = vlaneseq
  %v14023 = vshrl.u32 %v14022, 7
  %v14024 = vsub.s32 %v13210, %v14023
  %v14025 = vrot.slane %v12905, %v14024
  %v14026 = vsel %vm13215, %v14025, %v14021
  %v14027 = vlaneseq
  %v14028 = vshrl.u32 %v14027, 7
  %v14029 = vsub.s32 %v13217, %v14028
  %v14030 = vrot.slane %v12908, %v14029
  %v14031 = vsel %vm13222, %v14030, %v14026
  %v14032 = vlaneseq
  %v14033 = vshrl.u32 %v14032, 7
  %v14034 = vsub.s32 %v13224, %v14033
  %v14035 = vrot.slane %v12911, %v14034
  %v14036 = vsel %vm13229, %v14035, %v14031
  %v14037 = vlaneseq
  %v14038 = vshrl.u32 %v14037, 7
  %v14039 = vsub.s32 %v13231, %v14038
  %v14040 = vrot.slane %v12914, %v14039
  %v14041 = vsel %vm13236, %v14040, %v14036
  %v14042 = vlaneseq
  %v14043 = vshrl.u32 %v14042, 7
  %v14044 = vsub.s32 %v13238, %v14043
  %v14045 = vrot.slane %v12917, %v14044
  %v14046 = vsel %vm13243, %v14045, %v14041
  %v14047 = vlaneseq
  %v14048 = vshrl.u32 %v14047, 7
  %v14049 = vsub.s32 %v13245, %v14048
  %v14050 = vrot.slane %v12920, %v14049
  %v14051 = vsel %vm13250, %v14050, %v14046
  %v14052 = vlaneseq
  %v14053 = vshrl.u32 %v14052, 7
  %v14054 = vsub.s32 %v13252, %v14053
  %v14055 = vrot.slane %v12923, %v14054
  %v14056 = vsel %vm13257, %v14055, %v14051
  %v14057 = vlaneseq
  %v14058 = vshrl.u32 %v14057, 7
  %v14059 = vsub.s32 %v13259, %v14058
  %v14060 = vrot.slane %v12926, %v14059
  %v14061 = vsel %vm13264, %v14060, %v14056
  %v14062 = vlaneseq
  %v14063 = vshrl.u32 %v14062, 7
  %v14064 = vsub.s32 %v13266, %v14063
  %v14065 = vrot.slane %v12929, %v14064
  %v14066 = vsel %vm13271, %v14065, %v14061
  %v14067 = vlaneseq
  %v14068 = vshrl.u32 %v14067, 7
  %v14069 = vsub.s32 %v13273, %v14068
  %v14070 = vrot.slane %v12932, %v14069
  %v14071 = vsel %vm13278, %v14070, %v14066
  %v14072 = vlaneseq
  %v14073 = vshrl.u32 %v14072, 7
  %v14074 = vsub.s32 %v13280, %v14073
  %v14075 = vrot.slane %v12935, %v14074
  %v14076 = vsel %vm13285, %v14075, %v14071
  %v14077 = vlaneseq
  %v14078 = vshrl.u32 %v14077, 7
  %v14079 = vsub.s32 %v13177, %v14078
  %v14080 = vrot.slane %v12938, %v14079
  %v14081 = vlaneseq
  %v14082 = vshrl.u32 %v14081, 7
  %v14083 = vsub.s32 %v13182, %v14082
  %v14084 = vrot.slane %v12941, %v14083
  %v14085 = vsel %vm13187, %v14084, %v14080
  %v14086 = vlaneseq
  %v14087 = vshrl.u32 %v14086, 7
  %v14088 = vsub.s32 %v13189, %v14087
  %v14089 = vrot.slane %v12944, %v14088
  %v14090 = vsel %vm13194, %v14089, %v14085
  %v14091 = vlaneseq
  %v14092 = vshrl.u32 %v14091, 7
  %v14093 = vsub.s32 %v13196, %v14092
  %v14094 = vrot.slane %v12947, %v14093
  %v14095 = vsel %vm13201, %v14094, %v14090
  %v14096 = vlaneseq
  %v14097 = vshrl.u32 %v14096, 7
  %v14098 = vsub.s32 %v13203, %v14097
  %v14099 = vrot.slane %v12950, %v14098
  %v14100 = vsel %vm13208, %v14099, %v14095
  %v14101 = vlaneseq
  %v14102 = vshrl.u32 %v14101, 7
  %v14103 = vsub.s32 %v13210, %v14102
  %v14104 = vrot.slane %v12953, %v14103
  %v14105 = vsel %vm13215, %v14104, %v14100
  %v14106 = vlaneseq
  %v14107 = vshrl.u32 %v14106, 7
  %v14108 = vsub.s32 %v13217, %v14107
  %v14109 = vrot.slane %v12956, %v14108
  %v14110 = vsel %vm13222, %v14109, %v14105
  %v14111 = vlaneseq
  %v14112 = vshrl.u32 %v14111, 7
  %v14113 = vsub.s32 %v13224, %v14112
  %v14114 = vrot.slane %v12959, %v14113
  %v14115 = vsel %vm13229, %v14114, %v14110
  %v14116 = vlaneseq
  %v14117 = vshrl.u32 %v14116, 7
  %v14118 = vsub.s32 %v13231, %v14117
  %v14119 = vrot.slane %v12962, %v14118
  %v14120 = vsel %vm13236, %v14119, %v14115
  %v14121 = vlaneseq
  %v14122 = vshrl.u32 %v14121, 7
  %v14123 = vsub.s32 %v13238, %v14122
  %v14124 = vrot.slane %v12965, %v14123
  %v14125 = vsel %vm13243, %v14124, %v14120
  %v14126 = vlaneseq
  %v14127 = vshrl.u32 %v14126, 7
  %v14128 = vsub.s32 %v13245, %v14127
  %v14129 = vrot.slane %v12968, %v14128
  %v14130 = vsel %vm13250, %v14129, %v14125
  %v14131 = vlaneseq
  %v14132 = vshrl.u32 %v14131, 7
  %v14133 = vsub.s32 %v13252, %v14132
  %v14134 = vrot.slane %v12971, %v14133
  %v14135 = vsel %vm13257, %v14134, %v14130
  %v14136 = vlaneseq
  %v14137 = vshrl.u32 %v14136, 7
  %v14138 = vsub.s32 %v13259, %v14137
  %v14139 = vrot.slane %v12974, %v14138
  %v14140 = vsel %vm13264, %v14139, %v14135
  %v14141 = vlaneseq
  %v14142 = vshrl.u32 %v14141, 7
  %v14143 = vsub.s32 %v13266, %v14142
  %v14144 = vrot.slane %v12977, %v14143
  %v14145 = vsel %vm13271, %v14144, %v14140
  %v14146 = vlaneseq
  %v14147 = vshrl.u32 %v14146, 7
  %v14148 = vsub.s32 %v13273, %v14147
  %v14149 = vrot.slane %v12980, %v14148
  %v14150 = vsel %vm13278, %v14149, %v14145
  %v14151 = vlaneseq
  %v14152 = vshrl.u32 %v14151, 7
  %v14153 = vsub.s32 %v13280, %v14152
  %v14154 = vrot.slane %v12983, %v14153
  %v14155 = vsel %vm13285, %v14154, %v14150
  %v14156 = vlaneseq
  %v14157 = vshrl.u32 %v14156, 7
  %v14158 = vsub.s32 %v13177, %v14157
  %v14159 = vrot.slane %v12986, %v14158
  %v14160 = vlaneseq
  %v14161 = vshrl.u32 %v14160, 7
  %v14162 = vsub.s32 %v13182, %v14161
  %v14163 = vrot.slane %v12989, %v14162
  %v14164 = vsel %vm13187, %v14163, %v14159
  %v14165 = vlaneseq
  %v14166 = vshrl.u32 %v14165, 7
  %v14167 = vsub.s32 %v13189, %v14166
  %v14168 = vrot.slane %v12992, %v14167
  %v14169 = vsel %vm13194, %v14168, %v14164
  %v14170 = vlaneseq
  %v14171 = vshrl.u32 %v14170, 7
  %v14172 = vsub.s32 %v13196, %v14171
  %v14173 = vrot.slane %v12995, %v14172
  %v14174 = vsel %vm13201, %v14173, %v14169
  %v14175 = vlaneseq
  %v14176 = vshrl.u32 %v14175, 7
  %v14177 = vsub.s32 %v13203, %v14176
  %v14178 = vrot.slane %v12998, %v14177
  %v14179 = vsel %vm13208, %v14178, %v14174
  %v14180 = vlaneseq
  %v14181 = vshrl.u32 %v14180, 7
  %v14182 = vsub.s32 %v13210, %v14181
  %v14183 = vrot.slane %v13001, %v14182
  %v14184 = vsel %vm13215, %v14183, %v14179
  %v14185 = vlaneseq
  %v14186 = vshrl.u32 %v14185, 7
  %v14187 = vsub.s32 %v13217, %v14186
  %v14188 = vrot.slane %v13004, %v14187
  %v14189 = vsel %vm13222, %v14188, %v14184
  %v14190 = vlaneseq
  %v14191 = vshrl.u32 %v14190, 7
  %v14192 = vsub.s32 %v13224, %v14191
  %v14193 = vrot.slane %v13007, %v14192
  %v14194 = vsel %vm13229, %v14193, %v14189
  %v14195 = vlaneseq
  %v14196 = vshrl.u32 %v14195, 7
  %v14197 = vsub.s32 %v13231, %v14196
  %v14198 = vrot.slane %v13010, %v14197
  %v14199 = vsel %vm13236, %v14198, %v14194
  %v14200 = vlaneseq
  %v14201 = vshrl.u32 %v14200, 7
  %v14202 = vsub.s32 %v13238, %v14201
  %v14203 = vrot.slane %v13013, %v14202
  %v14204 = vsel %vm13243, %v14203, %v14199
  %v14205 = vlaneseq
  %v14206 = vshrl.u32 %v14205, 7
  %v14207 = vsub.s32 %v13245, %v14206
  %v14208 = vrot.slane %v13016, %v14207
  %v14209 = vsel %vm13250, %v14208, %v14204
  %v14210 = vlaneseq
  %v14211 = vshrl.u32 %v14210, 7
  %v14212 = vsub.s32 %v13252, %v14211
  %v14213 = vrot.slane %v13019, %v14212
  %v14214 = vsel %vm13257, %v14213, %v14209
  %v14215 = vlaneseq
  %v14216 = vshrl.u32 %v14215, 7
  %v14217 = vsub.s32 %v13259, %v14216
  %v14218 = vrot.slane %v13022, %v14217
  %v14219 = vsel %vm13264, %v14218, %v14214
  %v14220 = vlaneseq
  %v14221 = vshrl.u32 %v14220, 7
  %v14222 = vsub.s32 %v13266, %v14221
  %v14223 = vrot.slane %v13025, %v14222
  %v14224 = vsel %vm13271, %v14223, %v14219
  %v14225 = vlaneseq
  %v14226 = vshrl.u32 %v14225, 7
  %v14227 = vsub.s32 %v13273, %v14226
  %v14228 = vrot.slane %v13028, %v14227
  %v14229 = vsel %vm13278, %v14228, %v14224
  %v14230 = vlaneseq
  %v14231 = vshrl.u32 %v14230, 7
  %v14232 = vsub.s32 %v13280, %v14231
  %v14233 = vrot.slane %v13031, %v14232
  %v14234 = vsel %vm13285, %v14233, %v14229
  %v14235 = vlaneseq
  %v14236 = vshrl.u32 %v14235, 7
  %v14237 = vsub.s32 %v13177, %v14236
  %v14238 = vrot.slane %v13034, %v14237
  %v14239 = vlaneseq
  %v14240 = vshrl.u32 %v14239, 7
  %v14241 = vsub.s32 %v13182, %v14240
  %v14242 = vrot.slane %v13037, %v14241
  %v14243 = vsel %vm13187, %v14242, %v14238
  %v14244 = vlaneseq
  %v14245 = vshrl.u32 %v14244, 7
  %v14246 = vsub.s32 %v13189, %v14245
  %v14247 = vrot.slane %v13040, %v14246
  %v14248 = vsel %vm13194, %v14247, %v14243
  %v14249 = vlaneseq
  %v14250 = vshrl.u32 %v14249, 7
  %v14251 = vsub.s32 %v13196, %v14250
  %v14252 = vrot.slane %v13043, %v14251
  %v14253 = vsel %vm13201, %v14252, %v14248
  %v14254 = vlaneseq
  %v14255 = vshrl.u32 %v14254, 7
  %v14256 = vsub.s32 %v13203, %v14255
  %v14257 = vrot.slane %v13046, %v14256
  %v14258 = vsel %vm13208, %v14257, %v14253
  %v14259 = vlaneseq
  %v14260 = vshrl.u32 %v14259, 7
  %v14261 = vsub.s32 %v13210, %v14260
  %v14262 = vrot.slane %v13049, %v14261
  %v14263 = vsel %vm13215, %v14262, %v14258
  %v14264 = vlaneseq
  %v14265 = vshrl.u32 %v14264, 7
  %v14266 = vsub.s32 %v13217, %v14265
  %v14267 = vrot.slane %v13052, %v14266
  %v14268 = vsel %vm13222, %v14267, %v14263
  %v14269 = vlaneseq
  %v14270 = vshrl.u32 %v14269, 7
  %v14271 = vsub.s32 %v13224, %v14270
  %v14272 = vrot.slane %v13055, %v14271
  %v14273 = vsel %vm13229, %v14272, %v14268
  %v14274 = vlaneseq
  %v14275 = vshrl.u32 %v14274, 7
  %v14276 = vsub.s32 %v13231, %v14275
  %v14277 = vrot.slane %v13058, %v14276
  %v14278 = vsel %vm13236, %v14277, %v14273
  %v14279 = vlaneseq
  %v14280 = vshrl.u32 %v14279, 7
  %v14281 = vsub.s32 %v13238, %v14280
  %v14282 = vrot.slane %v13061, %v14281
  %v14283 = vsel %vm13243, %v14282, %v14278
  %v14284 = vlaneseq
  %v14285 = vshrl.u32 %v14284, 7
  %v14286 = vsub.s32 %v13245, %v14285
  %v14287 = vrot.slane %v13064, %v14286
  %v14288 = vsel %vm13250, %v14287, %v14283
  %v14289 = vlaneseq
  %v14290 = vshrl.u32 %v14289, 7
  %v14291 = vsub.s32 %v13252, %v14290
  %v14292 = vrot.slane %v13067, %v14291
  %v14293 = vsel %vm13257, %v14292, %v14288
  %v14294 = vlaneseq
  %v14295 = vshrl.u32 %v14294, 7
  %v14296 = vsub.s32 %v13259, %v14295
  %v14297 = vrot.slane %v13070, %v14296
  %v14298 = vsel %vm13264, %v14297, %v14293
  %v14299 = vlaneseq
  %v14300 = vshrl.u32 %v14299, 7
  %v14301 = vsub.s32 %v13266, %v14300
  %v14302 = vrot.slane %v13073, %v14301
  %v14303 = vsel %vm13271, %v14302, %v14298
  %v14304 = vlaneseq
  %v14305 = vshrl.u32 %v14304, 7
  %v14306 = vsub.s32 %v13273, %v14305
  %v14307 = vrot.slane %v13076, %v14306
  %v14308 = vsel %vm13278, %v14307, %v14303
  %v14309 = vlaneseq
  %v14310 = vshrl.u32 %v14309, 7
  %v14311 = vsub.s32 %v13280, %v14310
  %v14312 = vrot.slane %v13079, %v14311
  %v14313 = vsel %vm13285, %v14312, %v14308
  %v14314 = vlaneseq
  %v14315 = vshrl.u32 %v14314, 7
  %v14316 = vsub.s32 %v13177, %v14315
  %v14317 = vrot.slane %v13082, %v14316
  %v14318 = vlaneseq
  %v14319 = vshrl.u32 %v14318, 7
  %v14320 = vsub.s32 %v13182, %v14319
  %v14321 = vrot.slane %v13085, %v14320
  %v14322 = vsel %vm13187, %v14321, %v14317
  %v14323 = vlaneseq
  %v14324 = vshrl.u32 %v14323, 7
  %v14325 = vsub.s32 %v13189, %v14324
  %v14326 = vrot.slane %v13088, %v14325
  %v14327 = vsel %vm13194, %v14326, %v14322
  %v14328 = vlaneseq
  %v14329 = vshrl.u32 %v14328, 7
  %v14330 = vsub.s32 %v13196, %v14329
  %v14331 = vrot.slane %v13091, %v14330
  %v14332 = vsel %vm13201, %v14331, %v14327
  %v14333 = vlaneseq
  %v14334 = vshrl.u32 %v14333, 7
  %v14335 = vsub.s32 %v13203, %v14334
  %v14336 = vrot.slane %v13094, %v14335
  %v14337 = vsel %vm13208, %v14336, %v14332
  %v14338 = vlaneseq
  %v14339 = vshrl.u32 %v14338, 7
  %v14340 = vsub.s32 %v13210, %v14339
  %v14341 = vrot.slane %v13097, %v14340
  %v14342 = vsel %vm13215, %v14341, %v14337
  %v14343 = vlaneseq
  %v14344 = vshrl.u32 %v14343, 7
  %v14345 = vsub.s32 %v13217, %v14344
  %v14346 = vrot.slane %v13100, %v14345
  %v14347 = vsel %vm13222, %v14346, %v14342
  %v14348 = vlaneseq
  %v14349 = vshrl.u32 %v14348, 7
  %v14350 = vsub.s32 %v13224, %v14349
  %v14351 = vrot.slane %v13103, %v14350
  %v14352 = vsel %vm13229, %v14351, %v14347
  %v14353 = vlaneseq
  %v14354 = vshrl.u32 %v14353, 7
  %v14355 = vsub.s32 %v13231, %v14354
  %v14356 = vrot.slane %v13106, %v14355
  %v14357 = vsel %vm13236, %v14356, %v14352
  %v14358 = vlaneseq
  %v14359 = vshrl.u32 %v14358, 7
  %v14360 = vsub.s32 %v13238, %v14359
  %v14361 = vrot.slane %v13109, %v14360
  %v14362 = vsel %vm13243, %v14361, %v14357
  %v14363 = vlaneseq
  %v14364 = vshrl.u32 %v14363, 7
  %v14365 = vsub.s32 %v13245, %v14364
  %v14366 = vrot.slane %v13112, %v14365
  %v14367 = vsel %vm13250, %v14366, %v14362
  %v14368 = vlaneseq
  %v14369 = vshrl.u32 %v14368, 7
  %v14370 = vsub.s32 %v13252, %v14369
  %v14371 = vrot.slane %v13115, %v14370
  %v14372 = vsel %vm13257, %v14371, %v14367
  %v14373 = vlaneseq
  %v14374 = vshrl.u32 %v14373, 7
  %v14375 = vsub.s32 %v13259, %v14374
  %v14376 = vrot.slane %v13118, %v14375
  %v14377 = vsel %vm13264, %v14376, %v14372
  %v14378 = vlaneseq
  %v14379 = vshrl.u32 %v14378, 7
  %v14380 = vsub.s32 %v13266, %v14379
  %v14381 = vrot.slane %v13121, %v14380
  %v14382 = vsel %vm13271, %v14381, %v14377
  %v14383 = vlaneseq
  %v14384 = vshrl.u32 %v14383, 7
  %v14385 = vsub.s32 %v13273, %v14384
  %v14386 = vrot.slane %v13124, %v14385
  %v14387 = vsel %vm13278, %v14386, %v14382
  %v14388 = vlaneseq
  %v14389 = vshrl.u32 %v14388, 7
  %v14390 = vsub.s32 %v13280, %v14389
  %v14391 = vrot.slane %v13127, %v14390
  %v14392 = vsel %vm13285, %v14391, %v14387
  %v14393 = vlaneseq
  %v14394 = vshrl.u32 %v14393, 7
  %v14395 = vsub.s32 %v13177, %v14394
  %v14396 = vrot.slane %v13130, %v14395
  %v14397 = vlaneseq
  %v14398 = vshrl.u32 %v14397, 7
  %v14399 = vsub.s32 %v13182, %v14398
  %v14400 = vrot.slane %v13133, %v14399
  %v14401 = vsel %vm13187, %v14400, %v14396
  %v14402 = vlaneseq
  %v14403 = vshrl.u32 %v14402, 7
  %v14404 = vsub.s32 %v13189, %v14403
  %v14405 = vrot.slane %v13136, %v14404
  %v14406 = vsel %vm13194, %v14405, %v14401
  %v14407 = vlaneseq
  %v14408 = vshrl.u32 %v14407, 7
  %v14409 = vsub.s32 %v13196, %v14408
  %v14410 = vrot.slane %v13139, %v14409
  %v14411 = vsel %vm13201, %v14410, %v14406
  %v14412 = vlaneseq
  %v14413 = vshrl.u32 %v14412, 7
  %v14414 = vsub.s32 %v13203, %v14413
  %v14415 = vrot.slane %v13142, %v14414
  %v14416 = vsel %vm13208, %v14415, %v14411
  %v14417 = vlaneseq
  %v14418 = vshrl.u32 %v14417, 7
  %v14419 = vsub.s32 %v13210, %v14418
  %v14420 = vrot.slane %v13145, %v14419
  %v14421 = vsel %vm13215, %v14420, %v14416
  %v14422 = vlaneseq
  %v14423 = vshrl.u32 %v14422, 7
  %v14424 = vsub.s32 %v13217, %v14423
  %v14425 = vrot.slane %v13148, %v14424
  %v14426 = vsel %vm13222, %v14425, %v14421
  %v14427 = vlaneseq
  %v14428 = vshrl.u32 %v14427, 7
  %v14429 = vsub.s32 %v13224, %v14428
  %v14430 = vrot.slane %v13151, %v14429
  %v14431 = vsel %vm13229, %v14430, %v14426
  %v14432 = vlaneseq
  %v14433 = vshrl.u32 %v14432, 7
  %v14434 = vsub.s32 %v13231, %v14433
  %v14435 = vrot.slane %v13154, %v14434
  %v14436 = vsel %vm13236, %v14435, %v14431
  %v14437 = vlaneseq
  %v14438 = vshrl.u32 %v14437, 7
  %v14439 = vsub.s32 %v13238, %v14438
  %v14440 = vrot.slane %v13157, %v14439
  %v14441 = vsel %vm13243, %v14440, %v14436
  %v14442 = vlaneseq
  %v14443 = vshrl.u32 %v14442, 7
  %v14444 = vsub.s32 %v13245, %v14443
  %v14445 = vrot.slane %v13160, %v14444
  %v14446 = vsel %vm13250, %v14445, %v14441
  %v14447 = vlaneseq
  %v14448 = vshrl.u32 %v14447, 7
  %v14449 = vsub.s32 %v13252, %v14448
  %v14450 = vrot.slane %v13163, %v14449
  %v14451 = vsel %vm13257, %v14450, %v14446
  %v14452 = vlaneseq
  %v14453 = vshrl.u32 %v14452, 7
  %v14454 = vsub.s32 %v13259, %v14453
  %v14455 = vrot.slane %v13166, %v14454
  %v14456 = vsel %vm13264, %v14455, %v14451
  %v14457 = vlaneseq
  %v14458 = vshrl.u32 %v14457, 7
  %v14459 = vsub.s32 %v13266, %v14458
  %v14460 = vrot.slane %v13169, %v14459
  %v14461 = vsel %vm13271, %v14460, %v14456
  %v14462 = vlaneseq
  %v14463 = vshrl.u32 %v14462, 7
  %v14464 = vsub.s32 %v13273, %v14463
  %v14465 = vrot.slane %v13172, %v14464
  %v14466 = vsel %vm13278, %v14465, %v14461
  %v14467 = vlaneseq
  %v14468 = vshrl.u32 %v14467, 7
  %v14469 = vsub.s32 %v13280, %v14468
  %v14470 = vrot.slane %v13175, %v14469
  %v14471 = vsel %vm13285, %v14470, %v14466
  %vm14472 = vcmask 1041409
  %v14473 = vsel %vm14472, %v13602, %v13286
  %vm14474 = vcmask 1042434
  %v14475 = vsel %vm14474, %v13918, %v14473
  %vm14476 = vcmask 1043459
  %v14477 = vsel %vm14476, %v14234, %v14475
  %v14478 = vsel %vm14472, %v13681, %v13365
  %v14479 = vsel %vm14474, %v13997, %v14478
  %v14480 = vsel %vm14476, %v14313, %v14479
  %v14481 = vsel %vm14472, %v13760, %v13444
  %v14482 = vsel %vm14474, %v14076, %v14481
  %v14483 = vsel %vm14476, %v14392, %v14482
  %v14484 = vsel %vm14472, %v13839, %v13523
  %v14485 = vsel %vm14474, %v14155, %v14484
  %v14486 = vsel %vm14476, %v14471, %v14485
  %v14487 = vcombine.low %v14477, %v14480
  %v14488 = vcombine.low %v14483, %v14486
  %14491 = vst [vmem:[%s6] sm:$0xff] %v14487
  %14492 = vst [vmem:[%s6 + $0x8] sm:$0xff] %v14488
  // Predicated region
  $region26: #{variational_bound.1} parent=0 // pred_check
    _
  $region27: #{variational_bound.1} parent=0 // pred_check_branch
    %14494 = sbr.rel (0) target = $region29
  $region28: #{variational_bound.1} parent=0 // pred_region
    _
  $region29: #{variational_bound.1} parent=0 // pred_fallthru
    _
  // Predicated region
  $region30: #{variational_bound.1} parent=0 // pred_check
    _
  $region31: #{variational_bound.1} parent=0 // pred_check_branch
    %14496 = sbr.rel (0) target = $region33
  $region32: #{variational_bound.1} parent=0 // pred_region
    _
  $region33: #{variational_bound.1} parent=0 // pred_fallthru
    _

</llo_original>
